<compile_context>
chip_gen: v5e
topology: v5e:2x2
jax: 0.10.0
libtpu: 0.0.40
codegen_flags: <defaults>
</compile_context>

<pallas_src>
import jax
import jax.numpy as jnp
from jax import lax
from jax.experimental import pallas as pl
from jax.experimental.pallas import tpu as pltpu

REASON_DIM = 300          # true width of the "reason" feature (LayerNorm dim)
REASON_PAD = 384          # padded to 3 * 128 lanes


# --------------------------------------------------------------------------
# kernel 1: fused prologue
#   vision_reason = cls_project(pooled_cls)
#   s             = sentence_proj(sentence_embed)      (== mca_output, stubbed decoder)
#   pooled        = sum_seq softmax(MLP(s)) * s        (per-batch softmax over seq)
#   proj          = mca_project_after(pooled) + vision_reason
#   proj          = conbine_reson(proj) ; normed = LayerNorm_300(proj)
# --------------------------------------------------------------------------
def _prologue_kernel(cls_ref, sent_ref,
                     c1w_ref, c1b_ref, c2w_ref, c2b_ref,
                     sw_ref, sb_ref, m1w_ref, m1b_ref, m2r_ref,
                     aw_ref, ab_ref, q1w_ref, q1b_ref, q2w_ref, q2b_ref,
                     g_ref, beta_ref,
                     normed_ref, pooled_scr):
    f32 = jnp.float32
    bf = jnp.bfloat16
    B = cls_ref.shape[0]
    Ls = sent_ref.shape[0] // B

    # ---- cls_project: Linear(768,1024) + ReLU + Linear(1024,300->384p)
    h = jnp.dot(cls_ref[...].astype(bf), c1w_ref[...],
                preferred_element_type=f32) + c1b_ref[...]
    h = jnp.maximum(h, 0.0)
    vreason = jnp.dot(h.astype(bf), c2w_ref[...],
                      preferred_element_type=f32) + c2b_ref[...]             # (B, 384)

    # ---- sentence_proj over all B*Ls rows + mca_output_softmax_proj MLP
    s = jnp.dot(sent_ref[...].astype(bf), sw_ref[...],
                preferred_element_type=f32) + sb_ref[...]                    # (B*Ls, 512)
    h2 = jnp.dot(s.astype(bf), m1w_ref[...],
                 preferred_element_type=f32) + m1b_ref[...]
    h2 = jnp.maximum(h2, 0.0)
    # Linear(512,1) as lane-dense multiply + reduce; its scalar bias shifts all
    # seq positions equally and cancels in the softmax, so it is dropped.
    logits = jnp.sum(h2 * m2r_ref[...], axis=-1, keepdims=True)              # (B*Ls, 1)

    # ---- per-batch softmax pooling over the sequence dim (B static)
    for b in range(B):
        lg = logits[b * Ls:(b + 1) * Ls]                                     # (Ls, 1)
        sb_rows = s[b * Ls:(b + 1) * Ls]                                     # (Ls, 512)
        m = jnp.max(lg, axis=0, keepdims=True)
        e = jnp.exp(lg - m)
        soft = e / jnp.sum(e, axis=0, keepdims=True)
        pooled_scr[pl.ds(b, 1), :] = jnp.sum(soft * sb_rows, axis=0, keepdims=True)
    pooled = pooled_scr[...]                                                 # (B, 512)

    # ---- mca_project_after + vision_reason, conbine MLP, LayerNorm(300)
    proj = jnp.dot(pooled.astype(bf), aw_ref[...],
                   preferred_element_type=f32) + ab_ref[...] + vreason       # (B, 384)
    hq = jnp.dot(proj.astype(bf), q1w_ref[...],
                 preferred_element_type=f32) + q1b_ref[...]
    hq = jnp.maximum(hq, 0.0)
    proj = jnp.dot(hq.astype(bf), q2w_ref[...],
                   preferred_element_type=f32) + q2b_ref[...]                # (B, 384)
    # feature lanes >= 300 of proj are exactly zero (zero-padded weights/biases),
    # so the plain sum gives the 300-feature statistics when divided by 300.
    mu = jnp.sum(proj, axis=-1, keepdims=True) * (1.0 / REASON_DIM)
    mask = lax.broadcasted_iota(jnp.int32, proj.shape, 1) < REASON_DIM
    d = jnp.where(mask, proj - mu, 0.0)
    var = jnp.sum(d * d, axis=-1, keepdims=True) * (1.0 / REASON_DIM)
    normed = d * lax.rsqrt(var + 1e-5) * g_ref[...] + beta_ref[...]          # padded lanes -> 0
    normed_ref[...] = normed.astype(normed_ref.dtype)


def prologue(pooled_cls, sentence_flat, q):
    B, Kc = pooled_cls.shape
    R, Ke = sentence_flat.shape
    H1 = q["cls1_w"].shape[1]
    DP = q["cls2_w"].shape[1]
    Ds = q["sent_w"].shape[1]
    Hc = q["c1_w"].shape[1]
    c = lambda i: (0, 0)
    return pl.pallas_call(
        _prologue_kernel,
        out_shape=jax.ShapeDtypeStruct((B, DP), jnp.float32),
        grid=(1,),
        in_specs=[
            pl.BlockSpec((B, Kc), c), pl.BlockSpec((R, Ke), c),
            pl.BlockSpec((Kc, H1), c), pl.BlockSpec((1, H1), c),
            pl.BlockSpec((H1, DP), c), pl.BlockSpec((1, DP), c),
            pl.BlockSpec((Ke, Ds), c), pl.BlockSpec((1, Ds), c),
            pl.BlockSpec((Ds, Ds), c), pl.BlockSpec((1, Ds), c),
            pl.BlockSpec((1, Ds), c),
            pl.BlockSpec((Ds, DP), c), pl.BlockSpec((1, DP), c),
            pl.BlockSpec((DP, Hc), c), pl.BlockSpec((1, Hc), c),
            pl.BlockSpec((Hc, DP), c), pl.BlockSpec((1, DP), c),
            pl.BlockSpec((1, DP), c), pl.BlockSpec((1, DP), c),
        ],
        out_specs=pl.BlockSpec((B, DP), c),
        scratch_shapes=[pltpu.VMEM((B, Ds), jnp.float32)],
        compiler_params=pltpu.CompilerParams(vmem_limit_bytes=32 * 1024 * 1024),
    )(pooled_cls, sentence_flat,
      q["cls1_w"], q["cls1_b"], q["cls2_w"], q["cls2_b"],
      q["sent_w"], q["sent_b"], q["m1_w"], q["m1_b"], q["m2_row"],
      q["after_w"], q["after_b"], q["c1_w"], q["c1_b"], q["c2_w"], q["c2_b"],
      q["ln_g"], q["ln_b"])


# --------------------------------------------------------------------------
# kernel 2: fused focus attention + SGGA-side projections (single launch)
#   sim[i,j] = (vo_i Wv + bv)·(lo_j Wl + bl)
#            = vo_i (Wv Wl^T) lo_j^T + vo_i·(Wv bl) + lo_j·(Wl bv) + const
#   (constant term is invariant under top-1 over j and softmax over i)
#   The language [:,1:-1] slice is done in-kernel (no wrapper HBM copy).
# --------------------------------------------------------------------------
def _focus_sgga_kernel(vo_ref, lo_ref, wsim_ref, cv_ref, cl_ref,
                       wfoc_ref, bfoc_ref, wsg_ref, bsg_ref,
                       foc_ref, sg_ref, head_scr):
    f32 = jnp.float32
    bf = jnp.bfloat16
    B = foc_ref.shape[0]
    Lv = vo_ref.shape[0] // B
    Lwf = lo_ref.shape[0] // B
    Lw = Lwf - 2

    vo_all = vo_ref[...]                                                     # (B*Lv, 768)
    t_all = jnp.dot(vo_all.astype(bf), wsim_ref[...],
                    preferred_element_type=f32)                              # (B*Lv, 768)
    rowterm = jnp.sum(vo_all * cv_ref[...], axis=-1, keepdims=True)          # (B*Lv, 1)

    for b in range(B):
        lo = lo_ref[pl.ds(b * Lwf + 1, Lw), :]                               # (Lw, 768)  rows 1..Lwf-2
        lo_b = lo.astype(bf)
        sim = lax.dot_general(t_all[b * Lv:(b + 1) * Lv].astype(bf), lo_b,
                              (((1,), (1,)), ((), ())),
                              preferred_element_type=f32)                    # (Lv, Lw)
        colterm = lax.dot_general(cl_ref[...], lo, (((1,), (1,)), ((), ())),
                                  preferred_element_type=f32)                # (1, Lw)
        sim = sim + rowterm[b * Lv:(b + 1) * Lv] + colterm

        # top-1 over language dim, softmax over vision dim
        # TODO(synk): gumbel noise omitted for determinism; plain softmax used.
        kg = jnp.max(sim, axis=-1, keepdims=True)                            # (Lv, 1)
        m = jnp.max(kg, axis=0, keepdims=True)
        e = jnp.exp(kg - m)
        att = e / jnp.sum(e, axis=0, keepdims=True)
        head_scr[pl.ds(b, 1), :] = jnp.sum(vo_all[b * Lv:(b + 1) * Lv] * att,
                                           axis=0, keepdims=True)            # (1, 768)

        sg = jnp.dot(lo_b, wsg_ref[...],
                     preferred_element_type=f32) + bsg_ref[...]              # (Lw, 512)
        sg_ref[pl.ds(b * Lw, Lw), :] = sg.astype(sg_ref.dtype)

    foc = jnp.dot(head_scr[...].astype(bf), wfoc_ref[...],
                  preferred_element_type=f32) + bfoc_ref[...]                # (B, 512)
    foc_ref[...] = foc.astype(foc_ref.dtype)


def focus_and_sgga(vision_flat, language_flat, q, B):
    Dv = vision_flat.shape[1]
    Lv = vision_flat.shape[0] // B
    Lwf = language_flat.shape[0] // B
    Lw = Lwf - 2
    Df = q["focus_w"].shape[1]
    Ds = q["sgga_w"].shape[1]
    c = lambda i: (0, 0)
    return pl.pallas_call(
        _focus_sgga_kernel,
        out_shape=(jax.ShapeDtypeStruct((B, Df), jnp.float32),
                   jax.ShapeDtypeStruct((B * Lw, Ds), jnp.float32)),
        grid=(1,),
        in_specs=[
            pl.BlockSpec((B * Lv, Dv), c),
            pl.BlockSpec((B * Lwf, Dv), c),
            pl.BlockSpec((Dv, Dv), c),
            pl.BlockSpec((1, Dv), c),
            pl.BlockSpec((1, Dv), c),
            pl.BlockSpec((Dv, Df), c),
            pl.BlockSpec((1, Df), c),
            pl.BlockSpec((Dv, Ds), c),
            pl.BlockSpec((1, Ds), c),
        ],
        out_specs=(pl.BlockSpec((B, Df), c),
                   pl.BlockSpec((B * Lw, Ds), c)),
        scratch_shapes=[pltpu.VMEM((B, Dv), jnp.float32)],
        compiler_params=pltpu.CompilerParams(vmem_limit_bytes=32 * 1024 * 1024),
    )(vision_flat, language_flat, q["w_sim"], q["c_v"], q["c_l"],
      q["focus_w"], q["focus_b"], q["sgga_w"], q["sgga_b"])


# --------------------------------------------------------------------------
# kernel 3: vocab projection, tiled over the (pre-padded) vocab dim.
#   Each grid step is a single (B,384)@(384,tn) matmul; normed stays resident.
# --------------------------------------------------------------------------
def _vocab_kernel(n_ref, wv_ref, bv_ref, o_ref):
    o_ref[...] = (jnp.dot(n_ref[...].astype(jnp.bfloat16), wv_ref[...],
                          preferred_element_type=jnp.float32)
                  + bv_ref[...]).astype(o_ref.dtype)


def vocab_head(normed, wv, bv, tn):
    B, Kp = normed.shape
    Vp = wv.shape[1]
    return pl.pallas_call(
        _vocab_kernel,
        out_shape=jax.ShapeDtypeStruct((B, Vp), jnp.float32),
        grid=(Vp // tn,),
        in_specs=[pl.BlockSpec((B, Kp), lambda j: (0, 0)),
                  pl.BlockSpec((Kp, tn), lambda j: (0, j)),
                  pl.BlockSpec((1, tn), lambda j: (0, j))],
        out_specs=pl.BlockSpec((B, tn), lambda j: (0, j)),
        compiler_params=pltpu.CompilerParams(dimension_semantics=("parallel",)),
    )(normed, wv, bv)


# --------------------------------------------------------------------------
# parameters (deterministic PyTorch-Linear-style init) + one-time preparation
# --------------------------------------------------------------------------
def init_linear(key, fan_in, fan_out):
    kw, kb = jax.random.split(key)
    bound = 1.0 / (fan_in ** 0.5)
    w = jax.random.uniform(kw, (fan_in, fan_out), jnp.float32, -bound, bound)
    b = jax.random.uniform(kb, (fan_out,), jnp.float32, -bound, bound)
    return w, b


def init_params(key, vocab_num):
    ks = jax.random.split(key, 12)
    p = {}
    p["sentence_proj"] = init_linear(ks[0], 384, 512)
    p["cls_proj1"] = init_linear(ks[1], 768, 1024)
    p["cls_proj2"] = init_linear(ks[2], 1024, 300)
    p["l_att_proj_sim"] = init_linear(ks[3], 768, 1024)
    p["v_att_proj_sim"] = init_linear(ks[4], 768, 1024)
    p["l_att_proj_sgga"] = init_linear(ks[5], 768, 512)
    p["foucu_image_to_sgga"] = init_linear(ks[6], 768, 512)
    p["mca_soft1"] = init_linear(ks[7], 512, 512)
    p["mca_soft2"] = init_linear(ks[8], 512, 1)
    p["mca_after"] = init_linear(ks[9], 512, 300)
    p["conbine1"] = init_linear(ks[10], 300, 1024)
    p["conbine2"] = init_linear(ks[11], 1024, 300)
    p["ln_gamma"] = jnp.ones((300,), jnp.float32)
    p["ln_beta"] = jnp.zeros((300,), jnp.float32)
    kv = jax.random.fold_in(key, 123)
    p["vocab_proj"] = init_linear(kv, 300, vocab_num)
    return p


def prepare_params(p, vocab_tile=2048):
    """One-time prep: bf16 weights, folded sim matrix, 300->384 lane padding,
    and offline vocab padding to the tile multiple.  Returns (params, tile)."""
    bf = jnp.bfloat16
    DP = REASON_PAD

    def row(v, n=None):
        if n is not None:
            v = jnp.pad(v, (0, n - v.shape[0]))
        return v.reshape(1, -1).astype(jnp.float32)

    def pad_cols(w, n):
        return jnp.pad(w, ((0, 0), (0, n - w.shape[1])))

    def pad_rows(w, n):
        return jnp.pad(w, ((0, n - w.shape[0]), (0, 0)))

    wv_sim, bv_sim = p["v_att_proj_sim"]
    wl_sim, bl_sim = p["l_att_proj_sim"]
    w_voc, b_voc = p["vocab_proj"]
    V = w_voc.shape[1]

    # vocab tile: lane aligned, prefer >= 2 tiles (v7x megacore), pad once here
    v128 = -(-V // 128) * 128
    tn = min(vocab_tile, v128)
    if v128 >= 256:
        tn = min(tn, max(128, (v128 // 2) // 128 * 128))
    Vp = -(-V // tn) * tn

    q = {
        "cls1_w": p["cls_proj1"][0].astype(bf), "cls1_b": row(p["cls_proj1"][1]),
        "cls2_w": pad_cols(p["cls_proj2"][0], DP).astype(bf),
        "cls2_b": row(p["cls_proj2"][1], DP),
        "sent_w": p["sentence_proj"][0].astype(bf), "sent_b": row(p["sentence_proj"][1]),
        "m1_w": p["mca_soft1"][0].astype(bf), "m1_b": row(p["mca_soft1"][1]),
        # mca_soft2 bias is constant across the seq softmax -> dropped in-kernel
        "m2_row": p["mca_soft2"][0].reshape(1, -1).astype(jnp.float32),
        "after_w": pad_cols(p["mca_after"][0], DP).astype(bf),
        "after_b": row(p["mca_after"][1], DP),
        "c1_w": pad_rows(p["conbine1"][0], DP).astype(bf), "c1_b": row(p["conbine1"][1]),
        "c2_w": pad_cols(p["conbine2"][0], DP).astype(bf), "c2_b": row(p["conbine2"][1], DP),
        "ln_g": row(p["ln_gamma"], DP), "ln_b": row(p["ln_beta"], DP),
        # folded similarity: sim = vo (Wv Wl^T) lo^T + vo.(Wv bl) + lo.(Wl bv) (+ const)
        "w_sim": (wv_sim @ wl_sim.T).astype(bf),
        "c_v": (wv_sim @ bl_sim).reshape(1, -1).astype(jnp.float32),
        "c_l": (wl_sim @ bv_sim).reshape(1, -1).astype(jnp.float32),
        "focus_w": p["foucu_image_to_sgga"][0].astype(bf),
        "focus_b": row(p["foucu_image_to_sgga"][1]),
        "sgga_w": p["l_att_proj_sgga"][0].astype(bf),
        "sgga_b": row(p["l_att_proj_sgga"][1]),
        "vocab_w": jnp.pad(w_voc, ((0, DP - REASON_DIM), (0, Vp - V))).astype(bf),
        "vocab_b": row(b_voc, Vp),
    }
    return q, tn


# --------------------------------------------------------------------------
# MyModel.forward (post-LXMERT part) built from the fused Pallas kernels
# --------------------------------------------------------------------------
def my_model_forward(q, language_output_full, vision_output, pooled_cls,
                     sentence_embed, *, vocab_num, vocab_tile):
    # TODO(synk): pretrained LxmertModel is not reproducible in-script; its three
    # outputs (language_output, vision_output, pooled_output) are taken as inputs.
    B, Lwf, Dv = language_output_full.shape
    Lv = vision_output.shape[1]
    Ls = sentence_embed.shape[1]

    # fused prologue -> LayerNorm'ed reason feature (B, 384)
    normed = prologue(pooled_cls, sentence_embed.reshape(B * Ls, -1), q)

    # focus attention + SGGA-side projections (feed the stubbed decoder only)
    foc, sgga_flat = focus_and_sgga(vision_output.reshape(B * Lv, Dv),
                                    language_output_full.reshape(B * Lwf, Dv), q, B)
    # TODO(synk): SGGA_Decoder(cfgs) is not defined in the reference snippet; it is
    # approximated as identity on the sentence path, so these stay unused here.
    _ = (foc.reshape(B, 1, -1), sgga_flat.reshape(B, Lwf - 2, -1))

    out = vocab_head(normed, q["vocab_w"], q["vocab_b"], vocab_tile)
    return out if out.shape[1] == vocab_num else out[:, :vocab_num]


# pure-JAX reference of the kernelized path (f32, unpadded) for sanity checking
def reference_forward(p, pooled_cls, sentence_embed):
    w1, b1 = p["cls_proj1"]; w2, b2 = p["cls_proj2"]
    vreason = jnp.maximum(pooled_cls @ w1 + b1, 0.0) @ w2 + b2
    ws, bs = p["sentence_proj"]
    s = sentence_embed @ ws + bs
    m1w, m1b = p["mca_soft1"]; m2w, m2b = p["mca_soft2"]
    h = jnp.maximum(s @ m1w + m1b, 0.0)
    logits = h @ m2w + m2b
    soft = jax.nn.softmax(logits, axis=1)
    pooled = jnp.sum(soft * s, axis=1)
    aw, ab = p["mca_after"]
    proj = pooled @ aw + ab + vreason
    c1w, c1b = p["conbine1"]; c2w, c2b = p["conbine2"]
    proj = jnp.maximum(proj @ c1w + c1b, 0.0) @ c2w + c2b
    mu = proj.mean(-1, keepdims=True)
    var = jnp.mean(jnp.square(proj - mu), axis=-1, keepdims=True)
    normed = (proj - mu) * lax.rsqrt(var + 1e-5) * p["ln_gamma"] + p["ln_beta"]
    wv, bv = p["vocab_proj"]
    return normed @ wv + bv


if __name__ == "__main__":
    B, Lw_full, Lv, Ls, VOCAB = 2, 8, 8, 4, 128

    key = jax.random.PRNGKey(0)
    k_par, k_lang, k_vis, k_cls, k_sent = jax.random.split(key, 5)

    params = init_params(k_par, VOCAB)
    prep, vocab_tile = prepare_params(params, vocab_tile=2048)

    # synthetic stand-ins for the LXMERT outputs + sentence embedding input
    language_output_full = jax.random.normal(k_lang, (B, Lw_full, 768), jnp.float32)
    vision_output = jax.random.normal(k_vis, (B, Lv, 768), jnp.float32)
    pooled_cls = jax.random.normal(k_cls, (B, 768), jnp.float32)
    sentence_embed = jax.random.normal(k_sent, (B, Ls, 384), jnp.float32)

    fwd = jax.jit(my_model_forward, static_argnames=("vocab_num", "vocab_tile"))
    out = fwd(prep, language_output_full, vision_output, pooled_cls, sentence_embed,
              vocab_num=VOCAB, vocab_tile=vocab_tile)
    out = jax.block_until_ready(out)
    assert out.shape == (B, VOCAB) and out.dtype == jnp.float32
    assert bool(jnp.all(jnp.isfinite(out)))

    # numerical sanity vs. pure-JAX f32 reference (bf16 matmuls -> loose tolerance)
    ref = reference_forward(params, pooled_cls, sentence_embed)
    max_err = float(jnp.max(jnp.abs(out - ref)))
    assert max_err < 0.1, f"max abs error vs reference too large: {max_err}"

    # exercise the focus/SGGA kernel directly (its outputs feed only the stubbed
    # decoder inside the jitted forward, so they would otherwise be DCE'd)
    foc, sgga = focus_and_sgga(vision_output.reshape(B * Lv, 768),
                               language_output_full.reshape(B * Lw_full, 768),
                               prep, B)
    foc = jax.block_until_ready(foc)
    assert foc.shape == (B, 512) and sgga.shape == (B * (Lw_full - 2), 512)
    assert bool(jnp.all(jnp.isfinite(foc))) and bool(jnp.all(jnp.isfinite(sgga)))

    print("KERNEL_OK")
</pallas_src>

<mosaic_0001>
module attributes {stable_mosaic.version = 11 : i64} {
  func.func @_vocab_kernel(%arg0: i32, %arg1: memref<2x384xf32, #tpu.memory_space<vmem>>, %arg2: memref<384x128xbf16, #tpu.memory_space<vmem>>, %arg3: memref<1x128xf32, #tpu.memory_space<vmem>>, %arg4: memref<2x128xf32, #tpu.memory_space<vmem>>) attributes {dimension_semantics = [#tpu.dimension_semantics<parallel>], iteration_bounds = array<i64: 1>, scalar_prefetch = 0 : i64, scratch_operands = 0 : i64, tpu.core_type = #tpu.core_type<tc>, window_params = [{pipeline_mode = #tpu.pipeline_mode<synchronous>, transform_indices = @transform_0, window_bounds = array<i64: 2, 384>}, {transform_indices = @transform_1, window_bounds = array<i64: 384, 128>}, {transform_indices = @transform_2, window_bounds = array<i64: 1, 128>}, {transform_indices = @transform_3, window_bounds = array<i64: 2, 128>}]} {
    %c0 = arith.constant 0 : index
    %c0_0 = arith.constant 0 : index
    %0 = vector.load %arg1[%c0, %c0_0] : memref<2x384xf32, #tpu.memory_space<vmem>>, vector<2x384xf32>
    %1 = arith.truncf %0 : vector<2x384xf32> to vector<2x384xbf16>
    %c0_1 = arith.constant 0 : index
    %c0_2 = arith.constant 0 : index
    %2 = vector.load %arg2[%c0_1, %c0_2] : memref<384x128xbf16, #tpu.memory_space<vmem>>, vector<384x128xbf16>
    %cst = arith.constant dense<0.000000e+00> : vector<2x128xf32>
    %3 = tpu.matmul %1, %2, %cst {dimension_numbers = #tpu.dot_dimension_numbers<[1], [0], [0], [1], [0, 0, 1, 1], [], []>} : vector<2x384xbf16>, vector<384x128xbf16>, vector<2x128xf32> -> vector<2x128xf32>
    %c0_3 = arith.constant 0 : index
    %c0_4 = arith.constant 0 : index
    %4 = vector.load %arg3[%c0_3, %c0_4] : memref<1x128xf32, #tpu.memory_space<vmem>>, vector<1x128xf32>
    %5 = vector.broadcast %4 : vector<1x128xf32> to vector<2x128xf32>
    %6 = arith.addf %3, %5 : vector<2x128xf32>
    %c0_5 = arith.constant 0 : index
    %c0_6 = arith.constant 0 : index
    %7 = vector.load %arg4[%c0_5, %c0_6] : memref<2x128xf32, #tpu.memory_space<vmem>>, vector<2x128xf32>
    tpu.vector_store %arg4[%c0_5, %c0_6], %6 {strides = array<i32>} : memref<2x128xf32, #tpu.memory_space<vmem>>, vector<2x128xf32>,
    return
  }
  func.func @transform_0(%arg0: i32) -> (i32, i32) {
    %c0_i32 = arith.constant 0 : i32
    %c0_i32_0 = arith.constant 0 : i32
    %c0_i32_1 = arith.constant 0 : i32
    return %c0_i32, %c0_i32_0 : i32, i32
  }
  func.func @transform_1(%arg0: i32) -> (i32, i32) {
    %c0_i32 = arith.constant 0 : i32
    %c0_i32_0 = arith.constant 0 : i32
    return %c0_i32, %arg0 : i32, i32
  }
  func.func @transform_2(%arg0: i32) -> (i32, i32) {
    %c0_i32 = arith.constant 0 : i32
    %c0_i32_0 = arith.constant 0 : i32
    return %c0_i32, %arg0 : i32, i32
  }
  func.func @transform_3(%arg0: i32) -> (i32, i32) {
    %c0_i32 = arith.constant 0 : i32
    %c0_i32_0 = arith.constant 0 : i32
    return %c0_i32, %arg0 : i32, i32
  }
}

module attributes {stable_mosaic.version = 11 : i64} {
  func.func @_prologue_kernel(%arg0: i32, %arg1: memref<2x768xf32, #tpu.memory_space<vmem>>, %arg2: memref<8x384xf32, #tpu.memory_space<vmem>>, %arg3: memref<768x1024xbf16, #tpu.memory_space<vmem>>, %arg4: memref<1x1024xf32, #tpu.memory_space<vmem>>, %arg5: memref<1024x384xbf16, #tpu.memory_space<vmem>>, %arg6: memref<1x384xf32, #tpu.memory_space<vmem>>, %arg7: memref<384x512xbf16, #tpu.memory_space<vmem>>, %arg8: memref<1x512xf32, #tpu.memory_space<vmem>>, %arg9: memref<512x512xbf16, #tpu.memory_space<vmem>>, %arg10: memref<1x512xf32, #tpu.memory_space<vmem>>, %arg11: memref<1x512xf32, #tpu.memory_space<vmem>>, %arg12: memref<512x384xbf16, #tpu.memory_space<vmem>>, %arg13: memref<1x384xf32, #tpu.memory_space<vmem>>, %arg14: memref<384x1024xbf16, #tpu.memory_space<vmem>>, %arg15: memref<1x1024xf32, #tpu.memory_space<vmem>>, %arg16: memref<1024x384xbf16, #tpu.memory_space<vmem>>, %arg17: memref<1x384xf32, #tpu.memory_space<vmem>>, %arg18: memref<1x384xf32, #tpu.memory_space<vmem>>, %arg19: memref<1x384xf32, #tpu.memory_space<vmem>>, %arg20: memref<2x384xf32, #tpu.memory_space<vmem>>, %arg21: memref<2x512xf32, #tpu.memory_space<vmem>>) attributes {dimension_semantics = [#tpu.dimension_semantics<arbitrary>], iteration_bounds = array<i64: 1>, scalar_prefetch = 0 : i64, scratch_operands = 1 : i64, tpu.core_type = #tpu.core_type<tc>, window_params = [{pipeline_mode = #tpu.pipeline_mode<synchronous>, transform_indices = @transform_0, window_bounds = array<i64: 2, 768>}, {pipeline_mode = #tpu.pipeline_mode<synchronous>, transform_indices = @transform_1, window_bounds = array<i64: 8, 384>}, {pipeline_mode = #tpu.pipeline_mode<synchronous>, transform_indices = @transform_2, window_bounds = array<i64: 768, 1024>}, {pipeline_mode = #tpu.pipeline_mode<synchronous>, transform_indices = @transform_3, window_bounds = array<i64: 1, 1024>}, {pipeline_mode = #tpu.pipeline_mode<synchronous>, transform_indices = @transform_4, window_bounds = array<i64: 1024, 384>}, {pipeline_mode = #tpu.pipeline_mode<synchronous>, transform_indices = @transform_5, window_bounds = array<i64: 1, 384>}, {pipeline_mode = #tpu.pipeline_mode<synchronous>, transform_indices = @transform_6, window_bounds = array<i64: 384, 512>}, {pipeline_mode = #tpu.pipeline_mode<synchronous>, transform_indices = @transform_7, window_bounds = array<i64: 1, 512>}, {pipeline_mode = #tpu.pipeline_mode<synchronous>, transform_indices = @transform_8, window_bounds = array<i64: 512, 512>}, {pipeline_mode = #tpu.pipeline_mode<synchronous>, transform_indices = @transform_9, window_bounds = array<i64: 1, 512>}, {pipeline_mode = #tpu.pipeline_mode<synchronous>, transform_indices = @transform_10, window_bounds = array<i64: 1, 512>}, {pipeline_mode = #tpu.pipeline_mode<synchronous>, transform_indices = @transform_11, window_bounds = array<i64: 512, 384>}, {pipeline_mode = #tpu.pipeline_mode<synchronous>, transform_indices = @transform_12, window_bounds = array<i64: 1, 384>}, {pipeline_mode = #tpu.pipeline_mode<synchronous>, transform_indices = @transform_13, window_bounds = array<i64: 384, 1024>}, {pipeline_mode = #tpu.pipeline_mode<synchronous>, transform_indices = @transform_14, window_bounds = array<i64: 1, 1024>}, {pipeline_mode = #tpu.pipeline_mode<synchronous>, transform_indices = @transform_15, window_bounds = array<i64: 1024, 384>}, {pipeline_mode = #tpu.pipeline_mode<synchronous>, transform_indices = @transform_16, window_bounds = array<i64: 1, 384>}, {pipeline_mode = #tpu.pipeline_mode<synchronous>, transform_indices = @transform_17, window_bounds = array<i64: 1, 384>}, {pipeline_mode = #tpu.pipeline_mode<synchronous>, transform_indices = @transform_18, window_bounds = array<i64: 1, 384>}, {pipeline_mode = #tpu.pipeline_mode<synchronous>, transform_indices = @transform_19, window_bounds = array<i64: 2, 384>}]} {
    %c0 = arith.constant 0 : index
    %c0_0 = arith.constant 0 : index
    %0 = vector.load %arg1[%c0, %c0_0] : memref<2x768xf32, #tpu.memory_space<vmem>>, vector<2x768xf32>
    %1 = arith.truncf %0 : vector<2x768xf32> to vector<2x768xbf16>
    %c0_1 = arith.constant 0 : index
    %c0_2 = arith.constant 0 : index
    %2 = vector.load %arg3[%c0_1, %c0_2] : memref<768x1024xbf16, #tpu.memory_space<vmem>>, vector<768x1024xbf16>
    %cst = arith.constant dense<0.000000e+00> : vector<2x1024xf32>
    %3 = tpu.matmul %1, %2, %cst {dimension_numbers = #tpu.dot_dimension_numbers<[1], [0], [0], [1], [0, 0, 1, 1], [], []>} : vector<2x768xbf16>, vector<768x1024xbf16>, vector<2x1024xf32> -> vector<2x1024xf32>
    %c0_3 = arith.constant 0 : index
    %c0_4 = arith.constant 0 : index
    %4 = vector.load %arg4[%c0_3, %c0_4] : memref<1x1024xf32, #tpu.memory_space<vmem>>, vector<1x1024xf32>
    %5 = vector.broadcast %4 : vector<1x1024xf32> to vector<2x1024xf32>
    %6 = arith.addf %3, %5 : vector<2x1024xf32>
    %cst_5 = arith.constant 0.000000e+00 : f32
    %7 = vector.broadcast %cst_5 : f32 to vector<2x1024xf32>
    %8 = arith.maximumf %6, %7 : vector<2x1024xf32>
    %9 = arith.truncf %8 : vector<2x1024xf32> to vector<2x1024xbf16>
    %c0_6 = arith.constant 0 : index
    %c0_7 = arith.constant 0 : index
    %10 = vector.load %arg5[%c0_6, %c0_7] : memref<1024x384xbf16, #tpu.memory_space<vmem>>, vector<1024x384xbf16>
    %cst_8 = arith.constant dense<0.000000e+00> : vector<2x384xf32>
    %11 = tpu.matmul %9, %10, %cst_8 {dimension_numbers = #tpu.dot_dimension_numbers<[1], [0], [0], [1], [0, 0, 1, 1], [], []>} : vector<2x1024xbf16>, vector<1024x384xbf16>, vector<2x384xf32> -> vector<2x384xf32>
    %c0_9 = arith.constant 0 : index
    %c0_10 = arith.constant 0 : index
    %12 = vector.load %arg6[%c0_9, %c0_10] : memref<1x384xf32, #tpu.memory_space<vmem>>, vector<1x384xf32>
    %13 = vector.broadcast %12 : vector<1x384xf32> to vector<2x384xf32>
    %14 = arith.addf %11, %13 : vector<2x384xf32>
    %c0_11 = arith.constant 0 : index
    %c0_12 = arith.constant 0 : index
    %15 = vector.load %arg2[%c0_11, %c0_12] : memref<8x384xf32, #tpu.memory_space<vmem>>, vector<8x384xf32>
    %16 = arith.truncf %15 : vector<8x384xf32> to vector<8x384xbf16>
    %c0_13 = arith.constant 0 : index
    %c0_14 = arith.constant 0 : index
    %17 = vector.load %arg7[%c0_13, %c0_14] : memref<384x512xbf16, #tpu.memory_space<vmem>>, vector<384x512xbf16>
    %cst_15 = arith.constant dense<0.000000e+00> : vector<8x512xf32>
    %18 = tpu.matmul %16, %17, %cst_15 {dimension_numbers = #tpu.dot_dimension_numbers<[1], [0], [0], [1], [0, 0, 1, 1], [], []>} : vector<8x384xbf16>, vector<384x512xbf16>, vector<8x512xf32> -> vector<8x512xf32>
    %c0_16 = arith.constant 0 : index
    %c0_17 = arith.constant 0 : index
    %19 = vector.load %arg8[%c0_16, %c0_17] : memref<1x512xf32, #tpu.memory_space<vmem>>, vector<1x512xf32>
    %20 = vector.broadcast %19 : vector<1x512xf32> to vector<8x512xf32>
    %21 = arith.addf %18, %20 : vector<8x512xf32>
    %22 = arith.truncf %21 : vector<8x512xf32> to vector<8x512xbf16>
    %c0_18 = arith.constant 0 : index
    %c0_19 = arith.constant 0 : index
    %23 = vector.load %arg9[%c0_18, %c0_19] : memref<512x512xbf16, #tpu.memory_space<vmem>>, vector<512x512xbf16>
    %cst_20 = arith.constant dense<0.000000e+00> : vector<8x512xf32>
    %24 = tpu.matmul %22, %23, %cst_20 {dimension_numbers = #tpu.dot_dimension_numbers<[1], [0], [0], [1], [0, 0, 1, 1], [], []>} : vector<8x512xbf16>, vector<512x512xbf16>, vector<8x512xf32> -> vector<8x512xf32>
    %c0_21 = arith.constant 0 : index
    %c0_22 = arith.constant 0 : index
    %25 = vector.load %arg10[%c0_21, %c0_22] : memref<1x512xf32, #tpu.memory_space<vmem>>, vector<1x512xf32>
    %26 = vector.broadcast %25 : vector<1x512xf32> to vector<8x512xf32>
    %27 = arith.addf %24, %26 : vector<8x512xf32>
    %cst_23 = arith.constant 0.000000e+00 : f32
    %28 = vector.broadcast %cst_23 : f32 to vector<8x512xf32>
    %29 = arith.maximumf %27, %28 : vector<8x512xf32>
    %c0_24 = arith.constant 0 : index
    %c0_25 = arith.constant 0 : index
    %30 = vector.load %arg11[%c0_24, %c0_25] : memref<1x512xf32, #tpu.memory_space<vmem>>, vector<1x512xf32>
    %31 = vector.broadcast %30 : vector<1x512xf32> to vector<8x512xf32>
    %32 = arith.mulf %29, %31 : vector<8x512xf32>
    %cst_26 = arith.constant dense<0.000000e+00> : vector<8xf32>
    %33 = vector.multi_reduction <add>, %32, %cst_26 [1] : vector<8x512xf32> to vector<8xf32>
    %34 = vector.shape_cast %33 : vector<8xf32> to vector<8x1xf32>
    %35 = vector.extract_strided_slice %34 {offsets = [0, 0], sizes = [4, 1], strides = [1, 1]} : vector<8x1xf32> to vector<4x1xf32>
    %36 = vector.extract_strided_slice %21 {offsets = [0, 0], sizes = [4, 512], strides = [1, 1]} : vector<8x512xf32> to vector<4x512xf32>
    %cst_27 = arith.constant dense<0xFF800000> : vector<1xf32>
    %37 = vector.multi_reduction <maximumf>, %35, %cst_27 [0] : vector<4x1xf32> to vector<1xf32>
    %38 = vector.shape_cast %37 : vector<1xf32> to vector<1x1xf32>
    %39 = vector.broadcast %38 : vector<1x1xf32> to vector<4x1xf32>
    %40 = arith.subf %35, %39 : vector<4x1xf32>
    %41 = math.exp %40 : vector<4x1xf32>
    %cst_28 = arith.constant dense<0.000000e+00> : vector<1xf32>
    %42 = vector.multi_reduction <add>, %41, %cst_28 [0] : vector<4x1xf32> to vector<1xf32>
    %43 = vector.shape_cast %42 : vector<1xf32> to vector<1x1xf32>
    %44 = vector.broadcast %43 : vector<1x1xf32> to vector<4x1xf32>
    %45 = arith.divf %41, %44 : vector<4x1xf32>
    %46 = vector.broadcast %45 : vector<4x1xf32> to vector<4x512xf32>
    %47 = arith.mulf %46, %36 : vector<4x512xf32>
    %cst_29 = arith.constant dense<0.000000e+00> : vector<512xf32>
    %48 = vector.multi_reduction <add>, %47, %cst_29 [0] : vector<4x512xf32> to vector<512xf32>
    %49 = vector.shape_cast %48 : vector<512xf32> to vector<1x512xf32>
    %c0_30 = arith.constant 0 : index
    %c0_31 = arith.constant 0 : index
    %50 = vector.load %arg21[%c0_30, %c0_31] : memref<2x512xf32, #tpu.memory_space<vmem>>, vector<1x512xf32>
    tpu.vector_store %arg21[%c0_30, %c0_31], %49 {strides = array<i32>} : memref<2x512xf32, #tpu.memory_space<vmem>>, vector<1x512xf32>,
    %51 = vector.extract_strided_slice %34 {offsets = [4, 0], sizes = [4, 1], strides = [1, 1]} : vector<8x1xf32> to vector<4x1xf32>
    %52 = vector.extract_strided_slice %21 {offsets = [4, 0], sizes = [4, 512], strides = [1, 1]} : vector<8x512xf32> to vector<4x512xf32>
    %cst_32 = arith.constant dense<0xFF800000> : vector<1xf32>
    %53 = vector.multi_reduction <maximumf>, %51, %cst_32 [0] : vector<4x1xf32> to vector<1xf32>
    %54 = vector.shape_cast %53 : vector<1xf32> to vector<1x1xf32>
    %55 = vector.broadcast %54 : vector<1x1xf32> to vector<4x1xf32>
    %56 = arith.subf %51, %55 : vector<4x1xf32>
    %57 = math.exp %56 : vector<4x1xf32>
    %cst_33 = arith.constant dense<0.000000e+00> : vector<1xf32>
    %58 = vector.multi_reduction <add>, %57, %cst_33 [0] : vector<4x1xf32> to vector<1xf32>
    %59 = vector.shape_cast %58 : vector<1xf32> to vector<1x1xf32>
    %60 = vector.broadcast %59 : vector<1x1xf32> to vector<4x1xf32>
    %61 = arith.divf %57, %60 : vector<4x1xf32>
    %62 = vector.broadcast %61 : vector<4x1xf32> to vector<4x512xf32>
    %63 = arith.mulf %62, %52 : vector<4x512xf32>
    %cst_34 = arith.constant dense<0.000000e+00> : vector<512xf32>
    %64 = vector.multi_reduction <add>, %63, %cst_34 [0] : vector<4x512xf32> to vector<512xf32>
    %65 = vector.shape_cast %64 : vector<512xf32> to vector<1x512xf32>
    %c1 = arith.constant 1 : index
    %c0_35 = arith.constant 0 : index
    %66 = vector.load %arg21[%c1, %c0_35] : memref<2x512xf32, #tpu.memory_space<vmem>>, vector<1x512xf32>
    tpu.vector_store %arg21[%c1, %c0_35], %65 {strides = array<i32>} : memref<2x512xf32, #tpu.memory_space<vmem>>, vector<1x512xf32>,
    %c0_36 = arith.constant 0 : index
    %c0_37 = arith.constant 0 : index
    %67 = vector.load %arg21[%c0_36, %c0_37] : memref<2x512xf32, #tpu.memory_space<vmem>>, vector<2x512xf32>
    %68 = arith.truncf %67 : vector<2x512xf32> to vector<2x512xbf16>
    %c0_38 = arith.constant 0 : index
    %c0_39 = arith.constant 0 : index
    %69 = vector.load %arg12[%c0_38, %c0_39] : memref<512x384xbf16, #tpu.memory_space<vmem>>, vector<512x384xbf16>
    %cst_40 = arith.constant dense<0.000000e+00> : vector<2x384xf32>
    %70 = tpu.matmul %68, %69, %cst_40 {dimension_numbers = #tpu.dot_dimension_numbers<[1], [0], [0], [1], [0, 0, 1, 1], [], []>} : vector<2x512xbf16>, vector<512x384xbf16>, vector<2x384xf32> -> vector<2x384xf32>
    %c0_41 = arith.constant 0 : index
    %c0_42 = arith.constant 0 : index
    %71 = vector.load %arg13[%c0_41, %c0_42] : memref<1x384xf32, #tpu.memory_space<vmem>>, vector<1x384xf32>
    %72 = vector.broadcast %71 : vector<1x384xf32> to vector<2x384xf32>
    %73 = arith.addf %70, %72 : vector<2x384xf32>
    %74 = arith.addf %73, %14 : vector<2x384xf32>
    %75 = arith.truncf %74 : vector<2x384xf32> to vector<2x384xbf16>
    %c0_43 = arith.constant 0 : index
    %c0_44 = arith.constant 0 : index
    %76 = vector.load %arg14[%c0_43, %c0_44] : memref<384x1024xbf16, #tpu.memory_space<vmem>>, vector<384x1024xbf16>
    %cst_45 = arith.constant dense<0.000000e+00> : vector<2x1024xf32>
    %77 = tpu.matmul %75, %76, %cst_45 {dimension_numbers = #tpu.dot_dimension_numbers<[1], [0], [0], [1], [0, 0, 1, 1], [], []>} : vector<2x384xbf16>, vector<384x1024xbf16>, vector<2x1024xf32> -> vector<2x1024xf32>
    %c0_46 = arith.constant 0 : index
    %c0_47 = arith.constant 0 : index
    %78 = vector.load %arg15[%c0_46, %c0_47] : memref<1x1024xf32, #tpu.memory_space<vmem>>, vector<1x1024xf32>
    %79 = vector.broadcast %78 : vector<1x1024xf32> to vector<2x1024xf32>
    %80 = arith.addf %77, %79 : vector<2x1024xf32>
    %cst_48 = arith.constant 0.000000e+00 : f32
    %81 = vector.broadcast %cst_48 : f32 to vector<2x1024xf32>
    %82 = arith.maximumf %80, %81 : vector<2x1024xf32>
    %83 = arith.truncf %82 : vector<2x1024xf32> to vector<2x1024xbf16>
    %c0_49 = arith.constant 0 : index
    %c0_50 = arith.constant 0 : index
    %84 = vector.load %arg16[%c0_49, %c0_50] : memref<1024x384xbf16, #tpu.memory_space<vmem>>, vector<1024x384xbf16>
    %cst_51 = arith.constant dense<0.000000e+00> : vector<2x384xf32>
    %85 = tpu.matmul %83, %84, %cst_51 {dimension_numbers = #tpu.dot_dimension_numbers<[1], [0], [0], [1], [0, 0, 1, 1], [], []>} : vector<2x1024xbf16>, vector<1024x384xbf16>, vector<2x384xf32> -> vector<2x384xf32>
    %c0_52 = arith.constant 0 : index
    %c0_53 = arith.constant 0 : index
    %86 = vector.load %arg17[%c0_52, %c0_53] : memref<1x384xf32, #tpu.memory_space<vmem>>, vector<1x384xf32>
    %87 = vector.broadcast %86 : vector<1x384xf32> to vector<2x384xf32>
    %88 = arith.addf %85, %87 : vector<2x384xf32>
    %cst_54 = arith.constant dense<0.000000e+00> : vector<2xf32>
    %89 = vector.multi_reduction <add>, %88, %cst_54 [1] : vector<2x384xf32> to vector<2xf32>
    %90 = vector.shape_cast %89 : vector<2xf32> to vector<2x1xf32>
    %cst_55 = arith.constant 0.00333333341 : f32
    %91 = vector.broadcast %cst_55 : f32 to vector<2x1xf32>
    %92 = arith.mulf %90, %91 : vector<2x1xf32>
    %93 = tpu.iota {dimensions = array<i32: 1>} : vector<2x384xi32>
    %c300_i32 = arith.constant 300 : i32
    %94 = vector.broadcast %c300_i32 : i32 to vector<2x384xi32>
    %95 = arith.cmpi slt, %93, %94 : vector<2x384xi32>
    %96 = vector.broadcast %92 : vector<2x1xf32> to vector<2x384xf32>
    %97 = arith.subf %88, %96 : vector<2x384xf32>
    %cst_56 = arith.constant 0.000000e+00 : f32
    %98 = vector.broadcast %cst_56 : f32 to vector<2x384xf32>
    %99 = arith.select %95, %97, %98 : vector<2x384xi1>, vector<2x384xf32>
    %100 = arith.mulf %99, %99 : vector<2x384xf32>
    %cst_57 = arith.constant dense<0.000000e+00> : vector<2xf32>
    %101 = vector.multi_reduction <add>, %100, %cst_57 [1] : vector<2x384xf32> to vector<2xf32>
    %102 = vector.shape_cast %101 : vector<2xf32> to vector<2x1xf32>
    %cst_58 = arith.constant 0.00333333341 : f32
    %103 = vector.broadcast %cst_58 : f32 to vector<2x1xf32>
    %104 = arith.mulf %102, %103 : vector<2x1xf32>
    %cst_59 = arith.constant 9.99999974E-6 : f32
    %105 = vector.broadcast %cst_59 : f32 to vector<2x1xf32>
    %106 = arith.addf %104, %105 : vector<2x1xf32>
    %107 = math.rsqrt %106 : vector<2x1xf32>
    %108 = vector.broadcast %107 : vector<2x1xf32> to vector<2x384xf32>
    %109 = arith.mulf %99, %108 : vector<2x384xf32>
    %c0_60 = arith.constant 0 : index
    %c0_61 = arith.constant 0 : index
    %110 = vector.load %arg18[%c0_60, %c0_61] : memref<1x384xf32, #tpu.memory_space<vmem>>, vector<1x384xf32>
    %111 = vector.broadcast %110 : vector<1x384xf32> to vector<2x384xf32>
    %112 = arith.mulf %109, %111 : vector<2x384xf32>
    %c0_62 = arith.constant 0 : index
    %c0_63 = arith.constant 0 : index
    %113 = vector.load %arg19[%c0_62, %c0_63] : memref<1x384xf32, #tpu.memory_space<vmem>>, vector<1x384xf32>
    %114 = vector.broadcast %113 : vector<1x384xf32> to vector<2x384xf32>
    %115 = arith.addf %112, %114 : vector<2x384xf32>
    %c0_64 = arith.constant 0 : index
    %c0_65 = arith.constant 0 : index
    %116 = vector.load %arg20[%c0_64, %c0_65] : memref<2x384xf32, #tpu.memory_space<vmem>>, vector<2x384xf32>
    tpu.vector_store %arg20[%c0_64, %c0_65], %115 {strides = array<i32>} : memref<2x384xf32, #tpu.memory_space<vmem>>, vector<2x384xf32>,
    return
  }
  func.func @transform_0(%arg0: i32) -> (i32, i32) {
    %c0_i32 = arith.constant 0 : i32
    %c0_i32_0 = arith.constant 0 : i32
    %c0_i32_1 = arith.constant 0 : i32
    return %c0_i32, %c0_i32_0 : i32, i32
  }
  func.func @transform_1(%arg0: i32) -> (i32, i32) {
    %c0_i32 = arith.constant 0 : i32
    %c0_i32_0 = arith.constant 0 : i32
    %c0_i32_1 = arith.constant 0 : i32
    return %c0_i32, %c0_i32_0 : i32, i32
  }
  func.func @transform_2(%arg0: i32) -> (i32, i32) {
    %c0_i32 = arith.constant 0 : i32
    %c0_i32_0 = arith.constant 0 : i32
    %c0_i32_1 = arith.constant 0 : i32
    return %c0_i32, %c0_i32_0 : i32, i32
  }
  func.func @transform_3(%arg0: i32) -> (i32, i32) {
    %c0_i32 = arith.constant 0 : i32
    %c0_i32_0 = arith.constant 0 : i32
    %c0_i32_1 = arith.constant 0 : i32
    return %c0_i32, %c0_i32_0 : i32, i32
  }
  func.func @transform_4(%arg0: i32) -> (i32, i32) {
    %c0_i32 = arith.constant 0 : i32
    %c0_i32_0 = arith.constant 0 : i32
    %c0_i32_1 = arith.constant 0 : i32
    return %c0_i32, %c0_i32_0 : i32, i32
  }
  func.func @transform_5(%arg0: i32) -> (i32, i32) {
    %c0_i32 = arith.constant 0 : i32
    %c0_i32_0 = arith.constant 0 : i32
    %c0_i32_1 = arith.constant 0 : i32
    return %c0_i32, %c0_i32_0 : i32, i32
  }
  func.func @transform_6(%arg0: i32) -> (i32, i32) {
    %c0_i32 = arith.constant 0 : i32
    %c0_i32_0 = arith.constant 0 : i32
    %c0_i32_1 = arith.constant 0 : i32
    return %c0_i32, %c0_i32_0 : i32, i32
  }
  func.func @transform_7(%arg0: i32) -> (i32, i32) {
    %c0_i32 = arith.constant 0 : i32
    %c0_i32_0 = arith.constant 0 : i32
    %c0_i32_1 = arith.constant 0 : i32
    return %c0_i32, %c0_i32_0 : i32, i32
  }
  func.func @transform_8(%arg0: i32) -> (i32, i32) {
    %c0_i32 = arith.constant 0 : i32
    %c0_i32_0 = arith.constant 0 : i32
    %c0_i32_1 = arith.constant 0 : i32
    return %c0_i32, %c0_i32_0 : i32, i32
  }
  func.func @transform_9(%arg0: i32) -> (i32, i32) {
    %c0_i32 = arith.constant 0 : i32
    %c0_i32_0 = arith.constant 0 : i32
    %c0_i32_1 = arith.constant 0 : i32
    return %c0_i32, %c0_i32_0 : i32, i32
  }
  func.func @transform_10(%arg0: i32) -> (i32, i32) {
    %c0_i32 = arith.constant 0 : i32
    %c0_i32_0 = arith.constant 0 : i32
    %c0_i32_1 = arith.constant 0 : i32
    return %c0_i32, %c0_i32_0 : i32, i32
  }
  func.func @transform_11(%arg0: i32) -> (i32, i32) {
    %c0_i32 = arith.constant 0 : i32
    %c0_i32_0 = arith.constant 0 : i32
    %c0_i32_1 = arith.constant 0 : i32
    return %c0_i32, %c0_i32_0 : i32, i32
  }
  func.func @transform_12(%arg0: i32) -> (i32, i32) {
    %c0_i32 = arith.constant 0 : i32
    %c0_i32_0 = arith.constant 0 : i32
    %c0_i32_1 = arith.constant 0 : i32
    return %c0_i32, %c0_i32_0 : i32, i32
  }
  func.func @transform_13(%arg0: i32) -> (i32, i32) {
    %c0_i32 = arith.constant 0 : i32
    %c0_i32_0 = arith.constant 0 : i32
    %c0_i32_1 = arith.constant 0 : i32
    return %c0_i32, %c0_i32_0 : i32, i32
  }
  func.func @transform_14(%arg0: i32) -> (i32, i32) {
    %c0_i32 = arith.constant 0 : i32
    %c0_i32_0 = arith.constant 0 : i32
    %c0_i32_1 = arith.constant 0 : i32
    return %c0_i32, %c0_i32_0 : i32, i32
  }
  func.func @transform_15(%arg0: i32) -> (i32, i32) {
    %c0_i32 = arith.constant 0 : i32
    %c0_i32_0 = arith.constant 0 : i32
    %c0_i32_1 = arith.constant 0 : i32
    return %c0_i32, %c0_i32_0 : i32, i32
  }
  func.func @transform_16(%arg0: i32) -> (i32, i32) {
    %c0_i32 = arith.constant 0 : i32
    %c0_i32_0 = arith.constant 0 : i32
    %c0_i32_1 = arith.constant 0 : i32
    return %c0_i32, %c0_i32_0 : i32, i32
  }
  func.func @transform_17(%arg0: i32) -> (i32, i32) {
    %c0_i32 = arith.constant 0 : i32
    %c0_i32_0 = arith.constant 0 : i32
    %c0_i32_1 = arith.constant 0 : i32
    return %c0_i32, %c0_i32_0 : i32, i32
  }
  func.func @transform_18(%arg0: i32) -> (i32, i32) {
    %c0_i32 = arith.constant 0 : i32
    %c0_i32_0 = arith.constant 0 : i32
    %c0_i32_1 = arith.constant 0 : i32
    return %c0_i32, %c0_i32_0 : i32, i32
  }
  func.func @transform_19(%arg0: i32) -> (i32, i32) {
    %c0_i32 = arith.constant 0 : i32
    %c0_i32_0 = arith.constant 0 : i32
    %c0_i32_1 = arith.constant 0 : i32
    return %c0_i32, %c0_i32_0 : i32, i32
  }
}

</mosaic_0001>

<llo_original>
// kernel: my_model_forward.3
$region0: #{my_model_forward.3}
  #allocation0 [shape = 'u32[]', space=smem, size = 0x4, offset = 0x4, fixed_abs, tag = 'smem constant byte address 0x4 - core index']
  #allocation1 [shape = 'u32[72,128]{1,0:T(1,128)}', space=vmem, size = 0x9000, scoped, tag = 'internal scratch']
  %s0 = inlined_call_operand.vmem [shape: f32[2,384], index: 0, kind: input, shape index: {}]
  %s1 = inlined_call_operand.hbm [shape: bf16[384,128], index: 1, kind: input, shape index: {}]
  %s2 = inlined_call_operand.hbm [shape: f32[1,128], index: 2, kind: input, shape index: {}]
  %s3 = inlined_call_operand.hbm [shape: f32[2,128], index: 3, kind: output, shape index: {}]
  %s4 = sld [smem:[#allocation0]]
  $region30: #{my_model_forward.3} parent=0
    _
  %s6 = ssub.s32 1, %s4
  %s7 = scalar_select 0, %s6, %s4
  $region1: #{my_model_forward.3} parent=0
    #allocation2 [shape = 'u8[98304]{0}', space=vmem, size = 0x18000, scoped, tag = 'input window, operand 1, single buffered']
    #allocation3 [shape = 's32[1]{0}', space=sflag, size = 0x4, scoped, tag = 'scoped memory for my_model_forward.3']
    #allocation4 [shape = 's32[1]{0}', space=sflag, size = 0x4, scoped, tag = 'scoped memory for my_model_forward.3']
    #allocation5 [shape = 'u8[512]{0}', space=vmem, size = 0x400, scoped, tag = 'input window, operand 2, single buffered']
    #allocation6 [shape = 's32[1]{0}', space=sflag, size = 0x4, scoped, tag = 'scoped memory for my_model_forward.3']
    #allocation7 [shape = 'u8[1024]{0}', space=vmem, size = 0x400, scoped, tag = 'output window, operand 0, single buffered']
    %8 = vsyncpa [#allocation3], 0
    %9 = vsyncpa [#allocation6], 0
    %10 = vsyncpa [#allocation4], 0
    // Predicated region
    $region2: #{my_model_forward.3} parent=1 // pred_check
      _
    $region3: #{my_model_forward.3} parent=1 // pred_check_branch
      %12 = sbr.rel (0) target = $region5
    $region4: #{my_model_forward.3} parent=1 // pred_region
      _
    $region5: #{my_model_forward.3} parent=1 // pred_fallthru
      _
    // Predicated region
    $region6: #{my_model_forward.3} parent=1 // pred_check
      _
    $region7: #{my_model_forward.3} parent=1 // pred_check_branch
      %14 = sbr.rel (0) target = $region9
    $region8: #{my_model_forward.3} parent=1 // pred_region
      %16 = vsyncadd [#allocation3], 0
      %s17 = sshll.u32 %s1, 4
      %s18 = int_to_ptr.hbm [resolvable:$true] %s17
      %s19 = sshll.u32 [#allocation2], 4
      %s20 = int_to_ptr.vmem [resolvable:$true] %s19
      %25 = dma.hbm_to_vmem [thread:$0]  %s18, 3072, %s20, [#allocation3], 64, 64, 4
    $region9: #{my_model_forward.3} parent=1 // pred_fallthru
      _
    // Predicated region
    $region10: #{my_model_forward.3} parent=1 // pred_check
      _
    $region11: #{my_model_forward.3} parent=1 // pred_check_branch
      %27 = sbr.rel (0) target = $region13
    $region12: #{my_model_forward.3} parent=1 // pred_region
      %29 = vsyncadd [#allocation6], 0
      %s31 = sshll.u32 %s2, 4
      %s32 = int_to_ptr.hbm [resolvable:$true] %s31
      %s33 = sshll.u32 [#allocation5], 4
      %s34 = int_to_ptr.vmem [resolvable:$true] %s33
      %36 = dma.hbm_to_vmem [thread:$0]  %s32, 16, %s34, [#allocation6]
    $region13: #{my_model_forward.3} parent=1 // pred_fallthru
      _
    // Predicated region
    $region14: #{my_model_forward.3} parent=1 // pred_check
      _
    $region15: #{my_model_forward.3} parent=1 // pred_check_branch
      %38 = sbr.rel (0) target = $region17
    $region16: #{my_model_forward.3} parent=1 // pred_region
      %40 = dma.done [#allocation3], 3072
    $region17: #{my_model_forward.3} parent=1 // pred_fallthru
      _
    // Predicated region
    $region18: #{my_model_forward.3} parent=1 // pred_check
      _
    $region19: #{my_model_forward.3} parent=1 // pred_check_branch
      %42 = sbr.rel (0) target = $region21
    $region20: #{my_model_forward.3} parent=1 // pred_region
      %44 = dma.done [#allocation6], 16
    $region21: #{my_model_forward.3} parent=1 // pred_fallthru
      _
    %v45 = vld [vmem:[%s0] sm:$0x3f]
    %47 = vst [vmem:[#allocation1] ss:$4 sm:$0xff] %v45
    %v48 = vld.sshfl [vmem:[#allocation1] sm:$0xff pattern:$0x73625140]
    %v49 = vld.sshfl [vmem:[#allocation1 + $0x8] sm:$0xff pattern:$0x73625140]
    %v50 = vld.sshfl [vmem:[#allocation1 + $0x10] sm:$0xff pattern:$0x73625140]
    %v54 = vpack.c.bf16 %v48, %v48
    %v55 = vpack.c.bf16 %v49, %v49
    %v56 = vpack.c.bf16 %v50, %v50
    %v57 = vld [vmem:[#allocation2] sm:$0xf]
    %v58 = vld [vmem:[#allocation2 + $0x4] sm:$0xf]
    %v59 = vld [vmem:[#allocation2 + $0x8] sm:$0xf]
    %v60 = vld [vmem:[#allocation2 + $0xc] sm:$0xf]
    %v61 = vld [vmem:[#allocation2 + $0x10] sm:$0xf]
    %v62 = vld [vmem:[#allocation2 + $0x14] sm:$0xf]
    %v63 = vld [vmem:[#allocation2 + $0x18] sm:$0xf]
    %v64 = vld [vmem:[#allocation2 + $0x1c] sm:$0xf]
    %v65 = vld [vmem:[#allocation2 + $0x20] sm:$0xf]
    %v66 = vld [vmem:[#allocation2 + $0x24] sm:$0xf]
    %v67 = vld [vmem:[#allocation2 + $0x28] sm:$0xf]
    %v68 = vld [vmem:[#allocation2 + $0x2c] sm:$0xf]
    %v69 = vld [vmem:[#allocation2 + $0x30] sm:$0xf]
    %v70 = vld [vmem:[#allocation2 + $0x34] sm:$0xf]
    %v71 = vld [vmem:[#allocation2 + $0x38] sm:$0xf]
    %v72 = vld [vmem:[#allocation2 + $0x3c] sm:$0xf]
    %v73 = vld [vmem:[#allocation2 + $0x40] sm:$0xf]
    %v74 = vld [vmem:[#allocation2 + $0x44] sm:$0xf]
    %v75 = vld [vmem:[#allocation2 + $0x48] sm:$0xf]
    %v76 = vld [vmem:[#allocation2 + $0x4c] sm:$0xf]
    %v77 = vld [vmem:[#allocation2 + $0x50] sm:$0xf]
    %v78 = vld [vmem:[#allocation2 + $0x54] sm:$0xf]
    %v79 = vld [vmem:[#allocation2 + $0x58] sm:$0xf]
    %v80 = vld [vmem:[#allocation2 + $0x5c] sm:$0xf]
    %v81 = vld [vmem:[#allocation2 + $0x60] sm:$0xf]
    %v82 = vld [vmem:[#allocation2 + $0x64] sm:$0xf]
    %v83 = vld [vmem:[#allocation2 + $0x68] sm:$0xf]
    %v84 = vld [vmem:[#allocation2 + $0x6c] sm:$0xf]
    %v85 = vld [vmem:[#allocation2 + $0x70] sm:$0xf]
    %v86 = vld [vmem:[#allocation2 + $0x74] sm:$0xf]
    %v87 = vld [vmem:[#allocation2 + $0x78] sm:$0xf]
    %v88 = vld [vmem:[#allocation2 + $0x7c] sm:$0xf]
    %v89 = vld [vmem:[#allocation2 + $0x80] sm:$0xf]
    %v90 = vld [vmem:[#allocation2 + $0x84] sm:$0xf]
    %v91 = vld [vmem:[#allocation2 + $0x88] sm:$0xf]
    %v92 = vld [vmem:[#allocation2 + $0x8c] sm:$0xf]
    %v93 = vld [vmem:[#allocation2 + $0x90] sm:$0xf]
    %v94 = vld [vmem:[#allocation2 + $0x94] sm:$0xf]
    %v95 = vld [vmem:[#allocation2 + $0x98] sm:$0xf]
    %v96 = vld [vmem:[#allocation2 + $0x9c] sm:$0xf]
    %v97 = vld [vmem:[#allocation2 + $0xa0] sm:$0xf]
    %v98 = vld [vmem:[#allocation2 + $0xa4] sm:$0xf]
    %v99 = vld [vmem:[#allocation2 + $0xa8] sm:$0xf]
    %v100 = vld [vmem:[#allocation2 + $0xac] sm:$0xf]
    %v101 = vld [vmem:[#allocation2 + $0xb0] sm:$0xf]
    %v102 = vld [vmem:[#allocation2 + $0xb4] sm:$0xf]
    %v103 = vld [vmem:[#allocation2 + $0xb8] sm:$0xf]
    %v104 = vld [vmem:[#allocation2 + $0xbc] sm:$0xf]
    %v105 = vld [vmem:[#allocation5] sm:$0x1]
    %v107 = vperm.slane %v105, 0
    %v157 = vunpack.c.l.b16 %v57
    %v158 = vunpack.c.l.b16 %v58
    %v159 = vunpack.c.l.b16 %v59
    %v160 = vunpack.c.l.b16 %v60
    %v161 = vunpack.c.l.b16 %v61
    %v162 = vunpack.c.l.b16 %v62
    %v163 = vunpack.c.l.b16 %v63
    %v164 = vunpack.c.l.b16 %v64
    %v165 = vunpack.c.l.b16 %v65
    %v166 = vunpack.c.l.b16 %v66
    %v167 = vunpack.c.l.b16 %v67
    %v168 = vunpack.c.l.b16 %v68
    %v169 = vunpack.c.l.b16 %v69
    %v170 = vunpack.c.l.b16 %v70
    %v171 = vunpack.c.l.b16 %v71
    %v172 = vunpack.c.l.b16 %v72
    %v173 = vunpack.c.l.b16 %v73
    %v174 = vunpack.c.l.b16 %v74
    %v175 = vunpack.c.l.b16 %v75
    %v176 = vunpack.c.l.b16 %v76
    %v177 = vunpack.c.l.b16 %v77
    %v178 = vunpack.c.l.b16 %v78
    %v179 = vunpack.c.l.b16 %v79
    %v180 = vunpack.c.l.b16 %v80
    %v181 = vunpack.c.l.b16 %v81
    %v182 = vunpack.c.l.b16 %v82
    %v183 = vunpack.c.l.b16 %v83
    %v184 = vunpack.c.l.b16 %v84
    %v185 = vunpack.c.l.b16 %v85
    %v186 = vunpack.c.l.b16 %v86
    %v187 = vunpack.c.l.b16 %v87
    %v188 = vunpack.c.l.b16 %v88
    %v189 = vunpack.c.l.b16 %v89
    %v190 = vunpack.c.l.b16 %v90
    %v191 = vunpack.c.l.b16 %v91
    %v192 = vunpack.c.l.b16 %v92
    %v193 = vunpack.c.l.b16 %v93
    %v194 = vunpack.c.l.b16 %v94
    %v195 = vunpack.c.l.b16 %v95
    %v196 = vunpack.c.l.b16 %v96
    %v197 = vunpack.c.l.b16 %v97
    %v198 = vunpack.c.l.b16 %v98
    %v199 = vunpack.c.l.b16 %v99
    %v200 = vunpack.c.l.b16 %v100
    %v201 = vunpack.c.l.b16 %v101
    %v202 = vunpack.c.l.b16 %v102
    %v203 = vunpack.c.l.b16 %v103
    %v204 = vunpack.c.l.b16 %v104
    %v205 = vpack.c.b16 %v158, %v157
    %v206 = vpack.c.b16 %v160, %v159
    %v207 = vpack.c.b16 %v162, %v161
    %v208 = vpack.c.b16 %v164, %v163
    %v209 = vpack.c.b16 %v166, %v165
    %v210 = vpack.c.b16 %v168, %v167
    %v211 = vpack.c.b16 %v170, %v169
    %v212 = vpack.c.b16 %v172, %v171
    %v213 = vpack.c.b16 %v174, %v173
    %v214 = vpack.c.b16 %v176, %v175
    %v215 = vpack.c.b16 %v178, %v177
    %v216 = vpack.c.b16 %v180, %v179
    %v217 = vpack.c.b16 %v182, %v181
    %v218 = vpack.c.b16 %v184, %v183
    %v219 = vpack.c.b16 %v186, %v185
    %v220 = vpack.c.b16 %v188, %v187
    %v221 = vpack.c.b16 %v190, %v189
    %v222 = vpack.c.b16 %v192, %v191
    %v223 = vpack.c.b16 %v194, %v193
    %v224 = vpack.c.b16 %v196, %v195
    %v225 = vpack.c.b16 %v198, %v197
    %v226 = vpack.c.b16 %v200, %v199
    %v227 = vpack.c.b16 %v202, %v201
    %v228 = vpack.c.b16 %v204, %v203
    %253 = vmatpush.bf16.msra.mxu0 %v212
    %254 = vmatpush.bf16.msra.mxu0 %v211
    %255 = vmatpush.bf16.msra.mxu0 %v210
    %256 = vmatpush.bf16.msra.mxu0 %v209
    %257 = vmatpush.bf16.msra.mxu0 %v208
    %258 = vmatpush.bf16.msra.mxu0 %v207
    %259 = vmatpush.bf16.msra.mxu0 %v206
    %260 = vmatpush.bf16.msra.mxu0 %v205
    %261 = vmatmul.bf16.gmra.mxu0 %v54
    %v262 = vpop.f32.mrf.mxu0
    %v263 = vadd.f32 %v107, %v262
    %v264 = vpop.f32.mrf.mxu0
    %265 = vdwg.mxu0
    %266 = vmatpush.bf16.msra.mxu0 %v220
    %267 = vmatpush.bf16.msra.mxu0 %v219
    %268 = vmatpush.bf16.msra.mxu0 %v218
    %269 = vmatpush.bf16.msra.mxu0 %v217
    %270 = vmatpush.bf16.msra.mxu0 %v216
    %271 = vmatpush.bf16.msra.mxu0 %v215
    %272 = vmatpush.bf16.msra.mxu0 %v214
    %273 = vmatpush.bf16.msra.mxu0 %v213
    %274 = vmatmul.bf16.gmra.mxu0 %v55
    %v275 = vpop.f32.mrf.mxu0
    %v276 = vadd.f32 %v263, %v275
    %v277 = vpop.f32.mrf.mxu0
    %278 = vdwg.mxu0
    %279 = vmatpush.bf16.msra.mxu0 %v228
    %280 = vmatpush.bf16.msra.mxu0 %v227
    %281 = vmatpush.bf16.msra.mxu0 %v226
    %282 = vmatpush.bf16.msra.mxu0 %v225
    %283 = vmatpush.bf16.msra.mxu0 %v224
    %284 = vmatpush.bf16.msra.mxu0 %v223
    %285 = vmatpush.bf16.msra.mxu0 %v222
    %286 = vmatpush.bf16.msra.mxu0 %v221
    %287 = vmatmul.bf16.gmra.mxu0 %v56
    %v288 = vpop.f32.mrf.mxu0
    %v289 = vadd.f32 %v276, %v288
    %v290 = vpop.f32.mrf.mxu0
    %291 = vdwg.mxu0
    %292 = vst [vmem:[#allocation7] sm:$0x3] %v289
    // Predicated region
    $region22: #{my_model_forward.3} parent=1 // pred_check
      _
    $region23: #{my_model_forward.3} parent=1 // pred_check_branch
      %294 = sbr.rel (0) target = $region25
    $region24: #{my_model_forward.3} parent=1 // pred_region
      %296 = vsyncadd [#allocation4], 0
      %s298 = sshll.u32 [#allocation7], 4
      %s299 = int_to_ptr.vmem [resolvable:$true] %s298
      %s300 = sshll.u32 %s3, 4
      %s301 = int_to_ptr.hbm [resolvable:$true] %s300
      %303 = dma.vmem_to_hbm [thread:$0]  %s299, 32, %s301, [#allocation4]
    $region25: #{my_model_forward.3} parent=1 // pred_fallthru
      _
    // Predicated region
    $region26: #{my_model_forward.3} parent=1 // pred_check
      _
    $region27: #{my_model_forward.3} parent=1 // pred_check_branch
      %305 = sbr.rel (0) target = $region29
    $region28: #{my_model_forward.3} parent=1 // pred_region
      %307 = dma.done [#allocation4], 32
    $region29: #{my_model_forward.3} parent=1 // pred_fallthru
      _
    %308 = vsyncpa [#allocation3], 1
    %309 = vsyncpa [#allocation6], 1
    %310 = vsyncpa [#allocation4], 1

// kernel: my_model_forward.2
$region0: #{my_model_forward.2}
  #allocation0 [shape = 'u32[]', space=smem, size = 0x4, offset = 0x4, fixed_abs, tag = 'smem constant byte address 0x4 - core index']
  #allocation1 [shape = 'u32[72,128]{1,0:T(1,128)}', space=vmem, size = 0x9000, scoped, tag = 'internal scratch']
  #allocation2 [shape = 'f32[2,512]{1,0:T(2,128)}', space=vmem, size = 0x1000, scoped, tag = 'scratch operand']
  %s0 = inlined_call_operand.hbm [shape: f32[2,768], index: 0, kind: input, shape index: {}]
  %s1 = inlined_call_operand.vmem [shape: f32[8,384], index: 1, kind: input, shape index: {}]
  %s2 = inlined_call_operand.hbm [shape: bf16[768,1024], index: 2, kind: input, shape index: {}]
  %s3 = inlined_call_operand.hbm [shape: f32[1,1024], index: 3, kind: input, shape index: {}]
  %s4 = inlined_call_operand.hbm [shape: bf16[1024,384], index: 4, kind: input, shape index: {}]
  %s5 = inlined_call_operand.hbm [shape: f32[1,384], index: 5, kind: input, shape index: {}]
  %s6 = inlined_call_operand.hbm [shape: bf16[384,512], index: 6, kind: input, shape index: {}]
  %s7 = inlined_call_operand.hbm [shape: f32[1,512], index: 7, kind: input, shape index: {}]
  %s8 = inlined_call_operand.hbm [shape: bf16[512,512], index: 8, kind: input, shape index: {}]
  %s9 = inlined_call_operand.hbm [shape: f32[1,512], index: 9, kind: input, shape index: {}]
  %s10 = inlined_call_operand.hbm [shape: f32[1,512], index: 10, kind: input, shape index: {}]
  %s11 = inlined_call_operand.hbm [shape: bf16[512,384], index: 11, kind: input, shape index: {}]
  %s12 = inlined_call_operand.hbm [shape: f32[1,384], index: 12, kind: input, shape index: {}]
  %s13 = inlined_call_operand.hbm [shape: bf16[384,1024], index: 13, kind: input, shape index: {}]
  %s14 = inlined_call_operand.hbm [shape: f32[1,1024], index: 14, kind: input, shape index: {}]
  %s15 = inlined_call_operand.hbm [shape: bf16[1024,384], index: 15, kind: input, shape index: {}]
  %s16 = inlined_call_operand.hbm [shape: f32[1,384], index: 16, kind: input, shape index: {}]
  %s17 = inlined_call_operand.hbm [shape: f32[1,384], index: 17, kind: input, shape index: {}]
  %s18 = inlined_call_operand.hbm [shape: f32[1,384], index: 18, kind: input, shape index: {}]
  %s19 = inlined_call_operand.vmem [shape: f32[2,384], index: 19, kind: output, shape index: {}]
  %s20 = sld [smem:[#allocation0]]
  $region158: #{my_model_forward.2} parent=0
    _
  %s22 = ssub.s32 1, %s20
  %s23 = scalar_select 0, %s22, %s20
  $region1: #{my_model_forward.2} parent=0
    #allocation3 [shape = 'u8[6144]{0}', space=vmem, size = 0x1800, scoped, tag = 'input window, operand 0, single buffered']
    #allocation4 [shape = 's32[1]{0}', space=sflag, size = 0x4, scoped, tag = 'scoped memory for my_model_forward.2']
    #allocation5 [shape = 'u8[1572864]{0}', space=vmem, size = 0x180000, scoped, tag = 'input window, operand 2, single buffered']
    #allocation6 [shape = 's32[1]{0}', space=sflag, size = 0x4, scoped, tag = 'scoped memory for my_model_forward.2']
    #allocation7 [shape = 'u8[4096]{0}', space=vmem, size = 0x1000, scoped, tag = 'input window, operand 3, single buffered']
    #allocation8 [shape = 'u8[786432]{0}', space=vmem, size = 0xc0000, scoped, tag = 'input window, operand 4, single buffered']
    #allocation9 [shape = 's32[1]{0}', space=sflag, size = 0x4, scoped, tag = 'scoped memory for my_model_forward.2']
    #allocation10 [shape = 'u8[1536]{0}', space=vmem, size = 0x800, scoped, tag = 'input window, operand 5, single buffered']
    #allocation11 [shape = 'u8[393216]{0}', space=vmem, size = 0x60000, scoped, tag = 'input window, operand 6, single buffered']
    #allocation12 [shape = 's32[1]{0}', space=sflag, size = 0x4, scoped, tag = 'scoped memory for my_model_forward.2']
    #allocation13 [shape = 'u8[2048]{0}', space=vmem, size = 0x800, scoped, tag = 'input window, operand 7, single buffered']
    #allocation14 [shape = 'u8[524288]{0}', space=vmem, size = 0x80000, scoped, tag = 'input window, operand 8, single buffered']
    #allocation15 [shape = 's32[1]{0}', space=sflag, size = 0x4, scoped, tag = 'scoped memory for my_model_forward.2']
    #allocation16 [shape = 'u8[2048]{0}', space=vmem, size = 0x800, scoped, tag = 'input window, operand 9, single buffered']
    #allocation17 [shape = 'u8[2048]{0}', space=vmem, size = 0x800, scoped, tag = 'input window, operand 10, single buffered']
    #allocation18 [shape = 's32[1]{0}', space=sflag, size = 0x4, scoped, tag = 'scoped memory for my_model_forward.2']
    #allocation19 [shape = 'u8[393216]{0}', space=vmem, size = 0x60000, scoped, tag = 'input window, operand 11, single buffered']
    #allocation20 [shape = 'u8[1536]{0}', space=vmem, size = 0x800, scoped, tag = 'input window, operand 12, single buffered']
    #allocation21 [shape = 's32[1]{0}', space=sflag, size = 0x4, scoped, tag = 'scoped memory for my_model_forward.2']
    #allocation22 [shape = 'u8[786432]{0}', space=vmem, size = 0xc0000, scoped, tag = 'input window, operand 13, single buffered']
    #allocation23 [shape = 'u8[4096]{0}', space=vmem, size = 0x1000, scoped, tag = 'input window, operand 14, single buffered']
    #allocation24 [shape = 's32[1]{0}', space=sflag, size = 0x4, scoped, tag = 'scoped memory for my_model_forward.2']
    #allocation25 [shape = 'u8[786432]{0}', space=vmem, size = 0xc0000, scoped, tag = 'input window, operand 15, single buffered']
    #allocation26 [shape = 'u8[1536]{0}', space=vmem, size = 0x800, scoped, tag = 'input window, operand 16, single buffered']
    #allocation27 [shape = 's32[1]{0}', space=sflag, size = 0x4, scoped, tag = 'scoped memory for my_model_forward.2']
    #allocation28 [shape = 'u8[1536]{0}', space=vmem, size = 0x800, scoped, tag = 'input window, operand 17, single buffered']
    #allocation29 [shape = 'u8[1536]{0}', space=vmem, size = 0x800, scoped, tag = 'input window, operand 18, single buffered']
    #allocation30 [shape = 's32[1]{0}', space=sflag, size = 0x4, scoped, tag = 'scoped memory for my_model_forward.2']
    %24 = vsyncpa [#allocation4], 0
    %25 = vsyncpa [#allocation6], 0
    %26 = vsyncpa [#allocation9], 0
    %27 = vsyncpa [#allocation12], 0
    %28 = vsyncpa [#allocation15], 0
    %29 = vsyncpa [#allocation18], 0
    %30 = vsyncpa [#allocation21], 0
    %31 = vsyncpa [#allocation24], 0
    %32 = vsyncpa [#allocation27], 0
    %33 = vsyncpa [#allocation30], 0
    // Predicated region
    $region2: #{my_model_forward.2} parent=1 // pred_check
      _
    $region3: #{my_model_forward.2} parent=1 // pred_check_branch
      %35 = sbr.rel (0) target = $region5
    $region4: #{my_model_forward.2} parent=1 // pred_region
      %37 = vsyncadd [#allocation4], 0
      %s39 = sshll.u32 %s0, 4
      %s40 = int_to_ptr.hbm [resolvable:$true] %s39
      %s41 = sshll.u32 [#allocation3], 4
      %s42 = int_to_ptr.vmem [resolvable:$true] %s41
      %44 = dma.hbm_to_vmem [thread:$0]  %s40, 192, %s42, [#allocation4]
    $region5: #{my_model_forward.2} parent=1 // pred_fallthru
      _
    // Predicated region
    $region6: #{my_model_forward.2} parent=1 // pred_check
      _
    $region7: #{my_model_forward.2} parent=1 // pred_check_branch
      %46 = sbr.rel (0) target = $region9
    $region8: #{my_model_forward.2} parent=1 // pred_region
      _
    $region9: #{my_model_forward.2} parent=1 // pred_fallthru
      _
    // Predicated region
    $region10: #{my_model_forward.2} parent=1 // pred_check
      _
    $region11: #{my_model_forward.2} parent=1 // pred_check_branch
      %48 = sbr.rel (0) target = $region13
    $region12: #{my_model_forward.2} parent=1 // pred_region
      %50 = vsyncadd [#allocation6], 0
      %s51 = sshll.u32 %s2, 4
      %s52 = int_to_ptr.hbm [resolvable:$true] %s51
      %s53 = sshll.u32 [#allocation5], 4
      %s54 = int_to_ptr.vmem [resolvable:$true] %s53
      %59 = dma.hbm_to_vmem [thread:$0]  %s52, 49152, %s54, [#allocation6], 512, 512, 32
    $region13: #{my_model_forward.2} parent=1 // pred_fallthru
      _
    // Predicated region
    $region14: #{my_model_forward.2} parent=1 // pred_check
      _
    $region15: #{my_model_forward.2} parent=1 // pred_check_branch
      %61 = sbr.rel (0) target = $region17
    $region16: #{my_model_forward.2} parent=1 // pred_region
      %63 = vsyncadd [#allocation6], 0
      %s65 = sshll.u32 %s3, 4
      %s66 = int_to_ptr.hbm [resolvable:$true] %s65
      %s67 = sshll.u32 [#allocation7], 4
      %s68 = int_to_ptr.vmem [resolvable:$true] %s67
      %70 = dma.hbm_to_vmem [thread:$0]  %s66, 128, %s68, [#allocation6]
    $region17: #{my_model_forward.2} parent=1 // pred_fallthru
      _
    // Predicated region
    $region18: #{my_model_forward.2} parent=1 // pred_check
      _
    $region19: #{my_model_forward.2} parent=1 // pred_check_branch
      %72 = sbr.rel (0) target = $region21
    $region20: #{my_model_forward.2} parent=1 // pred_region
      %74 = vsyncadd [#allocation9], 0
      %s75 = sshll.u32 %s4, 4
      %s76 = int_to_ptr.hbm [resolvable:$true] %s75
      %s77 = sshll.u32 [#allocation8], 4
      %s78 = int_to_ptr.vmem [resolvable:$true] %s77
      %83 = dma.hbm_to_vmem [thread:$0]  %s76, 24576, %s78, [#allocation9], 192, 192, 12
    $region21: #{my_model_forward.2} parent=1 // pred_fallthru
      _
    // Predicated region
    $region22: #{my_model_forward.2} parent=1 // pred_check
      _
    $region23: #{my_model_forward.2} parent=1 // pred_check_branch
      %85 = sbr.rel (0) target = $region25
    $region24: #{my_model_forward.2} parent=1 // pred_region
      %87 = vsyncadd [#allocation9], 0
      %s89 = sshll.u32 %s5, 4
      %s90 = int_to_ptr.hbm [resolvable:$true] %s89
      %s91 = sshll.u32 [#allocation10], 4
      %s92 = int_to_ptr.vmem [resolvable:$true] %s91
      %94 = dma.hbm_to_vmem [thread:$0]  %s90, 48, %s92, [#allocation9]
    $region25: #{my_model_forward.2} parent=1 // pred_fallthru
      _
    // Predicated region
    $region26: #{my_model_forward.2} parent=1 // pred_check
      _
    $region27: #{my_model_forward.2} parent=1 // pred_check_branch
      %96 = sbr.rel (0) target = $region29
    $region28: #{my_model_forward.2} parent=1 // pred_region
      %98 = vsyncadd [#allocation12], 0
      %s99 = sshll.u32 %s6, 4
      %s100 = int_to_ptr.hbm [resolvable:$true] %s99
      %s101 = sshll.u32 [#allocation11], 4
      %s102 = int_to_ptr.vmem [resolvable:$true] %s101
      %107 = dma.hbm_to_vmem [thread:$0]  %s100, 12288, %s102, [#allocation12], 256, 256, 16
    $region29: #{my_model_forward.2} parent=1 // pred_fallthru
      _
    // Predicated region
    $region30: #{my_model_forward.2} parent=1 // pred_check
      _
    $region31: #{my_model_forward.2} parent=1 // pred_check_branch
      %109 = sbr.rel (0) target = $region33
    $region32: #{my_model_forward.2} parent=1 // pred_region
      %111 = vsyncadd [#allocation12], 0
      %s113 = sshll.u32 %s7, 4
      %s114 = int_to_ptr.hbm [resolvable:$true] %s113
      %s115 = sshll.u32 [#allocation13], 4
      %s116 = int_to_ptr.vmem [resolvable:$true] %s115
      %118 = dma.hbm_to_vmem [thread:$0]  %s114, 64, %s116, [#allocation12]
    $region33: #{my_model_forward.2} parent=1 // pred_fallthru
      _
    // Predicated region
    $region34: #{my_model_forward.2} parent=1 // pred_check
      _
    $region35: #{my_model_forward.2} parent=1 // pred_check_branch
      %120 = sbr.rel (0) target = $region37
    $region36: #{my_model_forward.2} parent=1 // pred_region
      %122 = vsyncadd [#allocation15], 0
      %s123 = sshll.u32 %s8, 4
      %s124 = int_to_ptr.hbm [resolvable:$true] %s123
      %s125 = sshll.u32 [#allocation14], 4
      %s126 = int_to_ptr.vmem [resolvable:$true] %s125
      %131 = dma.hbm_to_vmem [thread:$0]  %s124, 16384, %s126, [#allocation15], 256, 256, 16
    $region37: #{my_model_forward.2} parent=1 // pred_fallthru
      _
    // Predicated region
    $region38: #{my_model_forward.2} parent=1 // pred_check
      _
    $region39: #{my_model_forward.2} parent=1 // pred_check_branch
      %133 = sbr.rel (0) target = $region41
    $region40: #{my_model_forward.2} parent=1 // pred_region
      %135 = vsyncadd [#allocation15], 0
      %s137 = sshll.u32 %s9, 4
      %s138 = int_to_ptr.hbm [resolvable:$true] %s137
      %s139 = sshll.u32 [#allocation16], 4
      %s140 = int_to_ptr.vmem [resolvable:$true] %s139
      %142 = dma.hbm_to_vmem [thread:$0]  %s138, 64, %s140, [#allocation15]
    $region41: #{my_model_forward.2} parent=1 // pred_fallthru
      _
    // Predicated region
    $region42: #{my_model_forward.2} parent=1 // pred_check
      _
    $region43: #{my_model_forward.2} parent=1 // pred_check_branch
      %144 = sbr.rel (0) target = $region45
    $region44: #{my_model_forward.2} parent=1 // pred_region
      %146 = vsyncadd [#allocation18], 0
      %s148 = sshll.u32 %s10, 4
      %s149 = int_to_ptr.hbm [resolvable:$true] %s148
      %s150 = sshll.u32 [#allocation17], 4
      %s151 = int_to_ptr.vmem [resolvable:$true] %s150
      %153 = dma.hbm_to_vmem [thread:$0]  %s149, 64, %s151, [#allocation18]
    $region45: #{my_model_forward.2} parent=1 // pred_fallthru
      _
    // Predicated region
    $region46: #{my_model_forward.2} parent=1 // pred_check
      _
    $region47: #{my_model_forward.2} parent=1 // pred_check_branch
      %155 = sbr.rel (0) target = $region49
    $region48: #{my_model_forward.2} parent=1 // pred_region
      %157 = vsyncadd [#allocation18], 0
      %s158 = sshll.u32 %s11, 4
      %s159 = int_to_ptr.hbm [resolvable:$true] %s158
      %s160 = sshll.u32 [#allocation19], 4
      %s161 = int_to_ptr.vmem [resolvable:$true] %s160
      %166 = dma.hbm_to_vmem [thread:$0]  %s159, 12288, %s161, [#allocation18], 192, 192, 12
    $region49: #{my_model_forward.2} parent=1 // pred_fallthru
      _
    // Predicated region
    $region50: #{my_model_forward.2} parent=1 // pred_check
      _
    $region51: #{my_model_forward.2} parent=1 // pred_check_branch
      %168 = sbr.rel (0) target = $region53
    $region52: #{my_model_forward.2} parent=1 // pred_region
      %170 = vsyncadd [#allocation21], 0
      %s172 = sshll.u32 %s12, 4
      %s173 = int_to_ptr.hbm [resolvable:$true] %s172
      %s174 = sshll.u32 [#allocation20], 4
      %s175 = int_to_ptr.vmem [resolvable:$true] %s174
      %177 = dma.hbm_to_vmem [thread:$0]  %s173, 48, %s175, [#allocation21]
    $region53: #{my_model_forward.2} parent=1 // pred_fallthru
      _
    // Predicated region
    $region54: #{my_model_forward.2} parent=1 // pred_check
      _
    $region55: #{my_model_forward.2} parent=1 // pred_check_branch
      %179 = sbr.rel (0) target = $region57
    $region56: #{my_model_forward.2} parent=1 // pred_region
      %181 = vsyncadd [#allocation21], 0
      %s182 = sshll.u32 %s13, 4
      %s183 = int_to_ptr.hbm [resolvable:$true] %s182
      %s184 = sshll.u32 [#allocation22], 4
      %s185 = int_to_ptr.vmem [resolvable:$true] %s184
      %190 = dma.hbm_to_vmem [thread:$0]  %s183, 24576, %s185, [#allocation21], 512, 512, 32
    $region57: #{my_model_forward.2} parent=1 // pred_fallthru
      _
    // Predicated region
    $region58: #{my_model_forward.2} parent=1 // pred_check
      _
    $region59: #{my_model_forward.2} parent=1 // pred_check_branch
      %192 = sbr.rel (0) target = $region61
    $region60: #{my_model_forward.2} parent=1 // pred_region
      %194 = vsyncadd [#allocation24], 0
      %s196 = sshll.u32 %s14, 4
      %s197 = int_to_ptr.hbm [resolvable:$true] %s196
      %s198 = sshll.u32 [#allocation23], 4
      %s199 = int_to_ptr.vmem [resolvable:$true] %s198
      %201 = dma.hbm_to_vmem [thread:$0]  %s197, 128, %s199, [#allocation24]
    $region61: #{my_model_forward.2} parent=1 // pred_fallthru
      _
    // Predicated region
    $region62: #{my_model_forward.2} parent=1 // pred_check
      _
    $region63: #{my_model_forward.2} parent=1 // pred_check_branch
      %203 = sbr.rel (0) target = $region65
    $region64: #{my_model_forward.2} parent=1 // pred_region
      %205 = vsyncadd [#allocation24], 0
      %s206 = sshll.u32 %s15, 4
      %s207 = int_to_ptr.hbm [resolvable:$true] %s206
      %s208 = sshll.u32 [#allocation25], 4
      %s209 = int_to_ptr.vmem [resolvable:$true] %s208
      %214 = dma.hbm_to_vmem [thread:$0]  %s207, 24576, %s209, [#allocation24], 192, 192, 12
    $region65: #{my_model_forward.2} parent=1 // pred_fallthru
      _
    // Predicated region
    $region66: #{my_model_forward.2} parent=1 // pred_check
      _
    $region67: #{my_model_forward.2} parent=1 // pred_check_branch
      %216 = sbr.rel (0) target = $region69
    $region68: #{my_model_forward.2} parent=1 // pred_region
      %218 = vsyncadd [#allocation27], 0
      %s220 = sshll.u32 %s16, 4
      %s221 = int_to_ptr.hbm [resolvable:$true] %s220
      %s222 = sshll.u32 [#allocation26], 4
      %s223 = int_to_ptr.vmem [resolvable:$true] %s222
      %225 = dma.hbm_to_vmem [thread:$0]  %s221, 48, %s223, [#allocation27]
    $region69: #{my_model_forward.2} parent=1 // pred_fallthru
      _
    // Predicated region
    $region70: #{my_model_forward.2} parent=1 // pred_check
      _
    $region71: #{my_model_forward.2} parent=1 // pred_check_branch
      %227 = sbr.rel (0) target = $region73
    $region72: #{my_model_forward.2} parent=1 // pred_region
      %229 = vsyncadd [#allocation27], 0
      %s231 = sshll.u32 %s17, 4
      %s232 = int_to_ptr.hbm [resolvable:$true] %s231
      %s233 = sshll.u32 [#allocation28], 4
      %s234 = int_to_ptr.vmem [resolvable:$true] %s233
      %236 = dma.hbm_to_vmem [thread:$0]  %s232, 48, %s234, [#allocation27]
    $region73: #{my_model_forward.2} parent=1 // pred_fallthru
      _
    // Predicated region
    $region74: #{my_model_forward.2} parent=1 // pred_check
      _
    $region75: #{my_model_forward.2} parent=1 // pred_check_branch
      %238 = sbr.rel (0) target = $region77
    $region76: #{my_model_forward.2} parent=1 // pred_region
      %240 = vsyncadd [#allocation30], 0
      %s242 = sshll.u32 %s18, 4
      %s243 = int_to_ptr.hbm [resolvable:$true] %s242
      %s244 = sshll.u32 [#allocation29], 4
      %s245 = int_to_ptr.vmem [resolvable:$true] %s244
      %247 = dma.hbm_to_vmem [thread:$0]  %s243, 48, %s245, [#allocation30]
    $region77: #{my_model_forward.2} parent=1 // pred_fallthru
      _
    // Predicated region
    $region78: #{my_model_forward.2} parent=1 // pred_check
      _
    $region79: #{my_model_forward.2} parent=1 // pred_check_branch
      %249 = sbr.rel (0) target = $region81
    $region80: #{my_model_forward.2} parent=1 // pred_region
      %251 = dma.done [#allocation4], 192
    $region81: #{my_model_forward.2} parent=1 // pred_fallthru
      _
    // Predicated region
    $region82: #{my_model_forward.2} parent=1 // pred_check
      _
    $region83: #{my_model_forward.2} parent=1 // pred_check_branch
      %253 = sbr.rel (0) target = $region85
    $region84: #{my_model_forward.2} parent=1 // pred_region
      %255 = dma.done [#allocation6], 49152
    $region85: #{my_model_forward.2} parent=1 // pred_fallthru
      _
    // Predicated region
    $region86: #{my_model_forward.2} parent=1 // pred_check
      _
    $region87: #{my_model_forward.2} parent=1 // pred_check_branch
      %257 = sbr.rel (0) target = $region89
    $region88: #{my_model_forward.2} parent=1 // pred_region
      %259 = dma.done [#allocation6], 128
    $region89: #{my_model_forward.2} parent=1 // pred_fallthru
      _
    // Predicated region
    $region90: #{my_model_forward.2} parent=1 // pred_check
      _
    $region91: #{my_model_forward.2} parent=1 // pred_check_branch
      %261 = sbr.rel (0) target = $region93
    $region92: #{my_model_forward.2} parent=1 // pred_region
      %263 = dma.done [#allocation9], 24576
    $region93: #{my_model_forward.2} parent=1 // pred_fallthru
      _
    // Predicated region
    $region94: #{my_model_forward.2} parent=1 // pred_check
      _
    $region95: #{my_model_forward.2} parent=1 // pred_check_branch
      %265 = sbr.rel (0) target = $region97
    $region96: #{my_model_forward.2} parent=1 // pred_region
      %267 = dma.done [#allocation9], 48
    $region97: #{my_model_forward.2} parent=1 // pred_fallthru
      _
    // Predicated region
    $region98: #{my_model_forward.2} parent=1 // pred_check
      _
    $region99: #{my_model_forward.2} parent=1 // pred_check_branch
      %269 = sbr.rel (0) target = $region101
    $region100: #{my_model_forward.2} parent=1 // pred_region
      %271 = dma.done [#allocation12], 12288
    $region101: #{my_model_forward.2} parent=1 // pred_fallthru
      _
    // Predicated region
    $region102: #{my_model_forward.2} parent=1 // pred_check
      _
    $region103: #{my_model_forward.2} parent=1 // pred_check_branch
      %273 = sbr.rel (0) target = $region105
    $region104: #{my_model_forward.2} parent=1 // pred_region
      %275 = dma.done [#allocation12], 64
    $region105: #{my_model_forward.2} parent=1 // pred_fallthru
      _
    // Predicated region
    $region106: #{my_model_forward.2} parent=1 // pred_check
      _
    $region107: #{my_model_forward.2} parent=1 // pred_check_branch
      %277 = sbr.rel (0) target = $region109
    $region108: #{my_model_forward.2} parent=1 // pred_region
      %279 = dma.done [#allocation15], 16384
    $region109: #{my_model_forward.2} parent=1 // pred_fallthru
      _
    // Predicated region
    $region110: #{my_model_forward.2} parent=1 // pred_check
      _
    $region111: #{my_model_forward.2} parent=1 // pred_check_branch
      %281 = sbr.rel (0) target = $region113
    $region112: #{my_model_forward.2} parent=1 // pred_region
      %283 = dma.done [#allocation15], 64
    $region113: #{my_model_forward.2} parent=1 // pred_fallthru
      _
    // Predicated region
    $region114: #{my_model_forward.2} parent=1 // pred_check
      _
    $region115: #{my_model_forward.2} parent=1 // pred_check_branch
      %285 = sbr.rel (0) target = $region117
    $region116: #{my_model_forward.2} parent=1 // pred_region
      %287 = dma.done [#allocation18], 64
    $region117: #{my_model_forward.2} parent=1 // pred_fallthru
      _
    // Predicated region
    $region118: #{my_model_forward.2} parent=1 // pred_check
      _
    $region119: #{my_model_forward.2} parent=1 // pred_check_branch
      %289 = sbr.rel (0) target = $region121
    $region120: #{my_model_forward.2} parent=1 // pred_region
      %291 = dma.done [#allocation18], 12288
    $region121: #{my_model_forward.2} parent=1 // pred_fallthru
      _
    // Predicated region
    $region122: #{my_model_forward.2} parent=1 // pred_check
      _
    $region123: #{my_model_forward.2} parent=1 // pred_check_branch
      %293 = sbr.rel (0) target = $region125
    $region124: #{my_model_forward.2} parent=1 // pred_region
      %295 = dma.done [#allocation21], 48
    $region125: #{my_model_forward.2} parent=1 // pred_fallthru
      _
    // Predicated region
    $region126: #{my_model_forward.2} parent=1 // pred_check
      _
    $region127: #{my_model_forward.2} parent=1 // pred_check_branch
      %297 = sbr.rel (0) target = $region129
    $region128: #{my_model_forward.2} parent=1 // pred_region
      %299 = dma.done [#allocation21], 24576
    $region129: #{my_model_forward.2} parent=1 // pred_fallthru
      _
    // Predicated region
    $region130: #{my_model_forward.2} parent=1 // pred_check
      _
    $region131: #{my_model_forward.2} parent=1 // pred_check_branch
      %301 = sbr.rel (0) target = $region133
    $region132: #{my_model_forward.2} parent=1 // pred_region
      %303 = dma.done [#allocation24], 128
    $region133: #{my_model_forward.2} parent=1 // pred_fallthru
      _
    // Predicated region
    $region134: #{my_model_forward.2} parent=1 // pred_check
      _
    $region135: #{my_model_forward.2} parent=1 // pred_check_branch
      %305 = sbr.rel (0) target = $region137
    $region136: #{my_model_forward.2} parent=1 // pred_region
      %307 = dma.done [#allocation24], 24576
    $region137: #{my_model_forward.2} parent=1 // pred_fallthru
      _
    // Predicated region
    $region138: #{my_model_forward.2} parent=1 // pred_check
      _
    $region139: #{my_model_forward.2} parent=1 // pred_check_branch
      %309 = sbr.rel (0) target = $region141
    $region140: #{my_model_forward.2} parent=1 // pred_region
      %311 = dma.done [#allocation27], 48
    $region141: #{my_model_forward.2} parent=1 // pred_fallthru
      _
    // Predicated region
    $region142: #{my_model_forward.2} parent=1 // pred_check
      _
    $region143: #{my_model_forward.2} parent=1 // pred_check_branch
      %313 = sbr.rel (0) target = $region145
    $region144: #{my_model_forward.2} parent=1 // pred_region
      %315 = dma.done [#allocation27], 48
    $region145: #{my_model_forward.2} parent=1 // pred_fallthru
      _
    // Predicated region
    $region146: #{my_model_forward.2} parent=1 // pred_check
      _
    $region147: #{my_model_forward.2} parent=1 // pred_check_branch
      %317 = sbr.rel (0) target = $region149
    $region148: #{my_model_forward.2} parent=1 // pred_region
      %319 = dma.done [#allocation30], 48
    $region149: #{my_model_forward.2} parent=1 // pred_fallthru
      _
    %v320 = vld [vmem:[#allocation3] sm:$0xff]
    %v321 = vld [vmem:[#allocation3 + $0x8] sm:$0xf]
    %324 = vst [vmem:[#allocation1] ss:$4 sm:$0xff] %v320
    %s325 = scalar_lea.vmem [#allocation1], 32
    %326 = vst [vmem:[%s325] ss:$4 sm:$0xff] %v321
    %v327 = vld.sshfl [vmem:[#allocation1] sm:$0xff pattern:$0x73625140]
    %v328 = vld.sshfl [vmem:[#allocation1 + $0x8] sm:$0xff pattern:$0x73625140]
    %v329 = vld.sshfl [vmem:[#allocation1 + $0x10] sm:$0xff pattern:$0x73625140]
    %v330 = vld.sshfl [vmem:[#allocation1 + $0x18] sm:$0xff pattern:$0x73625140]
    %v331 = vld.sshfl [vmem:[#allocation1 + $0x20] sm:$0xff pattern:$0x73625140]
    %v332 = vld.sshfl [vmem:[#allocation1 + $0x28] sm:$0xff pattern:$0x73625140]
    %v339 = vpack.c.bf16 %v327, %v327
    %v340 = vpack.c.bf16 %v328, %v328
    %v341 = vpack.c.bf16 %v329, %v329
    %v342 = vpack.c.bf16 %v330, %v330
    %v343 = vpack.c.bf16 %v331, %v331
    %v344 = vpack.c.bf16 %v332, %v332
    %v345 = vld [vmem:[#allocation5] sm:$0xff]
    %v346 = vld [vmem:[#allocation5 + $0x8] sm:$0xff]
    %v347 = vld [vmem:[#allocation5 + $0x10] sm:$0xff]
    %v348 = vld [vmem:[#allocation5 + $0x18] sm:$0xff]
    %v349 = vld [vmem:[#allocation5 + $0x20] sm:$0xff]
    %v350 = vld [vmem:[#allocation5 + $0x28] sm:$0xff]
    %v351 = vld [vmem:[#allocation5 + $0x30] sm:$0xff]
    %v352 = vld [vmem:[#allocation5 + $0x38] sm:$0xff]
    %v353 = vld [vmem:[#allocation5 + $0x40] sm:$0xff]
    %v354 = vld [vmem:[#allocation5 + $0x48] sm:$0xff]
    %v355 = vld [vmem:[#allocation5 + $0x50] sm:$0xff]
    %v356 = vld [vmem:[#allocation5 + $0x58] sm:$0xff]
    %v357 = vld [vmem:[#allocation5 + $0x60] sm:$0xff]
    %v358 = vld [vmem:[#allocation5 + $0x68] sm:$0xff]
    %v359 = vld [vmem:[#allocation5 + $0x70] sm:$0xff]
    %v360 = vld [vmem:[#allocation5 + $0x78] sm:$0xff]
    %v361 = vld [vmem:[#allocation5 + $0x80] sm:$0xff]
    %v362 = vld [vmem:[#allocation5 + $0x88] sm:$0xff]
    %v363 = vld [vmem:[#allocation5 + $0x90] sm:$0xff]
    %v364 = vld [vmem:[#allocation5 + $0x98] sm:$0xff]
    %v365 = vld [vmem:[#allocation5 + $0xa0] sm:$0xff]
    %v366 = vld [vmem:[#allocation5 + $0xa8] sm:$0xff]
    %v367 = vld [vmem:[#allocation5 + $0xb0] sm:$0xff]
    %v368 = vld [vmem:[#allocation5 + $0xb8] sm:$0xff]
    %v369 = vld [vmem:[#allocation5 + $0xc0] sm:$0xff]
    %v370 = vld [vmem:[#allocation5 + $0xc8] sm:$0xff]
    %v371 = vld [vmem:[#allocation5 + $0xd0] sm:$0xff]
    %v372 = vld [vmem:[#allocation5 + $0xd8] sm:$0xff]
    %v373 = vld [vmem:[#allocation5 + $0xe0] sm:$0xff]
    %v374 = vld [vmem:[#allocation5 + $0xe8] sm:$0xff]
    %v375 = vld [vmem:[#allocation5 + $0xf0] sm:$0xff]
    %v376 = vld [vmem:[#allocation5 + $0xf8] sm:$0xff]
    %v377 = vld [vmem:[#allocation5 + $0x100] sm:$0xff]
    %v378 = vld [vmem:[#allocation5 + $0x108] sm:$0xff]
    %v379 = vld [vmem:[#allocation5 + $0x110] sm:$0xff]
    %v380 = vld [vmem:[#allocation5 + $0x118] sm:$0xff]
    %v381 = vld [vmem:[#allocation5 + $0x120] sm:$0xff]
    %v382 = vld [vmem:[#allocation5 + $0x128] sm:$0xff]
    %v383 = vld [vmem:[#allocation5 + $0x130] sm:$0xff]
    %v384 = vld [vmem:[#allocation5 + $0x138] sm:$0xff]
    %v385 = vld [vmem:[#allocation5 + $0x140] sm:$0xff]
    %v386 = vld [vmem:[#allocation5 + $0x148] sm:$0xff]
    %v387 = vld [vmem:[#allocation5 + $0x150] sm:$0xff]
    %v388 = vld [vmem:[#allocation5 + $0x158] sm:$0xff]
    %v389 = vld [vmem:[#allocation5 + $0x160] sm:$0xff]
    %v390 = vld [vmem:[#allocation5 + $0x168] sm:$0xff]
    %v391 = vld [vmem:[#allocation5 + $0x170] sm:$0xff]
    %v392 = vld [vmem:[#allocation5 + $0x178] sm:$0xff]
    %v393 = vld [vmem:[#allocation5 + $0x180] sm:$0xff]
    %v394 = vld [vmem:[#allocation5 + $0x188] sm:$0xff]
    %v395 = vld [vmem:[#allocation5 + $0x190] sm:$0xff]
    %v396 = vld [vmem:[#allocation5 + $0x198] sm:$0xff]
    %v397 = vld [vmem:[#allocation5 + $0x1a0] sm:$0xff]
    %v398 = vld [vmem:[#allocation5 + $0x1a8] sm:$0xff]
    %v399 = vld [vmem:[#allocation5 + $0x1b0] sm:$0xff]
    %v400 = vld [vmem:[#allocation5 + $0x1b8] sm:$0xff]
    %v401 = vld [vmem:[#allocation5 + $0x1c0] sm:$0xff]
    %v402 = vld [vmem:[#allocation5 + $0x1c8] sm:$0xff]
    %v403 = vld [vmem:[#allocation5 + $0x1d0] sm:$0xff]
    %v404 = vld [vmem:[#allocation5 + $0x1d8] sm:$0xff]
    %v405 = vld [vmem:[#allocation5 + $0x1e0] sm:$0xff]
    %v406 = vld [vmem:[#allocation5 + $0x1e8] sm:$0xff]
    %v407 = vld [vmem:[#allocation5 + $0x1f0] sm:$0xff]
    %v408 = vld [vmem:[#allocation5 + $0x1f8] sm:$0xff]
    %v409 = vld [vmem:[#allocation5 + $0x200] sm:$0xff]
    %v410 = vld [vmem:[#allocation5 + $0x208] sm:$0xff]
    %v411 = vld [vmem:[#allocation5 + $0x210] sm:$0xff]
    %v412 = vld [vmem:[#allocation5 + $0x218] sm:$0xff]
    %v413 = vld [vmem:[#allocation5 + $0x220] sm:$0xff]
    %v414 = vld [vmem:[#allocation5 + $0x228] sm:$0xff]
    %v415 = vld [vmem:[#allocation5 + $0x230] sm:$0xff]
    %v416 = vld [vmem:[#allocation5 + $0x238] sm:$0xff]
    %v417 = vld [vmem:[#allocation5 + $0x240] sm:$0xff]
    %v418 = vld [vmem:[#allocation5 + $0x248] sm:$0xff]
    %v419 = vld [vmem:[#allocation5 + $0x250] sm:$0xff]
    %v420 = vld [vmem:[#allocation5 + $0x258] sm:$0xff]
    %v421 = vld [vmem:[#allocation5 + $0x260] sm:$0xff]
    %v422 = vld [vmem:[#allocation5 + $0x268] sm:$0xff]
    %v423 = vld [vmem:[#allocation5 + $0x270] sm:$0xff]
    %v424 = vld [vmem:[#allocation5 + $0x278] sm:$0xff]
    %v425 = vld [vmem:[#allocation5 + $0x280] sm:$0xff]
    %v426 = vld [vmem:[#allocation5 + $0x288] sm:$0xff]
    %v427 = vld [vmem:[#allocation5 + $0x290] sm:$0xff]
    %v428 = vld [vmem:[#allocation5 + $0x298] sm:$0xff]
    %v429 = vld [vmem:[#allocation5 + $0x2a0] sm:$0xff]
    %v430 = vld [vmem:[#allocation5 + $0x2a8] sm:$0xff]
    %v431 = vld [vmem:[#allocation5 + $0x2b0] sm:$0xff]
    %v432 = vld [vmem:[#allocation5 + $0x2b8] sm:$0xff]
    %v433 = vld [vmem:[#allocation5 + $0x2c0] sm:$0xff]
    %v434 = vld [vmem:[#allocation5 + $0x2c8] sm:$0xff]
    %v435 = vld [vmem:[#allocation5 + $0x2d0] sm:$0xff]
    %v436 = vld [vmem:[#allocation5 + $0x2d8] sm:$0xff]
    %v437 = vld [vmem:[#allocation5 + $0x2e0] sm:$0xff]
    %v438 = vld [vmem:[#allocation5 + $0x2e8] sm:$0xff]
    %v439 = vld [vmem:[#allocation5 + $0x2f0] sm:$0xff]
    %v440 = vld [vmem:[#allocation5 + $0x2f8] sm:$0xff]
    %v441 = vld [vmem:[#allocation5 + $0x300] sm:$0xff]
    %v442 = vld [vmem:[#allocation5 + $0x308] sm:$0xff]
    %v443 = vld [vmem:[#allocation5 + $0x310] sm:$0xff]
    %v444 = vld [vmem:[#allocation5 + $0x318] sm:$0xff]
    %v445 = vld [vmem:[#allocation5 + $0x320] sm:$0xff]
    %v446 = vld [vmem:[#allocation5 + $0x328] sm:$0xff]
    %v447 = vld [vmem:[#allocation5 + $0x330] sm:$0xff]
    %v448 = vld [vmem:[#allocation5 + $0x338] sm:$0xff]
    %v449 = vld [vmem:[#allocation5 + $0x340] sm:$0xff]
    %v450 = vld [vmem:[#allocation5 + $0x348] sm:$0xff]
    %v451 = vld [vmem:[#allocation5 + $0x350] sm:$0xff]
    %v452 = vld [vmem:[#allocation5 + $0x358] sm:$0xff]
    %v453 = vld [vmem:[#allocation5 + $0x360] sm:$0xff]
    %v454 = vld [vmem:[#allocation5 + $0x368] sm:$0xff]
    %v455 = vld [vmem:[#allocation5 + $0x370] sm:$0xff]
    %v456 = vld [vmem:[#allocation5 + $0x378] sm:$0xff]
    %v457 = vld [vmem:[#allocation5 + $0x380] sm:$0xff]
    %v458 = vld [vmem:[#allocation5 + $0x388] sm:$0xff]
    %v459 = vld [vmem:[#allocation5 + $0x390] sm:$0xff]
    %v460 = vld [vmem:[#allocation5 + $0x398] sm:$0xff]
    %v461 = vld [vmem:[#allocation5 + $0x3a0] sm:$0xff]
    %v462 = vld [vmem:[#allocation5 + $0x3a8] sm:$0xff]
    %v463 = vld [vmem:[#allocation5 + $0x3b0] sm:$0xff]
    %v464 = vld [vmem:[#allocation5 + $0x3b8] sm:$0xff]
    %v465 = vld [vmem:[#allocation5 + $0x3c0] sm:$0xff]
    %v466 = vld [vmem:[#allocation5 + $0x3c8] sm:$0xff]
    %v467 = vld [vmem:[#allocation5 + $0x3d0] sm:$0xff]
    %v468 = vld [vmem:[#allocation5 + $0x3d8] sm:$0xff]
    %v469 = vld [vmem:[#allocation5 + $0x3e0] sm:$0xff]
    %v470 = vld [vmem:[#allocation5 + $0x3e8] sm:$0xff]
    %v471 = vld [vmem:[#allocation5 + $0x3f0] sm:$0xff]
    %v472 = vld [vmem:[#allocation5 + $0x3f8] sm:$0xff]
    %v473 = vld [vmem:[#allocation5 + $0x400] sm:$0xff]
    %v474 = vld [vmem:[#allocation5 + $0x408] sm:$0xff]
    %v475 = vld [vmem:[#allocation5 + $0x410] sm:$0xff]
    %v476 = vld [vmem:[#allocation5 + $0x418] sm:$0xff]
    %v477 = vld [vmem:[#allocation5 + $0x420] sm:$0xff]
    %v478 = vld [vmem:[#allocation5 + $0x428] sm:$0xff]
    %v479 = vld [vmem:[#allocation5 + $0x430] sm:$0xff]
    %v480 = vld [vmem:[#allocation5 + $0x438] sm:$0xff]
    %v481 = vld [vmem:[#allocation5 + $0x440] sm:$0xff]
    %v482 = vld [vmem:[#allocation5 + $0x448] sm:$0xff]
    %v483 = vld [vmem:[#allocation5 + $0x450] sm:$0xff]
    %v484 = vld [vmem:[#allocation5 + $0x458] sm:$0xff]
    %v485 = vld [vmem:[#allocation5 + $0x460] sm:$0xff]
    %v486 = vld [vmem:[#allocation5 + $0x468] sm:$0xff]
    %v487 = vld [vmem:[#allocation5 + $0x470] sm:$0xff]
    %v488 = vld [vmem:[#allocation5 + $0x478] sm:$0xff]
    %v489 = vld [vmem:[#allocation5 + $0x480] sm:$0xff]
    %v490 = vld [vmem:[#allocation5 + $0x488] sm:$0xff]
    %v491 = vld [vmem:[#allocation5 + $0x490] sm:$0xff]
    %v492 = vld [vmem:[#allocation5 + $0x498] sm:$0xff]
    %v493 = vld [vmem:[#allocation5 + $0x4a0] sm:$0xff]
    %v494 = vld [vmem:[#allocation5 + $0x4a8] sm:$0xff]
    %v495 = vld [vmem:[#allocation5 + $0x4b0] sm:$0xff]
    %v496 = vld [vmem:[#allocation5 + $0x4b8] sm:$0xff]
    %v497 = vld [vmem:[#allocation5 + $0x4c0] sm:$0xff]
    %v498 = vld [vmem:[#allocation5 + $0x4c8] sm:$0xff]
    %v499 = vld [vmem:[#allocation5 + $0x4d0] sm:$0xff]
    %v500 = vld [vmem:[#allocation5 + $0x4d8] sm:$0xff]
    %v501 = vld [vmem:[#allocation5 + $0x4e0] sm:$0xff]
    %v502 = vld [vmem:[#allocation5 + $0x4e8] sm:$0xff]
    %v503 = vld [vmem:[#allocation5 + $0x4f0] sm:$0xff]
    %v504 = vld [vmem:[#allocation5 + $0x4f8] sm:$0xff]
    %v505 = vld [vmem:[#allocation5 + $0x500] sm:$0xff]
    %v506 = vld [vmem:[#allocation5 + $0x508] sm:$0xff]
    %v507 = vld [vmem:[#allocation5 + $0x510] sm:$0xff]
    %v508 = vld [vmem:[#allocation5 + $0x518] sm:$0xff]
    %v509 = vld [vmem:[#allocation5 + $0x520] sm:$0xff]
    %v510 = vld [vmem:[#allocation5 + $0x528] sm:$0xff]
    %v511 = vld [vmem:[#allocation5 + $0x530] sm:$0xff]
    %v512 = vld [vmem:[#allocation5 + $0x538] sm:$0xff]
    %v513 = vld [vmem:[#allocation5 + $0x540] sm:$0xff]
    %v514 = vld [vmem:[#allocation5 + $0x548] sm:$0xff]
    %v515 = vld [vmem:[#allocation5 + $0x550] sm:$0xff]
    %v516 = vld [vmem:[#allocation5 + $0x558] sm:$0xff]
    %v517 = vld [vmem:[#allocation5 + $0x560] sm:$0xff]
    %v518 = vld [vmem:[#allocation5 + $0x568] sm:$0xff]
    %v519 = vld [vmem:[#allocation5 + $0x570] sm:$0xff]
    %v520 = vld [vmem:[#allocation5 + $0x578] sm:$0xff]
    %v521 = vld [vmem:[#allocation5 + $0x580] sm:$0xff]
    %v522 = vld [vmem:[#allocation5 + $0x588] sm:$0xff]
    %v523 = vld [vmem:[#allocation5 + $0x590] sm:$0xff]
    %v524 = vld [vmem:[#allocation5 + $0x598] sm:$0xff]
    %v525 = vld [vmem:[#allocation5 + $0x5a0] sm:$0xff]
    %v526 = vld [vmem:[#allocation5 + $0x5a8] sm:$0xff]
    %v527 = vld [vmem:[#allocation5 + $0x5b0] sm:$0xff]
    %v528 = vld [vmem:[#allocation5 + $0x5b8] sm:$0xff]
    %v529 = vld [vmem:[#allocation5 + $0x5c0] sm:$0xff]
    %v530 = vld [vmem:[#allocation5 + $0x5c8] sm:$0xff]
    %v531 = vld [vmem:[#allocation5 + $0x5d0] sm:$0xff]
    %v532 = vld [vmem:[#allocation5 + $0x5d8] sm:$0xff]
    %v533 = vld [vmem:[#allocation5 + $0x5e0] sm:$0xff]
    %v534 = vld [vmem:[#allocation5 + $0x5e8] sm:$0xff]
    %v535 = vld [vmem:[#allocation5 + $0x5f0] sm:$0xff]
    %v536 = vld [vmem:[#allocation5 + $0x5f8] sm:$0xff]
    %v537 = vld [vmem:[#allocation5 + $0x600] sm:$0xff]
    %v538 = vld [vmem:[#allocation5 + $0x608] sm:$0xff]
    %v539 = vld [vmem:[#allocation5 + $0x610] sm:$0xff]
    %v540 = vld [vmem:[#allocation5 + $0x618] sm:$0xff]
    %v541 = vld [vmem:[#allocation5 + $0x620] sm:$0xff]
    %v542 = vld [vmem:[#allocation5 + $0x628] sm:$0xff]
    %v543 = vld [vmem:[#allocation5 + $0x630] sm:$0xff]
    %v544 = vld [vmem:[#allocation5 + $0x638] sm:$0xff]
    %v545 = vld [vmem:[#allocation5 + $0x640] sm:$0xff]
    %v546 = vld [vmem:[#allocation5 + $0x648] sm:$0xff]
    %v547 = vld [vmem:[#allocation5 + $0x650] sm:$0xff]
    %v548 = vld [vmem:[#allocation5 + $0x658] sm:$0xff]
    %v549 = vld [vmem:[#allocation5 + $0x660] sm:$0xff]
    %v550 = vld [vmem:[#allocation5 + $0x668] sm:$0xff]
    %v551 = vld [vmem:[#allocation5 + $0x670] sm:$0xff]
    %v552 = vld [vmem:[#allocation5 + $0x678] sm:$0xff]
    %v553 = vld [vmem:[#allocation5 + $0x680] sm:$0xff]
    %v554 = vld [vmem:[#allocation5 + $0x688] sm:$0xff]
    %v555 = vld [vmem:[#allocation5 + $0x690] sm:$0xff]
    %v556 = vld [vmem:[#allocation5 + $0x698] sm:$0xff]
    %v557 = vld [vmem:[#allocation5 + $0x6a0] sm:$0xff]
    %v558 = vld [vmem:[#allocation5 + $0x6a8] sm:$0xff]
    %v559 = vld [vmem:[#allocation5 + $0x6b0] sm:$0xff]
    %v560 = vld [vmem:[#allocation5 + $0x6b8] sm:$0xff]
    %v561 = vld [vmem:[#allocation5 + $0x6c0] sm:$0xff]
    %v562 = vld [vmem:[#allocation5 + $0x6c8] sm:$0xff]
    %v563 = vld [vmem:[#allocation5 + $0x6d0] sm:$0xff]
    %v564 = vld [vmem:[#allocation5 + $0x6d8] sm:$0xff]
    %v565 = vld [vmem:[#allocation5 + $0x6e0] sm:$0xff]
    %v566 = vld [vmem:[#allocation5 + $0x6e8] sm:$0xff]
    %v567 = vld [vmem:[#allocation5 + $0x6f0] sm:$0xff]
    %v568 = vld [vmem:[#allocation5 + $0x6f8] sm:$0xff]
    %v569 = vld [vmem:[#allocation5 + $0x700] sm:$0xff]
    %v570 = vld [vmem:[#allocation5 + $0x708] sm:$0xff]
    %v571 = vld [vmem:[#allocation5 + $0x710] sm:$0xff]
    %v572 = vld [vmem:[#allocation5 + $0x718] sm:$0xff]
    %v573 = vld [vmem:[#allocation5 + $0x720] sm:$0xff]
    %v574 = vld [vmem:[#allocation5 + $0x728] sm:$0xff]
    %v575 = vld [vmem:[#allocation5 + $0x730] sm:$0xff]
    %v576 = vld [vmem:[#allocation5 + $0x738] sm:$0xff]
    %v577 = vld [vmem:[#allocation5 + $0x740] sm:$0xff]
    %v578 = vld [vmem:[#allocation5 + $0x748] sm:$0xff]
    %v579 = vld [vmem:[#allocation5 + $0x750] sm:$0xff]
    %v580 = vld [vmem:[#allocation5 + $0x758] sm:$0xff]
    %v581 = vld [vmem:[#allocation5 + $0x760] sm:$0xff]
    %v582 = vld [vmem:[#allocation5 + $0x768] sm:$0xff]
    %v583 = vld [vmem:[#allocation5 + $0x770] sm:$0xff]
    %v584 = vld [vmem:[#allocation5 + $0x778] sm:$0xff]
    %v585 = vld [vmem:[#allocation5 + $0x780] sm:$0xff]
    %v586 = vld [vmem:[#allocation5 + $0x788] sm:$0xff]
    %v587 = vld [vmem:[#allocation5 + $0x790] sm:$0xff]
    %v588 = vld [vmem:[#allocation5 + $0x798] sm:$0xff]
    %v589 = vld [vmem:[#allocation5 + $0x7a0] sm:$0xff]
    %v590 = vld [vmem:[#allocation5 + $0x7a8] sm:$0xff]
    %v591 = vld [vmem:[#allocation5 + $0x7b0] sm:$0xff]
    %v592 = vld [vmem:[#allocation5 + $0x7b8] sm:$0xff]
    %v593 = vld [vmem:[#allocation5 + $0x7c0] sm:$0xff]
    %v594 = vld [vmem:[#allocation5 + $0x7c8] sm:$0xff]
    %v595 = vld [vmem:[#allocation5 + $0x7d0] sm:$0xff]
    %v596 = vld [vmem:[#allocation5 + $0x7d8] sm:$0xff]
    %v597 = vld [vmem:[#allocation5 + $0x7e0] sm:$0xff]
    %v598 = vld [vmem:[#allocation5 + $0x7e8] sm:$0xff]
    %v599 = vld [vmem:[#allocation5 + $0x7f0] sm:$0xff]
    %v600 = vld [vmem:[#allocation5 + $0x7f8] sm:$0xff]
    %v601 = vld [vmem:[#allocation5 + $0x800] sm:$0xff]
    %v602 = vld [vmem:[#allocation5 + $0x808] sm:$0xff]
    %v603 = vld [vmem:[#allocation5 + $0x810] sm:$0xff]
    %v604 = vld [vmem:[#allocation5 + $0x818] sm:$0xff]
    %v605 = vld [vmem:[#allocation5 + $0x820] sm:$0xff]
    %v606 = vld [vmem:[#allocation5 + $0x828] sm:$0xff]
    %v607 = vld [vmem:[#allocation5 + $0x830] sm:$0xff]
    %v608 = vld [vmem:[#allocation5 + $0x838] sm:$0xff]
    %v609 = vld [vmem:[#allocation5 + $0x840] sm:$0xff]
    %v610 = vld [vmem:[#allocation5 + $0x848] sm:$0xff]
    %v611 = vld [vmem:[#allocation5 + $0x850] sm:$0xff]
    %v612 = vld [vmem:[#allocation5 + $0x858] sm:$0xff]
    %v613 = vld [vmem:[#allocation5 + $0x860] sm:$0xff]
    %v614 = vld [vmem:[#allocation5 + $0x868] sm:$0xff]
    %v615 = vld [vmem:[#allocation5 + $0x870] sm:$0xff]
    %v616 = vld [vmem:[#allocation5 + $0x878] sm:$0xff]
    %v617 = vld [vmem:[#allocation5 + $0x880] sm:$0xff]
    %v618 = vld [vmem:[#allocation5 + $0x888] sm:$0xff]
    %v619 = vld [vmem:[#allocation5 + $0x890] sm:$0xff]
    %v620 = vld [vmem:[#allocation5 + $0x898] sm:$0xff]
    %v621 = vld [vmem:[#allocation5 + $0x8a0] sm:$0xff]
    %v622 = vld [vmem:[#allocation5 + $0x8a8] sm:$0xff]
    %v623 = vld [vmem:[#allocation5 + $0x8b0] sm:$0xff]
    %v624 = vld [vmem:[#allocation5 + $0x8b8] sm:$0xff]
    %v625 = vld [vmem:[#allocation5 + $0x8c0] sm:$0xff]
    %v626 = vld [vmem:[#allocation5 + $0x8c8] sm:$0xff]
    %v627 = vld [vmem:[#allocation5 + $0x8d0] sm:$0xff]
    %v628 = vld [vmem:[#allocation5 + $0x8d8] sm:$0xff]
    %v629 = vld [vmem:[#allocation5 + $0x8e0] sm:$0xff]
    %v630 = vld [vmem:[#allocation5 + $0x8e8] sm:$0xff]
    %v631 = vld [vmem:[#allocation5 + $0x8f0] sm:$0xff]
    %v632 = vld [vmem:[#allocation5 + $0x8f8] sm:$0xff]
    %v633 = vld [vmem:[#allocation5 + $0x900] sm:$0xff]
    %v634 = vld [vmem:[#allocation5 + $0x908] sm:$0xff]
    %v635 = vld [vmem:[#allocation5 + $0x910] sm:$0xff]
    %v636 = vld [vmem:[#allocation5 + $0x918] sm:$0xff]
    %v637 = vld [vmem:[#allocation5 + $0x920] sm:$0xff]
    %v638 = vld [vmem:[#allocation5 + $0x928] sm:$0xff]
    %v639 = vld [vmem:[#allocation5 + $0x930] sm:$0xff]
    %v640 = vld [vmem:[#allocation5 + $0x938] sm:$0xff]
    %v641 = vld [vmem:[#allocation5 + $0x940] sm:$0xff]
    %v642 = vld [vmem:[#allocation5 + $0x948] sm:$0xff]
    %v643 = vld [vmem:[#allocation5 + $0x950] sm:$0xff]
    %v644 = vld [vmem:[#allocation5 + $0x958] sm:$0xff]
    %v645 = vld [vmem:[#allocation5 + $0x960] sm:$0xff]
    %v646 = vld [vmem:[#allocation5 + $0x968] sm:$0xff]
    %v647 = vld [vmem:[#allocation5 + $0x970] sm:$0xff]
    %v648 = vld [vmem:[#allocation5 + $0x978] sm:$0xff]
    %v649 = vld [vmem:[#allocation5 + $0x980] sm:$0xff]
    %v650 = vld [vmem:[#allocation5 + $0x988] sm:$0xff]
    %v651 = vld [vmem:[#allocation5 + $0x990] sm:$0xff]
    %v652 = vld [vmem:[#allocation5 + $0x998] sm:$0xff]
    %v653 = vld [vmem:[#allocation5 + $0x9a0] sm:$0xff]
    %v654 = vld [vmem:[#allocation5 + $0x9a8] sm:$0xff]
    %v655 = vld [vmem:[#allocation5 + $0x9b0] sm:$0xff]
    %v656 = vld [vmem:[#allocation5 + $0x9b8] sm:$0xff]
    %v657 = vld [vmem:[#allocation5 + $0x9c0] sm:$0xff]
    %v658 = vld [vmem:[#allocation5 + $0x9c8] sm:$0xff]
    %v659 = vld [vmem:[#allocation5 + $0x9d0] sm:$0xff]
    %v660 = vld [vmem:[#allocation5 + $0x9d8] sm:$0xff]
    %v661 = vld [vmem:[#allocation5 + $0x9e0] sm:$0xff]
    %v662 = vld [vmem:[#allocation5 + $0x9e8] sm:$0xff]
    %v663 = vld [vmem:[#allocation5 + $0x9f0] sm:$0xff]
    %v664 = vld [vmem:[#allocation5 + $0x9f8] sm:$0xff]
    %v665 = vld [vmem:[#allocation5 + $0xa00] sm:$0xff]
    %v666 = vld [vmem:[#allocation5 + $0xa08] sm:$0xff]
    %v667 = vld [vmem:[#allocation5 + $0xa10] sm:$0xff]
    %v668 = vld [vmem:[#allocation5 + $0xa18] sm:$0xff]
    %v669 = vld [vmem:[#allocation5 + $0xa20] sm:$0xff]
    %v670 = vld [vmem:[#allocation5 + $0xa28] sm:$0xff]
    %v671 = vld [vmem:[#allocation5 + $0xa30] sm:$0xff]
    %v672 = vld [vmem:[#allocation5 + $0xa38] sm:$0xff]
    %v673 = vld [vmem:[#allocation5 + $0xa40] sm:$0xff]
    %v674 = vld [vmem:[#allocation5 + $0xa48] sm:$0xff]
    %v675 = vld [vmem:[#allocation5 + $0xa50] sm:$0xff]
    %v676 = vld [vmem:[#allocation5 + $0xa58] sm:$0xff]
    %v677 = vld [vmem:[#allocation5 + $0xa60] sm:$0xff]
    %v678 = vld [vmem:[#allocation5 + $0xa68] sm:$0xff]
    %v679 = vld [vmem:[#allocation5 + $0xa70] sm:$0xff]
    %v680 = vld [vmem:[#allocation5 + $0xa78] sm:$0xff]
    %v681 = vld [vmem:[#allocation5 + $0xa80] sm:$0xff]
    %v682 = vld [vmem:[#allocation5 + $0xa88] sm:$0xff]
    %v683 = vld [vmem:[#allocation5 + $0xa90] sm:$0xff]
    %v684 = vld [vmem:[#allocation5 + $0xa98] sm:$0xff]
    %v685 = vld [vmem:[#allocation5 + $0xaa0] sm:$0xff]
    %v686 = vld [vmem:[#allocation5 + $0xaa8] sm:$0xff]
    %v687 = vld [vmem:[#allocation5 + $0xab0] sm:$0xff]
    %v688 = vld [vmem:[#allocation5 + $0xab8] sm:$0xff]
    %v689 = vld [vmem:[#allocation5 + $0xac0] sm:$0xff]
    %v690 = vld [vmem:[#allocation5 + $0xac8] sm:$0xff]
    %v691 = vld [vmem:[#allocation5 + $0xad0] sm:$0xff]
    %v692 = vld [vmem:[#allocation5 + $0xad8] sm:$0xff]
    %v693 = vld [vmem:[#allocation5 + $0xae0] sm:$0xff]
    %v694 = vld [vmem:[#allocation5 + $0xae8] sm:$0xff]
    %v695 = vld [vmem:[#allocation5 + $0xaf0] sm:$0xff]
    %v696 = vld [vmem:[#allocation5 + $0xaf8] sm:$0xff]
    %v697 = vld [vmem:[#allocation5 + $0xb00] sm:$0xff]
    %v698 = vld [vmem:[#allocation5 + $0xb08] sm:$0xff]
    %v699 = vld [vmem:[#allocation5 + $0xb10] sm:$0xff]
    %v700 = vld [vmem:[#allocation5 + $0xb18] sm:$0xff]
    %v701 = vld [vmem:[#allocation5 + $0xb20] sm:$0xff]
    %v702 = vld [vmem:[#allocation5 + $0xb28] sm:$0xff]
    %v703 = vld [vmem:[#allocation5 + $0xb30] sm:$0xff]
    %v704 = vld [vmem:[#allocation5 + $0xb38] sm:$0xff]
    %v705 = vld [vmem:[#allocation5 + $0xb40] sm:$0xff]
    %v706 = vld [vmem:[#allocation5 + $0xb48] sm:$0xff]
    %v707 = vld [vmem:[#allocation5 + $0xb50] sm:$0xff]
    %v708 = vld [vmem:[#allocation5 + $0xb58] sm:$0xff]
    %v709 = vld [vmem:[#allocation5 + $0xb60] sm:$0xff]
    %v710 = vld [vmem:[#allocation5 + $0xb68] sm:$0xff]
    %v711 = vld [vmem:[#allocation5 + $0xb70] sm:$0xff]
    %v712 = vld [vmem:[#allocation5 + $0xb78] sm:$0xff]
    %v713 = vld [vmem:[#allocation5 + $0xb80] sm:$0xff]
    %v714 = vld [vmem:[#allocation5 + $0xb88] sm:$0xff]
    %v715 = vld [vmem:[#allocation5 + $0xb90] sm:$0xff]
    %v716 = vld [vmem:[#allocation5 + $0xb98] sm:$0xff]
    %v717 = vld [vmem:[#allocation5 + $0xba0] sm:$0xff]
    %v718 = vld [vmem:[#allocation5 + $0xba8] sm:$0xff]
    %v719 = vld [vmem:[#allocation5 + $0xbb0] sm:$0xff]
    %v720 = vld [vmem:[#allocation5 + $0xbb8] sm:$0xff]
    %v721 = vld [vmem:[#allocation5 + $0xbc0] sm:$0xff]
    %v722 = vld [vmem:[#allocation5 + $0xbc8] sm:$0xff]
    %v723 = vld [vmem:[#allocation5 + $0xbd0] sm:$0xff]
    %v724 = vld [vmem:[#allocation5 + $0xbd8] sm:$0xff]
    %v725 = vld [vmem:[#allocation5 + $0xbe0] sm:$0xff]
    %v726 = vld [vmem:[#allocation5 + $0xbe8] sm:$0xff]
    %v727 = vld [vmem:[#allocation5 + $0xbf0] sm:$0xff]
    %v728 = vld [vmem:[#allocation5 + $0xbf8] sm:$0xff]
    %v729 = vld [vmem:[#allocation7] sm:$0xff]
    %v731 = vperm.slane %v729, 0
    %v732 = vperm.slane %v729, 1
    %v733 = vperm.slane %v729, 2
    %v734 = vperm.slane %v729, 3
    %v735 = vperm.slane %v729, 4
    %v736 = vperm.slane %v729, 5
    %v737 = vperm.slane %v729, 6
    %v738 = vperm.slane %v729, 7
    %v1131 = vunpack.c.l.b16 %v345
    %v1132 = vunpack.c.h.b16 %v345
    %v1133 = vunpack.c.l.b16 %v346
    %v1134 = vunpack.c.h.b16 %v346
    %v1135 = vunpack.c.l.b16 %v347
    %v1136 = vunpack.c.h.b16 %v347
    %v1137 = vunpack.c.l.b16 %v348
    %v1138 = vunpack.c.h.b16 %v348
    %v1139 = vunpack.c.l.b16 %v349
    %v1140 = vunpack.c.h.b16 %v349
    %v1141 = vunpack.c.l.b16 %v350
    %v1142 = vunpack.c.h.b16 %v350
    %v1143 = vunpack.c.l.b16 %v351
    %v1144 = vunpack.c.h.b16 %v351
    %v1145 = vunpack.c.l.b16 %v352
    %v1146 = vunpack.c.h.b16 %v352
    %v1147 = vunpack.c.l.b16 %v353
    %v1148 = vunpack.c.h.b16 %v353
    %v1149 = vunpack.c.l.b16 %v354
    %v1150 = vunpack.c.h.b16 %v354
    %v1151 = vunpack.c.l.b16 %v355
    %v1152 = vunpack.c.h.b16 %v355
    %v1153 = vunpack.c.l.b16 %v356
    %v1154 = vunpack.c.h.b16 %v356
    %v1155 = vunpack.c.l.b16 %v357
    %v1156 = vunpack.c.h.b16 %v357
    %v1157 = vunpack.c.l.b16 %v358
    %v1158 = vunpack.c.h.b16 %v358
    %v1159 = vunpack.c.l.b16 %v359
    %v1160 = vunpack.c.h.b16 %v359
    %v1161 = vunpack.c.l.b16 %v360
    %v1162 = vunpack.c.h.b16 %v360
    %v1163 = vunpack.c.l.b16 %v361
    %v1164 = vunpack.c.h.b16 %v361
    %v1165 = vunpack.c.l.b16 %v362
    %v1166 = vunpack.c.h.b16 %v362
    %v1167 = vunpack.c.l.b16 %v363
    %v1168 = vunpack.c.h.b16 %v363
    %v1169 = vunpack.c.l.b16 %v364
    %v1170 = vunpack.c.h.b16 %v364
    %v1171 = vunpack.c.l.b16 %v365
    %v1172 = vunpack.c.h.b16 %v365
    %v1173 = vunpack.c.l.b16 %v366
    %v1174 = vunpack.c.h.b16 %v366
    %v1175 = vunpack.c.l.b16 %v367
    %v1176 = vunpack.c.h.b16 %v367
    %v1177 = vunpack.c.l.b16 %v368
    %v1178 = vunpack.c.h.b16 %v368
    %v1179 = vunpack.c.l.b16 %v369
    %v1180 = vunpack.c.h.b16 %v369
    %v1181 = vunpack.c.l.b16 %v370
    %v1182 = vunpack.c.h.b16 %v370
    %v1183 = vunpack.c.l.b16 %v371
    %v1184 = vunpack.c.h.b16 %v371
    %v1185 = vunpack.c.l.b16 %v372
    %v1186 = vunpack.c.h.b16 %v372
    %v1187 = vunpack.c.l.b16 %v373
    %v1188 = vunpack.c.h.b16 %v373
    %v1189 = vunpack.c.l.b16 %v374
    %v1190 = vunpack.c.h.b16 %v374
    %v1191 = vunpack.c.l.b16 %v375
    %v1192 = vunpack.c.h.b16 %v375
    %v1193 = vunpack.c.l.b16 %v376
    %v1194 = vunpack.c.h.b16 %v376
    %v1195 = vunpack.c.l.b16 %v377
    %v1196 = vunpack.c.h.b16 %v377
    %v1197 = vunpack.c.l.b16 %v378
    %v1198 = vunpack.c.h.b16 %v378
    %v1199 = vunpack.c.l.b16 %v379
    %v1200 = vunpack.c.h.b16 %v379
    %v1201 = vunpack.c.l.b16 %v380
    %v1202 = vunpack.c.h.b16 %v380
    %v1203 = vunpack.c.l.b16 %v381
    %v1204 = vunpack.c.h.b16 %v381
    %v1205 = vunpack.c.l.b16 %v382
    %v1206 = vunpack.c.h.b16 %v382
    %v1207 = vunpack.c.l.b16 %v383
    %v1208 = vunpack.c.h.b16 %v383
    %v1209 = vunpack.c.l.b16 %v384
    %v1210 = vunpack.c.h.b16 %v384
    %v1211 = vunpack.c.l.b16 %v385
    %v1212 = vunpack.c.h.b16 %v385
    %v1213 = vunpack.c.l.b16 %v386
    %v1214 = vunpack.c.h.b16 %v386
    %v1215 = vunpack.c.l.b16 %v387
    %v1216 = vunpack.c.h.b16 %v387
    %v1217 = vunpack.c.l.b16 %v388
    %v1218 = vunpack.c.h.b16 %v388
    %v1219 = vunpack.c.l.b16 %v389
    %v1220 = vunpack.c.h.b16 %v389
    %v1221 = vunpack.c.l.b16 %v390
    %v1222 = vunpack.c.h.b16 %v390
    %v1223 = vunpack.c.l.b16 %v391
    %v1224 = vunpack.c.h.b16 %v391
    %v1225 = vunpack.c.l.b16 %v392
    %v1226 = vunpack.c.h.b16 %v392
    %v1227 = vunpack.c.l.b16 %v393
    %v1228 = vunpack.c.h.b16 %v393
    %v1229 = vunpack.c.l.b16 %v394
    %v1230 = vunpack.c.h.b16 %v394
    %v1231 = vunpack.c.l.b16 %v395
    %v1232 = vunpack.c.h.b16 %v395
    %v1233 = vunpack.c.l.b16 %v396
    %v1234 = vunpack.c.h.b16 %v396
    %v1235 = vunpack.c.l.b16 %v397
    %v1236 = vunpack.c.h.b16 %v397
    %v1237 = vunpack.c.l.b16 %v398
    %v1238 = vunpack.c.h.b16 %v398
    %v1239 = vunpack.c.l.b16 %v399
    %v1240 = vunpack.c.h.b16 %v399
    %v1241 = vunpack.c.l.b16 %v400
    %v1242 = vunpack.c.h.b16 %v400
    %v1243 = vunpack.c.l.b16 %v401
    %v1244 = vunpack.c.h.b16 %v401
    %v1245 = vunpack.c.l.b16 %v402
    %v1246 = vunpack.c.h.b16 %v402
    %v1247 = vunpack.c.l.b16 %v403
    %v1248 = vunpack.c.h.b16 %v403
    %v1249 = vunpack.c.l.b16 %v404
    %v1250 = vunpack.c.h.b16 %v404
    %v1251 = vunpack.c.l.b16 %v405
    %v1252 = vunpack.c.h.b16 %v405
    %v1253 = vunpack.c.l.b16 %v406
    %v1254 = vunpack.c.h.b16 %v406
    %v1255 = vunpack.c.l.b16 %v407
    %v1256 = vunpack.c.h.b16 %v407
    %v1257 = vunpack.c.l.b16 %v408
    %v1258 = vunpack.c.h.b16 %v408
    %v1259 = vunpack.c.l.b16 %v409
    %v1260 = vunpack.c.h.b16 %v409
    %v1261 = vunpack.c.l.b16 %v410
    %v1262 = vunpack.c.h.b16 %v410
    %v1263 = vunpack.c.l.b16 %v411
    %v1264 = vunpack.c.h.b16 %v411
    %v1265 = vunpack.c.l.b16 %v412
    %v1266 = vunpack.c.h.b16 %v412
    %v1267 = vunpack.c.l.b16 %v413
    %v1268 = vunpack.c.h.b16 %v413
    %v1269 = vunpack.c.l.b16 %v414
    %v1270 = vunpack.c.h.b16 %v414
    %v1271 = vunpack.c.l.b16 %v415
    %v1272 = vunpack.c.h.b16 %v415
    %v1273 = vunpack.c.l.b16 %v416
    %v1274 = vunpack.c.h.b16 %v416
    %v1275 = vunpack.c.l.b16 %v417
    %v1276 = vunpack.c.h.b16 %v417
    %v1277 = vunpack.c.l.b16 %v418
    %v1278 = vunpack.c.h.b16 %v418
    %v1279 = vunpack.c.l.b16 %v419
    %v1280 = vunpack.c.h.b16 %v419
    %v1281 = vunpack.c.l.b16 %v420
    %v1282 = vunpack.c.h.b16 %v420
    %v1283 = vunpack.c.l.b16 %v421
    %v1284 = vunpack.c.h.b16 %v421
    %v1285 = vunpack.c.l.b16 %v422
    %v1286 = vunpack.c.h.b16 %v422
    %v1287 = vunpack.c.l.b16 %v423
    %v1288 = vunpack.c.h.b16 %v423
    %v1289 = vunpack.c.l.b16 %v424
    %v1290 = vunpack.c.h.b16 %v424
    %v1291 = vunpack.c.l.b16 %v425
    %v1292 = vunpack.c.h.b16 %v425
    %v1293 = vunpack.c.l.b16 %v426
    %v1294 = vunpack.c.h.b16 %v426
    %v1295 = vunpack.c.l.b16 %v427
    %v1296 = vunpack.c.h.b16 %v427
    %v1297 = vunpack.c.l.b16 %v428
    %v1298 = vunpack.c.h.b16 %v428
    %v1299 = vunpack.c.l.b16 %v429
    %v1300 = vunpack.c.h.b16 %v429
    %v1301 = vunpack.c.l.b16 %v430
    %v1302 = vunpack.c.h.b16 %v430
    %v1303 = vunpack.c.l.b16 %v431
    %v1304 = vunpack.c.h.b16 %v431
    %v1305 = vunpack.c.l.b16 %v432
    %v1306 = vunpack.c.h.b16 %v432
    %v1307 = vunpack.c.l.b16 %v433
    %v1308 = vunpack.c.h.b16 %v433
    %v1309 = vunpack.c.l.b16 %v434
    %v1310 = vunpack.c.h.b16 %v434
    %v1311 = vunpack.c.l.b16 %v435
    %v1312 = vunpack.c.h.b16 %v435
    %v1313 = vunpack.c.l.b16 %v436
    %v1314 = vunpack.c.h.b16 %v436
    %v1315 = vunpack.c.l.b16 %v437
    %v1316 = vunpack.c.h.b16 %v437
    %v1317 = vunpack.c.l.b16 %v438
    %v1318 = vunpack.c.h.b16 %v438
    %v1319 = vunpack.c.l.b16 %v439
    %v1320 = vunpack.c.h.b16 %v439
    %v1321 = vunpack.c.l.b16 %v440
    %v1322 = vunpack.c.h.b16 %v440
    %v1323 = vunpack.c.l.b16 %v441
    %v1324 = vunpack.c.h.b16 %v441
    %v1325 = vunpack.c.l.b16 %v442
    %v1326 = vunpack.c.h.b16 %v442
    %v1327 = vunpack.c.l.b16 %v443
    %v1328 = vunpack.c.h.b16 %v443
    %v1329 = vunpack.c.l.b16 %v444
    %v1330 = vunpack.c.h.b16 %v444
    %v1331 = vunpack.c.l.b16 %v445
    %v1332 = vunpack.c.h.b16 %v445
    %v1333 = vunpack.c.l.b16 %v446
    %v1334 = vunpack.c.h.b16 %v446
    %v1335 = vunpack.c.l.b16 %v447
    %v1336 = vunpack.c.h.b16 %v447
    %v1337 = vunpack.c.l.b16 %v448
    %v1338 = vunpack.c.h.b16 %v448
    %v1339 = vunpack.c.l.b16 %v449
    %v1340 = vunpack.c.h.b16 %v449
    %v1341 = vunpack.c.l.b16 %v450
    %v1342 = vunpack.c.h.b16 %v450
    %v1343 = vunpack.c.l.b16 %v451
    %v1344 = vunpack.c.h.b16 %v451
    %v1345 = vunpack.c.l.b16 %v452
    %v1346 = vunpack.c.h.b16 %v452
    %v1347 = vunpack.c.l.b16 %v453
    %v1348 = vunpack.c.h.b16 %v453
    %v1349 = vunpack.c.l.b16 %v454
    %v1350 = vunpack.c.h.b16 %v454
    %v1351 = vunpack.c.l.b16 %v455
    %v1352 = vunpack.c.h.b16 %v455
    %v1353 = vunpack.c.l.b16 %v456
    %v1354 = vunpack.c.h.b16 %v456
    %v1355 = vunpack.c.l.b16 %v457
    %v1356 = vunpack.c.h.b16 %v457
    %v1357 = vunpack.c.l.b16 %v458
    %v1358 = vunpack.c.h.b16 %v458
    %v1359 = vunpack.c.l.b16 %v459
    %v1360 = vunpack.c.h.b16 %v459
    %v1361 = vunpack.c.l.b16 %v460
    %v1362 = vunpack.c.h.b16 %v460
    %v1363 = vunpack.c.l.b16 %v461
    %v1364 = vunpack.c.h.b16 %v461
    %v1365 = vunpack.c.l.b16 %v462
    %v1366 = vunpack.c.h.b16 %v462
    %v1367 = vunpack.c.l.b16 %v463
    %v1368 = vunpack.c.h.b16 %v463
    %v1369 = vunpack.c.l.b16 %v464
    %v1370 = vunpack.c.h.b16 %v464
    %v1371 = vunpack.c.l.b16 %v465
    %v1372 = vunpack.c.h.b16 %v465
    %v1373 = vunpack.c.l.b16 %v466
    %v1374 = vunpack.c.h.b16 %v466
    %v1375 = vunpack.c.l.b16 %v467
    %v1376 = vunpack.c.h.b16 %v467
    %v1377 = vunpack.c.l.b16 %v468
    %v1378 = vunpack.c.h.b16 %v468
    %v1379 = vunpack.c.l.b16 %v469
    %v1380 = vunpack.c.h.b16 %v469
    %v1381 = vunpack.c.l.b16 %v470
    %v1382 = vunpack.c.h.b16 %v470
    %v1383 = vunpack.c.l.b16 %v471
    %v1384 = vunpack.c.h.b16 %v471
    %v1385 = vunpack.c.l.b16 %v472
    %v1386 = vunpack.c.h.b16 %v472
    %v1387 = vunpack.c.l.b16 %v473
    %v1388 = vunpack.c.h.b16 %v473
    %v1389 = vunpack.c.l.b16 %v474
    %v1390 = vunpack.c.h.b16 %v474
    %v1391 = vunpack.c.l.b16 %v475
    %v1392 = vunpack.c.h.b16 %v475
    %v1393 = vunpack.c.l.b16 %v476
    %v1394 = vunpack.c.h.b16 %v476
    %v1395 = vunpack.c.l.b16 %v477
    %v1396 = vunpack.c.h.b16 %v477
    %v1397 = vunpack.c.l.b16 %v478
    %v1398 = vunpack.c.h.b16 %v478
    %v1399 = vunpack.c.l.b16 %v479
    %v1400 = vunpack.c.h.b16 %v479
    %v1401 = vunpack.c.l.b16 %v480
    %v1402 = vunpack.c.h.b16 %v480
    %v1403 = vunpack.c.l.b16 %v481
    %v1404 = vunpack.c.h.b16 %v481
    %v1405 = vunpack.c.l.b16 %v482
    %v1406 = vunpack.c.h.b16 %v482
    %v1407 = vunpack.c.l.b16 %v483
    %v1408 = vunpack.c.h.b16 %v483
    %v1409 = vunpack.c.l.b16 %v484
    %v1410 = vunpack.c.h.b16 %v484
    %v1411 = vunpack.c.l.b16 %v485
    %v1412 = vunpack.c.h.b16 %v485
    %v1413 = vunpack.c.l.b16 %v486
    %v1414 = vunpack.c.h.b16 %v486
    %v1415 = vunpack.c.l.b16 %v487
    %v1416 = vunpack.c.h.b16 %v487
    %v1417 = vunpack.c.l.b16 %v488
    %v1418 = vunpack.c.h.b16 %v488
    %v1419 = vunpack.c.l.b16 %v489
    %v1420 = vunpack.c.h.b16 %v489
    %v1421 = vunpack.c.l.b16 %v490
    %v1422 = vunpack.c.h.b16 %v490
    %v1423 = vunpack.c.l.b16 %v491
    %v1424 = vunpack.c.h.b16 %v491
    %v1425 = vunpack.c.l.b16 %v492
    %v1426 = vunpack.c.h.b16 %v492
    %v1427 = vunpack.c.l.b16 %v493
    %v1428 = vunpack.c.h.b16 %v493
    %v1429 = vunpack.c.l.b16 %v494
    %v1430 = vunpack.c.h.b16 %v494
    %v1431 = vunpack.c.l.b16 %v495
    %v1432 = vunpack.c.h.b16 %v495
    %v1433 = vunpack.c.l.b16 %v496
    %v1434 = vunpack.c.h.b16 %v496
    %v1435 = vunpack.c.l.b16 %v497
    %v1436 = vunpack.c.h.b16 %v497
    %v1437 = vunpack.c.l.b16 %v498
    %v1438 = vunpack.c.h.b16 %v498
    %v1439 = vunpack.c.l.b16 %v499
    %v1440 = vunpack.c.h.b16 %v499
    %v1441 = vunpack.c.l.b16 %v500
    %v1442 = vunpack.c.h.b16 %v500
    %v1443 = vunpack.c.l.b16 %v501
    %v1444 = vunpack.c.h.b16 %v501
    %v1445 = vunpack.c.l.b16 %v502
    %v1446 = vunpack.c.h.b16 %v502
    %v1447 = vunpack.c.l.b16 %v503
    %v1448 = vunpack.c.h.b16 %v503
    %v1449 = vunpack.c.l.b16 %v504
    %v1450 = vunpack.c.h.b16 %v504
    %v1451 = vunpack.c.l.b16 %v505
    %v1452 = vunpack.c.h.b16 %v505
    %v1453 = vunpack.c.l.b16 %v506
    %v1454 = vunpack.c.h.b16 %v506
    %v1455 = vunpack.c.l.b16 %v507
    %v1456 = vunpack.c.h.b16 %v507
    %v1457 = vunpack.c.l.b16 %v508
    %v1458 = vunpack.c.h.b16 %v508
    %v1459 = vunpack.c.l.b16 %v509
    %v1460 = vunpack.c.h.b16 %v509
    %v1461 = vunpack.c.l.b16 %v510
    %v1462 = vunpack.c.h.b16 %v510
    %v1463 = vunpack.c.l.b16 %v511
    %v1464 = vunpack.c.h.b16 %v511
    %v1465 = vunpack.c.l.b16 %v512
    %v1466 = vunpack.c.h.b16 %v512
    %v1467 = vunpack.c.l.b16 %v513
    %v1468 = vunpack.c.h.b16 %v513
    %v1469 = vunpack.c.l.b16 %v514
    %v1470 = vunpack.c.h.b16 %v514
    %v1471 = vunpack.c.l.b16 %v515
    %v1472 = vunpack.c.h.b16 %v515
    %v1473 = vunpack.c.l.b16 %v516
    %v1474 = vunpack.c.h.b16 %v516
    %v1475 = vunpack.c.l.b16 %v517
    %v1476 = vunpack.c.h.b16 %v517
    %v1477 = vunpack.c.l.b16 %v518
    %v1478 = vunpack.c.h.b16 %v518
    %v1479 = vunpack.c.l.b16 %v519
    %v1480 = vunpack.c.h.b16 %v519
    %v1481 = vunpack.c.l.b16 %v520
    %v1482 = vunpack.c.h.b16 %v520
    %v1483 = vunpack.c.l.b16 %v521
    %v1484 = vunpack.c.h.b16 %v521
    %v1485 = vunpack.c.l.b16 %v522
    %v1486 = vunpack.c.h.b16 %v522
    %v1487 = vunpack.c.l.b16 %v523
    %v1488 = vunpack.c.h.b16 %v523
    %v1489 = vunpack.c.l.b16 %v524
    %v1490 = vunpack.c.h.b16 %v524
    %v1491 = vunpack.c.l.b16 %v525
    %v1492 = vunpack.c.h.b16 %v525
    %v1493 = vunpack.c.l.b16 %v526
    %v1494 = vunpack.c.h.b16 %v526
    %v1495 = vunpack.c.l.b16 %v527
    %v1496 = vunpack.c.h.b16 %v527
    %v1497 = vunpack.c.l.b16 %v528
    %v1498 = vunpack.c.h.b16 %v528
    %v1499 = vunpack.c.l.b16 %v529
    %v1500 = vunpack.c.h.b16 %v529
    %v1501 = vunpack.c.l.b16 %v530
    %v1502 = vunpack.c.h.b16 %v530
    %v1503 = vunpack.c.l.b16 %v531
    %v1504 = vunpack.c.h.b16 %v531
    %v1505 = vunpack.c.l.b16 %v532
    %v1506 = vunpack.c.h.b16 %v532
    %v1507 = vunpack.c.l.b16 %v533
    %v1508 = vunpack.c.h.b16 %v533
    %v1509 = vunpack.c.l.b16 %v534
    %v1510 = vunpack.c.h.b16 %v534
    %v1511 = vunpack.c.l.b16 %v535
    %v1512 = vunpack.c.h.b16 %v535
    %v1513 = vunpack.c.l.b16 %v536
    %v1514 = vunpack.c.h.b16 %v536
    %v1515 = vunpack.c.l.b16 %v537
    %v1516 = vunpack.c.h.b16 %v537
    %v1517 = vunpack.c.l.b16 %v538
    %v1518 = vunpack.c.h.b16 %v538
    %v1519 = vunpack.c.l.b16 %v539
    %v1520 = vunpack.c.h.b16 %v539
    %v1521 = vunpack.c.l.b16 %v540
    %v1522 = vunpack.c.h.b16 %v540
    %v1523 = vunpack.c.l.b16 %v541
    %v1524 = vunpack.c.h.b16 %v541
    %v1525 = vunpack.c.l.b16 %v542
    %v1526 = vunpack.c.h.b16 %v542
    %v1527 = vunpack.c.l.b16 %v543
    %v1528 = vunpack.c.h.b16 %v543
    %v1529 = vunpack.c.l.b16 %v544
    %v1530 = vunpack.c.h.b16 %v544
    %v1531 = vunpack.c.l.b16 %v545
    %v1532 = vunpack.c.h.b16 %v545
    %v1533 = vunpack.c.l.b16 %v546
    %v1534 = vunpack.c.h.b16 %v546
    %v1535 = vunpack.c.l.b16 %v547
    %v1536 = vunpack.c.h.b16 %v547
    %v1537 = vunpack.c.l.b16 %v548
    %v1538 = vunpack.c.h.b16 %v548
    %v1539 = vunpack.c.l.b16 %v549
    %v1540 = vunpack.c.h.b16 %v549
    %v1541 = vunpack.c.l.b16 %v550
    %v1542 = vunpack.c.h.b16 %v550
    %v1543 = vunpack.c.l.b16 %v551
    %v1544 = vunpack.c.h.b16 %v551
    %v1545 = vunpack.c.l.b16 %v552
    %v1546 = vunpack.c.h.b16 %v552
    %v1547 = vunpack.c.l.b16 %v553
    %v1548 = vunpack.c.h.b16 %v553
    %v1549 = vunpack.c.l.b16 %v554
    %v1550 = vunpack.c.h.b16 %v554
    %v1551 = vunpack.c.l.b16 %v555
    %v1552 = vunpack.c.h.b16 %v555
    %v1553 = vunpack.c.l.b16 %v556
    %v1554 = vunpack.c.h.b16 %v556
    %v1555 = vunpack.c.l.b16 %v557
    %v1556 = vunpack.c.h.b16 %v557
    %v1557 = vunpack.c.l.b16 %v558
    %v1558 = vunpack.c.h.b16 %v558
    %v1559 = vunpack.c.l.b16 %v559
    %v1560 = vunpack.c.h.b16 %v559
    %v1561 = vunpack.c.l.b16 %v560
    %v1562 = vunpack.c.h.b16 %v560
    %v1563 = vunpack.c.l.b16 %v561
    %v1564 = vunpack.c.h.b16 %v561
    %v1565 = vunpack.c.l.b16 %v562
    %v1566 = vunpack.c.h.b16 %v562
    %v1567 = vunpack.c.l.b16 %v563
    %v1568 = vunpack.c.h.b16 %v563
    %v1569 = vunpack.c.l.b16 %v564
    %v1570 = vunpack.c.h.b16 %v564
    %v1571 = vunpack.c.l.b16 %v565
    %v1572 = vunpack.c.h.b16 %v565
    %v1573 = vunpack.c.l.b16 %v566
    %v1574 = vunpack.c.h.b16 %v566
    %v1575 = vunpack.c.l.b16 %v567
    %v1576 = vunpack.c.h.b16 %v567
    %v1577 = vunpack.c.l.b16 %v568
    %v1578 = vunpack.c.h.b16 %v568
    %v1579 = vunpack.c.l.b16 %v569
    %v1580 = vunpack.c.h.b16 %v569
    %v1581 = vunpack.c.l.b16 %v570
    %v1582 = vunpack.c.h.b16 %v570
    %v1583 = vunpack.c.l.b16 %v571
    %v1584 = vunpack.c.h.b16 %v571
    %v1585 = vunpack.c.l.b16 %v572
    %v1586 = vunpack.c.h.b16 %v572
    %v1587 = vunpack.c.l.b16 %v573
    %v1588 = vunpack.c.h.b16 %v573
    %v1589 = vunpack.c.l.b16 %v574
    %v1590 = vunpack.c.h.b16 %v574
    %v1591 = vunpack.c.l.b16 %v575
    %v1592 = vunpack.c.h.b16 %v575
    %v1593 = vunpack.c.l.b16 %v576
    %v1594 = vunpack.c.h.b16 %v576
    %v1595 = vunpack.c.l.b16 %v577
    %v1596 = vunpack.c.h.b16 %v577
    %v1597 = vunpack.c.l.b16 %v578
    %v1598 = vunpack.c.h.b16 %v578
    %v1599 = vunpack.c.l.b16 %v579
    %v1600 = vunpack.c.h.b16 %v579
    %v1601 = vunpack.c.l.b16 %v580
    %v1602 = vunpack.c.h.b16 %v580
    %v1603 = vunpack.c.l.b16 %v581
    %v1604 = vunpack.c.h.b16 %v581
    %v1605 = vunpack.c.l.b16 %v582
    %v1606 = vunpack.c.h.b16 %v582
    %v1607 = vunpack.c.l.b16 %v583
    %v1608 = vunpack.c.h.b16 %v583
    %v1609 = vunpack.c.l.b16 %v584
    %v1610 = vunpack.c.h.b16 %v584
    %v1611 = vunpack.c.l.b16 %v585
    %v1612 = vunpack.c.h.b16 %v585
    %v1613 = vunpack.c.l.b16 %v586
    %v1614 = vunpack.c.h.b16 %v586
    %v1615 = vunpack.c.l.b16 %v587
    %v1616 = vunpack.c.h.b16 %v587
    %v1617 = vunpack.c.l.b16 %v588
    %v1618 = vunpack.c.h.b16 %v588
    %v1619 = vunpack.c.l.b16 %v589
    %v1620 = vunpack.c.h.b16 %v589
    %v1621 = vunpack.c.l.b16 %v590
    %v1622 = vunpack.c.h.b16 %v590
    %v1623 = vunpack.c.l.b16 %v591
    %v1624 = vunpack.c.h.b16 %v591
    %v1625 = vunpack.c.l.b16 %v592
    %v1626 = vunpack.c.h.b16 %v592
    %v1627 = vunpack.c.l.b16 %v593
    %v1628 = vunpack.c.h.b16 %v593
    %v1629 = vunpack.c.l.b16 %v594
    %v1630 = vunpack.c.h.b16 %v594
    %v1631 = vunpack.c.l.b16 %v595
    %v1632 = vunpack.c.h.b16 %v595
    %v1633 = vunpack.c.l.b16 %v596
    %v1634 = vunpack.c.h.b16 %v596
    %v1635 = vunpack.c.l.b16 %v597
    %v1636 = vunpack.c.h.b16 %v597
    %v1637 = vunpack.c.l.b16 %v598
    %v1638 = vunpack.c.h.b16 %v598
    %v1639 = vunpack.c.l.b16 %v599
    %v1640 = vunpack.c.h.b16 %v599
    %v1641 = vunpack.c.l.b16 %v600
    %v1642 = vunpack.c.h.b16 %v600
    %v1643 = vunpack.c.l.b16 %v601
    %v1644 = vunpack.c.h.b16 %v601
    %v1645 = vunpack.c.l.b16 %v602
    %v1646 = vunpack.c.h.b16 %v602
    %v1647 = vunpack.c.l.b16 %v603
    %v1648 = vunpack.c.h.b16 %v603
    %v1649 = vunpack.c.l.b16 %v604
    %v1650 = vunpack.c.h.b16 %v604
    %v1651 = vunpack.c.l.b16 %v605
    %v1652 = vunpack.c.h.b16 %v605
    %v1653 = vunpack.c.l.b16 %v606
    %v1654 = vunpack.c.h.b16 %v606
    %v1655 = vunpack.c.l.b16 %v607
    %v1656 = vunpack.c.h.b16 %v607
    %v1657 = vunpack.c.l.b16 %v608
    %v1658 = vunpack.c.h.b16 %v608
    %v1659 = vunpack.c.l.b16 %v609
    %v1660 = vunpack.c.h.b16 %v609
    %v1661 = vunpack.c.l.b16 %v610
    %v1662 = vunpack.c.h.b16 %v610
    %v1663 = vunpack.c.l.b16 %v611
    %v1664 = vunpack.c.h.b16 %v611
    %v1665 = vunpack.c.l.b16 %v612
    %v1666 = vunpack.c.h.b16 %v612
    %v1667 = vunpack.c.l.b16 %v613
    %v1668 = vunpack.c.h.b16 %v613
    %v1669 = vunpack.c.l.b16 %v614
    %v1670 = vunpack.c.h.b16 %v614
    %v1671 = vunpack.c.l.b16 %v615
    %v1672 = vunpack.c.h.b16 %v615
    %v1673 = vunpack.c.l.b16 %v616
    %v1674 = vunpack.c.h.b16 %v616
    %v1675 = vunpack.c.l.b16 %v617
    %v1676 = vunpack.c.h.b16 %v617
    %v1677 = vunpack.c.l.b16 %v618
    %v1678 = vunpack.c.h.b16 %v618
    %v1679 = vunpack.c.l.b16 %v619
    %v1680 = vunpack.c.h.b16 %v619
    %v1681 = vunpack.c.l.b16 %v620
    %v1682 = vunpack.c.h.b16 %v620
    %v1683 = vunpack.c.l.b16 %v621
    %v1684 = vunpack.c.h.b16 %v621
    %v1685 = vunpack.c.l.b16 %v622
    %v1686 = vunpack.c.h.b16 %v622
    %v1687 = vunpack.c.l.b16 %v623
    %v1688 = vunpack.c.h.b16 %v623
    %v1689 = vunpack.c.l.b16 %v624
    %v1690 = vunpack.c.h.b16 %v624
    %v1691 = vunpack.c.l.b16 %v625
    %v1692 = vunpack.c.h.b16 %v625
    %v1693 = vunpack.c.l.b16 %v626
    %v1694 = vunpack.c.h.b16 %v626
    %v1695 = vunpack.c.l.b16 %v627
    %v1696 = vunpack.c.h.b16 %v627
    %v1697 = vunpack.c.l.b16 %v628
    %v1698 = vunpack.c.h.b16 %v628
    %v1699 = vunpack.c.l.b16 %v629
    %v1700 = vunpack.c.h.b16 %v629
    %v1701 = vunpack.c.l.b16 %v630
    %v1702 = vunpack.c.h.b16 %v630
    %v1703 = vunpack.c.l.b16 %v631
    %v1704 = vunpack.c.h.b16 %v631
    %v1705 = vunpack.c.l.b16 %v632
    %v1706 = vunpack.c.h.b16 %v632
    %v1707 = vunpack.c.l.b16 %v633
    %v1708 = vunpack.c.h.b16 %v633
    %v1709 = vunpack.c.l.b16 %v634
    %v1710 = vunpack.c.h.b16 %v634
    %v1711 = vunpack.c.l.b16 %v635
    %v1712 = vunpack.c.h.b16 %v635
    %v1713 = vunpack.c.l.b16 %v636
    %v1714 = vunpack.c.h.b16 %v636
    %v1715 = vunpack.c.l.b16 %v637
    %v1716 = vunpack.c.h.b16 %v637
    %v1717 = vunpack.c.l.b16 %v638
    %v1718 = vunpack.c.h.b16 %v638
    %v1719 = vunpack.c.l.b16 %v639
    %v1720 = vunpack.c.h.b16 %v639
    %v1721 = vunpack.c.l.b16 %v640
    %v1722 = vunpack.c.h.b16 %v640
    %v1723 = vunpack.c.l.b16 %v641
    %v1724 = vunpack.c.h.b16 %v641
    %v1725 = vunpack.c.l.b16 %v642
    %v1726 = vunpack.c.h.b16 %v642
    %v1727 = vunpack.c.l.b16 %v643
    %v1728 = vunpack.c.h.b16 %v643
    %v1729 = vunpack.c.l.b16 %v644
    %v1730 = vunpack.c.h.b16 %v644
    %v1731 = vunpack.c.l.b16 %v645
    %v1732 = vunpack.c.h.b16 %v645
    %v1733 = vunpack.c.l.b16 %v646
    %v1734 = vunpack.c.h.b16 %v646
    %v1735 = vunpack.c.l.b16 %v647
    %v1736 = vunpack.c.h.b16 %v647
    %v1737 = vunpack.c.l.b16 %v648
    %v1738 = vunpack.c.h.b16 %v648
    %v1739 = vunpack.c.l.b16 %v649
    %v1740 = vunpack.c.h.b16 %v649
    %v1741 = vunpack.c.l.b16 %v650
    %v1742 = vunpack.c.h.b16 %v650
    %v1743 = vunpack.c.l.b16 %v651
    %v1744 = vunpack.c.h.b16 %v651
    %v1745 = vunpack.c.l.b16 %v652
    %v1746 = vunpack.c.h.b16 %v652
    %v1747 = vunpack.c.l.b16 %v653
    %v1748 = vunpack.c.h.b16 %v653
    %v1749 = vunpack.c.l.b16 %v654
    %v1750 = vunpack.c.h.b16 %v654
    %v1751 = vunpack.c.l.b16 %v655
    %v1752 = vunpack.c.h.b16 %v655
    %v1753 = vunpack.c.l.b16 %v656
    %v1754 = vunpack.c.h.b16 %v656
    %v1755 = vunpack.c.l.b16 %v657
    %v1756 = vunpack.c.h.b16 %v657
    %v1757 = vunpack.c.l.b16 %v658
    %v1758 = vunpack.c.h.b16 %v658
    %v1759 = vunpack.c.l.b16 %v659
    %v1760 = vunpack.c.h.b16 %v659
    %v1761 = vunpack.c.l.b16 %v660
    %v1762 = vunpack.c.h.b16 %v660
    %v1763 = vunpack.c.l.b16 %v661
    %v1764 = vunpack.c.h.b16 %v661
    %v1765 = vunpack.c.l.b16 %v662
    %v1766 = vunpack.c.h.b16 %v662
    %v1767 = vunpack.c.l.b16 %v663
    %v1768 = vunpack.c.h.b16 %v663
    %v1769 = vunpack.c.l.b16 %v664
    %v1770 = vunpack.c.h.b16 %v664
    %v1771 = vunpack.c.l.b16 %v665
    %v1772 = vunpack.c.h.b16 %v665
    %v1773 = vunpack.c.l.b16 %v666
    %v1774 = vunpack.c.h.b16 %v666
    %v1775 = vunpack.c.l.b16 %v667
    %v1776 = vunpack.c.h.b16 %v667
    %v1777 = vunpack.c.l.b16 %v668
    %v1778 = vunpack.c.h.b16 %v668
    %v1779 = vunpack.c.l.b16 %v669
    %v1780 = vunpack.c.h.b16 %v669
    %v1781 = vunpack.c.l.b16 %v670
    %v1782 = vunpack.c.h.b16 %v670
    %v1783 = vunpack.c.l.b16 %v671
    %v1784 = vunpack.c.h.b16 %v671
    %v1785 = vunpack.c.l.b16 %v672
    %v1786 = vunpack.c.h.b16 %v672
    %v1787 = vunpack.c.l.b16 %v673
    %v1788 = vunpack.c.h.b16 %v673
    %v1789 = vunpack.c.l.b16 %v674
    %v1790 = vunpack.c.h.b16 %v674
    %v1791 = vunpack.c.l.b16 %v675
    %v1792 = vunpack.c.h.b16 %v675
    %v1793 = vunpack.c.l.b16 %v676
    %v1794 = vunpack.c.h.b16 %v676
    %v1795 = vunpack.c.l.b16 %v677
    %v1796 = vunpack.c.h.b16 %v677
    %v1797 = vunpack.c.l.b16 %v678
    %v1798 = vunpack.c.h.b16 %v678
    %v1799 = vunpack.c.l.b16 %v679
    %v1800 = vunpack.c.h.b16 %v679
    %v1801 = vunpack.c.l.b16 %v680
    %v1802 = vunpack.c.h.b16 %v680
    %v1803 = vunpack.c.l.b16 %v681
    %v1804 = vunpack.c.h.b16 %v681
    %v1805 = vunpack.c.l.b16 %v682
    %v1806 = vunpack.c.h.b16 %v682
    %v1807 = vunpack.c.l.b16 %v683
    %v1808 = vunpack.c.h.b16 %v683
    %v1809 = vunpack.c.l.b16 %v684
    %v1810 = vunpack.c.h.b16 %v684
    %v1811 = vunpack.c.l.b16 %v685
    %v1812 = vunpack.c.h.b16 %v685
    %v1813 = vunpack.c.l.b16 %v686
    %v1814 = vunpack.c.h.b16 %v686
    %v1815 = vunpack.c.l.b16 %v687
    %v1816 = vunpack.c.h.b16 %v687
    %v1817 = vunpack.c.l.b16 %v688
    %v1818 = vunpack.c.h.b16 %v688
    %v1819 = vunpack.c.l.b16 %v689
    %v1820 = vunpack.c.h.b16 %v689
    %v1821 = vunpack.c.l.b16 %v690
    %v1822 = vunpack.c.h.b16 %v690
    %v1823 = vunpack.c.l.b16 %v691
    %v1824 = vunpack.c.h.b16 %v691
    %v1825 = vunpack.c.l.b16 %v692
    %v1826 = vunpack.c.h.b16 %v692
    %v1827 = vunpack.c.l.b16 %v693
    %v1828 = vunpack.c.h.b16 %v693
    %v1829 = vunpack.c.l.b16 %v694
    %v1830 = vunpack.c.h.b16 %v694
    %v1831 = vunpack.c.l.b16 %v695
    %v1832 = vunpack.c.h.b16 %v695
    %v1833 = vunpack.c.l.b16 %v696
    %v1834 = vunpack.c.h.b16 %v696
    %v1835 = vunpack.c.l.b16 %v697
    %v1836 = vunpack.c.h.b16 %v697
    %v1837 = vunpack.c.l.b16 %v698
    %v1838 = vunpack.c.h.b16 %v698
    %v1839 = vunpack.c.l.b16 %v699
    %v1840 = vunpack.c.h.b16 %v699
    %v1841 = vunpack.c.l.b16 %v700
    %v1842 = vunpack.c.h.b16 %v700
    %v1843 = vunpack.c.l.b16 %v701
    %v1844 = vunpack.c.h.b16 %v701
    %v1845 = vunpack.c.l.b16 %v702
    %v1846 = vunpack.c.h.b16 %v702
    %v1847 = vunpack.c.l.b16 %v703
    %v1848 = vunpack.c.h.b16 %v703
    %v1849 = vunpack.c.l.b16 %v704
    %v1850 = vunpack.c.h.b16 %v704
    %v1851 = vunpack.c.l.b16 %v705
    %v1852 = vunpack.c.h.b16 %v705
    %v1853 = vunpack.c.l.b16 %v706
    %v1854 = vunpack.c.h.b16 %v706
    %v1855 = vunpack.c.l.b16 %v707
    %v1856 = vunpack.c.h.b16 %v707
    %v1857 = vunpack.c.l.b16 %v708
    %v1858 = vunpack.c.h.b16 %v708
    %v1859 = vunpack.c.l.b16 %v709
    %v1860 = vunpack.c.h.b16 %v709
    %v1861 = vunpack.c.l.b16 %v710
    %v1862 = vunpack.c.h.b16 %v710
    %v1863 = vunpack.c.l.b16 %v711
    %v1864 = vunpack.c.h.b16 %v711
    %v1865 = vunpack.c.l.b16 %v712
    %v1866 = vunpack.c.h.b16 %v712
    %v1867 = vunpack.c.l.b16 %v713
    %v1868 = vunpack.c.h.b16 %v713
    %v1869 = vunpack.c.l.b16 %v714
    %v1870 = vunpack.c.h.b16 %v714
    %v1871 = vunpack.c.l.b16 %v715
    %v1872 = vunpack.c.h.b16 %v715
    %v1873 = vunpack.c.l.b16 %v716
    %v1874 = vunpack.c.h.b16 %v716
    %v1875 = vunpack.c.l.b16 %v717
    %v1876 = vunpack.c.h.b16 %v717
    %v1877 = vunpack.c.l.b16 %v718
    %v1878 = vunpack.c.h.b16 %v718
    %v1879 = vunpack.c.l.b16 %v719
    %v1880 = vunpack.c.h.b16 %v719
    %v1881 = vunpack.c.l.b16 %v720
    %v1882 = vunpack.c.h.b16 %v720
    %v1883 = vunpack.c.l.b16 %v721
    %v1884 = vunpack.c.h.b16 %v721
    %v1885 = vunpack.c.l.b16 %v722
    %v1886 = vunpack.c.h.b16 %v722
    %v1887 = vunpack.c.l.b16 %v723
    %v1888 = vunpack.c.h.b16 %v723
    %v1889 = vunpack.c.l.b16 %v724
    %v1890 = vunpack.c.h.b16 %v724
    %v1891 = vunpack.c.l.b16 %v725
    %v1892 = vunpack.c.h.b16 %v725
    %v1893 = vunpack.c.l.b16 %v726
    %v1894 = vunpack.c.h.b16 %v726
    %v1895 = vunpack.c.l.b16 %v727
    %v1896 = vunpack.c.h.b16 %v727
    %v1897 = vunpack.c.l.b16 %v728
    %v1898 = vunpack.c.h.b16 %v728
    %v1899 = vpack.c.b16 %v1139, %v1131
    %v1900 = vpack.c.b16 %v1140, %v1132
    %v1901 = vpack.c.b16 %v1141, %v1133
    %v1902 = vpack.c.b16 %v1142, %v1134
    %v1903 = vpack.c.b16 %v1143, %v1135
    %v1904 = vpack.c.b16 %v1144, %v1136
    %v1905 = vpack.c.b16 %v1145, %v1137
    %v1906 = vpack.c.b16 %v1146, %v1138
    %v1907 = vpack.c.b16 %v1155, %v1147
    %v1908 = vpack.c.b16 %v1156, %v1148
    %v1909 = vpack.c.b16 %v1157, %v1149
    %v1910 = vpack.c.b16 %v1158, %v1150
    %v1911 = vpack.c.b16 %v1159, %v1151
    %v1912 = vpack.c.b16 %v1160, %v1152
    %v1913 = vpack.c.b16 %v1161, %v1153
    %v1914 = vpack.c.b16 %v1162, %v1154
    %v1915 = vpack.c.b16 %v1171, %v1163
    %v1916 = vpack.c.b16 %v1172, %v1164
    %v1917 = vpack.c.b16 %v1173, %v1165
    %v1918 = vpack.c.b16 %v1174, %v1166
    %v1919 = vpack.c.b16 %v1175, %v1167
    %v1920 = vpack.c.b16 %v1176, %v1168
    %v1921 = vpack.c.b16 %v1177, %v1169
    %v1922 = vpack.c.b16 %v1178, %v1170
    %v1923 = vpack.c.b16 %v1187, %v1179
    %v1924 = vpack.c.b16 %v1188, %v1180
    %v1925 = vpack.c.b16 %v1189, %v1181
    %v1926 = vpack.c.b16 %v1190, %v1182
    %v1927 = vpack.c.b16 %v1191, %v1183
    %v1928 = vpack.c.b16 %v1192, %v1184
    %v1929 = vpack.c.b16 %v1193, %v1185
    %v1930 = vpack.c.b16 %v1194, %v1186
    %v1931 = vpack.c.b16 %v1203, %v1195
    %v1932 = vpack.c.b16 %v1204, %v1196
    %v1933 = vpack.c.b16 %v1205, %v1197
    %v1934 = vpack.c.b16 %v1206, %v1198
    %v1935 = vpack.c.b16 %v1207, %v1199
    %v1936 = vpack.c.b16 %v1208, %v1200
    %v1937 = vpack.c.b16 %v1209, %v1201
    %v1938 = vpack.c.b16 %v1210, %v1202
    %v1939 = vpack.c.b16 %v1219, %v1211
    %v1940 = vpack.c.b16 %v1220, %v1212
    %v1941 = vpack.c.b16 %v1221, %v1213
    %v1942 = vpack.c.b16 %v1222, %v1214
    %v1943 = vpack.c.b16 %v1223, %v1215
    %v1944 = vpack.c.b16 %v1224, %v1216
    %v1945 = vpack.c.b16 %v1225, %v1217
    %v1946 = vpack.c.b16 %v1226, %v1218
    %v1947 = vpack.c.b16 %v1235, %v1227
    %v1948 = vpack.c.b16 %v1236, %v1228
    %v1949 = vpack.c.b16 %v1237, %v1229
    %v1950 = vpack.c.b16 %v1238, %v1230
    %v1951 = vpack.c.b16 %v1239, %v1231
    %v1952 = vpack.c.b16 %v1240, %v1232
    %v1953 = vpack.c.b16 %v1241, %v1233
    %v1954 = vpack.c.b16 %v1242, %v1234
    %v1955 = vpack.c.b16 %v1251, %v1243
    %v1956 = vpack.c.b16 %v1252, %v1244
    %v1957 = vpack.c.b16 %v1253, %v1245
    %v1958 = vpack.c.b16 %v1254, %v1246
    %v1959 = vpack.c.b16 %v1255, %v1247
    %v1960 = vpack.c.b16 %v1256, %v1248
    %v1961 = vpack.c.b16 %v1257, %v1249
    %v1962 = vpack.c.b16 %v1258, %v1250
    %v1963 = vpack.c.b16 %v1267, %v1259
    %v1964 = vpack.c.b16 %v1268, %v1260
    %v1965 = vpack.c.b16 %v1269, %v1261
    %v1966 = vpack.c.b16 %v1270, %v1262
    %v1967 = vpack.c.b16 %v1271, %v1263
    %v1968 = vpack.c.b16 %v1272, %v1264
    %v1969 = vpack.c.b16 %v1273, %v1265
    %v1970 = vpack.c.b16 %v1274, %v1266
    %v1971 = vpack.c.b16 %v1283, %v1275
    %v1972 = vpack.c.b16 %v1284, %v1276
    %v1973 = vpack.c.b16 %v1285, %v1277
    %v1974 = vpack.c.b16 %v1286, %v1278
    %v1975 = vpack.c.b16 %v1287, %v1279
    %v1976 = vpack.c.b16 %v1288, %v1280
    %v1977 = vpack.c.b16 %v1289, %v1281
    %v1978 = vpack.c.b16 %v1290, %v1282
    %v1979 = vpack.c.b16 %v1299, %v1291
    %v1980 = vpack.c.b16 %v1300, %v1292
    %v1981 = vpack.c.b16 %v1301, %v1293
    %v1982 = vpack.c.b16 %v1302, %v1294
    %v1983 = vpack.c.b16 %v1303, %v1295
    %v1984 = vpack.c.b16 %v1304, %v1296
    %v1985 = vpack.c.b16 %v1305, %v1297
    %v1986 = vpack.c.b16 %v1306, %v1298
    %v1987 = vpack.c.b16 %v1315, %v1307
    %v1988 = vpack.c.b16 %v1316, %v1308
    %v1989 = vpack.c.b16 %v1317, %v1309
    %v1990 = vpack.c.b16 %v1318, %v1310
    %v1991 = vpack.c.b16 %v1319, %v1311
    %v1992 = vpack.c.b16 %v1320, %v1312
    %v1993 = vpack.c.b16 %v1321, %v1313
    %v1994 = vpack.c.b16 %v1322, %v1314
    %v1995 = vpack.c.b16 %v1331, %v1323
    %v1996 = vpack.c.b16 %v1332, %v1324
    %v1997 = vpack.c.b16 %v1333, %v1325
    %v1998 = vpack.c.b16 %v1334, %v1326
    %v1999 = vpack.c.b16 %v1335, %v1327
    %v2000 = vpack.c.b16 %v1336, %v1328
    %v2001 = vpack.c.b16 %v1337, %v1329
    %v2002 = vpack.c.b16 %v1338, %v1330
    %v2003 = vpack.c.b16 %v1347, %v1339
    %v2004 = vpack.c.b16 %v1348, %v1340
    %v2005 = vpack.c.b16 %v1349, %v1341
    %v2006 = vpack.c.b16 %v1350, %v1342
    %v2007 = vpack.c.b16 %v1351, %v1343
    %v2008 = vpack.c.b16 %v1352, %v1344
    %v2009 = vpack.c.b16 %v1353, %v1345
    %v2010 = vpack.c.b16 %v1354, %v1346
    %v2011 = vpack.c.b16 %v1363, %v1355
    %v2012 = vpack.c.b16 %v1364, %v1356
    %v2013 = vpack.c.b16 %v1365, %v1357
    %v2014 = vpack.c.b16 %v1366, %v1358
    %v2015 = vpack.c.b16 %v1367, %v1359
    %v2016 = vpack.c.b16 %v1368, %v1360
    %v2017 = vpack.c.b16 %v1369, %v1361
    %v2018 = vpack.c.b16 %v1370, %v1362
    %v2019 = vpack.c.b16 %v1379, %v1371
    %v2020 = vpack.c.b16 %v1380, %v1372
    %v2021 = vpack.c.b16 %v1381, %v1373
    %v2022 = vpack.c.b16 %v1382, %v1374
    %v2023 = vpack.c.b16 %v1383, %v1375
    %v2024 = vpack.c.b16 %v1384, %v1376
    %v2025 = vpack.c.b16 %v1385, %v1377
    %v2026 = vpack.c.b16 %v1386, %v1378
    %v2027 = vpack.c.b16 %v1395, %v1387
    %v2028 = vpack.c.b16 %v1396, %v1388
    %v2029 = vpack.c.b16 %v1397, %v1389
    %v2030 = vpack.c.b16 %v1398, %v1390
    %v2031 = vpack.c.b16 %v1399, %v1391
    %v2032 = vpack.c.b16 %v1400, %v1392
    %v2033 = vpack.c.b16 %v1401, %v1393
    %v2034 = vpack.c.b16 %v1402, %v1394
    %v2035 = vpack.c.b16 %v1411, %v1403
    %v2036 = vpack.c.b16 %v1412, %v1404
    %v2037 = vpack.c.b16 %v1413, %v1405
    %v2038 = vpack.c.b16 %v1414, %v1406
    %v2039 = vpack.c.b16 %v1415, %v1407
    %v2040 = vpack.c.b16 %v1416, %v1408
    %v2041 = vpack.c.b16 %v1417, %v1409
    %v2042 = vpack.c.b16 %v1418, %v1410
    %v2043 = vpack.c.b16 %v1427, %v1419
    %v2044 = vpack.c.b16 %v1428, %v1420
    %v2045 = vpack.c.b16 %v1429, %v1421
    %v2046 = vpack.c.b16 %v1430, %v1422
    %v2047 = vpack.c.b16 %v1431, %v1423
    %v2048 = vpack.c.b16 %v1432, %v1424
    %v2049 = vpack.c.b16 %v1433, %v1425
    %v2050 = vpack.c.b16 %v1434, %v1426
    %v2051 = vpack.c.b16 %v1443, %v1435
    %v2052 = vpack.c.b16 %v1444, %v1436
    %v2053 = vpack.c.b16 %v1445, %v1437
    %v2054 = vpack.c.b16 %v1446, %v1438
    %v2055 = vpack.c.b16 %v1447, %v1439
    %v2056 = vpack.c.b16 %v1448, %v1440
    %v2057 = vpack.c.b16 %v1449, %v1441
    %v2058 = vpack.c.b16 %v1450, %v1442
    %v2059 = vpack.c.b16 %v1459, %v1451
    %v2060 = vpack.c.b16 %v1460, %v1452
    %v2061 = vpack.c.b16 %v1461, %v1453
    %v2062 = vpack.c.b16 %v1462, %v1454
    %v2063 = vpack.c.b16 %v1463, %v1455
    %v2064 = vpack.c.b16 %v1464, %v1456
    %v2065 = vpack.c.b16 %v1465, %v1457
    %v2066 = vpack.c.b16 %v1466, %v1458
    %v2067 = vpack.c.b16 %v1475, %v1467
    %v2068 = vpack.c.b16 %v1476, %v1468
    %v2069 = vpack.c.b16 %v1477, %v1469
    %v2070 = vpack.c.b16 %v1478, %v1470
    %v2071 = vpack.c.b16 %v1479, %v1471
    %v2072 = vpack.c.b16 %v1480, %v1472
    %v2073 = vpack.c.b16 %v1481, %v1473
    %v2074 = vpack.c.b16 %v1482, %v1474
    %v2075 = vpack.c.b16 %v1491, %v1483
    %v2076 = vpack.c.b16 %v1492, %v1484
    %v2077 = vpack.c.b16 %v1493, %v1485
    %v2078 = vpack.c.b16 %v1494, %v1486
    %v2079 = vpack.c.b16 %v1495, %v1487
    %v2080 = vpack.c.b16 %v1496, %v1488
    %v2081 = vpack.c.b16 %v1497, %v1489
    %v2082 = vpack.c.b16 %v1498, %v1490
    %v2083 = vpack.c.b16 %v1507, %v1499
    %v2084 = vpack.c.b16 %v1508, %v1500
    %v2085 = vpack.c.b16 %v1509, %v1501
    %v2086 = vpack.c.b16 %v1510, %v1502
    %v2087 = vpack.c.b16 %v1511, %v1503
    %v2088 = vpack.c.b16 %v1512, %v1504
    %v2089 = vpack.c.b16 %v1513, %v1505
    %v2090 = vpack.c.b16 %v1514, %v1506
    %v2091 = vpack.c.b16 %v1523, %v1515
    %v2092 = vpack.c.b16 %v1524, %v1516
    %v2093 = vpack.c.b16 %v1525, %v1517
    %v2094 = vpack.c.b16 %v1526, %v1518
    %v2095 = vpack.c.b16 %v1527, %v1519
    %v2096 = vpack.c.b16 %v1528, %v1520
    %v2097 = vpack.c.b16 %v1529, %v1521
    %v2098 = vpack.c.b16 %v1530, %v1522
    %v2099 = vpack.c.b16 %v1539, %v1531
    %v2100 = vpack.c.b16 %v1540, %v1532
    %v2101 = vpack.c.b16 %v1541, %v1533
    %v2102 = vpack.c.b16 %v1542, %v1534
    %v2103 = vpack.c.b16 %v1543, %v1535
    %v2104 = vpack.c.b16 %v1544, %v1536
    %v2105 = vpack.c.b16 %v1545, %v1537
    %v2106 = vpack.c.b16 %v1546, %v1538
    %v2107 = vpack.c.b16 %v1555, %v1547
    %v2108 = vpack.c.b16 %v1556, %v1548
    %v2109 = vpack.c.b16 %v1557, %v1549
    %v2110 = vpack.c.b16 %v1558, %v1550
    %v2111 = vpack.c.b16 %v1559, %v1551
    %v2112 = vpack.c.b16 %v1560, %v1552
    %v2113 = vpack.c.b16 %v1561, %v1553
    %v2114 = vpack.c.b16 %v1562, %v1554
    %v2115 = vpack.c.b16 %v1571, %v1563
    %v2116 = vpack.c.b16 %v1572, %v1564
    %v2117 = vpack.c.b16 %v1573, %v1565
    %v2118 = vpack.c.b16 %v1574, %v1566
    %v2119 = vpack.c.b16 %v1575, %v1567
    %v2120 = vpack.c.b16 %v1576, %v1568
    %v2121 = vpack.c.b16 %v1577, %v1569
    %v2122 = vpack.c.b16 %v1578, %v1570
    %v2123 = vpack.c.b16 %v1587, %v1579
    %v2124 = vpack.c.b16 %v1588, %v1580
    %v2125 = vpack.c.b16 %v1589, %v1581
    %v2126 = vpack.c.b16 %v1590, %v1582
    %v2127 = vpack.c.b16 %v1591, %v1583
    %v2128 = vpack.c.b16 %v1592, %v1584
    %v2129 = vpack.c.b16 %v1593, %v1585
    %v2130 = vpack.c.b16 %v1594, %v1586
    %v2131 = vpack.c.b16 %v1603, %v1595
    %v2132 = vpack.c.b16 %v1604, %v1596
    %v2133 = vpack.c.b16 %v1605, %v1597
    %v2134 = vpack.c.b16 %v1606, %v1598
    %v2135 = vpack.c.b16 %v1607, %v1599
    %v2136 = vpack.c.b16 %v1608, %v1600
    %v2137 = vpack.c.b16 %v1609, %v1601
    %v2138 = vpack.c.b16 %v1610, %v1602
    %v2139 = vpack.c.b16 %v1619, %v1611
    %v2140 = vpack.c.b16 %v1620, %v1612
    %v2141 = vpack.c.b16 %v1621, %v1613
    %v2142 = vpack.c.b16 %v1622, %v1614
    %v2143 = vpack.c.b16 %v1623, %v1615
    %v2144 = vpack.c.b16 %v1624, %v1616
    %v2145 = vpack.c.b16 %v1625, %v1617
    %v2146 = vpack.c.b16 %v1626, %v1618
    %v2147 = vpack.c.b16 %v1635, %v1627
    %v2148 = vpack.c.b16 %v1636, %v1628
    %v2149 = vpack.c.b16 %v1637, %v1629
    %v2150 = vpack.c.b16 %v1638, %v1630
    %v2151 = vpack.c.b16 %v1639, %v1631
    %v2152 = vpack.c.b16 %v1640, %v1632
    %v2153 = vpack.c.b16 %v1641, %v1633
    %v2154 = vpack.c.b16 %v1642, %v1634
    %v2155 = vpack.c.b16 %v1651, %v1643
    %v2156 = vpack.c.b16 %v1652, %v1644
    %v2157 = vpack.c.b16 %v1653, %v1645
    %v2158 = vpack.c.b16 %v1654, %v1646
    %v2159 = vpack.c.b16 %v1655, %v1647
    %v2160 = vpack.c.b16 %v1656, %v1648
    %v2161 = vpack.c.b16 %v1657, %v1649
    %v2162 = vpack.c.b16 %v1658, %v1650
    %v2163 = vpack.c.b16 %v1667, %v1659
    %v2164 = vpack.c.b16 %v1668, %v1660
    %v2165 = vpack.c.b16 %v1669, %v1661
    %v2166 = vpack.c.b16 %v1670, %v1662
    %v2167 = vpack.c.b16 %v1671, %v1663
    %v2168 = vpack.c.b16 %v1672, %v1664
    %v2169 = vpack.c.b16 %v1673, %v1665
    %v2170 = vpack.c.b16 %v1674, %v1666
    %v2171 = vpack.c.b16 %v1683, %v1675
    %v2172 = vpack.c.b16 %v1684, %v1676
    %v2173 = vpack.c.b16 %v1685, %v1677
    %v2174 = vpack.c.b16 %v1686, %v1678
    %v2175 = vpack.c.b16 %v1687, %v1679
    %v2176 = vpack.c.b16 %v1688, %v1680
    %v2177 = vpack.c.b16 %v1689, %v1681
    %v2178 = vpack.c.b16 %v1690, %v1682
    %v2179 = vpack.c.b16 %v1699, %v1691
    %v2180 = vpack.c.b16 %v1700, %v1692
    %v2181 = vpack.c.b16 %v1701, %v1693
    %v2182 = vpack.c.b16 %v1702, %v1694
    %v2183 = vpack.c.b16 %v1703, %v1695
    %v2184 = vpack.c.b16 %v1704, %v1696
    %v2185 = vpack.c.b16 %v1705, %v1697
    %v2186 = vpack.c.b16 %v1706, %v1698
    %v2187 = vpack.c.b16 %v1715, %v1707
    %v2188 = vpack.c.b16 %v1716, %v1708
    %v2189 = vpack.c.b16 %v1717, %v1709
    %v2190 = vpack.c.b16 %v1718, %v1710
    %v2191 = vpack.c.b16 %v1719, %v1711
    %v2192 = vpack.c.b16 %v1720, %v1712
    %v2193 = vpack.c.b16 %v1721, %v1713
    %v2194 = vpack.c.b16 %v1722, %v1714
    %v2195 = vpack.c.b16 %v1731, %v1723
    %v2196 = vpack.c.b16 %v1732, %v1724
    %v2197 = vpack.c.b16 %v1733, %v1725
    %v2198 = vpack.c.b16 %v1734, %v1726
    %v2199 = vpack.c.b16 %v1735, %v1727
    %v2200 = vpack.c.b16 %v1736, %v1728
    %v2201 = vpack.c.b16 %v1737, %v1729
    %v2202 = vpack.c.b16 %v1738, %v1730
    %v2203 = vpack.c.b16 %v1747, %v1739
    %v2204 = vpack.c.b16 %v1748, %v1740
    %v2205 = vpack.c.b16 %v1749, %v1741
    %v2206 = vpack.c.b16 %v1750, %v1742
    %v2207 = vpack.c.b16 %v1751, %v1743
    %v2208 = vpack.c.b16 %v1752, %v1744
    %v2209 = vpack.c.b16 %v1753, %v1745
    %v2210 = vpack.c.b16 %v1754, %v1746
    %v2211 = vpack.c.b16 %v1763, %v1755
    %v2212 = vpack.c.b16 %v1764, %v1756
    %v2213 = vpack.c.b16 %v1765, %v1757
    %v2214 = vpack.c.b16 %v1766, %v1758
    %v2215 = vpack.c.b16 %v1767, %v1759
    %v2216 = vpack.c.b16 %v1768, %v1760
    %v2217 = vpack.c.b16 %v1769, %v1761
    %v2218 = vpack.c.b16 %v1770, %v1762
    %v2219 = vpack.c.b16 %v1779, %v1771
    %v2220 = vpack.c.b16 %v1780, %v1772
    %v2221 = vpack.c.b16 %v1781, %v1773
    %v2222 = vpack.c.b16 %v1782, %v1774
    %v2223 = vpack.c.b16 %v1783, %v1775
    %v2224 = vpack.c.b16 %v1784, %v1776
    %v2225 = vpack.c.b16 %v1785, %v1777
    %v2226 = vpack.c.b16 %v1786, %v1778
    %v2227 = vpack.c.b16 %v1795, %v1787
    %v2228 = vpack.c.b16 %v1796, %v1788
    %v2229 = vpack.c.b16 %v1797, %v1789
    %v2230 = vpack.c.b16 %v1798, %v1790
    %v2231 = vpack.c.b16 %v1799, %v1791
    %v2232 = vpack.c.b16 %v1800, %v1792
    %v2233 = vpack.c.b16 %v1801, %v1793
    %v2234 = vpack.c.b16 %v1802, %v1794
    %v2235 = vpack.c.b16 %v1811, %v1803
    %v2236 = vpack.c.b16 %v1812, %v1804
    %v2237 = vpack.c.b16 %v1813, %v1805
    %v2238 = vpack.c.b16 %v1814, %v1806
    %v2239 = vpack.c.b16 %v1815, %v1807
    %v2240 = vpack.c.b16 %v1816, %v1808
    %v2241 = vpack.c.b16 %v1817, %v1809
    %v2242 = vpack.c.b16 %v1818, %v1810
    %v2243 = vpack.c.b16 %v1827, %v1819
    %v2244 = vpack.c.b16 %v1828, %v1820
    %v2245 = vpack.c.b16 %v1829, %v1821
    %v2246 = vpack.c.b16 %v1830, %v1822
    %v2247 = vpack.c.b16 %v1831, %v1823
    %v2248 = vpack.c.b16 %v1832, %v1824
    %v2249 = vpack.c.b16 %v1833, %v1825
    %v2250 = vpack.c.b16 %v1834, %v1826
    %v2251 = vpack.c.b16 %v1843, %v1835
    %v2252 = vpack.c.b16 %v1844, %v1836
    %v2253 = vpack.c.b16 %v1845, %v1837
    %v2254 = vpack.c.b16 %v1846, %v1838
    %v2255 = vpack.c.b16 %v1847, %v1839
    %v2256 = vpack.c.b16 %v1848, %v1840
    %v2257 = vpack.c.b16 %v1849, %v1841
    %v2258 = vpack.c.b16 %v1850, %v1842
    %v2259 = vpack.c.b16 %v1859, %v1851
    %v2260 = vpack.c.b16 %v1860, %v1852
    %v2261 = vpack.c.b16 %v1861, %v1853
    %v2262 = vpack.c.b16 %v1862, %v1854
    %v2263 = vpack.c.b16 %v1863, %v1855
    %v2264 = vpack.c.b16 %v1864, %v1856
    %v2265 = vpack.c.b16 %v1865, %v1857
    %v2266 = vpack.c.b16 %v1866, %v1858
    %v2267 = vpack.c.b16 %v1875, %v1867
    %v2268 = vpack.c.b16 %v1876, %v1868
    %v2269 = vpack.c.b16 %v1877, %v1869
    %v2270 = vpack.c.b16 %v1878, %v1870
    %v2271 = vpack.c.b16 %v1879, %v1871
    %v2272 = vpack.c.b16 %v1880, %v1872
    %v2273 = vpack.c.b16 %v1881, %v1873
    %v2274 = vpack.c.b16 %v1882, %v1874
    %v2275 = vpack.c.b16 %v1891, %v1883
    %v2276 = vpack.c.b16 %v1892, %v1884
    %v2277 = vpack.c.b16 %v1893, %v1885
    %v2278 = vpack.c.b16 %v1894, %v1886
    %v2279 = vpack.c.b16 %v1895, %v1887
    %v2280 = vpack.c.b16 %v1896, %v1888
    %v2281 = vpack.c.b16 %v1897, %v1889
    %v2282 = vpack.c.b16 %v1898, %v1890
    %2667 = vmatpush.bf16.msra.mxu0 %v1955
    %2668 = vmatpush.bf16.msra.mxu0 %v1947
    %2669 = vmatpush.bf16.msra.mxu0 %v1939
    %2670 = vmatpush.bf16.msra.mxu0 %v1931
    %2671 = vmatpush.bf16.msra.mxu0 %v1923
    %2672 = vmatpush.bf16.msra.mxu0 %v1915
    %2673 = vmatpush.bf16.msra.mxu0 %v1907
    %2674 = vmatpush.bf16.msra.mxu0 %v1899
    %2675 = vmatmul.bf16.gmra.mxu0 %v339
    %v2676 = vpop.f32.mrf.mxu0
    %v2677 = vadd.f32 %v731, %v2676
    %v2678 = vpop.f32.mrf.mxu0
    %2679 = vdwg.mxu0
    %2680 = vmatpush.bf16.msra.mxu0 %v2019
    %2681 = vmatpush.bf16.msra.mxu0 %v2011
    %2682 = vmatpush.bf16.msra.mxu0 %v2003
    %2683 = vmatpush.bf16.msra.mxu0 %v1995
    %2684 = vmatpush.bf16.msra.mxu0 %v1987
    %2685 = vmatpush.bf16.msra.mxu0 %v1979
    %2686 = vmatpush.bf16.msra.mxu0 %v1971
    %2687 = vmatpush.bf16.msra.mxu0 %v1963
    %2688 = vmatmul.bf16.gmra.mxu0 %v340
    %v2689 = vpop.f32.mrf.mxu0
    %v2690 = vadd.f32 %v2677, %v2689
    %v2691 = vpop.f32.mrf.mxu0
    %2692 = vdwg.mxu0
    %2693 = vmatpush.bf16.msra.mxu0 %v2083
    %2694 = vmatpush.bf16.msra.mxu0 %v2075
    %2695 = vmatpush.bf16.msra.mxu0 %v2067
    %2696 = vmatpush.bf16.msra.mxu0 %v2059
    %2697 = vmatpush.bf16.msra.mxu0 %v2051
    %2698 = vmatpush.bf16.msra.mxu0 %v2043
    %2699 = vmatpush.bf16.msra.mxu0 %v2035
    %2700 = vmatpush.bf16.msra.mxu0 %v2027
    %2701 = vmatmul.bf16.gmra.mxu0 %v341
    %v2702 = vpop.f32.mrf.mxu0
    %v2703 = vadd.f32 %v2690, %v2702
    %v2704 = vpop.f32.mrf.mxu0
    %2705 = vdwg.mxu0
    %2706 = vmatpush.bf16.msra.mxu0 %v2147
    %2707 = vmatpush.bf16.msra.mxu0 %v2139
    %2708 = vmatpush.bf16.msra.mxu0 %v2131
    %2709 = vmatpush.bf16.msra.mxu0 %v2123
    %2710 = vmatpush.bf16.msra.mxu0 %v2115
    %2711 = vmatpush.bf16.msra.mxu0 %v2107
    %2712 = vmatpush.bf16.msra.mxu0 %v2099
    %2713 = vmatpush.bf16.msra.mxu0 %v2091
    %2714 = vmatmul.bf16.gmra.mxu0 %v342
    %v2715 = vpop.f32.mrf.mxu0
    %v2716 = vadd.f32 %v2703, %v2715
    %v2717 = vpop.f32.mrf.mxu0
    %2718 = vdwg.mxu0
    %2719 = vmatpush.bf16.msra.mxu0 %v2211
    %2720 = vmatpush.bf16.msra.mxu0 %v2203
    %2721 = vmatpush.bf16.msra.mxu0 %v2195
    %2722 = vmatpush.bf16.msra.mxu0 %v2187
    %2723 = vmatpush.bf16.msra.mxu0 %v2179
    %2724 = vmatpush.bf16.msra.mxu0 %v2171
    %2725 = vmatpush.bf16.msra.mxu0 %v2163
    %2726 = vmatpush.bf16.msra.mxu0 %v2155
    %2727 = vmatmul.bf16.gmra.mxu0 %v343
    %v2728 = vpop.f32.mrf.mxu0
    %v2729 = vadd.f32 %v2716, %v2728
    %v2730 = vpop.f32.mrf.mxu0
    %2731 = vdwg.mxu0
    %2732 = vmatpush.bf16.msra.mxu0 %v2275
    %2733 = vmatpush.bf16.msra.mxu0 %v2267
    %2734 = vmatpush.bf16.msra.mxu0 %v2259
    %2735 = vmatpush.bf16.msra.mxu0 %v2251
    %2736 = vmatpush.bf16.msra.mxu0 %v2243
    %2737 = vmatpush.bf16.msra.mxu0 %v2235
    %2738 = vmatpush.bf16.msra.mxu0 %v2227
    %2739 = vmatpush.bf16.msra.mxu0 %v2219
    %2740 = vmatmul.bf16.gmra.mxu0 %v344
    %v2741 = vpop.f32.mrf.mxu0
    %v2742 = vadd.f32 %v2729, %v2741
    %v2743 = vpop.f32.mrf.mxu0
    %2744 = vdwg.mxu0
    %2745 = vmatpush.bf16.msra.mxu0 %v1956
    %2746 = vmatpush.bf16.msra.mxu0 %v1948
    %2747 = vmatpush.bf16.msra.mxu0 %v1940
    %2748 = vmatpush.bf16.msra.mxu0 %v1932
    %2749 = vmatpush.bf16.msra.mxu0 %v1924
    %2750 = vmatpush.bf16.msra.mxu0 %v1916
    %2751 = vmatpush.bf16.msra.mxu0 %v1908
    %2752 = vmatpush.bf16.msra.mxu0 %v1900
    %2753 = vmatmul.bf16.gmra.mxu0 %v339
    %v2754 = vpop.f32.mrf.mxu0
    %v2755 = vadd.f32 %v732, %v2754
    %v2756 = vpop.f32.mrf.mxu0
    %2757 = vdwg.mxu0
    %2758 = vmatpush.bf16.msra.mxu0 %v2020
    %2759 = vmatpush.bf16.msra.mxu0 %v2012
    %2760 = vmatpush.bf16.msra.mxu0 %v2004
    %2761 = vmatpush.bf16.msra.mxu0 %v1996
    %2762 = vmatpush.bf16.msra.mxu0 %v1988
    %2763 = vmatpush.bf16.msra.mxu0 %v1980
    %2764 = vmatpush.bf16.msra.mxu0 %v1972
    %2765 = vmatpush.bf16.msra.mxu0 %v1964
    %2766 = vmatmul.bf16.gmra.mxu0 %v340
    %v2767 = vpop.f32.mrf.mxu0
    %v2768 = vadd.f32 %v2755, %v2767
    %v2769 = vpop.f32.mrf.mxu0
    %2770 = vdwg.mxu0
    %2771 = vmatpush.bf16.msra.mxu0 %v2084
    %2772 = vmatpush.bf16.msra.mxu0 %v2076
    %2773 = vmatpush.bf16.msra.mxu0 %v2068
    %2774 = vmatpush.bf16.msra.mxu0 %v2060
    %2775 = vmatpush.bf16.msra.mxu0 %v2052
    %2776 = vmatpush.bf16.msra.mxu0 %v2044
    %2777 = vmatpush.bf16.msra.mxu0 %v2036
    %2778 = vmatpush.bf16.msra.mxu0 %v2028
    %2779 = vmatmul.bf16.gmra.mxu0 %v341
    %v2780 = vpop.f32.mrf.mxu0
    %v2781 = vadd.f32 %v2768, %v2780
    %v2782 = vpop.f32.mrf.mxu0
    %2783 = vdwg.mxu0
    %2784 = vmatpush.bf16.msra.mxu0 %v2148
    %2785 = vmatpush.bf16.msra.mxu0 %v2140
    %2786 = vmatpush.bf16.msra.mxu0 %v2132
    %2787 = vmatpush.bf16.msra.mxu0 %v2124
    %2788 = vmatpush.bf16.msra.mxu0 %v2116
    %2789 = vmatpush.bf16.msra.mxu0 %v2108
    %2790 = vmatpush.bf16.msra.mxu0 %v2100
    %2791 = vmatpush.bf16.msra.mxu0 %v2092
    %2792 = vmatmul.bf16.gmra.mxu0 %v342
    %v2793 = vpop.f32.mrf.mxu0
    %v2794 = vadd.f32 %v2781, %v2793
    %v2795 = vpop.f32.mrf.mxu0
    %2796 = vdwg.mxu0
    %2797 = vmatpush.bf16.msra.mxu0 %v2212
    %2798 = vmatpush.bf16.msra.mxu0 %v2204
    %2799 = vmatpush.bf16.msra.mxu0 %v2196
    %2800 = vmatpush.bf16.msra.mxu0 %v2188
    %2801 = vmatpush.bf16.msra.mxu0 %v2180
    %2802 = vmatpush.bf16.msra.mxu0 %v2172
    %2803 = vmatpush.bf16.msra.mxu0 %v2164
    %2804 = vmatpush.bf16.msra.mxu0 %v2156
    %2805 = vmatmul.bf16.gmra.mxu0 %v343
    %v2806 = vpop.f32.mrf.mxu0
    %v2807 = vadd.f32 %v2794, %v2806
    %v2808 = vpop.f32.mrf.mxu0
    %2809 = vdwg.mxu0
    %2810 = vmatpush.bf16.msra.mxu0 %v2276
    %2811 = vmatpush.bf16.msra.mxu0 %v2268
    %2812 = vmatpush.bf16.msra.mxu0 %v2260
    %2813 = vmatpush.bf16.msra.mxu0 %v2252
    %2814 = vmatpush.bf16.msra.mxu0 %v2244
    %2815 = vmatpush.bf16.msra.mxu0 %v2236
    %2816 = vmatpush.bf16.msra.mxu0 %v2228
    %2817 = vmatpush.bf16.msra.mxu0 %v2220
    %2818 = vmatmul.bf16.gmra.mxu0 %v344
    %v2819 = vpop.f32.mrf.mxu0
    %v2820 = vadd.f32 %v2807, %v2819
    %v2821 = vpop.f32.mrf.mxu0
    %2822 = vdwg.mxu0
    %2823 = vmatpush.bf16.msra.mxu0 %v1957
    %2824 = vmatpush.bf16.msra.mxu0 %v1949
    %2825 = vmatpush.bf16.msra.mxu0 %v1941
    %2826 = vmatpush.bf16.msra.mxu0 %v1933
    %2827 = vmatpush.bf16.msra.mxu0 %v1925
    %2828 = vmatpush.bf16.msra.mxu0 %v1917
    %2829 = vmatpush.bf16.msra.mxu0 %v1909
    %2830 = vmatpush.bf16.msra.mxu0 %v1901
    %2831 = vmatmul.bf16.gmra.mxu0 %v339
    %v2832 = vpop.f32.mrf.mxu0
    %v2833 = vadd.f32 %v733, %v2832
    %v2834 = vpop.f32.mrf.mxu0
    %2835 = vdwg.mxu0
    %2836 = vmatpush.bf16.msra.mxu0 %v2021
    %2837 = vmatpush.bf16.msra.mxu0 %v2013
    %2838 = vmatpush.bf16.msra.mxu0 %v2005
    %2839 = vmatpush.bf16.msra.mxu0 %v1997
    %2840 = vmatpush.bf16.msra.mxu0 %v1989
    %2841 = vmatpush.bf16.msra.mxu0 %v1981
    %2842 = vmatpush.bf16.msra.mxu0 %v1973
    %2843 = vmatpush.bf16.msra.mxu0 %v1965
    %2844 = vmatmul.bf16.gmra.mxu0 %v340
    %v2845 = vpop.f32.mrf.mxu0
    %v2846 = vadd.f32 %v2833, %v2845
    %v2847 = vpop.f32.mrf.mxu0
    %2848 = vdwg.mxu0
    %2849 = vmatpush.bf16.msra.mxu0 %v2085
    %2850 = vmatpush.bf16.msra.mxu0 %v2077
    %2851 = vmatpush.bf16.msra.mxu0 %v2069
    %2852 = vmatpush.bf16.msra.mxu0 %v2061
    %2853 = vmatpush.bf16.msra.mxu0 %v2053
    %2854 = vmatpush.bf16.msra.mxu0 %v2045
    %2855 = vmatpush.bf16.msra.mxu0 %v2037
    %2856 = vmatpush.bf16.msra.mxu0 %v2029
    %2857 = vmatmul.bf16.gmra.mxu0 %v341
    %v2858 = vpop.f32.mrf.mxu0
    %v2859 = vadd.f32 %v2846, %v2858
    %v2860 = vpop.f32.mrf.mxu0
    %2861 = vdwg.mxu0
    %2862 = vmatpush.bf16.msra.mxu0 %v2149
    %2863 = vmatpush.bf16.msra.mxu0 %v2141
    %2864 = vmatpush.bf16.msra.mxu0 %v2133
    %2865 = vmatpush.bf16.msra.mxu0 %v2125
    %2866 = vmatpush.bf16.msra.mxu0 %v2117
    %2867 = vmatpush.bf16.msra.mxu0 %v2109
    %2868 = vmatpush.bf16.msra.mxu0 %v2101
    %2869 = vmatpush.bf16.msra.mxu0 %v2093
    %2870 = vmatmul.bf16.gmra.mxu0 %v342
    %v2871 = vpop.f32.mrf.mxu0
    %v2872 = vadd.f32 %v2859, %v2871
    %v2873 = vpop.f32.mrf.mxu0
    %2874 = vdwg.mxu0
    %2875 = vmatpush.bf16.msra.mxu0 %v2213
    %2876 = vmatpush.bf16.msra.mxu0 %v2205
    %2877 = vmatpush.bf16.msra.mxu0 %v2197
    %2878 = vmatpush.bf16.msra.mxu0 %v2189
    %2879 = vmatpush.bf16.msra.mxu0 %v2181
    %2880 = vmatpush.bf16.msra.mxu0 %v2173
    %2881 = vmatpush.bf16.msra.mxu0 %v2165
    %2882 = vmatpush.bf16.msra.mxu0 %v2157
    %2883 = vmatmul.bf16.gmra.mxu0 %v343
    %v2884 = vpop.f32.mrf.mxu0
    %v2885 = vadd.f32 %v2872, %v2884
    %v2886 = vpop.f32.mrf.mxu0
    %2887 = vdwg.mxu0
    %2888 = vmatpush.bf16.msra.mxu0 %v2277
    %2889 = vmatpush.bf16.msra.mxu0 %v2269
    %2890 = vmatpush.bf16.msra.mxu0 %v2261
    %2891 = vmatpush.bf16.msra.mxu0 %v2253
    %2892 = vmatpush.bf16.msra.mxu0 %v2245
    %2893 = vmatpush.bf16.msra.mxu0 %v2237
    %2894 = vmatpush.bf16.msra.mxu0 %v2229
    %2895 = vmatpush.bf16.msra.mxu0 %v2221
    %2896 = vmatmul.bf16.gmra.mxu0 %v344
    %v2897 = vpop.f32.mrf.mxu0
    %v2898 = vadd.f32 %v2885, %v2897
    %v2899 = vpop.f32.mrf.mxu0
    %2900 = vdwg.mxu0
    %2901 = vmatpush.bf16.msra.mxu0 %v1958
    %2902 = vmatpush.bf16.msra.mxu0 %v1950
    %2903 = vmatpush.bf16.msra.mxu0 %v1942
    %2904 = vmatpush.bf16.msra.mxu0 %v1934
    %2905 = vmatpush.bf16.msra.mxu0 %v1926
    %2906 = vmatpush.bf16.msra.mxu0 %v1918
    %2907 = vmatpush.bf16.msra.mxu0 %v1910
    %2908 = vmatpush.bf16.msra.mxu0 %v1902
    %2909 = vmatmul.bf16.gmra.mxu0 %v339
    %v2910 = vpop.f32.mrf.mxu0
    %v2911 = vadd.f32 %v734, %v2910
    %v2912 = vpop.f32.mrf.mxu0
    %2913 = vdwg.mxu0
    %2914 = vmatpush.bf16.msra.mxu0 %v2022
    %2915 = vmatpush.bf16.msra.mxu0 %v2014
    %2916 = vmatpush.bf16.msra.mxu0 %v2006
    %2917 = vmatpush.bf16.msra.mxu0 %v1998
    %2918 = vmatpush.bf16.msra.mxu0 %v1990
    %2919 = vmatpush.bf16.msra.mxu0 %v1982
    %2920 = vmatpush.bf16.msra.mxu0 %v1974
    %2921 = vmatpush.bf16.msra.mxu0 %v1966
    %2922 = vmatmul.bf16.gmra.mxu0 %v340
    %v2923 = vpop.f32.mrf.mxu0
    %v2924 = vadd.f32 %v2911, %v2923
    %v2925 = vpop.f32.mrf.mxu0
    %2926 = vdwg.mxu0
    %2927 = vmatpush.bf16.msra.mxu0 %v2086
    %2928 = vmatpush.bf16.msra.mxu0 %v2078
    %2929 = vmatpush.bf16.msra.mxu0 %v2070
    %2930 = vmatpush.bf16.msra.mxu0 %v2062
    %2931 = vmatpush.bf16.msra.mxu0 %v2054
    %2932 = vmatpush.bf16.msra.mxu0 %v2046
    %2933 = vmatpush.bf16.msra.mxu0 %v2038
    %2934 = vmatpush.bf16.msra.mxu0 %v2030
    %2935 = vmatmul.bf16.gmra.mxu0 %v341
    %v2936 = vpop.f32.mrf.mxu0
    %v2937 = vadd.f32 %v2924, %v2936
    %v2938 = vpop.f32.mrf.mxu0
    %2939 = vdwg.mxu0
    %2940 = vmatpush.bf16.msra.mxu0 %v2150
    %2941 = vmatpush.bf16.msra.mxu0 %v2142
    %2942 = vmatpush.bf16.msra.mxu0 %v2134
    %2943 = vmatpush.bf16.msra.mxu0 %v2126
    %2944 = vmatpush.bf16.msra.mxu0 %v2118
    %2945 = vmatpush.bf16.msra.mxu0 %v2110
    %2946 = vmatpush.bf16.msra.mxu0 %v2102
    %2947 = vmatpush.bf16.msra.mxu0 %v2094
    %2948 = vmatmul.bf16.gmra.mxu0 %v342
    %v2949 = vpop.f32.mrf.mxu0
    %v2950 = vadd.f32 %v2937, %v2949
    %v2951 = vpop.f32.mrf.mxu0
    %2952 = vdwg.mxu0
    %2953 = vmatpush.bf16.msra.mxu0 %v2214
    %2954 = vmatpush.bf16.msra.mxu0 %v2206
    %2955 = vmatpush.bf16.msra.mxu0 %v2198
    %2956 = vmatpush.bf16.msra.mxu0 %v2190
    %2957 = vmatpush.bf16.msra.mxu0 %v2182
    %2958 = vmatpush.bf16.msra.mxu0 %v2174
    %2959 = vmatpush.bf16.msra.mxu0 %v2166
    %2960 = vmatpush.bf16.msra.mxu0 %v2158
    %2961 = vmatmul.bf16.gmra.mxu0 %v343
    %v2962 = vpop.f32.mrf.mxu0
    %v2963 = vadd.f32 %v2950, %v2962
    %v2964 = vpop.f32.mrf.mxu0
    %2965 = vdwg.mxu0
    %2966 = vmatpush.bf16.msra.mxu0 %v2278
    %2967 = vmatpush.bf16.msra.mxu0 %v2270
    %2968 = vmatpush.bf16.msra.mxu0 %v2262
    %2969 = vmatpush.bf16.msra.mxu0 %v2254
    %2970 = vmatpush.bf16.msra.mxu0 %v2246
    %2971 = vmatpush.bf16.msra.mxu0 %v2238
    %2972 = vmatpush.bf16.msra.mxu0 %v2230
    %2973 = vmatpush.bf16.msra.mxu0 %v2222
    %2974 = vmatmul.bf16.gmra.mxu0 %v344
    %v2975 = vpop.f32.mrf.mxu0
    %v2976 = vadd.f32 %v2963, %v2975
    %v2977 = vpop.f32.mrf.mxu0
    %2978 = vdwg.mxu0
    %2979 = vmatpush.bf16.msra.mxu0 %v1959
    %2980 = vmatpush.bf16.msra.mxu0 %v1951
    %2981 = vmatpush.bf16.msra.mxu0 %v1943
    %2982 = vmatpush.bf16.msra.mxu0 %v1935
    %2983 = vmatpush.bf16.msra.mxu0 %v1927
    %2984 = vmatpush.bf16.msra.mxu0 %v1919
    %2985 = vmatpush.bf16.msra.mxu0 %v1911
    %2986 = vmatpush.bf16.msra.mxu0 %v1903
    %2987 = vmatmul.bf16.gmra.mxu0 %v339
    %v2988 = vpop.f32.mrf.mxu0
    %v2989 = vadd.f32 %v735, %v2988
    %v2990 = vpop.f32.mrf.mxu0
    %2991 = vdwg.mxu0
    %2992 = vmatpush.bf16.msra.mxu0 %v2023
    %2993 = vmatpush.bf16.msra.mxu0 %v2015
    %2994 = vmatpush.bf16.msra.mxu0 %v2007
    %2995 = vmatpush.bf16.msra.mxu0 %v1999
    %2996 = vmatpush.bf16.msra.mxu0 %v1991
    %2997 = vmatpush.bf16.msra.mxu0 %v1983
    %2998 = vmatpush.bf16.msra.mxu0 %v1975
    %2999 = vmatpush.bf16.msra.mxu0 %v1967
    %3000 = vmatmul.bf16.gmra.mxu0 %v340
    %v3001 = vpop.f32.mrf.mxu0
    %v3002 = vadd.f32 %v2989, %v3001
    %v3003 = vpop.f32.mrf.mxu0
    %3004 = vdwg.mxu0
    %3005 = vmatpush.bf16.msra.mxu0 %v2087
    %3006 = vmatpush.bf16.msra.mxu0 %v2079
    %3007 = vmatpush.bf16.msra.mxu0 %v2071
    %3008 = vmatpush.bf16.msra.mxu0 %v2063
    %3009 = vmatpush.bf16.msra.mxu0 %v2055
    %3010 = vmatpush.bf16.msra.mxu0 %v2047
    %3011 = vmatpush.bf16.msra.mxu0 %v2039
    %3012 = vmatpush.bf16.msra.mxu0 %v2031
    %3013 = vmatmul.bf16.gmra.mxu0 %v341
    %v3014 = vpop.f32.mrf.mxu0
    %v3015 = vadd.f32 %v3002, %v3014
    %v3016 = vpop.f32.mrf.mxu0
    %3017 = vdwg.mxu0
    %3018 = vmatpush.bf16.msra.mxu0 %v2151
    %3019 = vmatpush.bf16.msra.mxu0 %v2143
    %3020 = vmatpush.bf16.msra.mxu0 %v2135
    %3021 = vmatpush.bf16.msra.mxu0 %v2127
    %3022 = vmatpush.bf16.msra.mxu0 %v2119
    %3023 = vmatpush.bf16.msra.mxu0 %v2111
    %3024 = vmatpush.bf16.msra.mxu0 %v2103
    %3025 = vmatpush.bf16.msra.mxu0 %v2095
    %3026 = vmatmul.bf16.gmra.mxu0 %v342
    %v3027 = vpop.f32.mrf.mxu0
    %v3028 = vadd.f32 %v3015, %v3027
    %v3029 = vpop.f32.mrf.mxu0
    %3030 = vdwg.mxu0
    %3031 = vmatpush.bf16.msra.mxu0 %v2215
    %3032 = vmatpush.bf16.msra.mxu0 %v2207
    %3033 = vmatpush.bf16.msra.mxu0 %v2199
    %3034 = vmatpush.bf16.msra.mxu0 %v2191
    %3035 = vmatpush.bf16.msra.mxu0 %v2183
    %3036 = vmatpush.bf16.msra.mxu0 %v2175
    %3037 = vmatpush.bf16.msra.mxu0 %v2167
    %3038 = vmatpush.bf16.msra.mxu0 %v2159
    %3039 = vmatmul.bf16.gmra.mxu0 %v343
    %v3040 = vpop.f32.mrf.mxu0
    %v3041 = vadd.f32 %v3028, %v3040
    %v3042 = vpop.f32.mrf.mxu0
    %3043 = vdwg.mxu0
    %3044 = vmatpush.bf16.msra.mxu0 %v2279
    %3045 = vmatpush.bf16.msra.mxu0 %v2271
    %3046 = vmatpush.bf16.msra.mxu0 %v2263
    %3047 = vmatpush.bf16.msra.mxu0 %v2255
    %3048 = vmatpush.bf16.msra.mxu0 %v2247
    %3049 = vmatpush.bf16.msra.mxu0 %v2239
    %3050 = vmatpush.bf16.msra.mxu0 %v2231
    %3051 = vmatpush.bf16.msra.mxu0 %v2223
    %3052 = vmatmul.bf16.gmra.mxu0 %v344
    %v3053 = vpop.f32.mrf.mxu0
    %v3054 = vadd.f32 %v3041, %v3053
    %v3055 = vpop.f32.mrf.mxu0
    %3056 = vdwg.mxu0
    %3057 = vmatpush.bf16.msra.mxu0 %v1960
    %3058 = vmatpush.bf16.msra.mxu0 %v1952
    %3059 = vmatpush.bf16.msra.mxu0 %v1944
    %3060 = vmatpush.bf16.msra.mxu0 %v1936
    %3061 = vmatpush.bf16.msra.mxu0 %v1928
    %3062 = vmatpush.bf16.msra.mxu0 %v1920
    %3063 = vmatpush.bf16.msra.mxu0 %v1912
    %3064 = vmatpush.bf16.msra.mxu0 %v1904
    %3065 = vmatmul.bf16.gmra.mxu0 %v339
    %v3066 = vpop.f32.mrf.mxu0
    %v3067 = vadd.f32 %v736, %v3066
    %v3068 = vpop.f32.mrf.mxu0
    %3069 = vdwg.mxu0
    %3070 = vmatpush.bf16.msra.mxu0 %v2024
    %3071 = vmatpush.bf16.msra.mxu0 %v2016
    %3072 = vmatpush.bf16.msra.mxu0 %v2008
    %3073 = vmatpush.bf16.msra.mxu0 %v2000
    %3074 = vmatpush.bf16.msra.mxu0 %v1992
    %3075 = vmatpush.bf16.msra.mxu0 %v1984
    %3076 = vmatpush.bf16.msra.mxu0 %v1976
    %3077 = vmatpush.bf16.msra.mxu0 %v1968
    %3078 = vmatmul.bf16.gmra.mxu0 %v340
    %v3079 = vpop.f32.mrf.mxu0
    %v3080 = vadd.f32 %v3067, %v3079
    %v3081 = vpop.f32.mrf.mxu0
    %3082 = vdwg.mxu0
    %3083 = vmatpush.bf16.msra.mxu0 %v2088
    %3084 = vmatpush.bf16.msra.mxu0 %v2080
    %3085 = vmatpush.bf16.msra.mxu0 %v2072
    %3086 = vmatpush.bf16.msra.mxu0 %v2064
    %3087 = vmatpush.bf16.msra.mxu0 %v2056
    %3088 = vmatpush.bf16.msra.mxu0 %v2048
    %3089 = vmatpush.bf16.msra.mxu0 %v2040
    %3090 = vmatpush.bf16.msra.mxu0 %v2032
    %3091 = vmatmul.bf16.gmra.mxu0 %v341
    %v3092 = vpop.f32.mrf.mxu0
    %v3093 = vadd.f32 %v3080, %v3092
    %v3094 = vpop.f32.mrf.mxu0
    %3095 = vdwg.mxu0
    %3096 = vmatpush.bf16.msra.mxu0 %v2152
    %3097 = vmatpush.bf16.msra.mxu0 %v2144
    %3098 = vmatpush.bf16.msra.mxu0 %v2136
    %3099 = vmatpush.bf16.msra.mxu0 %v2128
    %3100 = vmatpush.bf16.msra.mxu0 %v2120
    %3101 = vmatpush.bf16.msra.mxu0 %v2112
    %3102 = vmatpush.bf16.msra.mxu0 %v2104
    %3103 = vmatpush.bf16.msra.mxu0 %v2096
    %3104 = vmatmul.bf16.gmra.mxu0 %v342
    %v3105 = vpop.f32.mrf.mxu0
    %v3106 = vadd.f32 %v3093, %v3105
    %v3107 = vpop.f32.mrf.mxu0
    %3108 = vdwg.mxu0
    %3109 = vmatpush.bf16.msra.mxu0 %v2216
    %3110 = vmatpush.bf16.msra.mxu0 %v2208
    %3111 = vmatpush.bf16.msra.mxu0 %v2200
    %3112 = vmatpush.bf16.msra.mxu0 %v2192
    %3113 = vmatpush.bf16.msra.mxu0 %v2184
    %3114 = vmatpush.bf16.msra.mxu0 %v2176
    %3115 = vmatpush.bf16.msra.mxu0 %v2168
    %3116 = vmatpush.bf16.msra.mxu0 %v2160
    %3117 = vmatmul.bf16.gmra.mxu0 %v343
    %v3118 = vpop.f32.mrf.mxu0
    %v3119 = vadd.f32 %v3106, %v3118
    %v3120 = vpop.f32.mrf.mxu0
    %3121 = vdwg.mxu0
    %3122 = vmatpush.bf16.msra.mxu0 %v2280
    %3123 = vmatpush.bf16.msra.mxu0 %v2272
    %3124 = vmatpush.bf16.msra.mxu0 %v2264
    %3125 = vmatpush.bf16.msra.mxu0 %v2256
    %3126 = vmatpush.bf16.msra.mxu0 %v2248
    %3127 = vmatpush.bf16.msra.mxu0 %v2240
    %3128 = vmatpush.bf16.msra.mxu0 %v2232
    %3129 = vmatpush.bf16.msra.mxu0 %v2224
    %3130 = vmatmul.bf16.gmra.mxu0 %v344
    %v3131 = vpop.f32.mrf.mxu0
    %v3132 = vadd.f32 %v3119, %v3131
    %v3133 = vpop.f32.mrf.mxu0
    %3134 = vdwg.mxu0
    %3135 = vmatpush.bf16.msra.mxu0 %v1961
    %3136 = vmatpush.bf16.msra.mxu0 %v1953
    %3137 = vmatpush.bf16.msra.mxu0 %v1945
    %3138 = vmatpush.bf16.msra.mxu0 %v1937
    %3139 = vmatpush.bf16.msra.mxu0 %v1929
    %3140 = vmatpush.bf16.msra.mxu0 %v1921
    %3141 = vmatpush.bf16.msra.mxu0 %v1913
    %3142 = vmatpush.bf16.msra.mxu0 %v1905
    %3143 = vmatmul.bf16.gmra.mxu0 %v339
    %v3144 = vpop.f32.mrf.mxu0
    %v3145 = vadd.f32 %v737, %v3144
    %v3146 = vpop.f32.mrf.mxu0
    %3147 = vdwg.mxu0
    %3148 = vmatpush.bf16.msra.mxu0 %v2025
    %3149 = vmatpush.bf16.msra.mxu0 %v2017
    %3150 = vmatpush.bf16.msra.mxu0 %v2009
    %3151 = vmatpush.bf16.msra.mxu0 %v2001
    %3152 = vmatpush.bf16.msra.mxu0 %v1993
    %3153 = vmatpush.bf16.msra.mxu0 %v1985
    %3154 = vmatpush.bf16.msra.mxu0 %v1977
    %3155 = vmatpush.bf16.msra.mxu0 %v1969
    %3156 = vmatmul.bf16.gmra.mxu0 %v340
    %v3157 = vpop.f32.mrf.mxu0
    %v3158 = vadd.f32 %v3145, %v3157
    %v3159 = vpop.f32.mrf.mxu0
    %3160 = vdwg.mxu0
    %3161 = vmatpush.bf16.msra.mxu0 %v2089
    %3162 = vmatpush.bf16.msra.mxu0 %v2081
    %3163 = vmatpush.bf16.msra.mxu0 %v2073
    %3164 = vmatpush.bf16.msra.mxu0 %v2065
    %3165 = vmatpush.bf16.msra.mxu0 %v2057
    %3166 = vmatpush.bf16.msra.mxu0 %v2049
    %3167 = vmatpush.bf16.msra.mxu0 %v2041
    %3168 = vmatpush.bf16.msra.mxu0 %v2033
    %3169 = vmatmul.bf16.gmra.mxu0 %v341
    %v3170 = vpop.f32.mrf.mxu0
    %v3171 = vadd.f32 %v3158, %v3170
    %v3172 = vpop.f32.mrf.mxu0
    %3173 = vdwg.mxu0
    %3174 = vmatpush.bf16.msra.mxu0 %v2153
    %3175 = vmatpush.bf16.msra.mxu0 %v2145
    %3176 = vmatpush.bf16.msra.mxu0 %v2137
    %3177 = vmatpush.bf16.msra.mxu0 %v2129
    %3178 = vmatpush.bf16.msra.mxu0 %v2121
    %3179 = vmatpush.bf16.msra.mxu0 %v2113
    %3180 = vmatpush.bf16.msra.mxu0 %v2105
    %3181 = vmatpush.bf16.msra.mxu0 %v2097
    %3182 = vmatmul.bf16.gmra.mxu0 %v342
    %v3183 = vpop.f32.mrf.mxu0
    %v3184 = vadd.f32 %v3171, %v3183
    %v3185 = vpop.f32.mrf.mxu0
    %3186 = vdwg.mxu0
    %3187 = vmatpush.bf16.msra.mxu0 %v2217
    %3188 = vmatpush.bf16.msra.mxu0 %v2209
    %3189 = vmatpush.bf16.msra.mxu0 %v2201
    %3190 = vmatpush.bf16.msra.mxu0 %v2193
    %3191 = vmatpush.bf16.msra.mxu0 %v2185
    %3192 = vmatpush.bf16.msra.mxu0 %v2177
    %3193 = vmatpush.bf16.msra.mxu0 %v2169
    %3194 = vmatpush.bf16.msra.mxu0 %v2161
    %3195 = vmatmul.bf16.gmra.mxu0 %v343
    %v3196 = vpop.f32.mrf.mxu0
    %v3197 = vadd.f32 %v3184, %v3196
    %v3198 = vpop.f32.mrf.mxu0
    %3199 = vdwg.mxu0
    %3200 = vmatpush.bf16.msra.mxu0 %v2281
    %3201 = vmatpush.bf16.msra.mxu0 %v2273
    %3202 = vmatpush.bf16.msra.mxu0 %v2265
    %3203 = vmatpush.bf16.msra.mxu0 %v2257
    %3204 = vmatpush.bf16.msra.mxu0 %v2249
    %3205 = vmatpush.bf16.msra.mxu0 %v2241
    %3206 = vmatpush.bf16.msra.mxu0 %v2233
    %3207 = vmatpush.bf16.msra.mxu0 %v2225
    %3208 = vmatmul.bf16.gmra.mxu0 %v344
    %v3209 = vpop.f32.mrf.mxu0
    %v3210 = vadd.f32 %v3197, %v3209
    %v3211 = vpop.f32.mrf.mxu0
    %3212 = vdwg.mxu0
    %3213 = vmatpush.bf16.msra.mxu0 %v1962
    %3214 = vmatpush.bf16.msra.mxu0 %v1954
    %3215 = vmatpush.bf16.msra.mxu0 %v1946
    %3216 = vmatpush.bf16.msra.mxu0 %v1938
    %3217 = vmatpush.bf16.msra.mxu0 %v1930
    %3218 = vmatpush.bf16.msra.mxu0 %v1922
    %3219 = vmatpush.bf16.msra.mxu0 %v1914
    %3220 = vmatpush.bf16.msra.mxu0 %v1906
    %3221 = vmatmul.bf16.gmra.mxu0 %v339
    %v3222 = vpop.f32.mrf.mxu0
    %v3223 = vadd.f32 %v738, %v3222
    %v3224 = vpop.f32.mrf.mxu0
    %3225 = vdwg.mxu0
    %3226 = vmatpush.bf16.msra.mxu0 %v2026
    %3227 = vmatpush.bf16.msra.mxu0 %v2018
    %3228 = vmatpush.bf16.msra.mxu0 %v2010
    %3229 = vmatpush.bf16.msra.mxu0 %v2002
    %3230 = vmatpush.bf16.msra.mxu0 %v1994
    %3231 = vmatpush.bf16.msra.mxu0 %v1986
    %3232 = vmatpush.bf16.msra.mxu0 %v1978
    %3233 = vmatpush.bf16.msra.mxu0 %v1970
    %3234 = vmatmul.bf16.gmra.mxu0 %v340
    %v3235 = vpop.f32.mrf.mxu0
    %v3236 = vadd.f32 %v3223, %v3235
    %v3237 = vpop.f32.mrf.mxu0
    %3238 = vdwg.mxu0
    %3239 = vmatpush.bf16.msra.mxu0 %v2090
    %3240 = vmatpush.bf16.msra.mxu0 %v2082
    %3241 = vmatpush.bf16.msra.mxu0 %v2074
    %3242 = vmatpush.bf16.msra.mxu0 %v2066
    %3243 = vmatpush.bf16.msra.mxu0 %v2058
    %3244 = vmatpush.bf16.msra.mxu0 %v2050
    %3245 = vmatpush.bf16.msra.mxu0 %v2042
    %3246 = vmatpush.bf16.msra.mxu0 %v2034
    %3247 = vmatmul.bf16.gmra.mxu0 %v341
    %v3248 = vpop.f32.mrf.mxu0
    %v3249 = vadd.f32 %v3236, %v3248
    %v3250 = vpop.f32.mrf.mxu0
    %3251 = vdwg.mxu0
    %3252 = vmatpush.bf16.msra.mxu0 %v2154
    %3253 = vmatpush.bf16.msra.mxu0 %v2146
    %3254 = vmatpush.bf16.msra.mxu0 %v2138
    %3255 = vmatpush.bf16.msra.mxu0 %v2130
    %3256 = vmatpush.bf16.msra.mxu0 %v2122
    %3257 = vmatpush.bf16.msra.mxu0 %v2114
    %3258 = vmatpush.bf16.msra.mxu0 %v2106
    %3259 = vmatpush.bf16.msra.mxu0 %v2098
    %3260 = vmatmul.bf16.gmra.mxu0 %v342
    %v3261 = vpop.f32.mrf.mxu0
    %v3262 = vadd.f32 %v3249, %v3261
    %v3263 = vpop.f32.mrf.mxu0
    %3264 = vdwg.mxu0
    %3265 = vmatpush.bf16.msra.mxu0 %v2218
    %3266 = vmatpush.bf16.msra.mxu0 %v2210
    %3267 = vmatpush.bf16.msra.mxu0 %v2202
    %3268 = vmatpush.bf16.msra.mxu0 %v2194
    %3269 = vmatpush.bf16.msra.mxu0 %v2186
    %3270 = vmatpush.bf16.msra.mxu0 %v2178
    %3271 = vmatpush.bf16.msra.mxu0 %v2170
    %3272 = vmatpush.bf16.msra.mxu0 %v2162
    %3273 = vmatmul.bf16.gmra.mxu0 %v343
    %v3274 = vpop.f32.mrf.mxu0
    %v3275 = vadd.f32 %v3262, %v3274
    %v3276 = vpop.f32.mrf.mxu0
    %3277 = vdwg.mxu0
    %3278 = vmatpush.bf16.msra.mxu0 %v2282
    %3279 = vmatpush.bf16.msra.mxu0 %v2274
    %3280 = vmatpush.bf16.msra.mxu0 %v2266
    %3281 = vmatpush.bf16.msra.mxu0 %v2258
    %3282 = vmatpush.bf16.msra.mxu0 %v2250
    %3283 = vmatpush.bf16.msra.mxu0 %v2242
    %3284 = vmatpush.bf16.msra.mxu0 %v2234
    %3285 = vmatpush.bf16.msra.mxu0 %v2226
    %3286 = vmatmul.bf16.gmra.mxu0 %v344
    %v3287 = vpop.f32.mrf.mxu0
    %v3288 = vadd.f32 %v3275, %v3287
    %v3289 = vpop.f32.mrf.mxu0
    %3290 = vdwg.mxu0
    %v3291 = vmax.f32 %v2742, 0.0
    %v3292 = vmax.f32 %v2820, 0.0
    %v3293 = vmax.f32 %v2898, 0.0
    %v3294 = vmax.f32 %v2976, 0.0
    %v3295 = vmax.f32 %v3054, 0.0
    %v3296 = vmax.f32 %v3132, 0.0
    %v3297 = vmax.f32 %v3210, 0.0
    %v3298 = vmax.f32 %v3288, 0.0
    %v3299 = vpack.c.bf16 %v3291, %v3291
    %v3300 = vpack.c.bf16 %v3292, %v3292
    %v3301 = vpack.c.bf16 %v3293, %v3293
    %v3302 = vpack.c.bf16 %v3294, %v3294
    %v3303 = vpack.c.bf16 %v3295, %v3295
    %v3304 = vpack.c.bf16 %v3296, %v3296
    %v3305 = vpack.c.bf16 %v3297, %v3297
    %v3306 = vpack.c.bf16 %v3298, %v3298
    %v3307 = vld [vmem:[#allocation8] sm:$0xff]
    %v3308 = vld [vmem:[#allocation8 + $0x8] sm:$0xf]
    %v3309 = vld [vmem:[#allocation8 + $0xc] sm:$0xff]
    %v3310 = vld [vmem:[#allocation8 + $0x14] sm:$0xf]
    %v3311 = vld [vmem:[#allocation8 + $0x18] sm:$0xff]
    %v3312 = vld [vmem:[#allocation8 + $0x20] sm:$0xf]
    %v3313 = vld [vmem:[#allocation8 + $0x24] sm:$0xff]
    %v3314 = vld [vmem:[#allocation8 + $0x2c] sm:$0xf]
    %v3315 = vld [vmem:[#allocation8 + $0x30] sm:$0xff]
    %v3316 = vld [vmem:[#allocation8 + $0x38] sm:$0xf]
    %v3317 = vld [vmem:[#allocation8 + $0x3c] sm:$0xff]
    %v3318 = vld [vmem:[#allocation8 + $0x44] sm:$0xf]
    %v3319 = vld [vmem:[#allocation8 + $0x48] sm:$0xff]
    %v3320 = vld [vmem:[#allocation8 + $0x50] sm:$0xf]
    %v3321 = vld [vmem:[#allocation8 + $0x54] sm:$0xff]
    %v3322 = vld [vmem:[#allocation8 + $0x5c] sm:$0xf]
    %v3323 = vld [vmem:[#allocation8 + $0x60] sm:$0xff]
    %v3324 = vld [vmem:[#allocation8 + $0x68] sm:$0xf]
    %v3325 = vld [vmem:[#allocation8 + $0x6c] sm:$0xff]
    %v3326 = vld [vmem:[#allocation8 + $0x74] sm:$0xf]
    %v3327 = vld [vmem:[#allocation8 + $0x78] sm:$0xff]
    %v3328 = vld [vmem:[#allocation8 + $0x80] sm:$0xf]
    %v3329 = vld [vmem:[#allocation8 + $0x84] sm:$0xff]
    %v3330 = vld [vmem:[#allocation8 + $0x8c] sm:$0xf]
    %v3331 = vld [vmem:[#allocation8 + $0x90] sm:$0xff]
    %v3332 = vld [vmem:[#allocation8 + $0x98] sm:$0xf]
    %v3333 = vld [vmem:[#allocation8 + $0x9c] sm:$0xff]
    %v3334 = vld [vmem:[#allocation8 + $0xa4] sm:$0xf]
    %v3335 = vld [vmem:[#allocation8 + $0xa8] sm:$0xff]
    %v3336 = vld [vmem:[#allocation8 + $0xb0] sm:$0xf]
    %v3337 = vld [vmem:[#allocation8 + $0xb4] sm:$0xff]
    %v3338 = vld [vmem:[#allocation8 + $0xbc] sm:$0xf]
    %v3339 = vld [vmem:[#allocation8 + $0xc0] sm:$0xff]
    %v3340 = vld [vmem:[#allocation8 + $0xc8] sm:$0xf]
    %v3341 = vld [vmem:[#allocation8 + $0xcc] sm:$0xff]
    %v3342 = vld [vmem:[#allocation8 + $0xd4] sm:$0xf]
    %v3343 = vld [vmem:[#allocation8 + $0xd8] sm:$0xff]
    %v3344 = vld [vmem:[#allocation8 + $0xe0] sm:$0xf]
    %v3345 = vld [vmem:[#allocation8 + $0xe4] sm:$0xff]
    %v3346 = vld [vmem:[#allocation8 + $0xec] sm:$0xf]
    %v3347 = vld [vmem:[#allocation8 + $0xf0] sm:$0xff]
    %v3348 = vld [vmem:[#allocation8 + $0xf8] sm:$0xf]
    %v3349 = vld [vmem:[#allocation8 + $0xfc] sm:$0xff]
    %v3350 = vld [vmem:[#allocation8 + $0x104] sm:$0xf]
    %v3351 = vld [vmem:[#allocation8 + $0x108] sm:$0xff]
    %v3352 = vld [vmem:[#allocation8 + $0x110] sm:$0xf]
    %v3353 = vld [vmem:[#allocation8 + $0x114] sm:$0xff]
    %v3354 = vld [vmem:[#allocation8 + $0x11c] sm:$0xf]
    %v3355 = vld [vmem:[#allocation8 + $0x120] sm:$0xff]
    %v3356 = vld [vmem:[#allocation8 + $0x128] sm:$0xf]
    %v3357 = vld [vmem:[#allocation8 + $0x12c] sm:$0xff]
    %v3358 = vld [vmem:[#allocation8 + $0x134] sm:$0xf]
    %v3359 = vld [vmem:[#allocation8 + $0x138] sm:$0xff]
    %v3360 = vld [vmem:[#allocation8 + $0x140] sm:$0xf]
    %v3361 = vld [vmem:[#allocation8 + $0x144] sm:$0xff]
    %v3362 = vld [vmem:[#allocation8 + $0x14c] sm:$0xf]
    %v3363 = vld [vmem:[#allocation8 + $0x150] sm:$0xff]
    %v3364 = vld [vmem:[#allocation8 + $0x158] sm:$0xf]
    %v3365 = vld [vmem:[#allocation8 + $0x15c] sm:$0xff]
    %v3366 = vld [vmem:[#allocation8 + $0x164] sm:$0xf]
    %v3367 = vld [vmem:[#allocation8 + $0x168] sm:$0xff]
    %v3368 = vld [vmem:[#allocation8 + $0x170] sm:$0xf]
    %v3369 = vld [vmem:[#allocation8 + $0x174] sm:$0xff]
    %v3370 = vld [vmem:[#allocation8 + $0x17c] sm:$0xf]
    %v3371 = vld [vmem:[#allocation8 + $0x180] sm:$0xff]
    %v3372 = vld [vmem:[#allocation8 + $0x188] sm:$0xf]
    %v3373 = vld [vmem:[#allocation8 + $0x18c] sm:$0xff]
    %v3374 = vld [vmem:[#allocation8 + $0x194] sm:$0xf]
    %v3375 = vld [vmem:[#allocation8 + $0x198] sm:$0xff]
    %v3376 = vld [vmem:[#allocation8 + $0x1a0] sm:$0xf]
    %v3377 = vld [vmem:[#allocation8 + $0x1a4] sm:$0xff]
    %v3378 = vld [vmem:[#allocation8 + $0x1ac] sm:$0xf]
    %v3379 = vld [vmem:[#allocation8 + $0x1b0] sm:$0xff]
    %v3380 = vld [vmem:[#allocation8 + $0x1b8] sm:$0xf]
    %v3381 = vld [vmem:[#allocation8 + $0x1bc] sm:$0xff]
    %v3382 = vld [vmem:[#allocation8 + $0x1c4] sm:$0xf]
    %v3383 = vld [vmem:[#allocation8 + $0x1c8] sm:$0xff]
    %v3384 = vld [vmem:[#allocation8 + $0x1d0] sm:$0xf]
    %v3385 = vld [vmem:[#allocation8 + $0x1d4] sm:$0xff]
    %v3386 = vld [vmem:[#allocation8 + $0x1dc] sm:$0xf]
    %v3387 = vld [vmem:[#allocation8 + $0x1e0] sm:$0xff]
    %v3388 = vld [vmem:[#allocation8 + $0x1e8] sm:$0xf]
    %v3389 = vld [vmem:[#allocation8 + $0x1ec] sm:$0xff]
    %v3390 = vld [vmem:[#allocation8 + $0x1f4] sm:$0xf]
    %v3391 = vld [vmem:[#allocation8 + $0x1f8] sm:$0xff]
    %v3392 = vld [vmem:[#allocation8 + $0x200] sm:$0xf]
    %v3393 = vld [vmem:[#allocation8 + $0x204] sm:$0xff]
    %v3394 = vld [vmem:[#allocation8 + $0x20c] sm:$0xf]
    %v3395 = vld [vmem:[#allocation8 + $0x210] sm:$0xff]
    %v3396 = vld [vmem:[#allocation8 + $0x218] sm:$0xf]
    %v3397 = vld [vmem:[#allocation8 + $0x21c] sm:$0xff]
    %v3398 = vld [vmem:[#allocation8 + $0x224] sm:$0xf]
    %v3399 = vld [vmem:[#allocation8 + $0x228] sm:$0xff]
    %v3400 = vld [vmem:[#allocation8 + $0x230] sm:$0xf]
    %v3401 = vld [vmem:[#allocation8 + $0x234] sm:$0xff]
    %v3402 = vld [vmem:[#allocation8 + $0x23c] sm:$0xf]
    %v3403 = vld [vmem:[#allocation8 + $0x240] sm:$0xff]
    %v3404 = vld [vmem:[#allocation8 + $0x248] sm:$0xf]
    %v3405 = vld [vmem:[#allocation8 + $0x24c] sm:$0xff]
    %v3406 = vld [vmem:[#allocation8 + $0x254] sm:$0xf]
    %v3407 = vld [vmem:[#allocation8 + $0x258] sm:$0xff]
    %v3408 = vld [vmem:[#allocation8 + $0x260] sm:$0xf]
    %v3409 = vld [vmem:[#allocation8 + $0x264] sm:$0xff]
    %v3410 = vld [vmem:[#allocation8 + $0x26c] sm:$0xf]
    %v3411 = vld [vmem:[#allocation8 + $0x270] sm:$0xff]
    %v3412 = vld [vmem:[#allocation8 + $0x278] sm:$0xf]
    %v3413 = vld [vmem:[#allocation8 + $0x27c] sm:$0xff]
    %v3414 = vld [vmem:[#allocation8 + $0x284] sm:$0xf]
    %v3415 = vld [vmem:[#allocation8 + $0x288] sm:$0xff]
    %v3416 = vld [vmem:[#allocation8 + $0x290] sm:$0xf]
    %v3417 = vld [vmem:[#allocation8 + $0x294] sm:$0xff]
    %v3418 = vld [vmem:[#allocation8 + $0x29c] sm:$0xf]
    %v3419 = vld [vmem:[#allocation8 + $0x2a0] sm:$0xff]
    %v3420 = vld [vmem:[#allocation8 + $0x2a8] sm:$0xf]
    %v3421 = vld [vmem:[#allocation8 + $0x2ac] sm:$0xff]
    %v3422 = vld [vmem:[#allocation8 + $0x2b4] sm:$0xf]
    %v3423 = vld [vmem:[#allocation8 + $0x2b8] sm:$0xff]
    %v3424 = vld [vmem:[#allocation8 + $0x2c0] sm:$0xf]
    %v3425 = vld [vmem:[#allocation8 + $0x2c4] sm:$0xff]
    %v3426 = vld [vmem:[#allocation8 + $0x2cc] sm:$0xf]
    %v3427 = vld [vmem:[#allocation8 + $0x2d0] sm:$0xff]
    %v3428 = vld [vmem:[#allocation8 + $0x2d8] sm:$0xf]
    %v3429 = vld [vmem:[#allocation8 + $0x2dc] sm:$0xff]
    %v3430 = vld [vmem:[#allocation8 + $0x2e4] sm:$0xf]
    %v3431 = vld [vmem:[#allocation8 + $0x2e8] sm:$0xff]
    %v3432 = vld [vmem:[#allocation8 + $0x2f0] sm:$0xf]
    %v3433 = vld [vmem:[#allocation8 + $0x2f4] sm:$0xff]
    %v3434 = vld [vmem:[#allocation8 + $0x2fc] sm:$0xf]
    %v3435 = vld [vmem:[#allocation8 + $0x300] sm:$0xff]
    %v3436 = vld [vmem:[#allocation8 + $0x308] sm:$0xf]
    %v3437 = vld [vmem:[#allocation8 + $0x30c] sm:$0xff]
    %v3438 = vld [vmem:[#allocation8 + $0x314] sm:$0xf]
    %v3439 = vld [vmem:[#allocation8 + $0x318] sm:$0xff]
    %v3440 = vld [vmem:[#allocation8 + $0x320] sm:$0xf]
    %v3441 = vld [vmem:[#allocation8 + $0x324] sm:$0xff]
    %v3442 = vld [vmem:[#allocation8 + $0x32c] sm:$0xf]
    %v3443 = vld [vmem:[#allocation8 + $0x330] sm:$0xff]
    %v3444 = vld [vmem:[#allocation8 + $0x338] sm:$0xf]
    %v3445 = vld [vmem:[#allocation8 + $0x33c] sm:$0xff]
    %v3446 = vld [vmem:[#allocation8 + $0x344] sm:$0xf]
    %v3447 = vld [vmem:[#allocation8 + $0x348] sm:$0xff]
    %v3448 = vld [vmem:[#allocation8 + $0x350] sm:$0xf]
    %v3449 = vld [vmem:[#allocation8 + $0x354] sm:$0xff]
    %v3450 = vld [vmem:[#allocation8 + $0x35c] sm:$0xf]
    %v3451 = vld [vmem:[#allocation8 + $0x360] sm:$0xff]
    %v3452 = vld [vmem:[#allocation8 + $0x368] sm:$0xf]
    %v3453 = vld [vmem:[#allocation8 + $0x36c] sm:$0xff]
    %v3454 = vld [vmem:[#allocation8 + $0x374] sm:$0xf]
    %v3455 = vld [vmem:[#allocation8 + $0x378] sm:$0xff]
    %v3456 = vld [vmem:[#allocation8 + $0x380] sm:$0xf]
    %v3457 = vld [vmem:[#allocation8 + $0x384] sm:$0xff]
    %v3458 = vld [vmem:[#allocation8 + $0x38c] sm:$0xf]
    %v3459 = vld [vmem:[#allocation8 + $0x390] sm:$0xff]
    %v3460 = vld [vmem:[#allocation8 + $0x398] sm:$0xf]
    %v3461 = vld [vmem:[#allocation8 + $0x39c] sm:$0xff]
    %v3462 = vld [vmem:[#allocation8 + $0x3a4] sm:$0xf]
    %v3463 = vld [vmem:[#allocation8 + $0x3a8] sm:$0xff]
    %v3464 = vld [vmem:[#allocation8 + $0x3b0] sm:$0xf]
    %v3465 = vld [vmem:[#allocation8 + $0x3b4] sm:$0xff]
    %v3466 = vld [vmem:[#allocation8 + $0x3bc] sm:$0xf]
    %v3467 = vld [vmem:[#allocation8 + $0x3c0] sm:$0xff]
    %v3468 = vld [vmem:[#allocation8 + $0x3c8] sm:$0xf]
    %v3469 = vld [vmem:[#allocation8 + $0x3cc] sm:$0xff]
    %v3470 = vld [vmem:[#allocation8 + $0x3d4] sm:$0xf]
    %v3471 = vld [vmem:[#allocation8 + $0x3d8] sm:$0xff]
    %v3472 = vld [vmem:[#allocation8 + $0x3e0] sm:$0xf]
    %v3473 = vld [vmem:[#allocation8 + $0x3e4] sm:$0xff]
    %v3474 = vld [vmem:[#allocation8 + $0x3ec] sm:$0xf]
    %v3475 = vld [vmem:[#allocation8 + $0x3f0] sm:$0xff]
    %v3476 = vld [vmem:[#allocation8 + $0x3f8] sm:$0xf]
    %v3477 = vld [vmem:[#allocation8 + $0x3fc] sm:$0xff]
    %v3478 = vld [vmem:[#allocation8 + $0x404] sm:$0xf]
    %v3479 = vld [vmem:[#allocation8 + $0x408] sm:$0xff]
    %v3480 = vld [vmem:[#allocation8 + $0x410] sm:$0xf]
    %v3481 = vld [vmem:[#allocation8 + $0x414] sm:$0xff]
    %v3482 = vld [vmem:[#allocation8 + $0x41c] sm:$0xf]
    %v3483 = vld [vmem:[#allocation8 + $0x420] sm:$0xff]
    %v3484 = vld [vmem:[#allocation8 + $0x428] sm:$0xf]
    %v3485 = vld [vmem:[#allocation8 + $0x42c] sm:$0xff]
    %v3486 = vld [vmem:[#allocation8 + $0x434] sm:$0xf]
    %v3487 = vld [vmem:[#allocation8 + $0x438] sm:$0xff]
    %v3488 = vld [vmem:[#allocation8 + $0x440] sm:$0xf]
    %v3489 = vld [vmem:[#allocation8 + $0x444] sm:$0xff]
    %v3490 = vld [vmem:[#allocation8 + $0x44c] sm:$0xf]
    %v3491 = vld [vmem:[#allocation8 + $0x450] sm:$0xff]
    %v3492 = vld [vmem:[#allocation8 + $0x458] sm:$0xf]
    %v3493 = vld [vmem:[#allocation8 + $0x45c] sm:$0xff]
    %v3494 = vld [vmem:[#allocation8 + $0x464] sm:$0xf]
    %v3495 = vld [vmem:[#allocation8 + $0x468] sm:$0xff]
    %v3496 = vld [vmem:[#allocation8 + $0x470] sm:$0xf]
    %v3497 = vld [vmem:[#allocation8 + $0x474] sm:$0xff]
    %v3498 = vld [vmem:[#allocation8 + $0x47c] sm:$0xf]
    %v3499 = vld [vmem:[#allocation8 + $0x480] sm:$0xff]
    %v3500 = vld [vmem:[#allocation8 + $0x488] sm:$0xf]
    %v3501 = vld [vmem:[#allocation8 + $0x48c] sm:$0xff]
    %v3502 = vld [vmem:[#allocation8 + $0x494] sm:$0xf]
    %v3503 = vld [vmem:[#allocation8 + $0x498] sm:$0xff]
    %v3504 = vld [vmem:[#allocation8 + $0x4a0] sm:$0xf]
    %v3505 = vld [vmem:[#allocation8 + $0x4a4] sm:$0xff]
    %v3506 = vld [vmem:[#allocation8 + $0x4ac] sm:$0xf]
    %v3507 = vld [vmem:[#allocation8 + $0x4b0] sm:$0xff]
    %v3508 = vld [vmem:[#allocation8 + $0x4b8] sm:$0xf]
    %v3509 = vld [vmem:[#allocation8 + $0x4bc] sm:$0xff]
    %v3510 = vld [vmem:[#allocation8 + $0x4c4] sm:$0xf]
    %v3511 = vld [vmem:[#allocation8 + $0x4c8] sm:$0xff]
    %v3512 = vld [vmem:[#allocation8 + $0x4d0] sm:$0xf]
    %v3513 = vld [vmem:[#allocation8 + $0x4d4] sm:$0xff]
    %v3514 = vld [vmem:[#allocation8 + $0x4dc] sm:$0xf]
    %v3515 = vld [vmem:[#allocation8 + $0x4e0] sm:$0xff]
    %v3516 = vld [vmem:[#allocation8 + $0x4e8] sm:$0xf]
    %v3517 = vld [vmem:[#allocation8 + $0x4ec] sm:$0xff]
    %v3518 = vld [vmem:[#allocation8 + $0x4f4] sm:$0xf]
    %v3519 = vld [vmem:[#allocation8 + $0x4f8] sm:$0xff]
    %v3520 = vld [vmem:[#allocation8 + $0x500] sm:$0xf]
    %v3521 = vld [vmem:[#allocation8 + $0x504] sm:$0xff]
    %v3522 = vld [vmem:[#allocation8 + $0x50c] sm:$0xf]
    %v3523 = vld [vmem:[#allocation8 + $0x510] sm:$0xff]
    %v3524 = vld [vmem:[#allocation8 + $0x518] sm:$0xf]
    %v3525 = vld [vmem:[#allocation8 + $0x51c] sm:$0xff]
    %v3526 = vld [vmem:[#allocation8 + $0x524] sm:$0xf]
    %v3527 = vld [vmem:[#allocation8 + $0x528] sm:$0xff]
    %v3528 = vld [vmem:[#allocation8 + $0x530] sm:$0xf]
    %v3529 = vld [vmem:[#allocation8 + $0x534] sm:$0xff]
    %v3530 = vld [vmem:[#allocation8 + $0x53c] sm:$0xf]
    %v3531 = vld [vmem:[#allocation8 + $0x540] sm:$0xff]
    %v3532 = vld [vmem:[#allocation8 + $0x548] sm:$0xf]
    %v3533 = vld [vmem:[#allocation8 + $0x54c] sm:$0xff]
    %v3534 = vld [vmem:[#allocation8 + $0x554] sm:$0xf]
    %v3535 = vld [vmem:[#allocation8 + $0x558] sm:$0xff]
    %v3536 = vld [vmem:[#allocation8 + $0x560] sm:$0xf]
    %v3537 = vld [vmem:[#allocation8 + $0x564] sm:$0xff]
    %v3538 = vld [vmem:[#allocation8 + $0x56c] sm:$0xf]
    %v3539 = vld [vmem:[#allocation8 + $0x570] sm:$0xff]
    %v3540 = vld [vmem:[#allocation8 + $0x578] sm:$0xf]
    %v3541 = vld [vmem:[#allocation8 + $0x57c] sm:$0xff]
    %v3542 = vld [vmem:[#allocation8 + $0x584] sm:$0xf]
    %v3543 = vld [vmem:[#allocation8 + $0x588] sm:$0xff]
    %v3544 = vld [vmem:[#allocation8 + $0x590] sm:$0xf]
    %v3545 = vld [vmem:[#allocation8 + $0x594] sm:$0xff]
    %v3546 = vld [vmem:[#allocation8 + $0x59c] sm:$0xf]
    %v3547 = vld [vmem:[#allocation8 + $0x5a0] sm:$0xff]
    %v3548 = vld [vmem:[#allocation8 + $0x5a8] sm:$0xf]
    %v3549 = vld [vmem:[#allocation8 + $0x5ac] sm:$0xff]
    %v3550 = vld [vmem:[#allocation8 + $0x5b4] sm:$0xf]
    %v3551 = vld [vmem:[#allocation8 + $0x5b8] sm:$0xff]
    %v3552 = vld [vmem:[#allocation8 + $0x5c0] sm:$0xf]
    %v3553 = vld [vmem:[#allocation8 + $0x5c4] sm:$0xff]
    %v3554 = vld [vmem:[#allocation8 + $0x5cc] sm:$0xf]
    %v3555 = vld [vmem:[#allocation8 + $0x5d0] sm:$0xff]
    %v3556 = vld [vmem:[#allocation8 + $0x5d8] sm:$0xf]
    %v3557 = vld [vmem:[#allocation8 + $0x5dc] sm:$0xff]
    %v3558 = vld [vmem:[#allocation8 + $0x5e4] sm:$0xf]
    %v3559 = vld [vmem:[#allocation8 + $0x5e8] sm:$0xff]
    %v3560 = vld [vmem:[#allocation8 + $0x5f0] sm:$0xf]
    %v3561 = vld [vmem:[#allocation8 + $0x5f4] sm:$0xff]
    %v3562 = vld [vmem:[#allocation8 + $0x5fc] sm:$0xf]
    %v3563 = vld [vmem:[#allocation10] sm:$0x7]
    %v3565 = vperm.slane %v3563, 0
    %v3566 = vperm.slane %v3563, 1
    %v3567 = vperm.slane %v3563, 2
    %v3827 = vunpack.c.l.b16 %v3307
    %v3828 = vunpack.c.h.b16 %v3307
    %v3829 = vunpack.c.l.b16 %v3308
    %v3830 = vunpack.c.l.b16 %v3309
    %v3831 = vunpack.c.h.b16 %v3309
    %v3832 = vunpack.c.l.b16 %v3310
    %v3833 = vunpack.c.l.b16 %v3311
    %v3834 = vunpack.c.h.b16 %v3311
    %v3835 = vunpack.c.l.b16 %v3312
    %v3836 = vunpack.c.l.b16 %v3313
    %v3837 = vunpack.c.h.b16 %v3313
    %v3838 = vunpack.c.l.b16 %v3314
    %v3839 = vunpack.c.l.b16 %v3315
    %v3840 = vunpack.c.h.b16 %v3315
    %v3841 = vunpack.c.l.b16 %v3316
    %v3842 = vunpack.c.l.b16 %v3317
    %v3843 = vunpack.c.h.b16 %v3317
    %v3844 = vunpack.c.l.b16 %v3318
    %v3845 = vunpack.c.l.b16 %v3319
    %v3846 = vunpack.c.h.b16 %v3319
    %v3847 = vunpack.c.l.b16 %v3320
    %v3848 = vunpack.c.l.b16 %v3321
    %v3849 = vunpack.c.h.b16 %v3321
    %v3850 = vunpack.c.l.b16 %v3322
    %v3851 = vunpack.c.l.b16 %v3323
    %v3852 = vunpack.c.h.b16 %v3323
    %v3853 = vunpack.c.l.b16 %v3324
    %v3854 = vunpack.c.l.b16 %v3325
    %v3855 = vunpack.c.h.b16 %v3325
    %v3856 = vunpack.c.l.b16 %v3326
    %v3857 = vunpack.c.l.b16 %v3327
    %v3858 = vunpack.c.h.b16 %v3327
    %v3859 = vunpack.c.l.b16 %v3328
    %v3860 = vunpack.c.l.b16 %v3329
    %v3861 = vunpack.c.h.b16 %v3329
    %v3862 = vunpack.c.l.b16 %v3330
    %v3863 = vunpack.c.l.b16 %v3331
    %v3864 = vunpack.c.h.b16 %v3331
    %v3865 = vunpack.c.l.b16 %v3332
    %v3866 = vunpack.c.l.b16 %v3333
    %v3867 = vunpack.c.h.b16 %v3333
    %v3868 = vunpack.c.l.b16 %v3334
    %v3869 = vunpack.c.l.b16 %v3335
    %v3870 = vunpack.c.h.b16 %v3335
    %v3871 = vunpack.c.l.b16 %v3336
    %v3872 = vunpack.c.l.b16 %v3337
    %v3873 = vunpack.c.h.b16 %v3337
    %v3874 = vunpack.c.l.b16 %v3338
    %v3875 = vunpack.c.l.b16 %v3339
    %v3876 = vunpack.c.h.b16 %v3339
    %v3877 = vunpack.c.l.b16 %v3340
    %v3878 = vunpack.c.l.b16 %v3341
    %v3879 = vunpack.c.h.b16 %v3341
    %v3880 = vunpack.c.l.b16 %v3342
    %v3881 = vunpack.c.l.b16 %v3343
    %v3882 = vunpack.c.h.b16 %v3343
    %v3883 = vunpack.c.l.b16 %v3344
    %v3884 = vunpack.c.l.b16 %v3345
    %v3885 = vunpack.c.h.b16 %v3345
    %v3886 = vunpack.c.l.b16 %v3346
    %v3887 = vunpack.c.l.b16 %v3347
    %v3888 = vunpack.c.h.b16 %v3347
    %v3889 = vunpack.c.l.b16 %v3348
    %v3890 = vunpack.c.l.b16 %v3349
    %v3891 = vunpack.c.h.b16 %v3349
    %v3892 = vunpack.c.l.b16 %v3350
    %v3893 = vunpack.c.l.b16 %v3351
    %v3894 = vunpack.c.h.b16 %v3351
    %v3895 = vunpack.c.l.b16 %v3352
    %v3896 = vunpack.c.l.b16 %v3353
    %v3897 = vunpack.c.h.b16 %v3353
    %v3898 = vunpack.c.l.b16 %v3354
    %v3899 = vunpack.c.l.b16 %v3355
    %v3900 = vunpack.c.h.b16 %v3355
    %v3901 = vunpack.c.l.b16 %v3356
    %v3902 = vunpack.c.l.b16 %v3357
    %v3903 = vunpack.c.h.b16 %v3357
    %v3904 = vunpack.c.l.b16 %v3358
    %v3905 = vunpack.c.l.b16 %v3359
    %v3906 = vunpack.c.h.b16 %v3359
    %v3907 = vunpack.c.l.b16 %v3360
    %v3908 = vunpack.c.l.b16 %v3361
    %v3909 = vunpack.c.h.b16 %v3361
    %v3910 = vunpack.c.l.b16 %v3362
    %v3911 = vunpack.c.l.b16 %v3363
    %v3912 = vunpack.c.h.b16 %v3363
    %v3913 = vunpack.c.l.b16 %v3364
    %v3914 = vunpack.c.l.b16 %v3365
    %v3915 = vunpack.c.h.b16 %v3365
    %v3916 = vunpack.c.l.b16 %v3366
    %v3917 = vunpack.c.l.b16 %v3367
    %v3918 = vunpack.c.h.b16 %v3367
    %v3919 = vunpack.c.l.b16 %v3368
    %v3920 = vunpack.c.l.b16 %v3369
    %v3921 = vunpack.c.h.b16 %v3369
    %v3922 = vunpack.c.l.b16 %v3370
    %v3923 = vunpack.c.l.b16 %v3371
    %v3924 = vunpack.c.h.b16 %v3371
    %v3925 = vunpack.c.l.b16 %v3372
    %v3926 = vunpack.c.l.b16 %v3373
    %v3927 = vunpack.c.h.b16 %v3373
    %v3928 = vunpack.c.l.b16 %v3374
    %v3929 = vunpack.c.l.b16 %v3375
    %v3930 = vunpack.c.h.b16 %v3375
    %v3931 = vunpack.c.l.b16 %v3376
    %v3932 = vunpack.c.l.b16 %v3377
    %v3933 = vunpack.c.h.b16 %v3377
    %v3934 = vunpack.c.l.b16 %v3378
    %v3935 = vunpack.c.l.b16 %v3379
    %v3936 = vunpack.c.h.b16 %v3379
    %v3937 = vunpack.c.l.b16 %v3380
    %v3938 = vunpack.c.l.b16 %v3381
    %v3939 = vunpack.c.h.b16 %v3381
    %v3940 = vunpack.c.l.b16 %v3382
    %v3941 = vunpack.c.l.b16 %v3383
    %v3942 = vunpack.c.h.b16 %v3383
    %v3943 = vunpack.c.l.b16 %v3384
    %v3944 = vunpack.c.l.b16 %v3385
    %v3945 = vunpack.c.h.b16 %v3385
    %v3946 = vunpack.c.l.b16 %v3386
    %v3947 = vunpack.c.l.b16 %v3387
    %v3948 = vunpack.c.h.b16 %v3387
    %v3949 = vunpack.c.l.b16 %v3388
    %v3950 = vunpack.c.l.b16 %v3389
    %v3951 = vunpack.c.h.b16 %v3389
    %v3952 = vunpack.c.l.b16 %v3390
    %v3953 = vunpack.c.l.b16 %v3391
    %v3954 = vunpack.c.h.b16 %v3391
    %v3955 = vunpack.c.l.b16 %v3392
    %v3956 = vunpack.c.l.b16 %v3393
    %v3957 = vunpack.c.h.b16 %v3393
    %v3958 = vunpack.c.l.b16 %v3394
    %v3959 = vunpack.c.l.b16 %v3395
    %v3960 = vunpack.c.h.b16 %v3395
    %v3961 = vunpack.c.l.b16 %v3396
    %v3962 = vunpack.c.l.b16 %v3397
    %v3963 = vunpack.c.h.b16 %v3397
    %v3964 = vunpack.c.l.b16 %v3398
    %v3965 = vunpack.c.l.b16 %v3399
    %v3966 = vunpack.c.h.b16 %v3399
    %v3967 = vunpack.c.l.b16 %v3400
    %v3968 = vunpack.c.l.b16 %v3401
    %v3969 = vunpack.c.h.b16 %v3401
    %v3970 = vunpack.c.l.b16 %v3402
    %v3971 = vunpack.c.l.b16 %v3403
    %v3972 = vunpack.c.h.b16 %v3403
    %v3973 = vunpack.c.l.b16 %v3404
    %v3974 = vunpack.c.l.b16 %v3405
    %v3975 = vunpack.c.h.b16 %v3405
    %v3976 = vunpack.c.l.b16 %v3406
    %v3977 = vunpack.c.l.b16 %v3407
    %v3978 = vunpack.c.h.b16 %v3407
    %v3979 = vunpack.c.l.b16 %v3408
    %v3980 = vunpack.c.l.b16 %v3409
    %v3981 = vunpack.c.h.b16 %v3409
    %v3982 = vunpack.c.l.b16 %v3410
    %v3983 = vunpack.c.l.b16 %v3411
    %v3984 = vunpack.c.h.b16 %v3411
    %v3985 = vunpack.c.l.b16 %v3412
    %v3986 = vunpack.c.l.b16 %v3413
    %v3987 = vunpack.c.h.b16 %v3413
    %v3988 = vunpack.c.l.b16 %v3414
    %v3989 = vunpack.c.l.b16 %v3415
    %v3990 = vunpack.c.h.b16 %v3415
    %v3991 = vunpack.c.l.b16 %v3416
    %v3992 = vunpack.c.l.b16 %v3417
    %v3993 = vunpack.c.h.b16 %v3417
    %v3994 = vunpack.c.l.b16 %v3418
    %v3995 = vunpack.c.l.b16 %v3419
    %v3996 = vunpack.c.h.b16 %v3419
    %v3997 = vunpack.c.l.b16 %v3420
    %v3998 = vunpack.c.l.b16 %v3421
    %v3999 = vunpack.c.h.b16 %v3421
    %v4000 = vunpack.c.l.b16 %v3422
    %v4001 = vunpack.c.l.b16 %v3423
    %v4002 = vunpack.c.h.b16 %v3423
    %v4003 = vunpack.c.l.b16 %v3424
    %v4004 = vunpack.c.l.b16 %v3425
    %v4005 = vunpack.c.h.b16 %v3425
    %v4006 = vunpack.c.l.b16 %v3426
    %v4007 = vunpack.c.l.b16 %v3427
    %v4008 = vunpack.c.h.b16 %v3427
    %v4009 = vunpack.c.l.b16 %v3428
    %v4010 = vunpack.c.l.b16 %v3429
    %v4011 = vunpack.c.h.b16 %v3429
    %v4012 = vunpack.c.l.b16 %v3430
    %v4013 = vunpack.c.l.b16 %v3431
    %v4014 = vunpack.c.h.b16 %v3431
    %v4015 = vunpack.c.l.b16 %v3432
    %v4016 = vunpack.c.l.b16 %v3433
    %v4017 = vunpack.c.h.b16 %v3433
    %v4018 = vunpack.c.l.b16 %v3434
    %v4019 = vunpack.c.l.b16 %v3435
    %v4020 = vunpack.c.h.b16 %v3435
    %v4021 = vunpack.c.l.b16 %v3436
    %v4022 = vunpack.c.l.b16 %v3437
    %v4023 = vunpack.c.h.b16 %v3437
    %v4024 = vunpack.c.l.b16 %v3438
    %v4025 = vunpack.c.l.b16 %v3439
    %v4026 = vunpack.c.h.b16 %v3439
    %v4027 = vunpack.c.l.b16 %v3440
    %v4028 = vunpack.c.l.b16 %v3441
    %v4029 = vunpack.c.h.b16 %v3441
    %v4030 = vunpack.c.l.b16 %v3442
    %v4031 = vunpack.c.l.b16 %v3443
    %v4032 = vunpack.c.h.b16 %v3443
    %v4033 = vunpack.c.l.b16 %v3444
    %v4034 = vunpack.c.l.b16 %v3445
    %v4035 = vunpack.c.h.b16 %v3445
    %v4036 = vunpack.c.l.b16 %v3446
    %v4037 = vunpack.c.l.b16 %v3447
    %v4038 = vunpack.c.h.b16 %v3447
    %v4039 = vunpack.c.l.b16 %v3448
    %v4040 = vunpack.c.l.b16 %v3449
    %v4041 = vunpack.c.h.b16 %v3449
    %v4042 = vunpack.c.l.b16 %v3450
    %v4043 = vunpack.c.l.b16 %v3451
    %v4044 = vunpack.c.h.b16 %v3451
    %v4045 = vunpack.c.l.b16 %v3452
    %v4046 = vunpack.c.l.b16 %v3453
    %v4047 = vunpack.c.h.b16 %v3453
    %v4048 = vunpack.c.l.b16 %v3454
    %v4049 = vunpack.c.l.b16 %v3455
    %v4050 = vunpack.c.h.b16 %v3455
    %v4051 = vunpack.c.l.b16 %v3456
    %v4052 = vunpack.c.l.b16 %v3457
    %v4053 = vunpack.c.h.b16 %v3457
    %v4054 = vunpack.c.l.b16 %v3458
    %v4055 = vunpack.c.l.b16 %v3459
    %v4056 = vunpack.c.h.b16 %v3459
    %v4057 = vunpack.c.l.b16 %v3460
    %v4058 = vunpack.c.l.b16 %v3461
    %v4059 = vunpack.c.h.b16 %v3461
    %v4060 = vunpack.c.l.b16 %v3462
    %v4061 = vunpack.c.l.b16 %v3463
    %v4062 = vunpack.c.h.b16 %v3463
    %v4063 = vunpack.c.l.b16 %v3464
    %v4064 = vunpack.c.l.b16 %v3465
    %v4065 = vunpack.c.h.b16 %v3465
    %v4066 = vunpack.c.l.b16 %v3466
    %v4067 = vunpack.c.l.b16 %v3467
    %v4068 = vunpack.c.h.b16 %v3467
    %v4069 = vunpack.c.l.b16 %v3468
    %v4070 = vunpack.c.l.b16 %v3469
    %v4071 = vunpack.c.h.b16 %v3469
    %v4072 = vunpack.c.l.b16 %v3470
    %v4073 = vunpack.c.l.b16 %v3471
    %v4074 = vunpack.c.h.b16 %v3471
    %v4075 = vunpack.c.l.b16 %v3472
    %v4076 = vunpack.c.l.b16 %v3473
    %v4077 = vunpack.c.h.b16 %v3473
    %v4078 = vunpack.c.l.b16 %v3474
    %v4079 = vunpack.c.l.b16 %v3475
    %v4080 = vunpack.c.h.b16 %v3475
    %v4081 = vunpack.c.l.b16 %v3476
    %v4082 = vunpack.c.l.b16 %v3477
    %v4083 = vunpack.c.h.b16 %v3477
    %v4084 = vunpack.c.l.b16 %v3478
    %v4085 = vunpack.c.l.b16 %v3479
    %v4086 = vunpack.c.h.b16 %v3479
    %v4087 = vunpack.c.l.b16 %v3480
    %v4088 = vunpack.c.l.b16 %v3481
    %v4089 = vunpack.c.h.b16 %v3481
    %v4090 = vunpack.c.l.b16 %v3482
    %v4091 = vunpack.c.l.b16 %v3483
    %v4092 = vunpack.c.h.b16 %v3483
    %v4093 = vunpack.c.l.b16 %v3484
    %v4094 = vunpack.c.l.b16 %v3485
    %v4095 = vunpack.c.h.b16 %v3485
    %v4096 = vunpack.c.l.b16 %v3486
    %v4097 = vunpack.c.l.b16 %v3487
    %v4098 = vunpack.c.h.b16 %v3487
    %v4099 = vunpack.c.l.b16 %v3488
    %v4100 = vunpack.c.l.b16 %v3489
    %v4101 = vunpack.c.h.b16 %v3489
    %v4102 = vunpack.c.l.b16 %v3490
    %v4103 = vunpack.c.l.b16 %v3491
    %v4104 = vunpack.c.h.b16 %v3491
    %v4105 = vunpack.c.l.b16 %v3492
    %v4106 = vunpack.c.l.b16 %v3493
    %v4107 = vunpack.c.h.b16 %v3493
    %v4108 = vunpack.c.l.b16 %v3494
    %v4109 = vunpack.c.l.b16 %v3495
    %v4110 = vunpack.c.h.b16 %v3495
    %v4111 = vunpack.c.l.b16 %v3496
    %v4112 = vunpack.c.l.b16 %v3497
    %v4113 = vunpack.c.h.b16 %v3497
    %v4114 = vunpack.c.l.b16 %v3498
    %v4115 = vunpack.c.l.b16 %v3499
    %v4116 = vunpack.c.h.b16 %v3499
    %v4117 = vunpack.c.l.b16 %v3500
    %v4118 = vunpack.c.l.b16 %v3501
    %v4119 = vunpack.c.h.b16 %v3501
    %v4120 = vunpack.c.l.b16 %v3502
    %v4121 = vunpack.c.l.b16 %v3503
    %v4122 = vunpack.c.h.b16 %v3503
    %v4123 = vunpack.c.l.b16 %v3504
    %v4124 = vunpack.c.l.b16 %v3505
    %v4125 = vunpack.c.h.b16 %v3505
    %v4126 = vunpack.c.l.b16 %v3506
    %v4127 = vunpack.c.l.b16 %v3507
    %v4128 = vunpack.c.h.b16 %v3507
    %v4129 = vunpack.c.l.b16 %v3508
    %v4130 = vunpack.c.l.b16 %v3509
    %v4131 = vunpack.c.h.b16 %v3509
    %v4132 = vunpack.c.l.b16 %v3510
    %v4133 = vunpack.c.l.b16 %v3511
    %v4134 = vunpack.c.h.b16 %v3511
    %v4135 = vunpack.c.l.b16 %v3512
    %v4136 = vunpack.c.l.b16 %v3513
    %v4137 = vunpack.c.h.b16 %v3513
    %v4138 = vunpack.c.l.b16 %v3514
    %v4139 = vunpack.c.l.b16 %v3515
    %v4140 = vunpack.c.h.b16 %v3515
    %v4141 = vunpack.c.l.b16 %v3516
    %v4142 = vunpack.c.l.b16 %v3517
    %v4143 = vunpack.c.h.b16 %v3517
    %v4144 = vunpack.c.l.b16 %v3518
    %v4145 = vunpack.c.l.b16 %v3519
    %v4146 = vunpack.c.h.b16 %v3519
    %v4147 = vunpack.c.l.b16 %v3520
    %v4148 = vunpack.c.l.b16 %v3521
    %v4149 = vunpack.c.h.b16 %v3521
    %v4150 = vunpack.c.l.b16 %v3522
    %v4151 = vunpack.c.l.b16 %v3523
    %v4152 = vunpack.c.h.b16 %v3523
    %v4153 = vunpack.c.l.b16 %v3524
    %v4154 = vunpack.c.l.b16 %v3525
    %v4155 = vunpack.c.h.b16 %v3525
    %v4156 = vunpack.c.l.b16 %v3526
    %v4157 = vunpack.c.l.b16 %v3527
    %v4158 = vunpack.c.h.b16 %v3527
    %v4159 = vunpack.c.l.b16 %v3528
    %v4160 = vunpack.c.l.b16 %v3529
    %v4161 = vunpack.c.h.b16 %v3529
    %v4162 = vunpack.c.l.b16 %v3530
    %v4163 = vunpack.c.l.b16 %v3531
    %v4164 = vunpack.c.h.b16 %v3531
    %v4165 = vunpack.c.l.b16 %v3532
    %v4166 = vunpack.c.l.b16 %v3533
    %v4167 = vunpack.c.h.b16 %v3533
    %v4168 = vunpack.c.l.b16 %v3534
    %v4169 = vunpack.c.l.b16 %v3535
    %v4170 = vunpack.c.h.b16 %v3535
    %v4171 = vunpack.c.l.b16 %v3536
    %v4172 = vunpack.c.l.b16 %v3537
    %v4173 = vunpack.c.h.b16 %v3537
    %v4174 = vunpack.c.l.b16 %v3538
    %v4175 = vunpack.c.l.b16 %v3539
    %v4176 = vunpack.c.h.b16 %v3539
    %v4177 = vunpack.c.l.b16 %v3540
    %v4178 = vunpack.c.l.b16 %v3541
    %v4179 = vunpack.c.h.b16 %v3541
    %v4180 = vunpack.c.l.b16 %v3542
    %v4181 = vunpack.c.l.b16 %v3543
    %v4182 = vunpack.c.h.b16 %v3543
    %v4183 = vunpack.c.l.b16 %v3544
    %v4184 = vunpack.c.l.b16 %v3545
    %v4185 = vunpack.c.h.b16 %v3545
    %v4186 = vunpack.c.l.b16 %v3546
    %v4187 = vunpack.c.l.b16 %v3547
    %v4188 = vunpack.c.h.b16 %v3547
    %v4189 = vunpack.c.l.b16 %v3548
    %v4190 = vunpack.c.l.b16 %v3549
    %v4191 = vunpack.c.h.b16 %v3549
    %v4192 = vunpack.c.l.b16 %v3550
    %v4193 = vunpack.c.l.b16 %v3551
    %v4194 = vunpack.c.h.b16 %v3551
    %v4195 = vunpack.c.l.b16 %v3552
    %v4196 = vunpack.c.l.b16 %v3553
    %v4197 = vunpack.c.h.b16 %v3553
    %v4198 = vunpack.c.l.b16 %v3554
    %v4199 = vunpack.c.l.b16 %v3555
    %v4200 = vunpack.c.h.b16 %v3555
    %v4201 = vunpack.c.l.b16 %v3556
    %v4202 = vunpack.c.l.b16 %v3557
    %v4203 = vunpack.c.h.b16 %v3557
    %v4204 = vunpack.c.l.b16 %v3558
    %v4205 = vunpack.c.l.b16 %v3559
    %v4206 = vunpack.c.h.b16 %v3559
    %v4207 = vunpack.c.l.b16 %v3560
    %v4208 = vunpack.c.l.b16 %v3561
    %v4209 = vunpack.c.h.b16 %v3561
    %v4210 = vunpack.c.l.b16 %v3562
    %v4211 = vpack.c.b16 %v3830, %v3827
    %v4212 = vpack.c.b16 %v3831, %v3828
    %v4213 = vpack.c.b16 %v3832, %v3829
    %v4214 = vpack.c.b16 %v3836, %v3833
    %v4215 = vpack.c.b16 %v3837, %v3834
    %v4216 = vpack.c.b16 %v3838, %v3835
    %v4217 = vpack.c.b16 %v3842, %v3839
    %v4218 = vpack.c.b16 %v3843, %v3840
    %v4219 = vpack.c.b16 %v3844, %v3841
    %v4220 = vpack.c.b16 %v3848, %v3845
    %v4221 = vpack.c.b16 %v3849, %v3846
    %v4222 = vpack.c.b16 %v3850, %v3847
    %v4223 = vpack.c.b16 %v3854, %v3851
    %v4224 = vpack.c.b16 %v3855, %v3852
    %v4225 = vpack.c.b16 %v3856, %v3853
    %v4226 = vpack.c.b16 %v3860, %v3857
    %v4227 = vpack.c.b16 %v3861, %v3858
    %v4228 = vpack.c.b16 %v3862, %v3859
    %v4229 = vpack.c.b16 %v3866, %v3863
    %v4230 = vpack.c.b16 %v3867, %v3864
    %v4231 = vpack.c.b16 %v3868, %v3865
    %v4232 = vpack.c.b16 %v3872, %v3869
    %v4233 = vpack.c.b16 %v3873, %v3870
    %v4234 = vpack.c.b16 %v3874, %v3871
    %v4235 = vpack.c.b16 %v3878, %v3875
    %v4236 = vpack.c.b16 %v3879, %v3876
    %v4237 = vpack.c.b16 %v3880, %v3877
    %v4238 = vpack.c.b16 %v3884, %v3881
    %v4239 = vpack.c.b16 %v3885, %v3882
    %v4240 = vpack.c.b16 %v3886, %v3883
    %v4241 = vpack.c.b16 %v3890, %v3887
    %v4242 = vpack.c.b16 %v3891, %v3888
    %v4243 = vpack.c.b16 %v3892, %v3889
    %v4244 = vpack.c.b16 %v3896, %v3893
    %v4245 = vpack.c.b16 %v3897, %v3894
    %v4246 = vpack.c.b16 %v3898, %v3895
    %v4247 = vpack.c.b16 %v3902, %v3899
    %v4248 = vpack.c.b16 %v3903, %v3900
    %v4249 = vpack.c.b16 %v3904, %v3901
    %v4250 = vpack.c.b16 %v3908, %v3905
    %v4251 = vpack.c.b16 %v3909, %v3906
    %v4252 = vpack.c.b16 %v3910, %v3907
    %v4253 = vpack.c.b16 %v3914, %v3911
    %v4254 = vpack.c.b16 %v3915, %v3912
    %v4255 = vpack.c.b16 %v3916, %v3913
    %v4256 = vpack.c.b16 %v3920, %v3917
    %v4257 = vpack.c.b16 %v3921, %v3918
    %v4258 = vpack.c.b16 %v3922, %v3919
    %v4259 = vpack.c.b16 %v3926, %v3923
    %v4260 = vpack.c.b16 %v3927, %v3924
    %v4261 = vpack.c.b16 %v3928, %v3925
    %v4262 = vpack.c.b16 %v3932, %v3929
    %v4263 = vpack.c.b16 %v3933, %v3930
    %v4264 = vpack.c.b16 %v3934, %v3931
    %v4265 = vpack.c.b16 %v3938, %v3935
    %v4266 = vpack.c.b16 %v3939, %v3936
    %v4267 = vpack.c.b16 %v3940, %v3937
    %v4268 = vpack.c.b16 %v3944, %v3941
    %v4269 = vpack.c.b16 %v3945, %v3942
    %v4270 = vpack.c.b16 %v3946, %v3943
    %v4271 = vpack.c.b16 %v3950, %v3947
    %v4272 = vpack.c.b16 %v3951, %v3948
    %v4273 = vpack.c.b16 %v3952, %v3949
    %v4274 = vpack.c.b16 %v3956, %v3953
    %v4275 = vpack.c.b16 %v3957, %v3954
    %v4276 = vpack.c.b16 %v3958, %v3955
    %v4277 = vpack.c.b16 %v3962, %v3959
    %v4278 = vpack.c.b16 %v3963, %v3960
    %v4279 = vpack.c.b16 %v3964, %v3961
    %v4280 = vpack.c.b16 %v3968, %v3965
    %v4281 = vpack.c.b16 %v3969, %v3966
    %v4282 = vpack.c.b16 %v3970, %v3967
    %v4283 = vpack.c.b16 %v3974, %v3971
    %v4284 = vpack.c.b16 %v3975, %v3972
    %v4285 = vpack.c.b16 %v3976, %v3973
    %v4286 = vpack.c.b16 %v3980, %v3977
    %v4287 = vpack.c.b16 %v3981, %v3978
    %v4288 = vpack.c.b16 %v3982, %v3979
    %v4289 = vpack.c.b16 %v3986, %v3983
    %v4290 = vpack.c.b16 %v3987, %v3984
    %v4291 = vpack.c.b16 %v3988, %v3985
    %v4292 = vpack.c.b16 %v3992, %v3989
    %v4293 = vpack.c.b16 %v3993, %v3990
    %v4294 = vpack.c.b16 %v3994, %v3991
    %v4295 = vpack.c.b16 %v3998, %v3995
    %v4296 = vpack.c.b16 %v3999, %v3996
    %v4297 = vpack.c.b16 %v4000, %v3997
    %v4298 = vpack.c.b16 %v4004, %v4001
    %v4299 = vpack.c.b16 %v4005, %v4002
    %v4300 = vpack.c.b16 %v4006, %v4003
    %v4301 = vpack.c.b16 %v4010, %v4007
    %v4302 = vpack.c.b16 %v4011, %v4008
    %v4303 = vpack.c.b16 %v4012, %v4009
    %v4304 = vpack.c.b16 %v4016, %v4013
    %v4305 = vpack.c.b16 %v4017, %v4014
    %v4306 = vpack.c.b16 %v4018, %v4015
    %v4307 = vpack.c.b16 %v4022, %v4019
    %v4308 = vpack.c.b16 %v4023, %v4020
    %v4309 = vpack.c.b16 %v4024, %v4021
    %v4310 = vpack.c.b16 %v4028, %v4025
    %v4311 = vpack.c.b16 %v4029, %v4026
    %v4312 = vpack.c.b16 %v4030, %v4027
    %v4313 = vpack.c.b16 %v4034, %v4031
    %v4314 = vpack.c.b16 %v4035, %v4032
    %v4315 = vpack.c.b16 %v4036, %v4033
    %v4316 = vpack.c.b16 %v4040, %v4037
    %v4317 = vpack.c.b16 %v4041, %v4038
    %v4318 = vpack.c.b16 %v4042, %v4039
    %v4319 = vpack.c.b16 %v4046, %v4043
    %v4320 = vpack.c.b16 %v4047, %v4044
    %v4321 = vpack.c.b16 %v4048, %v4045
    %v4322 = vpack.c.b16 %v4052, %v4049
    %v4323 = vpack.c.b16 %v4053, %v4050
    %v4324 = vpack.c.b16 %v4054, %v4051
    %v4325 = vpack.c.b16 %v4058, %v4055
    %v4326 = vpack.c.b16 %v4059, %v4056
    %v4327 = vpack.c.b16 %v4060, %v4057
    %v4328 = vpack.c.b16 %v4064, %v4061
    %v4329 = vpack.c.b16 %v4065, %v4062
    %v4330 = vpack.c.b16 %v4066, %v4063
    %v4331 = vpack.c.b16 %v4070, %v4067
    %v4332 = vpack.c.b16 %v4071, %v4068
    %v4333 = vpack.c.b16 %v4072, %v4069
    %v4334 = vpack.c.b16 %v4076, %v4073
    %v4335 = vpack.c.b16 %v4077, %v4074
    %v4336 = vpack.c.b16 %v4078, %v4075
    %v4337 = vpack.c.b16 %v4082, %v4079
    %v4338 = vpack.c.b16 %v4083, %v4080
    %v4339 = vpack.c.b16 %v4084, %v4081
    %v4340 = vpack.c.b16 %v4088, %v4085
    %v4341 = vpack.c.b16 %v4089, %v4086
    %v4342 = vpack.c.b16 %v4090, %v4087
    %v4343 = vpack.c.b16 %v4094, %v4091
    %v4344 = vpack.c.b16 %v4095, %v4092
    %v4345 = vpack.c.b16 %v4096, %v4093
    %v4346 = vpack.c.b16 %v4100, %v4097
    %v4347 = vpack.c.b16 %v4101, %v4098
    %v4348 = vpack.c.b16 %v4102, %v4099
    %v4349 = vpack.c.b16 %v4106, %v4103
    %v4350 = vpack.c.b16 %v4107, %v4104
    %v4351 = vpack.c.b16 %v4108, %v4105
    %v4352 = vpack.c.b16 %v4112, %v4109
    %v4353 = vpack.c.b16 %v4113, %v4110
    %v4354 = vpack.c.b16 %v4114, %v4111
    %v4355 = vpack.c.b16 %v4118, %v4115
    %v4356 = vpack.c.b16 %v4119, %v4116
    %v4357 = vpack.c.b16 %v4120, %v4117
    %v4358 = vpack.c.b16 %v4124, %v4121
    %v4359 = vpack.c.b16 %v4125, %v4122
    %v4360 = vpack.c.b16 %v4126, %v4123
    %v4361 = vpack.c.b16 %v4130, %v4127
    %v4362 = vpack.c.b16 %v4131, %v4128
    %v4363 = vpack.c.b16 %v4132, %v4129
    %v4364 = vpack.c.b16 %v4136, %v4133
    %v4365 = vpack.c.b16 %v4137, %v4134
    %v4366 = vpack.c.b16 %v4138, %v4135
    %v4367 = vpack.c.b16 %v4142, %v4139
    %v4368 = vpack.c.b16 %v4143, %v4140
    %v4369 = vpack.c.b16 %v4144, %v4141
    %v4370 = vpack.c.b16 %v4148, %v4145
    %v4371 = vpack.c.b16 %v4149, %v4146
    %v4372 = vpack.c.b16 %v4150, %v4147
    %v4373 = vpack.c.b16 %v4154, %v4151
    %v4374 = vpack.c.b16 %v4155, %v4152
    %v4375 = vpack.c.b16 %v4156, %v4153
    %v4376 = vpack.c.b16 %v4160, %v4157
    %v4377 = vpack.c.b16 %v4161, %v4158
    %v4378 = vpack.c.b16 %v4162, %v4159
    %v4379 = vpack.c.b16 %v4166, %v4163
    %v4380 = vpack.c.b16 %v4167, %v4164
    %v4381 = vpack.c.b16 %v4168, %v4165
    %v4382 = vpack.c.b16 %v4172, %v4169
    %v4383 = vpack.c.b16 %v4173, %v4170
    %v4384 = vpack.c.b16 %v4174, %v4171
    %v4385 = vpack.c.b16 %v4178, %v4175
    %v4386 = vpack.c.b16 %v4179, %v4176
    %v4387 = vpack.c.b16 %v4180, %v4177
    %v4388 = vpack.c.b16 %v4184, %v4181
    %v4389 = vpack.c.b16 %v4185, %v4182
    %v4390 = vpack.c.b16 %v4186, %v4183
    %v4391 = vpack.c.b16 %v4190, %v4187
    %v4392 = vpack.c.b16 %v4191, %v4188
    %v4393 = vpack.c.b16 %v4192, %v4189
    %v4394 = vpack.c.b16 %v4196, %v4193
    %v4395 = vpack.c.b16 %v4197, %v4194
    %v4396 = vpack.c.b16 %v4198, %v4195
    %v4397 = vpack.c.b16 %v4202, %v4199
    %v4398 = vpack.c.b16 %v4203, %v4200
    %v4399 = vpack.c.b16 %v4204, %v4201
    %v4400 = vpack.c.b16 %v4208, %v4205
    %v4401 = vpack.c.b16 %v4209, %v4206
    %v4402 = vpack.c.b16 %v4210, %v4207
    %4595 = vmatpush.bf16.msra.mxu0 %v4232
    %4596 = vmatpush.bf16.msra.mxu0 %v4229
    %4597 = vmatpush.bf16.msra.mxu0 %v4226
    %4598 = vmatpush.bf16.msra.mxu0 %v4223
    %4599 = vmatpush.bf16.msra.mxu0 %v4220
    %4600 = vmatpush.bf16.msra.mxu0 %v4217
    %4601 = vmatpush.bf16.msra.mxu0 %v4214
    %4602 = vmatpush.bf16.msra.mxu0 %v4211
    %4603 = vmatmul.bf16.gmra.mxu0 %v3299
    %v4604 = vpop.f32.mrf.mxu0
    %v4605 = vadd.f32 %v3565, %v4604
    %v4606 = vpop.f32.mrf.mxu0
    %4607 = vdwg.mxu0
    %4608 = vmatpush.bf16.msra.mxu0 %v4256
    %4609 = vmatpush.bf16.msra.mxu0 %v4253
    %4610 = vmatpush.bf16.msra.mxu0 %v4250
    %4611 = vmatpush.bf16.msra.mxu0 %v4247
    %4612 = vmatpush.bf16.msra.mxu0 %v4244
    %4613 = vmatpush.bf16.msra.mxu0 %v4241
    %4614 = vmatpush.bf16.msra.mxu0 %v4238
    %4615 = vmatpush.bf16.msra.mxu0 %v4235
    %4616 = vmatmul.bf16.gmra.mxu0 %v3300
    %v4617 = vpop.f32.mrf.mxu0
    %v4618 = vadd.f32 %v4605, %v4617
    %v4619 = vpop.f32.mrf.mxu0
    %4620 = vdwg.mxu0
    %4621 = vmatpush.bf16.msra.mxu0 %v4280
    %4622 = vmatpush.bf16.msra.mxu0 %v4277
    %4623 = vmatpush.bf16.msra.mxu0 %v4274
    %4624 = vmatpush.bf16.msra.mxu0 %v4271
    %4625 = vmatpush.bf16.msra.mxu0 %v4268
    %4626 = vmatpush.bf16.msra.mxu0 %v4265
    %4627 = vmatpush.bf16.msra.mxu0 %v4262
    %4628 = vmatpush.bf16.msra.mxu0 %v4259
    %4629 = vmatmul.bf16.gmra.mxu0 %v3301
    %v4630 = vpop.f32.mrf.mxu0
    %v4631 = vadd.f32 %v4618, %v4630
    %v4632 = vpop.f32.mrf.mxu0
    %4633 = vdwg.mxu0
    %4634 = vmatpush.bf16.msra.mxu0 %v4304
    %4635 = vmatpush.bf16.msra.mxu0 %v4301
    %4636 = vmatpush.bf16.msra.mxu0 %v4298
    %4637 = vmatpush.bf16.msra.mxu0 %v4295
    %4638 = vmatpush.bf16.msra.mxu0 %v4292
    %4639 = vmatpush.bf16.msra.mxu0 %v4289
    %4640 = vmatpush.bf16.msra.mxu0 %v4286
    %4641 = vmatpush.bf16.msra.mxu0 %v4283
    %4642 = vmatmul.bf16.gmra.mxu0 %v3302
    %v4643 = vpop.f32.mrf.mxu0
    %v4644 = vadd.f32 %v4631, %v4643
    %v4645 = vpop.f32.mrf.mxu0
    %4646 = vdwg.mxu0
    %4647 = vmatpush.bf16.msra.mxu0 %v4328
    %4648 = vmatpush.bf16.msra.mxu0 %v4325
    %4649 = vmatpush.bf16.msra.mxu0 %v4322
    %4650 = vmatpush.bf16.msra.mxu0 %v4319
    %4651 = vmatpush.bf16.msra.mxu0 %v4316
    %4652 = vmatpush.bf16.msra.mxu0 %v4313
    %4653 = vmatpush.bf16.msra.mxu0 %v4310
    %4654 = vmatpush.bf16.msra.mxu0 %v4307
    %4655 = vmatmul.bf16.gmra.mxu0 %v3303
    %v4656 = vpop.f32.mrf.mxu0
    %v4657 = vadd.f32 %v4644, %v4656
    %v4658 = vpop.f32.mrf.mxu0
    %4659 = vdwg.mxu0
    %4660 = vmatpush.bf16.msra.mxu0 %v4352
    %4661 = vmatpush.bf16.msra.mxu0 %v4349
    %4662 = vmatpush.bf16.msra.mxu0 %v4346
    %4663 = vmatpush.bf16.msra.mxu0 %v4343
    %4664 = vmatpush.bf16.msra.mxu0 %v4340
    %4665 = vmatpush.bf16.msra.mxu0 %v4337
    %4666 = vmatpush.bf16.msra.mxu0 %v4334
    %4667 = vmatpush.bf16.msra.mxu0 %v4331
    %4668 = vmatmul.bf16.gmra.mxu0 %v3304
    %v4669 = vpop.f32.mrf.mxu0
    %v4670 = vadd.f32 %v4657, %v4669
    %v4671 = vpop.f32.mrf.mxu0
    %4672 = vdwg.mxu0
    %4673 = vmatpush.bf16.msra.mxu0 %v4376
    %4674 = vmatpush.bf16.msra.mxu0 %v4373
    %4675 = vmatpush.bf16.msra.mxu0 %v4370
    %4676 = vmatpush.bf16.msra.mxu0 %v4367
    %4677 = vmatpush.bf16.msra.mxu0 %v4364
    %4678 = vmatpush.bf16.msra.mxu0 %v4361
    %4679 = vmatpush.bf16.msra.mxu0 %v4358
    %4680 = vmatpush.bf16.msra.mxu0 %v4355
    %4681 = vmatmul.bf16.gmra.mxu0 %v3305
    %v4682 = vpop.f32.mrf.mxu0
    %v4683 = vadd.f32 %v4670, %v4682
    %v4684 = vpop.f32.mrf.mxu0
    %4685 = vdwg.mxu0
    %4686 = vmatpush.bf16.msra.mxu0 %v4400
    %4687 = vmatpush.bf16.msra.mxu0 %v4397
    %4688 = vmatpush.bf16.msra.mxu0 %v4394
    %4689 = vmatpush.bf16.msra.mxu0 %v4391
    %4690 = vmatpush.bf16.msra.mxu0 %v4388
    %4691 = vmatpush.bf16.msra.mxu0 %v4385
    %4692 = vmatpush.bf16.msra.mxu0 %v4382
    %4693 = vmatpush.bf16.msra.mxu0 %v4379
    %4694 = vmatmul.bf16.gmra.mxu0 %v3306
    %v4695 = vpop.f32.mrf.mxu0
    %v4696 = vadd.f32 %v4683, %v4695
    %v4697 = vpop.f32.mrf.mxu0
    %4698 = vdwg.mxu0
    %4699 = vmatpush.bf16.msra.mxu0 %v4233
    %4700 = vmatpush.bf16.msra.mxu0 %v4230
    %4701 = vmatpush.bf16.msra.mxu0 %v4227
    %4702 = vmatpush.bf16.msra.mxu0 %v4224
    %4703 = vmatpush.bf16.msra.mxu0 %v4221
    %4704 = vmatpush.bf16.msra.mxu0 %v4218
    %4705 = vmatpush.bf16.msra.mxu0 %v4215
    %4706 = vmatpush.bf16.msra.mxu0 %v4212
    %4707 = vmatmul.bf16.gmra.mxu0 %v3299
    %v4708 = vpop.f32.mrf.mxu0
    %v4709 = vadd.f32 %v3566, %v4708
    %v4710 = vpop.f32.mrf.mxu0
    %4711 = vdwg.mxu0
    %4712 = vmatpush.bf16.msra.mxu0 %v4257
    %4713 = vmatpush.bf16.msra.mxu0 %v4254
    %4714 = vmatpush.bf16.msra.mxu0 %v4251
    %4715 = vmatpush.bf16.msra.mxu0 %v4248
    %4716 = vmatpush.bf16.msra.mxu0 %v4245
    %4717 = vmatpush.bf16.msra.mxu0 %v4242
    %4718 = vmatpush.bf16.msra.mxu0 %v4239
    %4719 = vmatpush.bf16.msra.mxu0 %v4236
    %4720 = vmatmul.bf16.gmra.mxu0 %v3300
    %v4721 = vpop.f32.mrf.mxu0
    %v4722 = vadd.f32 %v4709, %v4721
    %v4723 = vpop.f32.mrf.mxu0
    %4724 = vdwg.mxu0
    %4725 = vmatpush.bf16.msra.mxu0 %v4281
    %4726 = vmatpush.bf16.msra.mxu0 %v4278
    %4727 = vmatpush.bf16.msra.mxu0 %v4275
    %4728 = vmatpush.bf16.msra.mxu0 %v4272
    %4729 = vmatpush.bf16.msra.mxu0 %v4269
    %4730 = vmatpush.bf16.msra.mxu0 %v4266
    %4731 = vmatpush.bf16.msra.mxu0 %v4263
    %4732 = vmatpush.bf16.msra.mxu0 %v4260
    %4733 = vmatmul.bf16.gmra.mxu0 %v3301
    %v4734 = vpop.f32.mrf.mxu0
    %v4735 = vadd.f32 %v4722, %v4734
    %v4736 = vpop.f32.mrf.mxu0
    %4737 = vdwg.mxu0
    %4738 = vmatpush.bf16.msra.mxu0 %v4305
    %4739 = vmatpush.bf16.msra.mxu0 %v4302
    %4740 = vmatpush.bf16.msra.mxu0 %v4299
    %4741 = vmatpush.bf16.msra.mxu0 %v4296
    %4742 = vmatpush.bf16.msra.mxu0 %v4293
    %4743 = vmatpush.bf16.msra.mxu0 %v4290
    %4744 = vmatpush.bf16.msra.mxu0 %v4287
    %4745 = vmatpush.bf16.msra.mxu0 %v4284
    %4746 = vmatmul.bf16.gmra.mxu0 %v3302
    %v4747 = vpop.f32.mrf.mxu0
    %v4748 = vadd.f32 %v4735, %v4747
    %v4749 = vpop.f32.mrf.mxu0
    %4750 = vdwg.mxu0
    %4751 = vmatpush.bf16.msra.mxu0 %v4329
    %4752 = vmatpush.bf16.msra.mxu0 %v4326
    %4753 = vmatpush.bf16.msra.mxu0 %v4323
    %4754 = vmatpush.bf16.msra.mxu0 %v4320
    %4755 = vmatpush.bf16.msra.mxu0 %v4317
    %4756 = vmatpush.bf16.msra.mxu0 %v4314
    %4757 = vmatpush.bf16.msra.mxu0 %v4311
    %4758 = vmatpush.bf16.msra.mxu0 %v4308
    %4759 = vmatmul.bf16.gmra.mxu0 %v3303
    %v4760 = vpop.f32.mrf.mxu0
    %v4761 = vadd.f32 %v4748, %v4760
    %v4762 = vpop.f32.mrf.mxu0
    %4763 = vdwg.mxu0
    %4764 = vmatpush.bf16.msra.mxu0 %v4353
    %4765 = vmatpush.bf16.msra.mxu0 %v4350
    %4766 = vmatpush.bf16.msra.mxu0 %v4347
    %4767 = vmatpush.bf16.msra.mxu0 %v4344
    %4768 = vmatpush.bf16.msra.mxu0 %v4341
    %4769 = vmatpush.bf16.msra.mxu0 %v4338
    %4770 = vmatpush.bf16.msra.mxu0 %v4335
    %4771 = vmatpush.bf16.msra.mxu0 %v4332
    %4772 = vmatmul.bf16.gmra.mxu0 %v3304
    %v4773 = vpop.f32.mrf.mxu0
    %v4774 = vadd.f32 %v4761, %v4773
    %v4775 = vpop.f32.mrf.mxu0
    %4776 = vdwg.mxu0
    %4777 = vmatpush.bf16.msra.mxu0 %v4377
    %4778 = vmatpush.bf16.msra.mxu0 %v4374
    %4779 = vmatpush.bf16.msra.mxu0 %v4371
    %4780 = vmatpush.bf16.msra.mxu0 %v4368
    %4781 = vmatpush.bf16.msra.mxu0 %v4365
    %4782 = vmatpush.bf16.msra.mxu0 %v4362
    %4783 = vmatpush.bf16.msra.mxu0 %v4359
    %4784 = vmatpush.bf16.msra.mxu0 %v4356
    %4785 = vmatmul.bf16.gmra.mxu0 %v3305
    %v4786 = vpop.f32.mrf.mxu0
    %v4787 = vadd.f32 %v4774, %v4786
    %v4788 = vpop.f32.mrf.mxu0
    %4789 = vdwg.mxu0
    %4790 = vmatpush.bf16.msra.mxu0 %v4401
    %4791 = vmatpush.bf16.msra.mxu0 %v4398
    %4792 = vmatpush.bf16.msra.mxu0 %v4395
    %4793 = vmatpush.bf16.msra.mxu0 %v4392
    %4794 = vmatpush.bf16.msra.mxu0 %v4389
    %4795 = vmatpush.bf16.msra.mxu0 %v4386
    %4796 = vmatpush.bf16.msra.mxu0 %v4383
    %4797 = vmatpush.bf16.msra.mxu0 %v4380
    %4798 = vmatmul.bf16.gmra.mxu0 %v3306
    %v4799 = vpop.f32.mrf.mxu0
    %v4800 = vadd.f32 %v4787, %v4799
    %v4801 = vpop.f32.mrf.mxu0
    %4802 = vdwg.mxu0
    %4803 = vmatpush.bf16.msra.mxu0 %v4234
    %4804 = vmatpush.bf16.msra.mxu0 %v4231
    %4805 = vmatpush.bf16.msra.mxu0 %v4228
    %4806 = vmatpush.bf16.msra.mxu0 %v4225
    %4807 = vmatpush.bf16.msra.mxu0 %v4222
    %4808 = vmatpush.bf16.msra.mxu0 %v4219
    %4809 = vmatpush.bf16.msra.mxu0 %v4216
    %4810 = vmatpush.bf16.msra.mxu0 %v4213
    %4811 = vmatmul.bf16.gmra.mxu0 %v3299
    %v4812 = vpop.f32.mrf.mxu0
    %v4813 = vadd.f32 %v3567, %v4812
    %v4814 = vpop.f32.mrf.mxu0
    %4815 = vdwg.mxu0
    %4816 = vmatpush.bf16.msra.mxu0 %v4258
    %4817 = vmatpush.bf16.msra.mxu0 %v4255
    %4818 = vmatpush.bf16.msra.mxu0 %v4252
    %4819 = vmatpush.bf16.msra.mxu0 %v4249
    %4820 = vmatpush.bf16.msra.mxu0 %v4246
    %4821 = vmatpush.bf16.msra.mxu0 %v4243
    %4822 = vmatpush.bf16.msra.mxu0 %v4240
    %4823 = vmatpush.bf16.msra.mxu0 %v4237
    %4824 = vmatmul.bf16.gmra.mxu0 %v3300
    %v4825 = vpop.f32.mrf.mxu0
    %v4826 = vadd.f32 %v4813, %v4825
    %v4827 = vpop.f32.mrf.mxu0
    %4828 = vdwg.mxu0
    %4829 = vmatpush.bf16.msra.mxu0 %v4282
    %4830 = vmatpush.bf16.msra.mxu0 %v4279
    %4831 = vmatpush.bf16.msra.mxu0 %v4276
    %4832 = vmatpush.bf16.msra.mxu0 %v4273
    %4833 = vmatpush.bf16.msra.mxu0 %v4270
    %4834 = vmatpush.bf16.msra.mxu0 %v4267
    %4835 = vmatpush.bf16.msra.mxu0 %v4264
    %4836 = vmatpush.bf16.msra.mxu0 %v4261
    %4837 = vmatmul.bf16.gmra.mxu0 %v3301
    %v4838 = vpop.f32.mrf.mxu0
    %v4839 = vadd.f32 %v4826, %v4838
    %v4840 = vpop.f32.mrf.mxu0
    %4841 = vdwg.mxu0
    %4842 = vmatpush.bf16.msra.mxu0 %v4306
    %4843 = vmatpush.bf16.msra.mxu0 %v4303
    %4844 = vmatpush.bf16.msra.mxu0 %v4300
    %4845 = vmatpush.bf16.msra.mxu0 %v4297
    %4846 = vmatpush.bf16.msra.mxu0 %v4294
    %4847 = vmatpush.bf16.msra.mxu0 %v4291
    %4848 = vmatpush.bf16.msra.mxu0 %v4288
    %4849 = vmatpush.bf16.msra.mxu0 %v4285
    %4850 = vmatmul.bf16.gmra.mxu0 %v3302
    %v4851 = vpop.f32.mrf.mxu0
    %v4852 = vadd.f32 %v4839, %v4851
    %v4853 = vpop.f32.mrf.mxu0
    %4854 = vdwg.mxu0
    %4855 = vmatpush.bf16.msra.mxu0 %v4330
    %4856 = vmatpush.bf16.msra.mxu0 %v4327
    %4857 = vmatpush.bf16.msra.mxu0 %v4324
    %4858 = vmatpush.bf16.msra.mxu0 %v4321
    %4859 = vmatpush.bf16.msra.mxu0 %v4318
    %4860 = vmatpush.bf16.msra.mxu0 %v4315
    %4861 = vmatpush.bf16.msra.mxu0 %v4312
    %4862 = vmatpush.bf16.msra.mxu0 %v4309
    %4863 = vmatmul.bf16.gmra.mxu0 %v3303
    %v4864 = vpop.f32.mrf.mxu0
    %v4865 = vadd.f32 %v4852, %v4864
    %v4866 = vpop.f32.mrf.mxu0
    %4867 = vdwg.mxu0
    %4868 = vmatpush.bf16.msra.mxu0 %v4354
    %4869 = vmatpush.bf16.msra.mxu0 %v4351
    %4870 = vmatpush.bf16.msra.mxu0 %v4348
    %4871 = vmatpush.bf16.msra.mxu0 %v4345
    %4872 = vmatpush.bf16.msra.mxu0 %v4342
    %4873 = vmatpush.bf16.msra.mxu0 %v4339
    %4874 = vmatpush.bf16.msra.mxu0 %v4336
    %4875 = vmatpush.bf16.msra.mxu0 %v4333
    %4876 = vmatmul.bf16.gmra.mxu0 %v3304
    %v4877 = vpop.f32.mrf.mxu0
    %v4878 = vadd.f32 %v4865, %v4877
    %v4879 = vpop.f32.mrf.mxu0
    %4880 = vdwg.mxu0
    %4881 = vmatpush.bf16.msra.mxu0 %v4378
    %4882 = vmatpush.bf16.msra.mxu0 %v4375
    %4883 = vmatpush.bf16.msra.mxu0 %v4372
    %4884 = vmatpush.bf16.msra.mxu0 %v4369
    %4885 = vmatpush.bf16.msra.mxu0 %v4366
    %4886 = vmatpush.bf16.msra.mxu0 %v4363
    %4887 = vmatpush.bf16.msra.mxu0 %v4360
    %4888 = vmatpush.bf16.msra.mxu0 %v4357
    %4889 = vmatmul.bf16.gmra.mxu0 %v3305
    %v4890 = vpop.f32.mrf.mxu0
    %v4891 = vadd.f32 %v4878, %v4890
    %v4892 = vpop.f32.mrf.mxu0
    %4893 = vdwg.mxu0
    %4894 = vmatpush.bf16.msra.mxu0 %v4402
    %4895 = vmatpush.bf16.msra.mxu0 %v4399
    %4896 = vmatpush.bf16.msra.mxu0 %v4396
    %4897 = vmatpush.bf16.msra.mxu0 %v4393
    %4898 = vmatpush.bf16.msra.mxu0 %v4390
    %4899 = vmatpush.bf16.msra.mxu0 %v4387
    %4900 = vmatpush.bf16.msra.mxu0 %v4384
    %4901 = vmatpush.bf16.msra.mxu0 %v4381
    %4902 = vmatmul.bf16.gmra.mxu0 %v3306
    %v4903 = vpop.f32.mrf.mxu0
    %v4904 = vadd.f32 %v4891, %v4903
    %v4905 = vpop.f32.mrf.mxu0
    %4906 = vdwg.mxu0
    %v4907 = vld [vmem:[%s1] sm:$0xff]
    %v4908 = vld [vmem:[%s1 + $0x8] sm:$0xff]
    %v4909 = vld [vmem:[%s1 + $0x10] sm:$0xff]
    %v4910 = vpack.c.bf16 %v4907, %v4907
    %v4911 = vpack.c.bf16 %v4908, %v4908
    %v4912 = vpack.c.bf16 %v4909, %v4909
    %v4913 = vld [vmem:[#allocation11] sm:$0xff]
    %v4914 = vld [vmem:[#allocation11 + $0x8] sm:$0xff]
    %v4915 = vld [vmem:[#allocation11 + $0x10] sm:$0xff]
    %v4916 = vld [vmem:[#allocation11 + $0x18] sm:$0xff]
    %v4917 = vld [vmem:[#allocation11 + $0x20] sm:$0xff]
    %v4918 = vld [vmem:[#allocation11 + $0x28] sm:$0xff]
    %v4919 = vld [vmem:[#allocation11 + $0x30] sm:$0xff]
    %v4920 = vld [vmem:[#allocation11 + $0x38] sm:$0xff]
    %v4921 = vld [vmem:[#allocation11 + $0x40] sm:$0xff]
    %v4922 = vld [vmem:[#allocation11 + $0x48] sm:$0xff]
    %v4923 = vld [vmem:[#allocation11 + $0x50] sm:$0xff]
    %v4924 = vld [vmem:[#allocation11 + $0x58] sm:$0xff]
    %v4925 = vld [vmem:[#allocation11 + $0x60] sm:$0xff]
    %v4926 = vld [vmem:[#allocation11 + $0x68] sm:$0xff]
    %v4927 = vld [vmem:[#allocation11 + $0x70] sm:$0xff]
    %v4928 = vld [vmem:[#allocation11 + $0x78] sm:$0xff]
    %v4929 = vld [vmem:[#allocation11 + $0x80] sm:$0xff]
    %v4930 = vld [vmem:[#allocation11 + $0x88] sm:$0xff]
    %v4931 = vld [vmem:[#allocation11 + $0x90] sm:$0xff]
    %v4932 = vld [vmem:[#allocation11 + $0x98] sm:$0xff]
    %v4933 = vld [vmem:[#allocation11 + $0xa0] sm:$0xff]
    %v4934 = vld [vmem:[#allocation11 + $0xa8] sm:$0xff]
    %v4935 = vld [vmem:[#allocation11 + $0xb0] sm:$0xff]
    %v4936 = vld [vmem:[#allocation11 + $0xb8] sm:$0xff]
    %v4937 = vld [vmem:[#allocation11 + $0xc0] sm:$0xff]
    %v4938 = vld [vmem:[#allocation11 + $0xc8] sm:$0xff]
    %v4939 = vld [vmem:[#allocation11 + $0xd0] sm:$0xff]
    %v4940 = vld [vmem:[#allocation11 + $0xd8] sm:$0xff]
    %v4941 = vld [vmem:[#allocation11 + $0xe0] sm:$0xff]
    %v4942 = vld [vmem:[#allocation11 + $0xe8] sm:$0xff]
    %v4943 = vld [vmem:[#allocation11 + $0xf0] sm:$0xff]
    %v4944 = vld [vmem:[#allocation11 + $0xf8] sm:$0xff]
    %v4945 = vld [vmem:[#allocation11 + $0x100] sm:$0xff]
    %v4946 = vld [vmem:[#allocation11 + $0x108] sm:$0xff]
    %v4947 = vld [vmem:[#allocation11 + $0x110] sm:$0xff]
    %v4948 = vld [vmem:[#allocation11 + $0x118] sm:$0xff]
    %v4949 = vld [vmem:[#allocation11 + $0x120] sm:$0xff]
    %v4950 = vld [vmem:[#allocation11 + $0x128] sm:$0xff]
    %v4951 = vld [vmem:[#allocation11 + $0x130] sm:$0xff]
    %v4952 = vld [vmem:[#allocation11 + $0x138] sm:$0xff]
    %v4953 = vld [vmem:[#allocation11 + $0x140] sm:$0xff]
    %v4954 = vld [vmem:[#allocation11 + $0x148] sm:$0xff]
    %v4955 = vld [vmem:[#allocation11 + $0x150] sm:$0xff]
    %v4956 = vld [vmem:[#allocation11 + $0x158] sm:$0xff]
    %v4957 = vld [vmem:[#allocation11 + $0x160] sm:$0xff]
    %v4958 = vld [vmem:[#allocation11 + $0x168] sm:$0xff]
    %v4959 = vld [vmem:[#allocation11 + $0x170] sm:$0xff]
    %v4960 = vld [vmem:[#allocation11 + $0x178] sm:$0xff]
    %v4961 = vld [vmem:[#allocation11 + $0x180] sm:$0xff]
    %v4962 = vld [vmem:[#allocation11 + $0x188] sm:$0xff]
    %v4963 = vld [vmem:[#allocation11 + $0x190] sm:$0xff]
    %v4964 = vld [vmem:[#allocation11 + $0x198] sm:$0xff]
    %v4965 = vld [vmem:[#allocation11 + $0x1a0] sm:$0xff]
    %v4966 = vld [vmem:[#allocation11 + $0x1a8] sm:$0xff]
    %v4967 = vld [vmem:[#allocation11 + $0x1b0] sm:$0xff]
    %v4968 = vld [vmem:[#allocation11 + $0x1b8] sm:$0xff]
    %v4969 = vld [vmem:[#allocation11 + $0x1c0] sm:$0xff]
    %v4970 = vld [vmem:[#allocation11 + $0x1c8] sm:$0xff]
    %v4971 = vld [vmem:[#allocation11 + $0x1d0] sm:$0xff]
    %v4972 = vld [vmem:[#allocation11 + $0x1d8] sm:$0xff]
    %v4973 = vld [vmem:[#allocation11 + $0x1e0] sm:$0xff]
    %v4974 = vld [vmem:[#allocation11 + $0x1e8] sm:$0xff]
    %v4975 = vld [vmem:[#allocation11 + $0x1f0] sm:$0xff]
    %v4976 = vld [vmem:[#allocation11 + $0x1f8] sm:$0xff]
    %v4977 = vld [vmem:[#allocation11 + $0x200] sm:$0xff]
    %v4978 = vld [vmem:[#allocation11 + $0x208] sm:$0xff]
    %v4979 = vld [vmem:[#allocation11 + $0x210] sm:$0xff]
    %v4980 = vld [vmem:[#allocation11 + $0x218] sm:$0xff]
    %v4981 = vld [vmem:[#allocation11 + $0x220] sm:$0xff]
    %v4982 = vld [vmem:[#allocation11 + $0x228] sm:$0xff]
    %v4983 = vld [vmem:[#allocation11 + $0x230] sm:$0xff]
    %v4984 = vld [vmem:[#allocation11 + $0x238] sm:$0xff]
    %v4985 = vld [vmem:[#allocation11 + $0x240] sm:$0xff]
    %v4986 = vld [vmem:[#allocation11 + $0x248] sm:$0xff]
    %v4987 = vld [vmem:[#allocation11 + $0x250] sm:$0xff]
    %v4988 = vld [vmem:[#allocation11 + $0x258] sm:$0xff]
    %v4989 = vld [vmem:[#allocation11 + $0x260] sm:$0xff]
    %v4990 = vld [vmem:[#allocation11 + $0x268] sm:$0xff]
    %v4991 = vld [vmem:[#allocation11 + $0x270] sm:$0xff]
    %v4992 = vld [vmem:[#allocation11 + $0x278] sm:$0xff]
    %v4993 = vld [vmem:[#allocation11 + $0x280] sm:$0xff]
    %v4994 = vld [vmem:[#allocation11 + $0x288] sm:$0xff]
    %v4995 = vld [vmem:[#allocation11 + $0x290] sm:$0xff]
    %v4996 = vld [vmem:[#allocation11 + $0x298] sm:$0xff]
    %v4997 = vld [vmem:[#allocation11 + $0x2a0] sm:$0xff]
    %v4998 = vld [vmem:[#allocation11 + $0x2a8] sm:$0xff]
    %v4999 = vld [vmem:[#allocation11 + $0x2b0] sm:$0xff]
    %v5000 = vld [vmem:[#allocation11 + $0x2b8] sm:$0xff]
    %v5001 = vld [vmem:[#allocation11 + $0x2c0] sm:$0xff]
    %v5002 = vld [vmem:[#allocation11 + $0x2c8] sm:$0xff]
    %v5003 = vld [vmem:[#allocation11 + $0x2d0] sm:$0xff]
    %v5004 = vld [vmem:[#allocation11 + $0x2d8] sm:$0xff]
    %v5005 = vld [vmem:[#allocation11 + $0x2e0] sm:$0xff]
    %v5006 = vld [vmem:[#allocation11 + $0x2e8] sm:$0xff]
    %v5007 = vld [vmem:[#allocation11 + $0x2f0] sm:$0xff]
    %v5008 = vld [vmem:[#allocation11 + $0x2f8] sm:$0xff]
    %v5009 = vld [vmem:[#allocation13] sm:$0xf]
    %v5011 = vperm.slane %v5009, 0
    %v5012 = vperm.slane %v5009, 1
    %v5013 = vperm.slane %v5009, 2
    %v5014 = vperm.slane %v5009, 3
    %v5115 = vunpack.c.l.b16 %v4913
    %v5116 = vunpack.c.h.b16 %v4913
    %v5117 = vunpack.c.l.b16 %v4914
    %v5118 = vunpack.c.h.b16 %v4914
    %v5119 = vunpack.c.l.b16 %v4915
    %v5120 = vunpack.c.h.b16 %v4915
    %v5121 = vunpack.c.l.b16 %v4916
    %v5122 = vunpack.c.h.b16 %v4916
    %v5123 = vunpack.c.l.b16 %v4917
    %v5124 = vunpack.c.h.b16 %v4917
    %v5125 = vunpack.c.l.b16 %v4918
    %v5126 = vunpack.c.h.b16 %v4918
    %v5127 = vunpack.c.l.b16 %v4919
    %v5128 = vunpack.c.h.b16 %v4919
    %v5129 = vunpack.c.l.b16 %v4920
    %v5130 = vunpack.c.h.b16 %v4920
    %v5131 = vunpack.c.l.b16 %v4921
    %v5132 = vunpack.c.h.b16 %v4921
    %v5133 = vunpack.c.l.b16 %v4922
    %v5134 = vunpack.c.h.b16 %v4922
    %v5135 = vunpack.c.l.b16 %v4923
    %v5136 = vunpack.c.h.b16 %v4923
    %v5137 = vunpack.c.l.b16 %v4924
    %v5138 = vunpack.c.h.b16 %v4924
    %v5139 = vunpack.c.l.b16 %v4925
    %v5140 = vunpack.c.h.b16 %v4925
    %v5141 = vunpack.c.l.b16 %v4926
    %v5142 = vunpack.c.h.b16 %v4926
    %v5143 = vunpack.c.l.b16 %v4927
    %v5144 = vunpack.c.h.b16 %v4927
    %v5145 = vunpack.c.l.b16 %v4928
    %v5146 = vunpack.c.h.b16 %v4928
    %v5147 = vunpack.c.l.b16 %v4929
    %v5148 = vunpack.c.h.b16 %v4929
    %v5149 = vunpack.c.l.b16 %v4930
    %v5150 = vunpack.c.h.b16 %v4930
    %v5151 = vunpack.c.l.b16 %v4931
    %v5152 = vunpack.c.h.b16 %v4931
    %v5153 = vunpack.c.l.b16 %v4932
    %v5154 = vunpack.c.h.b16 %v4932
    %v5155 = vunpack.c.l.b16 %v4933
    %v5156 = vunpack.c.h.b16 %v4933
    %v5157 = vunpack.c.l.b16 %v4934
    %v5158 = vunpack.c.h.b16 %v4934
    %v5159 = vunpack.c.l.b16 %v4935
    %v5160 = vunpack.c.h.b16 %v4935
    %v5161 = vunpack.c.l.b16 %v4936
    %v5162 = vunpack.c.h.b16 %v4936
    %v5163 = vunpack.c.l.b16 %v4937
    %v5164 = vunpack.c.h.b16 %v4937
    %v5165 = vunpack.c.l.b16 %v4938
    %v5166 = vunpack.c.h.b16 %v4938
    %v5167 = vunpack.c.l.b16 %v4939
    %v5168 = vunpack.c.h.b16 %v4939
    %v5169 = vunpack.c.l.b16 %v4940
    %v5170 = vunpack.c.h.b16 %v4940
    %v5171 = vunpack.c.l.b16 %v4941
    %v5172 = vunpack.c.h.b16 %v4941
    %v5173 = vunpack.c.l.b16 %v4942
    %v5174 = vunpack.c.h.b16 %v4942
    %v5175 = vunpack.c.l.b16 %v4943
    %v5176 = vunpack.c.h.b16 %v4943
    %v5177 = vunpack.c.l.b16 %v4944
    %v5178 = vunpack.c.h.b16 %v4944
    %v5179 = vunpack.c.l.b16 %v4945
    %v5180 = vunpack.c.h.b16 %v4945
    %v5181 = vunpack.c.l.b16 %v4946
    %v5182 = vunpack.c.h.b16 %v4946
    %v5183 = vunpack.c.l.b16 %v4947
    %v5184 = vunpack.c.h.b16 %v4947
    %v5185 = vunpack.c.l.b16 %v4948
    %v5186 = vunpack.c.h.b16 %v4948
    %v5187 = vunpack.c.l.b16 %v4949
    %v5188 = vunpack.c.h.b16 %v4949
    %v5189 = vunpack.c.l.b16 %v4950
    %v5190 = vunpack.c.h.b16 %v4950
    %v5191 = vunpack.c.l.b16 %v4951
    %v5192 = vunpack.c.h.b16 %v4951
    %v5193 = vunpack.c.l.b16 %v4952
    %v5194 = vunpack.c.h.b16 %v4952
    %v5195 = vunpack.c.l.b16 %v4953
    %v5196 = vunpack.c.h.b16 %v4953
    %v5197 = vunpack.c.l.b16 %v4954
    %v5198 = vunpack.c.h.b16 %v4954
    %v5199 = vunpack.c.l.b16 %v4955
    %v5200 = vunpack.c.h.b16 %v4955
    %v5201 = vunpack.c.l.b16 %v4956
    %v5202 = vunpack.c.h.b16 %v4956
    %v5203 = vunpack.c.l.b16 %v4957
    %v5204 = vunpack.c.h.b16 %v4957
    %v5205 = vunpack.c.l.b16 %v4958
    %v5206 = vunpack.c.h.b16 %v4958
    %v5207 = vunpack.c.l.b16 %v4959
    %v5208 = vunpack.c.h.b16 %v4959
    %v5209 = vunpack.c.l.b16 %v4960
    %v5210 = vunpack.c.h.b16 %v4960
    %v5211 = vunpack.c.l.b16 %v4961
    %v5212 = vunpack.c.h.b16 %v4961
    %v5213 = vunpack.c.l.b16 %v4962
    %v5214 = vunpack.c.h.b16 %v4962
    %v5215 = vunpack.c.l.b16 %v4963
    %v5216 = vunpack.c.h.b16 %v4963
    %v5217 = vunpack.c.l.b16 %v4964
    %v5218 = vunpack.c.h.b16 %v4964
    %v5219 = vunpack.c.l.b16 %v4965
    %v5220 = vunpack.c.h.b16 %v4965
    %v5221 = vunpack.c.l.b16 %v4966
    %v5222 = vunpack.c.h.b16 %v4966
    %v5223 = vunpack.c.l.b16 %v4967
    %v5224 = vunpack.c.h.b16 %v4967
    %v5225 = vunpack.c.l.b16 %v4968
    %v5226 = vunpack.c.h.b16 %v4968
    %v5227 = vunpack.c.l.b16 %v4969
    %v5228 = vunpack.c.h.b16 %v4969
    %v5229 = vunpack.c.l.b16 %v4970
    %v5230 = vunpack.c.h.b16 %v4970
    %v5231 = vunpack.c.l.b16 %v4971
    %v5232 = vunpack.c.h.b16 %v4971
    %v5233 = vunpack.c.l.b16 %v4972
    %v5234 = vunpack.c.h.b16 %v4972
    %v5235 = vunpack.c.l.b16 %v4973
    %v5236 = vunpack.c.h.b16 %v4973
    %v5237 = vunpack.c.l.b16 %v4974
    %v5238 = vunpack.c.h.b16 %v4974
    %v5239 = vunpack.c.l.b16 %v4975
    %v5240 = vunpack.c.h.b16 %v4975
    %v5241 = vunpack.c.l.b16 %v4976
    %v5242 = vunpack.c.h.b16 %v4976
    %v5243 = vunpack.c.l.b16 %v4977
    %v5244 = vunpack.c.h.b16 %v4977
    %v5245 = vunpack.c.l.b16 %v4978
    %v5246 = vunpack.c.h.b16 %v4978
    %v5247 = vunpack.c.l.b16 %v4979
    %v5248 = vunpack.c.h.b16 %v4979
    %v5249 = vunpack.c.l.b16 %v4980
    %v5250 = vunpack.c.h.b16 %v4980
    %v5251 = vunpack.c.l.b16 %v4981
    %v5252 = vunpack.c.h.b16 %v4981
    %v5253 = vunpack.c.l.b16 %v4982
    %v5254 = vunpack.c.h.b16 %v4982
    %v5255 = vunpack.c.l.b16 %v4983
    %v5256 = vunpack.c.h.b16 %v4983
    %v5257 = vunpack.c.l.b16 %v4984
    %v5258 = vunpack.c.h.b16 %v4984
    %v5259 = vunpack.c.l.b16 %v4985
    %v5260 = vunpack.c.h.b16 %v4985
    %v5261 = vunpack.c.l.b16 %v4986
    %v5262 = vunpack.c.h.b16 %v4986
    %v5263 = vunpack.c.l.b16 %v4987
    %v5264 = vunpack.c.h.b16 %v4987
    %v5265 = vunpack.c.l.b16 %v4988
    %v5266 = vunpack.c.h.b16 %v4988
    %v5267 = vunpack.c.l.b16 %v4989
    %v5268 = vunpack.c.h.b16 %v4989
    %v5269 = vunpack.c.l.b16 %v4990
    %v5270 = vunpack.c.h.b16 %v4990
    %v5271 = vunpack.c.l.b16 %v4991
    %v5272 = vunpack.c.h.b16 %v4991
    %v5273 = vunpack.c.l.b16 %v4992
    %v5274 = vunpack.c.h.b16 %v4992
    %v5275 = vunpack.c.l.b16 %v4993
    %v5276 = vunpack.c.h.b16 %v4993
    %v5277 = vunpack.c.l.b16 %v4994
    %v5278 = vunpack.c.h.b16 %v4994
    %v5279 = vunpack.c.l.b16 %v4995
    %v5280 = vunpack.c.h.b16 %v4995
    %v5281 = vunpack.c.l.b16 %v4996
    %v5282 = vunpack.c.h.b16 %v4996
    %v5283 = vunpack.c.l.b16 %v4997
    %v5284 = vunpack.c.h.b16 %v4997
    %v5285 = vunpack.c.l.b16 %v4998
    %v5286 = vunpack.c.h.b16 %v4998
    %v5287 = vunpack.c.l.b16 %v4999
    %v5288 = vunpack.c.h.b16 %v4999
    %v5289 = vunpack.c.l.b16 %v5000
    %v5290 = vunpack.c.h.b16 %v5000
    %v5291 = vunpack.c.l.b16 %v5001
    %v5292 = vunpack.c.h.b16 %v5001
    %v5293 = vunpack.c.l.b16 %v5002
    %v5294 = vunpack.c.h.b16 %v5002
    %v5295 = vunpack.c.l.b16 %v5003
    %v5296 = vunpack.c.h.b16 %v5003
    %v5297 = vunpack.c.l.b16 %v5004
    %v5298 = vunpack.c.h.b16 %v5004
    %v5299 = vunpack.c.l.b16 %v5005
    %v5300 = vunpack.c.h.b16 %v5005
    %v5301 = vunpack.c.l.b16 %v5006
    %v5302 = vunpack.c.h.b16 %v5006
    %v5303 = vunpack.c.l.b16 %v5007
    %v5304 = vunpack.c.h.b16 %v5007
    %v5305 = vunpack.c.l.b16 %v5008
    %v5306 = vunpack.c.h.b16 %v5008
    %v5307 = vpack.c.b16 %v5119, %v5115
    %v5308 = vpack.c.b16 %v5120, %v5116
    %v5309 = vpack.c.b16 %v5121, %v5117
    %v5310 = vpack.c.b16 %v5122, %v5118
    %v5311 = vpack.c.b16 %v5127, %v5123
    %v5312 = vpack.c.b16 %v5128, %v5124
    %v5313 = vpack.c.b16 %v5129, %v5125
    %v5314 = vpack.c.b16 %v5130, %v5126
    %v5315 = vpack.c.b16 %v5135, %v5131
    %v5316 = vpack.c.b16 %v5136, %v5132
    %v5317 = vpack.c.b16 %v5137, %v5133
    %v5318 = vpack.c.b16 %v5138, %v5134
    %v5319 = vpack.c.b16 %v5143, %v5139
    %v5320 = vpack.c.b16 %v5144, %v5140
    %v5321 = vpack.c.b16 %v5145, %v5141
    %v5322 = vpack.c.b16 %v5146, %v5142
    %v5323 = vpack.c.b16 %v5151, %v5147
    %v5324 = vpack.c.b16 %v5152, %v5148
    %v5325 = vpack.c.b16 %v5153, %v5149
    %v5326 = vpack.c.b16 %v5154, %v5150
    %v5327 = vpack.c.b16 %v5159, %v5155
    %v5328 = vpack.c.b16 %v5160, %v5156
    %v5329 = vpack.c.b16 %v5161, %v5157
    %v5330 = vpack.c.b16 %v5162, %v5158
    %v5331 = vpack.c.b16 %v5167, %v5163
    %v5332 = vpack.c.b16 %v5168, %v5164
    %v5333 = vpack.c.b16 %v5169, %v5165
    %v5334 = vpack.c.b16 %v5170, %v5166
    %v5335 = vpack.c.b16 %v5175, %v5171
    %v5336 = vpack.c.b16 %v5176, %v5172
    %v5337 = vpack.c.b16 %v5177, %v5173
    %v5338 = vpack.c.b16 %v5178, %v5174
    %v5339 = vpack.c.b16 %v5183, %v5179
    %v5340 = vpack.c.b16 %v5184, %v5180
    %v5341 = vpack.c.b16 %v5185, %v5181
    %v5342 = vpack.c.b16 %v5186, %v5182
    %v5343 = vpack.c.b16 %v5191, %v5187
    %v5344 = vpack.c.b16 %v5192, %v5188
    %v5345 = vpack.c.b16 %v5193, %v5189
    %v5346 = vpack.c.b16 %v5194, %v5190
    %v5347 = vpack.c.b16 %v5199, %v5195
    %v5348 = vpack.c.b16 %v5200, %v5196
    %v5349 = vpack.c.b16 %v5201, %v5197
    %v5350 = vpack.c.b16 %v5202, %v5198
    %v5351 = vpack.c.b16 %v5207, %v5203
    %v5352 = vpack.c.b16 %v5208, %v5204
    %v5353 = vpack.c.b16 %v5209, %v5205
    %v5354 = vpack.c.b16 %v5210, %v5206
    %v5355 = vpack.c.b16 %v5215, %v5211
    %v5356 = vpack.c.b16 %v5216, %v5212
    %v5357 = vpack.c.b16 %v5217, %v5213
    %v5358 = vpack.c.b16 %v5218, %v5214
    %v5359 = vpack.c.b16 %v5223, %v5219
    %v5360 = vpack.c.b16 %v5224, %v5220
    %v5361 = vpack.c.b16 %v5225, %v5221
    %v5362 = vpack.c.b16 %v5226, %v5222
    %v5363 = vpack.c.b16 %v5231, %v5227
    %v5364 = vpack.c.b16 %v5232, %v5228
    %v5365 = vpack.c.b16 %v5233, %v5229
    %v5366 = vpack.c.b16 %v5234, %v5230
    %v5367 = vpack.c.b16 %v5239, %v5235
    %v5368 = vpack.c.b16 %v5240, %v5236
    %v5369 = vpack.c.b16 %v5241, %v5237
    %v5370 = vpack.c.b16 %v5242, %v5238
    %v5371 = vpack.c.b16 %v5247, %v5243
    %v5372 = vpack.c.b16 %v5248, %v5244
    %v5373 = vpack.c.b16 %v5249, %v5245
    %v5374 = vpack.c.b16 %v5250, %v5246
    %v5375 = vpack.c.b16 %v5255, %v5251
    %v5376 = vpack.c.b16 %v5256, %v5252
    %v5377 = vpack.c.b16 %v5257, %v5253
    %v5378 = vpack.c.b16 %v5258, %v5254
    %v5379 = vpack.c.b16 %v5263, %v5259
    %v5380 = vpack.c.b16 %v5264, %v5260
    %v5381 = vpack.c.b16 %v5265, %v5261
    %v5382 = vpack.c.b16 %v5266, %v5262
    %v5383 = vpack.c.b16 %v5271, %v5267
    %v5384 = vpack.c.b16 %v5272, %v5268
    %v5385 = vpack.c.b16 %v5273, %v5269
    %v5386 = vpack.c.b16 %v5274, %v5270
    %v5387 = vpack.c.b16 %v5279, %v5275
    %v5388 = vpack.c.b16 %v5280, %v5276
    %v5389 = vpack.c.b16 %v5281, %v5277
    %v5390 = vpack.c.b16 %v5282, %v5278
    %v5391 = vpack.c.b16 %v5287, %v5283
    %v5392 = vpack.c.b16 %v5288, %v5284
    %v5393 = vpack.c.b16 %v5289, %v5285
    %v5394 = vpack.c.b16 %v5290, %v5286
    %v5395 = vpack.c.b16 %v5295, %v5291
    %v5396 = vpack.c.b16 %v5296, %v5292
    %v5397 = vpack.c.b16 %v5297, %v5293
    %v5398 = vpack.c.b16 %v5298, %v5294
    %v5399 = vpack.c.b16 %v5303, %v5299
    %v5400 = vpack.c.b16 %v5304, %v5300
    %v5401 = vpack.c.b16 %v5305, %v5301
    %v5402 = vpack.c.b16 %v5306, %v5302
    %5499 = vmatpush.bf16.msra.mxu0 %v5335
    %5500 = vmatpush.bf16.msra.mxu0 %v5331
    %5501 = vmatpush.bf16.msra.mxu0 %v5327
    %5502 = vmatpush.bf16.msra.mxu0 %v5323
    %5503 = vmatpush.bf16.msra.mxu0 %v5319
    %5504 = vmatpush.bf16.msra.mxu0 %v5315
    %5505 = vmatpush.bf16.msra.mxu0 %v5311
    %5506 = vmatpush.bf16.msra.mxu0 %v5307
    %5507 = vmatmul.bf16.gmra.mxu0 %v4910
    %v5508 = vpop.f32.mrf.mxu0
    %v5509 = vadd.f32 %v5011, %v5508
    %v5510 = vpop.f32.mrf.mxu0
    %5511 = vdwg.mxu0
    %5512 = vmatpush.bf16.msra.mxu0 %v5367
    %5513 = vmatpush.bf16.msra.mxu0 %v5363
    %5514 = vmatpush.bf16.msra.mxu0 %v5359
    %5515 = vmatpush.bf16.msra.mxu0 %v5355
    %5516 = vmatpush.bf16.msra.mxu0 %v5351
    %5517 = vmatpush.bf16.msra.mxu0 %v5347
    %5518 = vmatpush.bf16.msra.mxu0 %v5343
    %5519 = vmatpush.bf16.msra.mxu0 %v5339
    %5520 = vmatmul.bf16.gmra.mxu0 %v4911
    %v5521 = vpop.f32.mrf.mxu0
    %v5522 = vadd.f32 %v5509, %v5521
    %v5523 = vpop.f32.mrf.mxu0
    %5524 = vdwg.mxu0
    %5525 = vmatpush.bf16.msra.mxu0 %v5399
    %5526 = vmatpush.bf16.msra.mxu0 %v5395
    %5527 = vmatpush.bf16.msra.mxu0 %v5391
    %5528 = vmatpush.bf16.msra.mxu0 %v5387
    %5529 = vmatpush.bf16.msra.mxu0 %v5383
    %5530 = vmatpush.bf16.msra.mxu0 %v5379
    %5531 = vmatpush.bf16.msra.mxu0 %v5375
    %5532 = vmatpush.bf16.msra.mxu0 %v5371
    %5533 = vmatmul.bf16.gmra.mxu0 %v4912
    %v5534 = vpop.f32.mrf.mxu0
    %v5535 = vadd.f32 %v5522, %v5534
    %v5536 = vpop.f32.mrf.mxu0
    %5537 = vdwg.mxu0
    %5538 = vmatpush.bf16.msra.mxu0 %v5336
    %5539 = vmatpush.bf16.msra.mxu0 %v5332
    %5540 = vmatpush.bf16.msra.mxu0 %v5328
    %5541 = vmatpush.bf16.msra.mxu0 %v5324
    %5542 = vmatpush.bf16.msra.mxu0 %v5320
    %5543 = vmatpush.bf16.msra.mxu0 %v5316
    %5544 = vmatpush.bf16.msra.mxu0 %v5312
    %5545 = vmatpush.bf16.msra.mxu0 %v5308
    %5546 = vmatmul.bf16.gmra.mxu0 %v4910
    %v5547 = vpop.f32.mrf.mxu0
    %v5548 = vadd.f32 %v5012, %v5547
    %v5549 = vpop.f32.mrf.mxu0
    %5550 = vdwg.mxu0
    %5551 = vmatpush.bf16.msra.mxu0 %v5368
    %5552 = vmatpush.bf16.msra.mxu0 %v5364
    %5553 = vmatpush.bf16.msra.mxu0 %v5360
    %5554 = vmatpush.bf16.msra.mxu0 %v5356
    %5555 = vmatpush.bf16.msra.mxu0 %v5352
    %5556 = vmatpush.bf16.msra.mxu0 %v5348
    %5557 = vmatpush.bf16.msra.mxu0 %v5344
    %5558 = vmatpush.bf16.msra.mxu0 %v5340
    %5559 = vmatmul.bf16.gmra.mxu0 %v4911
    %v5560 = vpop.f32.mrf.mxu0
    %v5561 = vadd.f32 %v5548, %v5560
    %v5562 = vpop.f32.mrf.mxu0
    %5563 = vdwg.mxu0
    %5564 = vmatpush.bf16.msra.mxu0 %v5400
    %5565 = vmatpush.bf16.msra.mxu0 %v5396
    %5566 = vmatpush.bf16.msra.mxu0 %v5392
    %5567 = vmatpush.bf16.msra.mxu0 %v5388
    %5568 = vmatpush.bf16.msra.mxu0 %v5384
    %5569 = vmatpush.bf16.msra.mxu0 %v5380
    %5570 = vmatpush.bf16.msra.mxu0 %v5376
    %5571 = vmatpush.bf16.msra.mxu0 %v5372
    %5572 = vmatmul.bf16.gmra.mxu0 %v4912
    %v5573 = vpop.f32.mrf.mxu0
    %v5574 = vadd.f32 %v5561, %v5573
    %v5575 = vpop.f32.mrf.mxu0
    %5576 = vdwg.mxu0
    %5577 = vmatpush.bf16.msra.mxu0 %v5337
    %5578 = vmatpush.bf16.msra.mxu0 %v5333
    %5579 = vmatpush.bf16.msra.mxu0 %v5329
    %5580 = vmatpush.bf16.msra.mxu0 %v5325
    %5581 = vmatpush.bf16.msra.mxu0 %v5321
    %5582 = vmatpush.bf16.msra.mxu0 %v5317
    %5583 = vmatpush.bf16.msra.mxu0 %v5313
    %5584 = vmatpush.bf16.msra.mxu0 %v5309
    %5585 = vmatmul.bf16.gmra.mxu0 %v4910
    %v5586 = vpop.f32.mrf.mxu0
    %v5587 = vadd.f32 %v5013, %v5586
    %v5588 = vpop.f32.mrf.mxu0
    %5589 = vdwg.mxu0
    %5590 = vmatpush.bf16.msra.mxu0 %v5369
    %5591 = vmatpush.bf16.msra.mxu0 %v5365
    %5592 = vmatpush.bf16.msra.mxu0 %v5361
    %5593 = vmatpush.bf16.msra.mxu0 %v5357
    %5594 = vmatpush.bf16.msra.mxu0 %v5353
    %5595 = vmatpush.bf16.msra.mxu0 %v5349
    %5596 = vmatpush.bf16.msra.mxu0 %v5345
    %5597 = vmatpush.bf16.msra.mxu0 %v5341
    %5598 = vmatmul.bf16.gmra.mxu0 %v4911
    %v5599 = vpop.f32.mrf.mxu0
    %v5600 = vadd.f32 %v5587, %v5599
    %v5601 = vpop.f32.mrf.mxu0
    %5602 = vdwg.mxu0
    %5603 = vmatpush.bf16.msra.mxu0 %v5401
    %5604 = vmatpush.bf16.msra.mxu0 %v5397
    %5605 = vmatpush.bf16.msra.mxu0 %v5393
    %5606 = vmatpush.bf16.msra.mxu0 %v5389
    %5607 = vmatpush.bf16.msra.mxu0 %v5385
    %5608 = vmatpush.bf16.msra.mxu0 %v5381
    %5609 = vmatpush.bf16.msra.mxu0 %v5377
    %5610 = vmatpush.bf16.msra.mxu0 %v5373
    %5611 = vmatmul.bf16.gmra.mxu0 %v4912
    %v5612 = vpop.f32.mrf.mxu0
    %v5613 = vadd.f32 %v5600, %v5612
    %v5614 = vpop.f32.mrf.mxu0
    %5615 = vdwg.mxu0
    %5616 = vmatpush.bf16.msra.mxu0 %v5338
    %5617 = vmatpush.bf16.msra.mxu0 %v5334
    %5618 = vmatpush.bf16.msra.mxu0 %v5330
    %5619 = vmatpush.bf16.msra.mxu0 %v5326
    %5620 = vmatpush.bf16.msra.mxu0 %v5322
    %5621 = vmatpush.bf16.msra.mxu0 %v5318
    %5622 = vmatpush.bf16.msra.mxu0 %v5314
    %5623 = vmatpush.bf16.msra.mxu0 %v5310
    %5624 = vmatmul.bf16.gmra.mxu0 %v4910
    %v5625 = vpop.f32.mrf.mxu0
    %v5626 = vadd.f32 %v5014, %v5625
    %v5627 = vpop.f32.mrf.mxu0
    %5628 = vdwg.mxu0
    %5629 = vmatpush.bf16.msra.mxu0 %v5370
    %5630 = vmatpush.bf16.msra.mxu0 %v5366
    %5631 = vmatpush.bf16.msra.mxu0 %v5362
    %5632 = vmatpush.bf16.msra.mxu0 %v5358
    %5633 = vmatpush.bf16.msra.mxu0 %v5354
    %5634 = vmatpush.bf16.msra.mxu0 %v5350
    %5635 = vmatpush.bf16.msra.mxu0 %v5346
    %5636 = vmatpush.bf16.msra.mxu0 %v5342
    %5637 = vmatmul.bf16.gmra.mxu0 %v4911
    %v5638 = vpop.f32.mrf.mxu0
    %v5639 = vadd.f32 %v5626, %v5638
    %v5640 = vpop.f32.mrf.mxu0
    %5641 = vdwg.mxu0
    %5642 = vmatpush.bf16.msra.mxu0 %v5402
    %5643 = vmatpush.bf16.msra.mxu0 %v5398
    %5644 = vmatpush.bf16.msra.mxu0 %v5394
    %5645 = vmatpush.bf16.msra.mxu0 %v5390
    %5646 = vmatpush.bf16.msra.mxu0 %v5386
    %5647 = vmatpush.bf16.msra.mxu0 %v5382
    %5648 = vmatpush.bf16.msra.mxu0 %v5378
    %5649 = vmatpush.bf16.msra.mxu0 %v5374
    %5650 = vmatmul.bf16.gmra.mxu0 %v4912
    %v5651 = vpop.f32.mrf.mxu0
    %v5652 = vadd.f32 %v5639, %v5651
    %v5653 = vpop.f32.mrf.mxu0
    %5654 = vdwg.mxu0
    %v5655 = vpack.c.bf16 %v5535, %v5535
    %v5656 = vpack.c.bf16 %v5574, %v5574
    %v5657 = vpack.c.bf16 %v5613, %v5613
    %v5658 = vpack.c.bf16 %v5652, %v5652
    %v5659 = vld [vmem:[#allocation14] sm:$0xff]
    %v5660 = vld [vmem:[#allocation14 + $0x8] sm:$0xff]
    %v5661 = vld [vmem:[#allocation14 + $0x10] sm:$0xff]
    %v5662 = vld [vmem:[#allocation14 + $0x18] sm:$0xff]
    %v5663 = vld [vmem:[#allocation14 + $0x20] sm:$0xff]
    %v5664 = vld [vmem:[#allocation14 + $0x28] sm:$0xff]
    %v5665 = vld [vmem:[#allocation14 + $0x30] sm:$0xff]
    %v5666 = vld [vmem:[#allocation14 + $0x38] sm:$0xff]
    %v5667 = vld [vmem:[#allocation14 + $0x40] sm:$0xff]
    %v5668 = vld [vmem:[#allocation14 + $0x48] sm:$0xff]
    %v5669 = vld [vmem:[#allocation14 + $0x50] sm:$0xff]
    %v5670 = vld [vmem:[#allocation14 + $0x58] sm:$0xff]
    %v5671 = vld [vmem:[#allocation14 + $0x60] sm:$0xff]
    %v5672 = vld [vmem:[#allocation14 + $0x68] sm:$0xff]
    %v5673 = vld [vmem:[#allocation14 + $0x70] sm:$0xff]
    %v5674 = vld [vmem:[#allocation14 + $0x78] sm:$0xff]
    %v5675 = vld [vmem:[#allocation14 + $0x80] sm:$0xff]
    %v5676 = vld [vmem:[#allocation14 + $0x88] sm:$0xff]
    %v5677 = vld [vmem:[#allocation14 + $0x90] sm:$0xff]
    %v5678 = vld [vmem:[#allocation14 + $0x98] sm:$0xff]
    %v5679 = vld [vmem:[#allocation14 + $0xa0] sm:$0xff]
    %v5680 = vld [vmem:[#allocation14 + $0xa8] sm:$0xff]
    %v5681 = vld [vmem:[#allocation14 + $0xb0] sm:$0xff]
    %v5682 = vld [vmem:[#allocation14 + $0xb8] sm:$0xff]
    %v5683 = vld [vmem:[#allocation14 + $0xc0] sm:$0xff]
    %v5684 = vld [vmem:[#allocation14 + $0xc8] sm:$0xff]
    %v5685 = vld [vmem:[#allocation14 + $0xd0] sm:$0xff]
    %v5686 = vld [vmem:[#allocation14 + $0xd8] sm:$0xff]
    %v5687 = vld [vmem:[#allocation14 + $0xe0] sm:$0xff]
    %v5688 = vld [vmem:[#allocation14 + $0xe8] sm:$0xff]
    %v5689 = vld [vmem:[#allocation14 + $0xf0] sm:$0xff]
    %v5690 = vld [vmem:[#allocation14 + $0xf8] sm:$0xff]
    %v5691 = vld [vmem:[#allocation14 + $0x100] sm:$0xff]
    %v5692 = vld [vmem:[#allocation14 + $0x108] sm:$0xff]
    %v5693 = vld [vmem:[#allocation14 + $0x110] sm:$0xff]
    %v5694 = vld [vmem:[#allocation14 + $0x118] sm:$0xff]
    %v5695 = vld [vmem:[#allocation14 + $0x120] sm:$0xff]
    %v5696 = vld [vmem:[#allocation14 + $0x128] sm:$0xff]
    %v5697 = vld [vmem:[#allocation14 + $0x130] sm:$0xff]
    %v5698 = vld [vmem:[#allocation14 + $0x138] sm:$0xff]
    %v5699 = vld [vmem:[#allocation14 + $0x140] sm:$0xff]
    %v5700 = vld [vmem:[#allocation14 + $0x148] sm:$0xff]
    %v5701 = vld [vmem:[#allocation14 + $0x150] sm:$0xff]
    %v5702 = vld [vmem:[#allocation14 + $0x158] sm:$0xff]
    %v5703 = vld [vmem:[#allocation14 + $0x160] sm:$0xff]
    %v5704 = vld [vmem:[#allocation14 + $0x168] sm:$0xff]
    %v5705 = vld [vmem:[#allocation14 + $0x170] sm:$0xff]
    %v5706 = vld [vmem:[#allocation14 + $0x178] sm:$0xff]
    %v5707 = vld [vmem:[#allocation14 + $0x180] sm:$0xff]
    %v5708 = vld [vmem:[#allocation14 + $0x188] sm:$0xff]
    %v5709 = vld [vmem:[#allocation14 + $0x190] sm:$0xff]
    %v5710 = vld [vmem:[#allocation14 + $0x198] sm:$0xff]
    %v5711 = vld [vmem:[#allocation14 + $0x1a0] sm:$0xff]
    %v5712 = vld [vmem:[#allocation14 + $0x1a8] sm:$0xff]
    %v5713 = vld [vmem:[#allocation14 + $0x1b0] sm:$0xff]
    %v5714 = vld [vmem:[#allocation14 + $0x1b8] sm:$0xff]
    %v5715 = vld [vmem:[#allocation14 + $0x1c0] sm:$0xff]
    %v5716 = vld [vmem:[#allocation14 + $0x1c8] sm:$0xff]
    %v5717 = vld [vmem:[#allocation14 + $0x1d0] sm:$0xff]
    %v5718 = vld [vmem:[#allocation14 + $0x1d8] sm:$0xff]
    %v5719 = vld [vmem:[#allocation14 + $0x1e0] sm:$0xff]
    %v5720 = vld [vmem:[#allocation14 + $0x1e8] sm:$0xff]
    %v5721 = vld [vmem:[#allocation14 + $0x1f0] sm:$0xff]
    %v5722 = vld [vmem:[#allocation14 + $0x1f8] sm:$0xff]
    %v5723 = vld [vmem:[#allocation14 + $0x200] sm:$0xff]
    %v5724 = vld [vmem:[#allocation14 + $0x208] sm:$0xff]
    %v5725 = vld [vmem:[#allocation14 + $0x210] sm:$0xff]
    %v5726 = vld [vmem:[#allocation14 + $0x218] sm:$0xff]
    %v5727 = vld [vmem:[#allocation14 + $0x220] sm:$0xff]
    %v5728 = vld [vmem:[#allocation14 + $0x228] sm:$0xff]
    %v5729 = vld [vmem:[#allocation14 + $0x230] sm:$0xff]
    %v5730 = vld [vmem:[#allocation14 + $0x238] sm:$0xff]
    %v5731 = vld [vmem:[#allocation14 + $0x240] sm:$0xff]
    %v5732 = vld [vmem:[#allocation14 + $0x248] sm:$0xff]
    %v5733 = vld [vmem:[#allocation14 + $0x250] sm:$0xff]
    %v5734 = vld [vmem:[#allocation14 + $0x258] sm:$0xff]
    %v5735 = vld [vmem:[#allocation14 + $0x260] sm:$0xff]
    %v5736 = vld [vmem:[#allocation14 + $0x268] sm:$0xff]
    %v5737 = vld [vmem:[#allocation14 + $0x270] sm:$0xff]
    %v5738 = vld [vmem:[#allocation14 + $0x278] sm:$0xff]
    %v5739 = vld [vmem:[#allocation14 + $0x280] sm:$0xff]
    %v5740 = vld [vmem:[#allocation14 + $0x288] sm:$0xff]
    %v5741 = vld [vmem:[#allocation14 + $0x290] sm:$0xff]
    %v5742 = vld [vmem:[#allocation14 + $0x298] sm:$0xff]
    %v5743 = vld [vmem:[#allocation14 + $0x2a0] sm:$0xff]
    %v5744 = vld [vmem:[#allocation14 + $0x2a8] sm:$0xff]
    %v5745 = vld [vmem:[#allocation14 + $0x2b0] sm:$0xff]
    %v5746 = vld [vmem:[#allocation14 + $0x2b8] sm:$0xff]
    %v5747 = vld [vmem:[#allocation14 + $0x2c0] sm:$0xff]
    %v5748 = vld [vmem:[#allocation14 + $0x2c8] sm:$0xff]
    %v5749 = vld [vmem:[#allocation14 + $0x2d0] sm:$0xff]
    %v5750 = vld [vmem:[#allocation14 + $0x2d8] sm:$0xff]
    %v5751 = vld [vmem:[#allocation14 + $0x2e0] sm:$0xff]
    %v5752 = vld [vmem:[#allocation14 + $0x2e8] sm:$0xff]
    %v5753 = vld [vmem:[#allocation14 + $0x2f0] sm:$0xff]
    %v5754 = vld [vmem:[#allocation14 + $0x2f8] sm:$0xff]
    %v5755 = vld [vmem:[#allocation14 + $0x300] sm:$0xff]
    %v5756 = vld [vmem:[#allocation14 + $0x308] sm:$0xff]
    %v5757 = vld [vmem:[#allocation14 + $0x310] sm:$0xff]
    %v5758 = vld [vmem:[#allocation14 + $0x318] sm:$0xff]
    %v5759 = vld [vmem:[#allocation14 + $0x320] sm:$0xff]
    %v5760 = vld [vmem:[#allocation14 + $0x328] sm:$0xff]
    %v5761 = vld [vmem:[#allocation14 + $0x330] sm:$0xff]
    %v5762 = vld [vmem:[#allocation14 + $0x338] sm:$0xff]
    %v5763 = vld [vmem:[#allocation14 + $0x340] sm:$0xff]
    %v5764 = vld [vmem:[#allocation14 + $0x348] sm:$0xff]
    %v5765 = vld [vmem:[#allocation14 + $0x350] sm:$0xff]
    %v5766 = vld [vmem:[#allocation14 + $0x358] sm:$0xff]
    %v5767 = vld [vmem:[#allocation14 + $0x360] sm:$0xff]
    %v5768 = vld [vmem:[#allocation14 + $0x368] sm:$0xff]
    %v5769 = vld [vmem:[#allocation14 + $0x370] sm:$0xff]
    %v5770 = vld [vmem:[#allocation14 + $0x378] sm:$0xff]
    %v5771 = vld [vmem:[#allocation14 + $0x380] sm:$0xff]
    %v5772 = vld [vmem:[#allocation14 + $0x388] sm:$0xff]
    %v5773 = vld [vmem:[#allocation14 + $0x390] sm:$0xff]
    %v5774 = vld [vmem:[#allocation14 + $0x398] sm:$0xff]
    %v5775 = vld [vmem:[#allocation14 + $0x3a0] sm:$0xff]
    %v5776 = vld [vmem:[#allocation14 + $0x3a8] sm:$0xff]
    %v5777 = vld [vmem:[#allocation14 + $0x3b0] sm:$0xff]
    %v5778 = vld [vmem:[#allocation14 + $0x3b8] sm:$0xff]
    %v5779 = vld [vmem:[#allocation14 + $0x3c0] sm:$0xff]
    %v5780 = vld [vmem:[#allocation14 + $0x3c8] sm:$0xff]
    %v5781 = vld [vmem:[#allocation14 + $0x3d0] sm:$0xff]
    %v5782 = vld [vmem:[#allocation14 + $0x3d8] sm:$0xff]
    %v5783 = vld [vmem:[#allocation14 + $0x3e0] sm:$0xff]
    %v5784 = vld [vmem:[#allocation14 + $0x3e8] sm:$0xff]
    %v5785 = vld [vmem:[#allocation14 + $0x3f0] sm:$0xff]
    %v5786 = vld [vmem:[#allocation14 + $0x3f8] sm:$0xff]
    %v5787 = vld [vmem:[#allocation16] sm:$0xf]
    %v5789 = vperm.slane %v5787, 0
    %v5790 = vperm.slane %v5787, 1
    %v5791 = vperm.slane %v5787, 2
    %v5792 = vperm.slane %v5787, 3
    %v5925 = vunpack.c.l.b16 %v5659
    %v5926 = vunpack.c.h.b16 %v5659
    %v5927 = vunpack.c.l.b16 %v5660
    %v5928 = vunpack.c.h.b16 %v5660
    %v5929 = vunpack.c.l.b16 %v5661
    %v5930 = vunpack.c.h.b16 %v5661
    %v5931 = vunpack.c.l.b16 %v5662
    %v5932 = vunpack.c.h.b16 %v5662
    %v5933 = vunpack.c.l.b16 %v5663
    %v5934 = vunpack.c.h.b16 %v5663
    %v5935 = vunpack.c.l.b16 %v5664
    %v5936 = vunpack.c.h.b16 %v5664
    %v5937 = vunpack.c.l.b16 %v5665
    %v5938 = vunpack.c.h.b16 %v5665
    %v5939 = vunpack.c.l.b16 %v5666
    %v5940 = vunpack.c.h.b16 %v5666
    %v5941 = vunpack.c.l.b16 %v5667
    %v5942 = vunpack.c.h.b16 %v5667
    %v5943 = vunpack.c.l.b16 %v5668
    %v5944 = vunpack.c.h.b16 %v5668
    %v5945 = vunpack.c.l.b16 %v5669
    %v5946 = vunpack.c.h.b16 %v5669
    %v5947 = vunpack.c.l.b16 %v5670
    %v5948 = vunpack.c.h.b16 %v5670
    %v5949 = vunpack.c.l.b16 %v5671
    %v5950 = vunpack.c.h.b16 %v5671
    %v5951 = vunpack.c.l.b16 %v5672
    %v5952 = vunpack.c.h.b16 %v5672
    %v5953 = vunpack.c.l.b16 %v5673
    %v5954 = vunpack.c.h.b16 %v5673
    %v5955 = vunpack.c.l.b16 %v5674
    %v5956 = vunpack.c.h.b16 %v5674
    %v5957 = vunpack.c.l.b16 %v5675
    %v5958 = vunpack.c.h.b16 %v5675
    %v5959 = vunpack.c.l.b16 %v5676
    %v5960 = vunpack.c.h.b16 %v5676
    %v5961 = vunpack.c.l.b16 %v5677
    %v5962 = vunpack.c.h.b16 %v5677
    %v5963 = vunpack.c.l.b16 %v5678
    %v5964 = vunpack.c.h.b16 %v5678
    %v5965 = vunpack.c.l.b16 %v5679
    %v5966 = vunpack.c.h.b16 %v5679
    %v5967 = vunpack.c.l.b16 %v5680
    %v5968 = vunpack.c.h.b16 %v5680
    %v5969 = vunpack.c.l.b16 %v5681
    %v5970 = vunpack.c.h.b16 %v5681
    %v5971 = vunpack.c.l.b16 %v5682
    %v5972 = vunpack.c.h.b16 %v5682
    %v5973 = vunpack.c.l.b16 %v5683
    %v5974 = vunpack.c.h.b16 %v5683
    %v5975 = vunpack.c.l.b16 %v5684
    %v5976 = vunpack.c.h.b16 %v5684
    %v5977 = vunpack.c.l.b16 %v5685
    %v5978 = vunpack.c.h.b16 %v5685
    %v5979 = vunpack.c.l.b16 %v5686
    %v5980 = vunpack.c.h.b16 %v5686
    %v5981 = vunpack.c.l.b16 %v5687
    %v5982 = vunpack.c.h.b16 %v5687
    %v5983 = vunpack.c.l.b16 %v5688
    %v5984 = vunpack.c.h.b16 %v5688
    %v5985 = vunpack.c.l.b16 %v5689
    %v5986 = vunpack.c.h.b16 %v5689
    %v5987 = vunpack.c.l.b16 %v5690
    %v5988 = vunpack.c.h.b16 %v5690
    %v5989 = vunpack.c.l.b16 %v5691
    %v5990 = vunpack.c.h.b16 %v5691
    %v5991 = vunpack.c.l.b16 %v5692
    %v5992 = vunpack.c.h.b16 %v5692
    %v5993 = vunpack.c.l.b16 %v5693
    %v5994 = vunpack.c.h.b16 %v5693
    %v5995 = vunpack.c.l.b16 %v5694
    %v5996 = vunpack.c.h.b16 %v5694
    %v5997 = vunpack.c.l.b16 %v5695
    %v5998 = vunpack.c.h.b16 %v5695
    %v5999 = vunpack.c.l.b16 %v5696
    %v6000 = vunpack.c.h.b16 %v5696
    %v6001 = vunpack.c.l.b16 %v5697
    %v6002 = vunpack.c.h.b16 %v5697
    %v6003 = vunpack.c.l.b16 %v5698
    %v6004 = vunpack.c.h.b16 %v5698
    %v6005 = vunpack.c.l.b16 %v5699
    %v6006 = vunpack.c.h.b16 %v5699
    %v6007 = vunpack.c.l.b16 %v5700
    %v6008 = vunpack.c.h.b16 %v5700
    %v6009 = vunpack.c.l.b16 %v5701
    %v6010 = vunpack.c.h.b16 %v5701
    %v6011 = vunpack.c.l.b16 %v5702
    %v6012 = vunpack.c.h.b16 %v5702
    %v6013 = vunpack.c.l.b16 %v5703
    %v6014 = vunpack.c.h.b16 %v5703
    %v6015 = vunpack.c.l.b16 %v5704
    %v6016 = vunpack.c.h.b16 %v5704
    %v6017 = vunpack.c.l.b16 %v5705
    %v6018 = vunpack.c.h.b16 %v5705
    %v6019 = vunpack.c.l.b16 %v5706
    %v6020 = vunpack.c.h.b16 %v5706
    %v6021 = vunpack.c.l.b16 %v5707
    %v6022 = vunpack.c.h.b16 %v5707
    %v6023 = vunpack.c.l.b16 %v5708
    %v6024 = vunpack.c.h.b16 %v5708
    %v6025 = vunpack.c.l.b16 %v5709
    %v6026 = vunpack.c.h.b16 %v5709
    %v6027 = vunpack.c.l.b16 %v5710
    %v6028 = vunpack.c.h.b16 %v5710
    %v6029 = vunpack.c.l.b16 %v5711
    %v6030 = vunpack.c.h.b16 %v5711
    %v6031 = vunpack.c.l.b16 %v5712
    %v6032 = vunpack.c.h.b16 %v5712
    %v6033 = vunpack.c.l.b16 %v5713
    %v6034 = vunpack.c.h.b16 %v5713
    %v6035 = vunpack.c.l.b16 %v5714
    %v6036 = vunpack.c.h.b16 %v5714
    %v6037 = vunpack.c.l.b16 %v5715
    %v6038 = vunpack.c.h.b16 %v5715
    %v6039 = vunpack.c.l.b16 %v5716
    %v6040 = vunpack.c.h.b16 %v5716
    %v6041 = vunpack.c.l.b16 %v5717
    %v6042 = vunpack.c.h.b16 %v5717
    %v6043 = vunpack.c.l.b16 %v5718
    %v6044 = vunpack.c.h.b16 %v5718
    %v6045 = vunpack.c.l.b16 %v5719
    %v6046 = vunpack.c.h.b16 %v5719
    %v6047 = vunpack.c.l.b16 %v5720
    %v6048 = vunpack.c.h.b16 %v5720
    %v6049 = vunpack.c.l.b16 %v5721
    %v6050 = vunpack.c.h.b16 %v5721
    %v6051 = vunpack.c.l.b16 %v5722
    %v6052 = vunpack.c.h.b16 %v5722
    %v6053 = vunpack.c.l.b16 %v5723
    %v6054 = vunpack.c.h.b16 %v5723
    %v6055 = vunpack.c.l.b16 %v5724
    %v6056 = vunpack.c.h.b16 %v5724
    %v6057 = vunpack.c.l.b16 %v5725
    %v6058 = vunpack.c.h.b16 %v5725
    %v6059 = vunpack.c.l.b16 %v5726
    %v6060 = vunpack.c.h.b16 %v5726
    %v6061 = vunpack.c.l.b16 %v5727
    %v6062 = vunpack.c.h.b16 %v5727
    %v6063 = vunpack.c.l.b16 %v5728
    %v6064 = vunpack.c.h.b16 %v5728
    %v6065 = vunpack.c.l.b16 %v5729
    %v6066 = vunpack.c.h.b16 %v5729
    %v6067 = vunpack.c.l.b16 %v5730
    %v6068 = vunpack.c.h.b16 %v5730
    %v6069 = vunpack.c.l.b16 %v5731
    %v6070 = vunpack.c.h.b16 %v5731
    %v6071 = vunpack.c.l.b16 %v5732
    %v6072 = vunpack.c.h.b16 %v5732
    %v6073 = vunpack.c.l.b16 %v5733
    %v6074 = vunpack.c.h.b16 %v5733
    %v6075 = vunpack.c.l.b16 %v5734
    %v6076 = vunpack.c.h.b16 %v5734
    %v6077 = vunpack.c.l.b16 %v5735
    %v6078 = vunpack.c.h.b16 %v5735
    %v6079 = vunpack.c.l.b16 %v5736
    %v6080 = vunpack.c.h.b16 %v5736
    %v6081 = vunpack.c.l.b16 %v5737
    %v6082 = vunpack.c.h.b16 %v5737
    %v6083 = vunpack.c.l.b16 %v5738
    %v6084 = vunpack.c.h.b16 %v5738
    %v6085 = vunpack.c.l.b16 %v5739
    %v6086 = vunpack.c.h.b16 %v5739
    %v6087 = vunpack.c.l.b16 %v5740
    %v6088 = vunpack.c.h.b16 %v5740
    %v6089 = vunpack.c.l.b16 %v5741
    %v6090 = vunpack.c.h.b16 %v5741
    %v6091 = vunpack.c.l.b16 %v5742
    %v6092 = vunpack.c.h.b16 %v5742
    %v6093 = vunpack.c.l.b16 %v5743
    %v6094 = vunpack.c.h.b16 %v5743
    %v6095 = vunpack.c.l.b16 %v5744
    %v6096 = vunpack.c.h.b16 %v5744
    %v6097 = vunpack.c.l.b16 %v5745
    %v6098 = vunpack.c.h.b16 %v5745
    %v6099 = vunpack.c.l.b16 %v5746
    %v6100 = vunpack.c.h.b16 %v5746
    %v6101 = vunpack.c.l.b16 %v5747
    %v6102 = vunpack.c.h.b16 %v5747
    %v6103 = vunpack.c.l.b16 %v5748
    %v6104 = vunpack.c.h.b16 %v5748
    %v6105 = vunpack.c.l.b16 %v5749
    %v6106 = vunpack.c.h.b16 %v5749
    %v6107 = vunpack.c.l.b16 %v5750
    %v6108 = vunpack.c.h.b16 %v5750
    %v6109 = vunpack.c.l.b16 %v5751
    %v6110 = vunpack.c.h.b16 %v5751
    %v6111 = vunpack.c.l.b16 %v5752
    %v6112 = vunpack.c.h.b16 %v5752
    %v6113 = vunpack.c.l.b16 %v5753
    %v6114 = vunpack.c.h.b16 %v5753
    %v6115 = vunpack.c.l.b16 %v5754
    %v6116 = vunpack.c.h.b16 %v5754
    %v6117 = vunpack.c.l.b16 %v5755
    %v6118 = vunpack.c.h.b16 %v5755
    %v6119 = vunpack.c.l.b16 %v5756
    %v6120 = vunpack.c.h.b16 %v5756
    %v6121 = vunpack.c.l.b16 %v5757
    %v6122 = vunpack.c.h.b16 %v5757
    %v6123 = vunpack.c.l.b16 %v5758
    %v6124 = vunpack.c.h.b16 %v5758
    %v6125 = vunpack.c.l.b16 %v5759
    %v6126 = vunpack.c.h.b16 %v5759
    %v6127 = vunpack.c.l.b16 %v5760
    %v6128 = vunpack.c.h.b16 %v5760
    %v6129 = vunpack.c.l.b16 %v5761
    %v6130 = vunpack.c.h.b16 %v5761
    %v6131 = vunpack.c.l.b16 %v5762
    %v6132 = vunpack.c.h.b16 %v5762
    %v6133 = vunpack.c.l.b16 %v5763
    %v6134 = vunpack.c.h.b16 %v5763
    %v6135 = vunpack.c.l.b16 %v5764
    %v6136 = vunpack.c.h.b16 %v5764
    %v6137 = vunpack.c.l.b16 %v5765
    %v6138 = vunpack.c.h.b16 %v5765
    %v6139 = vunpack.c.l.b16 %v5766
    %v6140 = vunpack.c.h.b16 %v5766
    %v6141 = vunpack.c.l.b16 %v5767
    %v6142 = vunpack.c.h.b16 %v5767
    %v6143 = vunpack.c.l.b16 %v5768
    %v6144 = vunpack.c.h.b16 %v5768
    %v6145 = vunpack.c.l.b16 %v5769
    %v6146 = vunpack.c.h.b16 %v5769
    %v6147 = vunpack.c.l.b16 %v5770
    %v6148 = vunpack.c.h.b16 %v5770
    %v6149 = vunpack.c.l.b16 %v5771
    %v6150 = vunpack.c.h.b16 %v5771
    %v6151 = vunpack.c.l.b16 %v5772
    %v6152 = vunpack.c.h.b16 %v5772
    %v6153 = vunpack.c.l.b16 %v5773
    %v6154 = vunpack.c.h.b16 %v5773
    %v6155 = vunpack.c.l.b16 %v5774
    %v6156 = vunpack.c.h.b16 %v5774
    %v6157 = vunpack.c.l.b16 %v5775
    %v6158 = vunpack.c.h.b16 %v5775
    %v6159 = vunpack.c.l.b16 %v5776
    %v6160 = vunpack.c.h.b16 %v5776
    %v6161 = vunpack.c.l.b16 %v5777
    %v6162 = vunpack.c.h.b16 %v5777
    %v6163 = vunpack.c.l.b16 %v5778
    %v6164 = vunpack.c.h.b16 %v5778
    %v6165 = vunpack.c.l.b16 %v5779
    %v6166 = vunpack.c.h.b16 %v5779
    %v6167 = vunpack.c.l.b16 %v5780
    %v6168 = vunpack.c.h.b16 %v5780
    %v6169 = vunpack.c.l.b16 %v5781
    %v6170 = vunpack.c.h.b16 %v5781
    %v6171 = vunpack.c.l.b16 %v5782
    %v6172 = vunpack.c.h.b16 %v5782
    %v6173 = vunpack.c.l.b16 %v5783
    %v6174 = vunpack.c.h.b16 %v5783
    %v6175 = vunpack.c.l.b16 %v5784
    %v6176 = vunpack.c.h.b16 %v5784
    %v6177 = vunpack.c.l.b16 %v5785
    %v6178 = vunpack.c.h.b16 %v5785
    %v6179 = vunpack.c.l.b16 %v5786
    %v6180 = vunpack.c.h.b16 %v5786
    %v6181 = vpack.c.b16 %v5929, %v5925
    %v6182 = vpack.c.b16 %v5930, %v5926
    %v6183 = vpack.c.b16 %v5931, %v5927
    %v6184 = vpack.c.b16 %v5932, %v5928
    %v6185 = vpack.c.b16 %v5937, %v5933
    %v6186 = vpack.c.b16 %v5938, %v5934
    %v6187 = vpack.c.b16 %v5939, %v5935
    %v6188 = vpack.c.b16 %v5940, %v5936
    %v6189 = vpack.c.b16 %v5945, %v5941
    %v6190 = vpack.c.b16 %v5946, %v5942
    %v6191 = vpack.c.b16 %v5947, %v5943
    %v6192 = vpack.c.b16 %v5948, %v5944
    %v6193 = vpack.c.b16 %v5953, %v5949
    %v6194 = vpack.c.b16 %v5954, %v5950
    %v6195 = vpack.c.b16 %v5955, %v5951
    %v6196 = vpack.c.b16 %v5956, %v5952
    %v6197 = vpack.c.b16 %v5961, %v5957
    %v6198 = vpack.c.b16 %v5962, %v5958
    %v6199 = vpack.c.b16 %v5963, %v5959
    %v6200 = vpack.c.b16 %v5964, %v5960
    %v6201 = vpack.c.b16 %v5969, %v5965
    %v6202 = vpack.c.b16 %v5970, %v5966
    %v6203 = vpack.c.b16 %v5971, %v5967
    %v6204 = vpack.c.b16 %v5972, %v5968
    %v6205 = vpack.c.b16 %v5977, %v5973
    %v6206 = vpack.c.b16 %v5978, %v5974
    %v6207 = vpack.c.b16 %v5979, %v5975
    %v6208 = vpack.c.b16 %v5980, %v5976
    %v6209 = vpack.c.b16 %v5985, %v5981
    %v6210 = vpack.c.b16 %v5986, %v5982
    %v6211 = vpack.c.b16 %v5987, %v5983
    %v6212 = vpack.c.b16 %v5988, %v5984
    %v6213 = vpack.c.b16 %v5993, %v5989
    %v6214 = vpack.c.b16 %v5994, %v5990
    %v6215 = vpack.c.b16 %v5995, %v5991
    %v6216 = vpack.c.b16 %v5996, %v5992
    %v6217 = vpack.c.b16 %v6001, %v5997
    %v6218 = vpack.c.b16 %v6002, %v5998
    %v6219 = vpack.c.b16 %v6003, %v5999
    %v6220 = vpack.c.b16 %v6004, %v6000
    %v6221 = vpack.c.b16 %v6009, %v6005
    %v6222 = vpack.c.b16 %v6010, %v6006
    %v6223 = vpack.c.b16 %v6011, %v6007
    %v6224 = vpack.c.b16 %v6012, %v6008
    %v6225 = vpack.c.b16 %v6017, %v6013
    %v6226 = vpack.c.b16 %v6018, %v6014
    %v6227 = vpack.c.b16 %v6019, %v6015
    %v6228 = vpack.c.b16 %v6020, %v6016
    %v6229 = vpack.c.b16 %v6025, %v6021
    %v6230 = vpack.c.b16 %v6026, %v6022
    %v6231 = vpack.c.b16 %v6027, %v6023
    %v6232 = vpack.c.b16 %v6028, %v6024
    %v6233 = vpack.c.b16 %v6033, %v6029
    %v6234 = vpack.c.b16 %v6034, %v6030
    %v6235 = vpack.c.b16 %v6035, %v6031
    %v6236 = vpack.c.b16 %v6036, %v6032
    %v6237 = vpack.c.b16 %v6041, %v6037
    %v6238 = vpack.c.b16 %v6042, %v6038
    %v6239 = vpack.c.b16 %v6043, %v6039
    %v6240 = vpack.c.b16 %v6044, %v6040
    %v6241 = vpack.c.b16 %v6049, %v6045
    %v6242 = vpack.c.b16 %v6050, %v6046
    %v6243 = vpack.c.b16 %v6051, %v6047
    %v6244 = vpack.c.b16 %v6052, %v6048
    %v6245 = vpack.c.b16 %v6057, %v6053
    %v6246 = vpack.c.b16 %v6058, %v6054
    %v6247 = vpack.c.b16 %v6059, %v6055
    %v6248 = vpack.c.b16 %v6060, %v6056
    %v6249 = vpack.c.b16 %v6065, %v6061
    %v6250 = vpack.c.b16 %v6066, %v6062
    %v6251 = vpack.c.b16 %v6067, %v6063
    %v6252 = vpack.c.b16 %v6068, %v6064
    %v6253 = vpack.c.b16 %v6073, %v6069
    %v6254 = vpack.c.b16 %v6074, %v6070
    %v6255 = vpack.c.b16 %v6075, %v6071
    %v6256 = vpack.c.b16 %v6076, %v6072
    %v6257 = vpack.c.b16 %v6081, %v6077
    %v6258 = vpack.c.b16 %v6082, %v6078
    %v6259 = vpack.c.b16 %v6083, %v6079
    %v6260 = vpack.c.b16 %v6084, %v6080
    %v6261 = vpack.c.b16 %v6089, %v6085
    %v6262 = vpack.c.b16 %v6090, %v6086
    %v6263 = vpack.c.b16 %v6091, %v6087
    %v6264 = vpack.c.b16 %v6092, %v6088
    %v6265 = vpack.c.b16 %v6097, %v6093
    %v6266 = vpack.c.b16 %v6098, %v6094
    %v6267 = vpack.c.b16 %v6099, %v6095
    %v6268 = vpack.c.b16 %v6100, %v6096
    %v6269 = vpack.c.b16 %v6105, %v6101
    %v6270 = vpack.c.b16 %v6106, %v6102
    %v6271 = vpack.c.b16 %v6107, %v6103
    %v6272 = vpack.c.b16 %v6108, %v6104
    %v6273 = vpack.c.b16 %v6113, %v6109
    %v6274 = vpack.c.b16 %v6114, %v6110
    %v6275 = vpack.c.b16 %v6115, %v6111
    %v6276 = vpack.c.b16 %v6116, %v6112
    %v6277 = vpack.c.b16 %v6121, %v6117
    %v6278 = vpack.c.b16 %v6122, %v6118
    %v6279 = vpack.c.b16 %v6123, %v6119
    %v6280 = vpack.c.b16 %v6124, %v6120
    %v6281 = vpack.c.b16 %v6129, %v6125
    %v6282 = vpack.c.b16 %v6130, %v6126
    %v6283 = vpack.c.b16 %v6131, %v6127
    %v6284 = vpack.c.b16 %v6132, %v6128
    %v6285 = vpack.c.b16 %v6137, %v6133
    %v6286 = vpack.c.b16 %v6138, %v6134
    %v6287 = vpack.c.b16 %v6139, %v6135
    %v6288 = vpack.c.b16 %v6140, %v6136
    %v6289 = vpack.c.b16 %v6145, %v6141
    %v6290 = vpack.c.b16 %v6146, %v6142
    %v6291 = vpack.c.b16 %v6147, %v6143
    %v6292 = vpack.c.b16 %v6148, %v6144
    %v6293 = vpack.c.b16 %v6153, %v6149
    %v6294 = vpack.c.b16 %v6154, %v6150
    %v6295 = vpack.c.b16 %v6155, %v6151
    %v6296 = vpack.c.b16 %v6156, %v6152
    %v6297 = vpack.c.b16 %v6161, %v6157
    %v6298 = vpack.c.b16 %v6162, %v6158
    %v6299 = vpack.c.b16 %v6163, %v6159
    %v6300 = vpack.c.b16 %v6164, %v6160
    %v6301 = vpack.c.b16 %v6169, %v6165
    %v6302 = vpack.c.b16 %v6170, %v6166
    %v6303 = vpack.c.b16 %v6171, %v6167
    %v6304 = vpack.c.b16 %v6172, %v6168
    %v6305 = vpack.c.b16 %v6177, %v6173
    %v6306 = vpack.c.b16 %v6178, %v6174
    %v6307 = vpack.c.b16 %v6179, %v6175
    %v6308 = vpack.c.b16 %v6180, %v6176
    %6437 = vmatpush.bf16.msra.mxu0 %v6209
    %6438 = vmatpush.bf16.msra.mxu0 %v6205
    %6439 = vmatpush.bf16.msra.mxu0 %v6201
    %6440 = vmatpush.bf16.msra.mxu0 %v6197
    %6441 = vmatpush.bf16.msra.mxu0 %v6193
    %6442 = vmatpush.bf16.msra.mxu0 %v6189
    %6443 = vmatpush.bf16.msra.mxu0 %v6185
    %6444 = vmatpush.bf16.msra.mxu0 %v6181
    %6445 = vmatmul.bf16.gmra.mxu0 %v5655
    %v6446 = vpop.f32.mrf.mxu0
    %v6447 = vadd.f32 %v5789, %v6446
    %v6448 = vpop.f32.mrf.mxu0
    %6449 = vdwg.mxu0
    %6450 = vmatpush.bf16.msra.mxu0 %v6241
    %6451 = vmatpush.bf16.msra.mxu0 %v6237
    %6452 = vmatpush.bf16.msra.mxu0 %v6233
    %6453 = vmatpush.bf16.msra.mxu0 %v6229
    %6454 = vmatpush.bf16.msra.mxu0 %v6225
    %6455 = vmatpush.bf16.msra.mxu0 %v6221
    %6456 = vmatpush.bf16.msra.mxu0 %v6217
    %6457 = vmatpush.bf16.msra.mxu0 %v6213
    %6458 = vmatmul.bf16.gmra.mxu0 %v5656
    %v6459 = vpop.f32.mrf.mxu0
    %v6460 = vadd.f32 %v6447, %v6459
    %v6461 = vpop.f32.mrf.mxu0
    %6462 = vdwg.mxu0
    %6463 = vmatpush.bf16.msra.mxu0 %v6273
    %6464 = vmatpush.bf16.msra.mxu0 %v6269
    %6465 = vmatpush.bf16.msra.mxu0 %v6265
    %6466 = vmatpush.bf16.msra.mxu0 %v6261
    %6467 = vmatpush.bf16.msra.mxu0 %v6257
    %6468 = vmatpush.bf16.msra.mxu0 %v6253
    %6469 = vmatpush.bf16.msra.mxu0 %v6249
    %6470 = vmatpush.bf16.msra.mxu0 %v6245
    %6471 = vmatmul.bf16.gmra.mxu0 %v5657
    %v6472 = vpop.f32.mrf.mxu0
    %v6473 = vadd.f32 %v6460, %v6472
    %v6474 = vpop.f32.mrf.mxu0
    %6475 = vdwg.mxu0
    %6476 = vmatpush.bf16.msra.mxu0 %v6305
    %6477 = vmatpush.bf16.msra.mxu0 %v6301
    %6478 = vmatpush.bf16.msra.mxu0 %v6297
    %6479 = vmatpush.bf16.msra.mxu0 %v6293
    %6480 = vmatpush.bf16.msra.mxu0 %v6289
    %6481 = vmatpush.bf16.msra.mxu0 %v6285
    %6482 = vmatpush.bf16.msra.mxu0 %v6281
    %6483 = vmatpush.bf16.msra.mxu0 %v6277
    %6484 = vmatmul.bf16.gmra.mxu0 %v5658
    %v6485 = vpop.f32.mrf.mxu0
    %v6486 = vadd.f32 %v6473, %v6485
    %v6487 = vpop.f32.mrf.mxu0
    %6488 = vdwg.mxu0
    %6489 = vmatpush.bf16.msra.mxu0 %v6210
    %6490 = vmatpush.bf16.msra.mxu0 %v6206
    %6491 = vmatpush.bf16.msra.mxu0 %v6202
    %6492 = vmatpush.bf16.msra.mxu0 %v6198
    %6493 = vmatpush.bf16.msra.mxu0 %v6194
    %6494 = vmatpush.bf16.msra.mxu0 %v6190
    %6495 = vmatpush.bf16.msra.mxu0 %v6186
    %6496 = vmatpush.bf16.msra.mxu0 %v6182
    %6497 = vmatmul.bf16.gmra.mxu0 %v5655
    %v6498 = vpop.f32.mrf.mxu0
    %v6499 = vadd.f32 %v5790, %v6498
    %v6500 = vpop.f32.mrf.mxu0
    %6501 = vdwg.mxu0
    %6502 = vmatpush.bf16.msra.mxu0 %v6242
    %6503 = vmatpush.bf16.msra.mxu0 %v6238
    %6504 = vmatpush.bf16.msra.mxu0 %v6234
    %6505 = vmatpush.bf16.msra.mxu0 %v6230
    %6506 = vmatpush.bf16.msra.mxu0 %v6226
    %6507 = vmatpush.bf16.msra.mxu0 %v6222
    %6508 = vmatpush.bf16.msra.mxu0 %v6218
    %6509 = vmatpush.bf16.msra.mxu0 %v6214
    %6510 = vmatmul.bf16.gmra.mxu0 %v5656
    %v6511 = vpop.f32.mrf.mxu0
    %v6512 = vadd.f32 %v6499, %v6511
    %v6513 = vpop.f32.mrf.mxu0
    %6514 = vdwg.mxu0
    %6515 = vmatpush.bf16.msra.mxu0 %v6274
    %6516 = vmatpush.bf16.msra.mxu0 %v6270
    %6517 = vmatpush.bf16.msra.mxu0 %v6266
    %6518 = vmatpush.bf16.msra.mxu0 %v6262
    %6519 = vmatpush.bf16.msra.mxu0 %v6258
    %6520 = vmatpush.bf16.msra.mxu0 %v6254
    %6521 = vmatpush.bf16.msra.mxu0 %v6250
    %6522 = vmatpush.bf16.msra.mxu0 %v6246
    %6523 = vmatmul.bf16.gmra.mxu0 %v5657
    %v6524 = vpop.f32.mrf.mxu0
    %v6525 = vadd.f32 %v6512, %v6524
    %v6526 = vpop.f32.mrf.mxu0
    %6527 = vdwg.mxu0
    %6528 = vmatpush.bf16.msra.mxu0 %v6306
    %6529 = vmatpush.bf16.msra.mxu0 %v6302
    %6530 = vmatpush.bf16.msra.mxu0 %v6298
    %6531 = vmatpush.bf16.msra.mxu0 %v6294
    %6532 = vmatpush.bf16.msra.mxu0 %v6290
    %6533 = vmatpush.bf16.msra.mxu0 %v6286
    %6534 = vmatpush.bf16.msra.mxu0 %v6282
    %6535 = vmatpush.bf16.msra.mxu0 %v6278
    %6536 = vmatmul.bf16.gmra.mxu0 %v5658
    %v6537 = vpop.f32.mrf.mxu0
    %v6538 = vadd.f32 %v6525, %v6537
    %v6539 = vpop.f32.mrf.mxu0
    %6540 = vdwg.mxu0
    %6541 = vmatpush.bf16.msra.mxu0 %v6211
    %6542 = vmatpush.bf16.msra.mxu0 %v6207
    %6543 = vmatpush.bf16.msra.mxu0 %v6203
    %6544 = vmatpush.bf16.msra.mxu0 %v6199
    %6545 = vmatpush.bf16.msra.mxu0 %v6195
    %6546 = vmatpush.bf16.msra.mxu0 %v6191
    %6547 = vmatpush.bf16.msra.mxu0 %v6187
    %6548 = vmatpush.bf16.msra.mxu0 %v6183
    %6549 = vmatmul.bf16.gmra.mxu0 %v5655
    %v6550 = vpop.f32.mrf.mxu0
    %v6551 = vadd.f32 %v5791, %v6550
    %v6552 = vpop.f32.mrf.mxu0
    %6553 = vdwg.mxu0
    %6554 = vmatpush.bf16.msra.mxu0 %v6243
    %6555 = vmatpush.bf16.msra.mxu0 %v6239
    %6556 = vmatpush.bf16.msra.mxu0 %v6235
    %6557 = vmatpush.bf16.msra.mxu0 %v6231
    %6558 = vmatpush.bf16.msra.mxu0 %v6227
    %6559 = vmatpush.bf16.msra.mxu0 %v6223
    %6560 = vmatpush.bf16.msra.mxu0 %v6219
    %6561 = vmatpush.bf16.msra.mxu0 %v6215
    %6562 = vmatmul.bf16.gmra.mxu0 %v5656
    %v6563 = vpop.f32.mrf.mxu0
    %v6564 = vadd.f32 %v6551, %v6563
    %v6565 = vpop.f32.mrf.mxu0
    %6566 = vdwg.mxu0
    %6567 = vmatpush.bf16.msra.mxu0 %v6275
    %6568 = vmatpush.bf16.msra.mxu0 %v6271
    %6569 = vmatpush.bf16.msra.mxu0 %v6267
    %6570 = vmatpush.bf16.msra.mxu0 %v6263
    %6571 = vmatpush.bf16.msra.mxu0 %v6259
    %6572 = vmatpush.bf16.msra.mxu0 %v6255
    %6573 = vmatpush.bf16.msra.mxu0 %v6251
    %6574 = vmatpush.bf16.msra.mxu0 %v6247
    %6575 = vmatmul.bf16.gmra.mxu0 %v5657
    %v6576 = vpop.f32.mrf.mxu0
    %v6577 = vadd.f32 %v6564, %v6576
    %v6578 = vpop.f32.mrf.mxu0
    %6579 = vdwg.mxu0
    %6580 = vmatpush.bf16.msra.mxu0 %v6307
    %6581 = vmatpush.bf16.msra.mxu0 %v6303
    %6582 = vmatpush.bf16.msra.mxu0 %v6299
    %6583 = vmatpush.bf16.msra.mxu0 %v6295
    %6584 = vmatpush.bf16.msra.mxu0 %v6291
    %6585 = vmatpush.bf16.msra.mxu0 %v6287
    %6586 = vmatpush.bf16.msra.mxu0 %v6283
    %6587 = vmatpush.bf16.msra.mxu0 %v6279
    %6588 = vmatmul.bf16.gmra.mxu0 %v5658
    %v6589 = vpop.f32.mrf.mxu0
    %v6590 = vadd.f32 %v6577, %v6589
    %v6591 = vpop.f32.mrf.mxu0
    %6592 = vdwg.mxu0
    %6593 = vmatpush.bf16.msra.mxu0 %v6212
    %6594 = vmatpush.bf16.msra.mxu0 %v6208
    %6595 = vmatpush.bf16.msra.mxu0 %v6204
    %6596 = vmatpush.bf16.msra.mxu0 %v6200
    %6597 = vmatpush.bf16.msra.mxu0 %v6196
    %6598 = vmatpush.bf16.msra.mxu0 %v6192
    %6599 = vmatpush.bf16.msra.mxu0 %v6188
    %6600 = vmatpush.bf16.msra.mxu0 %v6184
    %6601 = vmatmul.bf16.gmra.mxu0 %v5655
    %v6602 = vpop.f32.mrf.mxu0
    %v6603 = vadd.f32 %v5792, %v6602
    %v6604 = vpop.f32.mrf.mxu0
    %6605 = vdwg.mxu0
    %6606 = vmatpush.bf16.msra.mxu0 %v6244
    %6607 = vmatpush.bf16.msra.mxu0 %v6240
    %6608 = vmatpush.bf16.msra.mxu0 %v6236
    %6609 = vmatpush.bf16.msra.mxu0 %v6232
    %6610 = vmatpush.bf16.msra.mxu0 %v6228
    %6611 = vmatpush.bf16.msra.mxu0 %v6224
    %6612 = vmatpush.bf16.msra.mxu0 %v6220
    %6613 = vmatpush.bf16.msra.mxu0 %v6216
    %6614 = vmatmul.bf16.gmra.mxu0 %v5656
    %v6615 = vpop.f32.mrf.mxu0
    %v6616 = vadd.f32 %v6603, %v6615
    %v6617 = vpop.f32.mrf.mxu0
    %6618 = vdwg.mxu0
    %6619 = vmatpush.bf16.msra.mxu0 %v6276
    %6620 = vmatpush.bf16.msra.mxu0 %v6272
    %6621 = vmatpush.bf16.msra.mxu0 %v6268
    %6622 = vmatpush.bf16.msra.mxu0 %v6264
    %6623 = vmatpush.bf16.msra.mxu0 %v6260
    %6624 = vmatpush.bf16.msra.mxu0 %v6256
    %6625 = vmatpush.bf16.msra.mxu0 %v6252
    %6626 = vmatpush.bf16.msra.mxu0 %v6248
    %6627 = vmatmul.bf16.gmra.mxu0 %v5657
    %v6628 = vpop.f32.mrf.mxu0
    %v6629 = vadd.f32 %v6616, %v6628
    %v6630 = vpop.f32.mrf.mxu0
    %6631 = vdwg.mxu0
    %6632 = vmatpush.bf16.msra.mxu0 %v6308
    %6633 = vmatpush.bf16.msra.mxu0 %v6304
    %6634 = vmatpush.bf16.msra.mxu0 %v6300
    %6635 = vmatpush.bf16.msra.mxu0 %v6296
    %6636 = vmatpush.bf16.msra.mxu0 %v6292
    %6637 = vmatpush.bf16.msra.mxu0 %v6288
    %6638 = vmatpush.bf16.msra.mxu0 %v6284
    %6639 = vmatpush.bf16.msra.mxu0 %v6280
    %6640 = vmatmul.bf16.gmra.mxu0 %v5658
    %v6641 = vpop.f32.mrf.mxu0
    %v6642 = vadd.f32 %v6629, %v6641
    %v6643 = vpop.f32.mrf.mxu0
    %6644 = vdwg.mxu0
    %v6645 = vmax.f32 %v6486, 0.0
    %v6646 = vmax.f32 %v6538, 0.0
    %v6647 = vmax.f32 %v6590, 0.0
    %v6648 = vmax.f32 %v6642, 0.0
    %v6649 = vld [vmem:[#allocation17] sm:$0xf]
    %v6651 = vperm.slane %v6649, 0
    %v6652 = vperm.slane %v6649, 1
    %v6653 = vperm.slane %v6649, 2
    %v6654 = vperm.slane %v6649, 3
    %v6659 = vmul.f32 %v6645, %v6651
    %v6660 = vmul.f32 %v6646, %v6652
    %v6661 = vmul.f32 %v6647, %v6653
    %v6662 = vmul.f32 %v6648, %v6654
    %v6663 = vadd.f32 %v6659, %v6660
    %v6664 = vadd.f32 %v6663, %v6661
    %v6665 = vadd.f32 %v6664, %v6662
    %6666 = vadd.xlane.f32.xlu0 %v6665
    %v6667 = vpop.xlane.xlu0 %6666
    %vm6668 = vcmask 1043456
    %v6669 = vsel %vm6668, %v6667, -inf
    %v6670 = vrot.slane %v6669, 4
    %v6671 = vmax.f32 %v6669, %v6670
    %v6672 = vrot.slane %v6671, 2
    %v6673 = vmax.f32 %v6671, %v6672
    %v6674 = vrot.slane %v6673, 1
    %v6675 = vmax.f32 %v6673, %v6674
    %v6676 = vsub.f32 %v6667, %v6675
    %v6677 = vmul.f32 %v6676, 1.442695
    %v6678 = vpow.pop %v6677
    %v6679 = vsel %vm6668, %v6678, 0.0
    %v6680 = vrot.slane %v6679, 4
    %v6681 = vadd.f32 %v6679, %v6680
    %v6682 = vrot.slane %v6681, 2
    %v6683 = vadd.f32 %v6681, %v6682
    %v6684 = vrot.slane %v6683, 1
    %v6685 = vadd.f32 %v6683, %v6684
    %v6686 = vrcp.pop %v6685
    %v6687 = vmul.f32 %v6685, %v6686
    %v6688 = vsub.f32 1.0, %v6687
    %v6689 = vmul.f32 %v6686, %v6688
    %v6690 = vadd.f32 %v6686, %v6689
    %vm6691 = vweird.f32 %v6685
    %vm6692 = vweird.f32 %v6686
    %vm6693 = vmor %vm6691, %vm6692
    %v6694 = vsel %vm6693, %v6686, %v6690
    %v6695 = vand.u32 2147483647, %v6685
    %vm6696 = vcmp.eq.f32.partialorder %v6695, 8.507059e+37
    %v6697 = vand.u32 %v6685, 2147483648
    %v6698 = vor.u32 1.1754944e-38, %v6697
    %v6699 = vsel %vm6696, %v6698, %v6694
    %v6700 = vmul.f32 %v6678, %v6699
    %v6701 = vmul.f32 %v6700, %v5535
    %v6702 = vmul.f32 %v6700, %v5574
    %v6703 = vmul.f32 %v6700, %v5613
    %v6704 = vmul.f32 %v6700, %v5652
    %v6705 = vsel %vm6668, %v6701, 0.0
    %v6706 = vrot.slane %v6705, 4
    %v6707 = vadd.f32 %v6705, %v6706
    %v6708 = vrot.slane %v6707, 2
    %v6709 = vadd.f32 %v6707, %v6708
    %v6710 = vrot.slane %v6709, 1
    %v6711 = vadd.f32 %v6709, %v6710
    %v6712 = vsel %vm6668, %v6702, 0.0
    %v6713 = vrot.slane %v6712, 4
    %v6714 = vadd.f32 %v6712, %v6713
    %v6715 = vrot.slane %v6714, 2
    %v6716 = vadd.f32 %v6714, %v6715
    %v6717 = vrot.slane %v6716, 1
    %v6718 = vadd.f32 %v6716, %v6717
    %v6719 = vsel %vm6668, %v6703, 0.0
    %v6720 = vrot.slane %v6719, 4
    %v6721 = vadd.f32 %v6719, %v6720
    %v6722 = vrot.slane %v6721, 2
    %v6723 = vadd.f32 %v6721, %v6722
    %v6724 = vrot.slane %v6723, 1
    %v6725 = vadd.f32 %v6723, %v6724
    %v6726 = vsel %vm6668, %v6704, 0.0
    %v6727 = vrot.slane %v6726, 4
    %v6728 = vadd.f32 %v6726, %v6727
    %v6729 = vrot.slane %v6728, 2
    %v6730 = vadd.f32 %v6728, %v6729
    %v6731 = vrot.slane %v6730, 1
    %v6732 = vadd.f32 %v6730, %v6731
    %v6737 = vrot.slane %v6718, 7
    %v6738 = vrot.slane %v6725, 6
    %v6739 = vrot.slane %v6732, 5
    %vm6740 = vcmask 1040384
    %v6741 = vsel %vm6740, %v6711, %v6737
    %vm6742 = vcmask 1042434
    %v6743 = vsel %vm6742, %v6738, %v6739
    %vm6744 = vcmask 1041408
    %v6745 = vsel %vm6744, %v6741, %v6743
    %v6747 = vlaneseq
    %vm6748 = vcmp.ge.s32.totalorder %v6747, 0
    %vm6749 = vcmp.lt.s32.totalorder %v6747, 512
    %vm6750 = vmand %vm6748, %vm6749
    %6751 = vst.msk [vmem:[#allocation2] ss:$2 sm:$0xf] %vm6750, %v6745
    %vm6752 = vcmask 1047556
    %v6753 = vsel %vm6752, %v6667, -inf
    %v6754 = vrot.slane %v6753, 4
    %v6755 = vmax.f32 %v6753, %v6754
    %v6756 = vrot.slane %v6755, 2
    %v6757 = vmax.f32 %v6755, %v6756
    %v6758 = vrot.slane %v6757, 1
    %v6759 = vmax.f32 %v6757, %v6758
    %v6760 = vsub.f32 %v6667, %v6759
    %v6761 = vmul.f32 %v6760, 1.442695
    %v6762 = vpow.pop %v6761
    %v6764 = vrot.slane %v6762, 4
    %v6766 = vsel %vm6668, %v6764, 0.0
    %v6767 = vrot.slane %v6766, 4
    %v6768 = vadd.f32 %v6766, %v6767
    %v6769 = vrot.slane %v6768, 2
    %v6770 = vadd.f32 %v6768, %v6769
    %v6771 = vrot.slane %v6770, 1
    %v6772 = vadd.f32 %v6770, %v6771
    %v6773 = vrcp.pop %v6772
    %v6774 = vmul.f32 %v6772, %v6773
    %v6775 = vsub.f32 1.0, %v6774
    %v6776 = vmul.f32 %v6773, %v6775
    %v6777 = vadd.f32 %v6773, %v6776
    %vm6778 = vweird.f32 %v6772
    %vm6779 = vweird.f32 %v6773
    %vm6780 = vmor %vm6778, %vm6779
    %v6781 = vsel %vm6780, %v6773, %v6777
    %v6782 = vand.u32 2147483647, %v6772
    %vm6783 = vcmp.eq.f32.partialorder %v6782, 8.507059e+37
    %v6784 = vand.u32 %v6772, 2147483648
    %v6785 = vor.u32 1.1754944e-38, %v6784
    %v6786 = vsel %vm6783, %v6785, %v6781
    %v6787 = vmul.f32 %v6762, %v6786
    %v6788 = vmul.f32 %v6787, %v5535
    %v6789 = vmul.f32 %v6787, %v5574
    %v6790 = vmul.f32 %v6787, %v5613
    %v6791 = vmul.f32 %v6787, %v5652
    %v6796 = vrot.slane %v6788, 4
    %v6797 = vrot.slane %v6789, 4
    %v6798 = vrot.slane %v6790, 4
    %v6799 = vrot.slane %v6791, 4
    %v6804 = vsel %vm6668, %v6796, 0.0
    %v6805 = vrot.slane %v6804, 4
    %v6806 = vadd.f32 %v6804, %v6805
    %v6807 = vrot.slane %v6806, 2
    %v6808 = vadd.f32 %v6806, %v6807
    %v6809 = vrot.slane %v6808, 1
    %v6810 = vadd.f32 %v6808, %v6809
    %v6811 = vsel %vm6668, %v6797, 0.0
    %v6812 = vrot.slane %v6811, 4
    %v6813 = vadd.f32 %v6811, %v6812
    %v6814 = vrot.slane %v6813, 2
    %v6815 = vadd.f32 %v6813, %v6814
    %v6816 = vrot.slane %v6815, 1
    %v6817 = vadd.f32 %v6815, %v6816
    %v6818 = vsel %vm6668, %v6798, 0.0
    %v6819 = vrot.slane %v6818, 4
    %v6820 = vadd.f32 %v6818, %v6819
    %v6821 = vrot.slane %v6820, 2
    %v6822 = vadd.f32 %v6820, %v6821
    %v6823 = vrot.slane %v6822, 1
    %v6824 = vadd.f32 %v6822, %v6823
    %v6825 = vsel %vm6668, %v6799, 0.0
    %v6826 = vrot.slane %v6825, 4
    %v6827 = vadd.f32 %v6825, %v6826
    %v6828 = vrot.slane %v6827, 2
    %v6829 = vadd.f32 %v6827, %v6828
    %v6830 = vrot.slane %v6829, 1
    %v6831 = vadd.f32 %v6829, %v6830
    %v6836 = vrot.slane %v6817, 7
    %v6837 = vrot.slane %v6824, 6
    %v6838 = vrot.slane %v6831, 5
    %v6839 = vsel %vm6740, %v6810, %v6836
    %v6840 = vsel %vm6742, %v6837, %v6838
    %v6841 = vsel %vm6744, %v6839, %v6840
    %s6843 = scalar_lea.vmem [#allocation2], 1
    %6844 = vst.msk [vmem:[%s6843] ss:$2 sm:$0xf] %vm6750, %v6841
    %v6845 = vld [vmem:[#allocation2] sm:$0xff]
    %6847 = vst [vmem:[#allocation1] ss:$4 sm:$0xff] %v6845
    %v6848 = vld.sshfl [vmem:[#allocation1] sm:$0xff pattern:$0x73625140]
    %v6849 = vld.sshfl [vmem:[#allocation1 + $0x8] sm:$0xff pattern:$0x73625140]
    %v6850 = vld.sshfl [vmem:[#allocation1 + $0x10] sm:$0xff pattern:$0x73625140]
    %v6851 = vld.sshfl [vmem:[#allocation1 + $0x18] sm:$0xff pattern:$0x73625140]
    %v6856 = vpack.c.bf16 %v6848, %v6848
    %v6857 = vpack.c.bf16 %v6849, %v6849
    %v6858 = vpack.c.bf16 %v6850, %v6850
    %v6859 = vpack.c.bf16 %v6851, %v6851
    %v6860 = vld [vmem:[#allocation19] sm:$0xff]
    %v6861 = vld [vmem:[#allocation19 + $0x8] sm:$0xf]
    %v6862 = vld [vmem:[#allocation19 + $0xc] sm:$0xff]
    %v6863 = vld [vmem:[#allocation19 + $0x14] sm:$0xf]
    %v6864 = vld [vmem:[#allocation19 + $0x18] sm:$0xff]
    %v6865 = vld [vmem:[#allocation19 + $0x20] sm:$0xf]
    %v6866 = vld [vmem:[#allocation19 + $0x24] sm:$0xff]
    %v6867 = vld [vmem:[#allocation19 + $0x2c] sm:$0xf]
    %v6868 = vld [vmem:[#allocation19 + $0x30] sm:$0xff]
    %v6869 = vld [vmem:[#allocation19 + $0x38] sm:$0xf]
    %v6870 = vld [vmem:[#allocation19 + $0x3c] sm:$0xff]
    %v6871 = vld [vmem:[#allocation19 + $0x44] sm:$0xf]
    %v6872 = vld [vmem:[#allocation19 + $0x48] sm:$0xff]
    %v6873 = vld [vmem:[#allocation19 + $0x50] sm:$0xf]
    %v6874 = vld [vmem:[#allocation19 + $0x54] sm:$0xff]
    %v6875 = vld [vmem:[#allocation19 + $0x5c] sm:$0xf]
    %v6876 = vld [vmem:[#allocation19 + $0x60] sm:$0xff]
    %v6877 = vld [vmem:[#allocation19 + $0x68] sm:$0xf]
    %v6878 = vld [vmem:[#allocation19 + $0x6c] sm:$0xff]
    %v6879 = vld [vmem:[#allocation19 + $0x74] sm:$0xf]
    %v6880 = vld [vmem:[#allocation19 + $0x78] sm:$0xff]
    %v6881 = vld [vmem:[#allocation19 + $0x80] sm:$0xf]
    %v6882 = vld [vmem:[#allocation19 + $0x84] sm:$0xff]
    %v6883 = vld [vmem:[#allocation19 + $0x8c] sm:$0xf]
    %v6884 = vld [vmem:[#allocation19 + $0x90] sm:$0xff]
    %v6885 = vld [vmem:[#allocation19 + $0x98] sm:$0xf]
    %v6886 = vld [vmem:[#allocation19 + $0x9c] sm:$0xff]
    %v6887 = vld [vmem:[#allocation19 + $0xa4] sm:$0xf]
    %v6888 = vld [vmem:[#allocation19 + $0xa8] sm:$0xff]
    %v6889 = vld [vmem:[#allocation19 + $0xb0] sm:$0xf]
    %v6890 = vld [vmem:[#allocation19 + $0xb4] sm:$0xff]
    %v6891 = vld [vmem:[#allocation19 + $0xbc] sm:$0xf]
    %v6892 = vld [vmem:[#allocation19 + $0xc0] sm:$0xff]
    %v6893 = vld [vmem:[#allocation19 + $0xc8] sm:$0xf]
    %v6894 = vld [vmem:[#allocation19 + $0xcc] sm:$0xff]
    %v6895 = vld [vmem:[#allocation19 + $0xd4] sm:$0xf]
    %v6896 = vld [vmem:[#allocation19 + $0xd8] sm:$0xff]
    %v6897 = vld [vmem:[#allocation19 + $0xe0] sm:$0xf]
    %v6898 = vld [vmem:[#allocation19 + $0xe4] sm:$0xff]
    %v6899 = vld [vmem:[#allocation19 + $0xec] sm:$0xf]
    %v6900 = vld [vmem:[#allocation19 + $0xf0] sm:$0xff]
    %v6901 = vld [vmem:[#allocation19 + $0xf8] sm:$0xf]
    %v6902 = vld [vmem:[#allocation19 + $0xfc] sm:$0xff]
    %v6903 = vld [vmem:[#allocation19 + $0x104] sm:$0xf]
    %v6904 = vld [vmem:[#allocation19 + $0x108] sm:$0xff]
    %v6905 = vld [vmem:[#allocation19 + $0x110] sm:$0xf]
    %v6906 = vld [vmem:[#allocation19 + $0x114] sm:$0xff]
    %v6907 = vld [vmem:[#allocation19 + $0x11c] sm:$0xf]
    %v6908 = vld [vmem:[#allocation19 + $0x120] sm:$0xff]
    %v6909 = vld [vmem:[#allocation19 + $0x128] sm:$0xf]
    %v6910 = vld [vmem:[#allocation19 + $0x12c] sm:$0xff]
    %v6911 = vld [vmem:[#allocation19 + $0x134] sm:$0xf]
    %v6912 = vld [vmem:[#allocation19 + $0x138] sm:$0xff]
    %v6913 = vld [vmem:[#allocation19 + $0x140] sm:$0xf]
    %v6914 = vld [vmem:[#allocation19 + $0x144] sm:$0xff]
    %v6915 = vld [vmem:[#allocation19 + $0x14c] sm:$0xf]
    %v6916 = vld [vmem:[#allocation19 + $0x150] sm:$0xff]
    %v6917 = vld [vmem:[#allocation19 + $0x158] sm:$0xf]
    %v6918 = vld [vmem:[#allocation19 + $0x15c] sm:$0xff]
    %v6919 = vld [vmem:[#allocation19 + $0x164] sm:$0xf]
    %v6920 = vld [vmem:[#allocation19 + $0x168] sm:$0xff]
    %v6921 = vld [vmem:[#allocation19 + $0x170] sm:$0xf]
    %v6922 = vld [vmem:[#allocation19 + $0x174] sm:$0xff]
    %v6923 = vld [vmem:[#allocation19 + $0x17c] sm:$0xf]
    %v6924 = vld [vmem:[#allocation19 + $0x180] sm:$0xff]
    %v6925 = vld [vmem:[#allocation19 + $0x188] sm:$0xf]
    %v6926 = vld [vmem:[#allocation19 + $0x18c] sm:$0xff]
    %v6927 = vld [vmem:[#allocation19 + $0x194] sm:$0xf]
    %v6928 = vld [vmem:[#allocation19 + $0x198] sm:$0xff]
    %v6929 = vld [vmem:[#allocation19 + $0x1a0] sm:$0xf]
    %v6930 = vld [vmem:[#allocation19 + $0x1a4] sm:$0xff]
    %v6931 = vld [vmem:[#allocation19 + $0x1ac] sm:$0xf]
    %v6932 = vld [vmem:[#allocation19 + $0x1b0] sm:$0xff]
    %v6933 = vld [vmem:[#allocation19 + $0x1b8] sm:$0xf]
    %v6934 = vld [vmem:[#allocation19 + $0x1bc] sm:$0xff]
    %v6935 = vld [vmem:[#allocation19 + $0x1c4] sm:$0xf]
    %v6936 = vld [vmem:[#allocation19 + $0x1c8] sm:$0xff]
    %v6937 = vld [vmem:[#allocation19 + $0x1d0] sm:$0xf]
    %v6938 = vld [vmem:[#allocation19 + $0x1d4] sm:$0xff]
    %v6939 = vld [vmem:[#allocation19 + $0x1dc] sm:$0xf]
    %v6940 = vld [vmem:[#allocation19 + $0x1e0] sm:$0xff]
    %v6941 = vld [vmem:[#allocation19 + $0x1e8] sm:$0xf]
    %v6942 = vld [vmem:[#allocation19 + $0x1ec] sm:$0xff]
    %v6943 = vld [vmem:[#allocation19 + $0x1f4] sm:$0xf]
    %v6944 = vld [vmem:[#allocation19 + $0x1f8] sm:$0xff]
    %v6945 = vld [vmem:[#allocation19 + $0x200] sm:$0xf]
    %v6946 = vld [vmem:[#allocation19 + $0x204] sm:$0xff]
    %v6947 = vld [vmem:[#allocation19 + $0x20c] sm:$0xf]
    %v6948 = vld [vmem:[#allocation19 + $0x210] sm:$0xff]
    %v6949 = vld [vmem:[#allocation19 + $0x218] sm:$0xf]
    %v6950 = vld [vmem:[#allocation19 + $0x21c] sm:$0xff]
    %v6951 = vld [vmem:[#allocation19 + $0x224] sm:$0xf]
    %v6952 = vld [vmem:[#allocation19 + $0x228] sm:$0xff]
    %v6953 = vld [vmem:[#allocation19 + $0x230] sm:$0xf]
    %v6954 = vld [vmem:[#allocation19 + $0x234] sm:$0xff]
    %v6955 = vld [vmem:[#allocation19 + $0x23c] sm:$0xf]
    %v6956 = vld [vmem:[#allocation19 + $0x240] sm:$0xff]
    %v6957 = vld [vmem:[#allocation19 + $0x248] sm:$0xf]
    %v6958 = vld [vmem:[#allocation19 + $0x24c] sm:$0xff]
    %v6959 = vld [vmem:[#allocation19 + $0x254] sm:$0xf]
    %v6960 = vld [vmem:[#allocation19 + $0x258] sm:$0xff]
    %v6961 = vld [vmem:[#allocation19 + $0x260] sm:$0xf]
    %v6962 = vld [vmem:[#allocation19 + $0x264] sm:$0xff]
    %v6963 = vld [vmem:[#allocation19 + $0x26c] sm:$0xf]
    %v6964 = vld [vmem:[#allocation19 + $0x270] sm:$0xff]
    %v6965 = vld [vmem:[#allocation19 + $0x278] sm:$0xf]
    %v6966 = vld [vmem:[#allocation19 + $0x27c] sm:$0xff]
    %v6967 = vld [vmem:[#allocation19 + $0x284] sm:$0xf]
    %v6968 = vld [vmem:[#allocation19 + $0x288] sm:$0xff]
    %v6969 = vld [vmem:[#allocation19 + $0x290] sm:$0xf]
    %v6970 = vld [vmem:[#allocation19 + $0x294] sm:$0xff]
    %v6971 = vld [vmem:[#allocation19 + $0x29c] sm:$0xf]
    %v6972 = vld [vmem:[#allocation19 + $0x2a0] sm:$0xff]
    %v6973 = vld [vmem:[#allocation19 + $0x2a8] sm:$0xf]
    %v6974 = vld [vmem:[#allocation19 + $0x2ac] sm:$0xff]
    %v6975 = vld [vmem:[#allocation19 + $0x2b4] sm:$0xf]
    %v6976 = vld [vmem:[#allocation19 + $0x2b8] sm:$0xff]
    %v6977 = vld [vmem:[#allocation19 + $0x2c0] sm:$0xf]
    %v6978 = vld [vmem:[#allocation19 + $0x2c4] sm:$0xff]
    %v6979 = vld [vmem:[#allocation19 + $0x2cc] sm:$0xf]
    %v6980 = vld [vmem:[#allocation19 + $0x2d0] sm:$0xff]
    %v6981 = vld [vmem:[#allocation19 + $0x2d8] sm:$0xf]
    %v6982 = vld [vmem:[#allocation19 + $0x2dc] sm:$0xff]
    %v6983 = vld [vmem:[#allocation19 + $0x2e4] sm:$0xf]
    %v6984 = vld [vmem:[#allocation19 + $0x2e8] sm:$0xff]
    %v6985 = vld [vmem:[#allocation19 + $0x2f0] sm:$0xf]
    %v6986 = vld [vmem:[#allocation19 + $0x2f4] sm:$0xff]
    %v6987 = vld [vmem:[#allocation19 + $0x2fc] sm:$0xf]
    %v6988 = vld [vmem:[#allocation20] sm:$0x7]
    %v6990 = vperm.slane %v6988, 0
    %v6991 = vperm.slane %v6988, 1
    %v6992 = vperm.slane %v6988, 2
    %v7124 = vunpack.c.l.b16 %v6860
    %v7125 = vunpack.c.h.b16 %v6860
    %v7126 = vunpack.c.l.b16 %v6861
    %v7127 = vunpack.c.l.b16 %v6862
    %v7128 = vunpack.c.h.b16 %v6862
    %v7129 = vunpack.c.l.b16 %v6863
    %v7130 = vunpack.c.l.b16 %v6864
    %v7131 = vunpack.c.h.b16 %v6864
    %v7132 = vunpack.c.l.b16 %v6865
    %v7133 = vunpack.c.l.b16 %v6866
    %v7134 = vunpack.c.h.b16 %v6866
    %v7135 = vunpack.c.l.b16 %v6867
    %v7136 = vunpack.c.l.b16 %v6868
    %v7137 = vunpack.c.h.b16 %v6868
    %v7138 = vunpack.c.l.b16 %v6869
    %v7139 = vunpack.c.l.b16 %v6870
    %v7140 = vunpack.c.h.b16 %v6870
    %v7141 = vunpack.c.l.b16 %v6871
    %v7142 = vunpack.c.l.b16 %v6872
    %v7143 = vunpack.c.h.b16 %v6872
    %v7144 = vunpack.c.l.b16 %v6873
    %v7145 = vunpack.c.l.b16 %v6874
    %v7146 = vunpack.c.h.b16 %v6874
    %v7147 = vunpack.c.l.b16 %v6875
    %v7148 = vunpack.c.l.b16 %v6876
    %v7149 = vunpack.c.h.b16 %v6876
    %v7150 = vunpack.c.l.b16 %v6877
    %v7151 = vunpack.c.l.b16 %v6878
    %v7152 = vunpack.c.h.b16 %v6878
    %v7153 = vunpack.c.l.b16 %v6879
    %v7154 = vunpack.c.l.b16 %v6880
    %v7155 = vunpack.c.h.b16 %v6880
    %v7156 = vunpack.c.l.b16 %v6881
    %v7157 = vunpack.c.l.b16 %v6882
    %v7158 = vunpack.c.h.b16 %v6882
    %v7159 = vunpack.c.l.b16 %v6883
    %v7160 = vunpack.c.l.b16 %v6884
    %v7161 = vunpack.c.h.b16 %v6884
    %v7162 = vunpack.c.l.b16 %v6885
    %v7163 = vunpack.c.l.b16 %v6886
    %v7164 = vunpack.c.h.b16 %v6886
    %v7165 = vunpack.c.l.b16 %v6887
    %v7166 = vunpack.c.l.b16 %v6888
    %v7167 = vunpack.c.h.b16 %v6888
    %v7168 = vunpack.c.l.b16 %v6889
    %v7169 = vunpack.c.l.b16 %v6890
    %v7170 = vunpack.c.h.b16 %v6890
    %v7171 = vunpack.c.l.b16 %v6891
    %v7172 = vunpack.c.l.b16 %v6892
    %v7173 = vunpack.c.h.b16 %v6892
    %v7174 = vunpack.c.l.b16 %v6893
    %v7175 = vunpack.c.l.b16 %v6894
    %v7176 = vunpack.c.h.b16 %v6894
    %v7177 = vunpack.c.l.b16 %v6895
    %v7178 = vunpack.c.l.b16 %v6896
    %v7179 = vunpack.c.h.b16 %v6896
    %v7180 = vunpack.c.l.b16 %v6897
    %v7181 = vunpack.c.l.b16 %v6898
    %v7182 = vunpack.c.h.b16 %v6898
    %v7183 = vunpack.c.l.b16 %v6899
    %v7184 = vunpack.c.l.b16 %v6900
    %v7185 = vunpack.c.h.b16 %v6900
    %v7186 = vunpack.c.l.b16 %v6901
    %v7187 = vunpack.c.l.b16 %v6902
    %v7188 = vunpack.c.h.b16 %v6902
    %v7189 = vunpack.c.l.b16 %v6903
    %v7190 = vunpack.c.l.b16 %v6904
    %v7191 = vunpack.c.h.b16 %v6904
    %v7192 = vunpack.c.l.b16 %v6905
    %v7193 = vunpack.c.l.b16 %v6906
    %v7194 = vunpack.c.h.b16 %v6906
    %v7195 = vunpack.c.l.b16 %v6907
    %v7196 = vunpack.c.l.b16 %v6908
    %v7197 = vunpack.c.h.b16 %v6908
    %v7198 = vunpack.c.l.b16 %v6909
    %v7199 = vunpack.c.l.b16 %v6910
    %v7200 = vunpack.c.h.b16 %v6910
    %v7201 = vunpack.c.l.b16 %v6911
    %v7202 = vunpack.c.l.b16 %v6912
    %v7203 = vunpack.c.h.b16 %v6912
    %v7204 = vunpack.c.l.b16 %v6913
    %v7205 = vunpack.c.l.b16 %v6914
    %v7206 = vunpack.c.h.b16 %v6914
    %v7207 = vunpack.c.l.b16 %v6915
    %v7208 = vunpack.c.l.b16 %v6916
    %v7209 = vunpack.c.h.b16 %v6916
    %v7210 = vunpack.c.l.b16 %v6917
    %v7211 = vunpack.c.l.b16 %v6918
    %v7212 = vunpack.c.h.b16 %v6918
    %v7213 = vunpack.c.l.b16 %v6919
    %v7214 = vunpack.c.l.b16 %v6920
    %v7215 = vunpack.c.h.b16 %v6920
    %v7216 = vunpack.c.l.b16 %v6921
    %v7217 = vunpack.c.l.b16 %v6922
    %v7218 = vunpack.c.h.b16 %v6922
    %v7219 = vunpack.c.l.b16 %v6923
    %v7220 = vunpack.c.l.b16 %v6924
    %v7221 = vunpack.c.h.b16 %v6924
    %v7222 = vunpack.c.l.b16 %v6925
    %v7223 = vunpack.c.l.b16 %v6926
    %v7224 = vunpack.c.h.b16 %v6926
    %v7225 = vunpack.c.l.b16 %v6927
    %v7226 = vunpack.c.l.b16 %v6928
    %v7227 = vunpack.c.h.b16 %v6928
    %v7228 = vunpack.c.l.b16 %v6929
    %v7229 = vunpack.c.l.b16 %v6930
    %v7230 = vunpack.c.h.b16 %v6930
    %v7231 = vunpack.c.l.b16 %v6931
    %v7232 = vunpack.c.l.b16 %v6932
    %v7233 = vunpack.c.h.b16 %v6932
    %v7234 = vunpack.c.l.b16 %v6933
    %v7235 = vunpack.c.l.b16 %v6934
    %v7236 = vunpack.c.h.b16 %v6934
    %v7237 = vunpack.c.l.b16 %v6935
    %v7238 = vunpack.c.l.b16 %v6936
    %v7239 = vunpack.c.h.b16 %v6936
    %v7240 = vunpack.c.l.b16 %v6937
    %v7241 = vunpack.c.l.b16 %v6938
    %v7242 = vunpack.c.h.b16 %v6938
    %v7243 = vunpack.c.l.b16 %v6939
    %v7244 = vunpack.c.l.b16 %v6940
    %v7245 = vunpack.c.h.b16 %v6940
    %v7246 = vunpack.c.l.b16 %v6941
    %v7247 = vunpack.c.l.b16 %v6942
    %v7248 = vunpack.c.h.b16 %v6942
    %v7249 = vunpack.c.l.b16 %v6943
    %v7250 = vunpack.c.l.b16 %v6944
    %v7251 = vunpack.c.h.b16 %v6944
    %v7252 = vunpack.c.l.b16 %v6945
    %v7253 = vunpack.c.l.b16 %v6946
    %v7254 = vunpack.c.h.b16 %v6946
    %v7255 = vunpack.c.l.b16 %v6947
    %v7256 = vunpack.c.l.b16 %v6948
    %v7257 = vunpack.c.h.b16 %v6948
    %v7258 = vunpack.c.l.b16 %v6949
    %v7259 = vunpack.c.l.b16 %v6950
    %v7260 = vunpack.c.h.b16 %v6950
    %v7261 = vunpack.c.l.b16 %v6951
    %v7262 = vunpack.c.l.b16 %v6952
    %v7263 = vunpack.c.h.b16 %v6952
    %v7264 = vunpack.c.l.b16 %v6953
    %v7265 = vunpack.c.l.b16 %v6954
    %v7266 = vunpack.c.h.b16 %v6954
    %v7267 = vunpack.c.l.b16 %v6955
    %v7268 = vunpack.c.l.b16 %v6956
    %v7269 = vunpack.c.h.b16 %v6956
    %v7270 = vunpack.c.l.b16 %v6957
    %v7271 = vunpack.c.l.b16 %v6958
    %v7272 = vunpack.c.h.b16 %v6958
    %v7273 = vunpack.c.l.b16 %v6959
    %v7274 = vunpack.c.l.b16 %v6960
    %v7275 = vunpack.c.h.b16 %v6960
    %v7276 = vunpack.c.l.b16 %v6961
    %v7277 = vunpack.c.l.b16 %v6962
    %v7278 = vunpack.c.h.b16 %v6962
    %v7279 = vunpack.c.l.b16 %v6963
    %v7280 = vunpack.c.l.b16 %v6964
    %v7281 = vunpack.c.h.b16 %v6964
    %v7282 = vunpack.c.l.b16 %v6965
    %v7283 = vunpack.c.l.b16 %v6966
    %v7284 = vunpack.c.h.b16 %v6966
    %v7285 = vunpack.c.l.b16 %v6967
    %v7286 = vunpack.c.l.b16 %v6968
    %v7287 = vunpack.c.h.b16 %v6968
    %v7288 = vunpack.c.l.b16 %v6969
    %v7289 = vunpack.c.l.b16 %v6970
    %v7290 = vunpack.c.h.b16 %v6970
    %v7291 = vunpack.c.l.b16 %v6971
    %v7292 = vunpack.c.l.b16 %v6972
    %v7293 = vunpack.c.h.b16 %v6972
    %v7294 = vunpack.c.l.b16 %v6973
    %v7295 = vunpack.c.l.b16 %v6974
    %v7296 = vunpack.c.h.b16 %v6974
    %v7297 = vunpack.c.l.b16 %v6975
    %v7298 = vunpack.c.l.b16 %v6976
    %v7299 = vunpack.c.h.b16 %v6976
    %v7300 = vunpack.c.l.b16 %v6977
    %v7301 = vunpack.c.l.b16 %v6978
    %v7302 = vunpack.c.h.b16 %v6978
    %v7303 = vunpack.c.l.b16 %v6979
    %v7304 = vunpack.c.l.b16 %v6980
    %v7305 = vunpack.c.h.b16 %v6980
    %v7306 = vunpack.c.l.b16 %v6981
    %v7307 = vunpack.c.l.b16 %v6982
    %v7308 = vunpack.c.h.b16 %v6982
    %v7309 = vunpack.c.l.b16 %v6983
    %v7310 = vunpack.c.l.b16 %v6984
    %v7311 = vunpack.c.h.b16 %v6984
    %v7312 = vunpack.c.l.b16 %v6985
    %v7313 = vunpack.c.l.b16 %v6986
    %v7314 = vunpack.c.h.b16 %v6986
    %v7315 = vunpack.c.l.b16 %v6987
    %v7316 = vpack.c.b16 %v7127, %v7124
    %v7317 = vpack.c.b16 %v7128, %v7125
    %v7318 = vpack.c.b16 %v7129, %v7126
    %v7319 = vpack.c.b16 %v7133, %v7130
    %v7320 = vpack.c.b16 %v7134, %v7131
    %v7321 = vpack.c.b16 %v7135, %v7132
    %v7322 = vpack.c.b16 %v7139, %v7136
    %v7323 = vpack.c.b16 %v7140, %v7137
    %v7324 = vpack.c.b16 %v7141, %v7138
    %v7325 = vpack.c.b16 %v7145, %v7142
    %v7326 = vpack.c.b16 %v7146, %v7143
    %v7327 = vpack.c.b16 %v7147, %v7144
    %v7328 = vpack.c.b16 %v7151, %v7148
    %v7329 = vpack.c.b16 %v7152, %v7149
    %v7330 = vpack.c.b16 %v7153, %v7150
    %v7331 = vpack.c.b16 %v7157, %v7154
    %v7332 = vpack.c.b16 %v7158, %v7155
    %v7333 = vpack.c.b16 %v7159, %v7156
    %v7334 = vpack.c.b16 %v7163, %v7160
    %v7335 = vpack.c.b16 %v7164, %v7161
    %v7336 = vpack.c.b16 %v7165, %v7162
    %v7337 = vpack.c.b16 %v7169, %v7166
    %v7338 = vpack.c.b16 %v7170, %v7167
    %v7339 = vpack.c.b16 %v7171, %v7168
    %v7340 = vpack.c.b16 %v7175, %v7172
    %v7341 = vpack.c.b16 %v7176, %v7173
    %v7342 = vpack.c.b16 %v7177, %v7174
    %v7343 = vpack.c.b16 %v7181, %v7178
    %v7344 = vpack.c.b16 %v7182, %v7179
    %v7345 = vpack.c.b16 %v7183, %v7180
    %v7346 = vpack.c.b16 %v7187, %v7184
    %v7347 = vpack.c.b16 %v7188, %v7185
    %v7348 = vpack.c.b16 %v7189, %v7186
    %v7349 = vpack.c.b16 %v7193, %v7190
    %v7350 = vpack.c.b16 %v7194, %v7191
    %v7351 = vpack.c.b16 %v7195, %v7192
    %v7352 = vpack.c.b16 %v7199, %v7196
    %v7353 = vpack.c.b16 %v7200, %v7197
    %v7354 = vpack.c.b16 %v7201, %v7198
    %v7355 = vpack.c.b16 %v7205, %v7202
    %v7356 = vpack.c.b16 %v7206, %v7203
    %v7357 = vpack.c.b16 %v7207, %v7204
    %v7358 = vpack.c.b16 %v7211, %v7208
    %v7359 = vpack.c.b16 %v7212, %v7209
    %v7360 = vpack.c.b16 %v7213, %v7210
    %v7361 = vpack.c.b16 %v7217, %v7214
    %v7362 = vpack.c.b16 %v7218, %v7215
    %v7363 = vpack.c.b16 %v7219, %v7216
    %v7364 = vpack.c.b16 %v7223, %v7220
    %v7365 = vpack.c.b16 %v7224, %v7221
    %v7366 = vpack.c.b16 %v7225, %v7222
    %v7367 = vpack.c.b16 %v7229, %v7226
    %v7368 = vpack.c.b16 %v7230, %v7227
    %v7369 = vpack.c.b16 %v7231, %v7228
    %v7370 = vpack.c.b16 %v7235, %v7232
    %v7371 = vpack.c.b16 %v7236, %v7233
    %v7372 = vpack.c.b16 %v7237, %v7234
    %v7373 = vpack.c.b16 %v7241, %v7238
    %v7374 = vpack.c.b16 %v7242, %v7239
    %v7375 = vpack.c.b16 %v7243, %v7240
    %v7376 = vpack.c.b16 %v7247, %v7244
    %v7377 = vpack.c.b16 %v7248, %v7245
    %v7378 = vpack.c.b16 %v7249, %v7246
    %v7379 = vpack.c.b16 %v7253, %v7250
    %v7380 = vpack.c.b16 %v7254, %v7251
    %v7381 = vpack.c.b16 %v7255, %v7252
    %v7382 = vpack.c.b16 %v7259, %v7256
    %v7383 = vpack.c.b16 %v7260, %v7257
    %v7384 = vpack.c.b16 %v7261, %v7258
    %v7385 = vpack.c.b16 %v7265, %v7262
    %v7386 = vpack.c.b16 %v7266, %v7263
    %v7387 = vpack.c.b16 %v7267, %v7264
    %v7388 = vpack.c.b16 %v7271, %v7268
    %v7389 = vpack.c.b16 %v7272, %v7269
    %v7390 = vpack.c.b16 %v7273, %v7270
    %v7391 = vpack.c.b16 %v7277, %v7274
    %v7392 = vpack.c.b16 %v7278, %v7275
    %v7393 = vpack.c.b16 %v7279, %v7276
    %v7394 = vpack.c.b16 %v7283, %v7280
    %v7395 = vpack.c.b16 %v7284, %v7281
    %v7396 = vpack.c.b16 %v7285, %v7282
    %v7397 = vpack.c.b16 %v7289, %v7286
    %v7398 = vpack.c.b16 %v7290, %v7287
    %v7399 = vpack.c.b16 %v7291, %v7288
    %v7400 = vpack.c.b16 %v7295, %v7292
    %v7401 = vpack.c.b16 %v7296, %v7293
    %v7402 = vpack.c.b16 %v7297, %v7294
    %v7403 = vpack.c.b16 %v7301, %v7298
    %v7404 = vpack.c.b16 %v7302, %v7299
    %v7405 = vpack.c.b16 %v7303, %v7300
    %v7406 = vpack.c.b16 %v7307, %v7304
    %v7407 = vpack.c.b16 %v7308, %v7305
    %v7408 = vpack.c.b16 %v7309, %v7306
    %v7409 = vpack.c.b16 %v7313, %v7310
    %v7410 = vpack.c.b16 %v7314, %v7311
    %v7411 = vpack.c.b16 %v7315, %v7312
    %7508 = vmatpush.bf16.msra.mxu0 %v7337
    %7509 = vmatpush.bf16.msra.mxu0 %v7334
    %7510 = vmatpush.bf16.msra.mxu0 %v7331
    %7511 = vmatpush.bf16.msra.mxu0 %v7328
    %7512 = vmatpush.bf16.msra.mxu0 %v7325
    %7513 = vmatpush.bf16.msra.mxu0 %v7322
    %7514 = vmatpush.bf16.msra.mxu0 %v7319
    %7515 = vmatpush.bf16.msra.mxu0 %v7316
    %7516 = vmatmul.bf16.gmra.mxu0 %v6856
    %v7517 = vpop.f32.mrf.mxu0
    %v7518 = vadd.f32 %v6990, %v7517
    %v7519 = vpop.f32.mrf.mxu0
    %7520 = vdwg.mxu0
    %7521 = vmatpush.bf16.msra.mxu0 %v7361
    %7522 = vmatpush.bf16.msra.mxu0 %v7358
    %7523 = vmatpush.bf16.msra.mxu0 %v7355
    %7524 = vmatpush.bf16.msra.mxu0 %v7352
    %7525 = vmatpush.bf16.msra.mxu0 %v7349
    %7526 = vmatpush.bf16.msra.mxu0 %v7346
    %7527 = vmatpush.bf16.msra.mxu0 %v7343
    %7528 = vmatpush.bf16.msra.mxu0 %v7340
    %7529 = vmatmul.bf16.gmra.mxu0 %v6857
    %v7530 = vpop.f32.mrf.mxu0
    %v7531 = vadd.f32 %v7518, %v7530
    %v7532 = vpop.f32.mrf.mxu0
    %7533 = vdwg.mxu0
    %7534 = vmatpush.bf16.msra.mxu0 %v7385
    %7535 = vmatpush.bf16.msra.mxu0 %v7382
    %7536 = vmatpush.bf16.msra.mxu0 %v7379
    %7537 = vmatpush.bf16.msra.mxu0 %v7376
    %7538 = vmatpush.bf16.msra.mxu0 %v7373
    %7539 = vmatpush.bf16.msra.mxu0 %v7370
    %7540 = vmatpush.bf16.msra.mxu0 %v7367
    %7541 = vmatpush.bf16.msra.mxu0 %v7364
    %7542 = vmatmul.bf16.gmra.mxu0 %v6858
    %v7543 = vpop.f32.mrf.mxu0
    %v7544 = vadd.f32 %v7531, %v7543
    %v7545 = vpop.f32.mrf.mxu0
    %7546 = vdwg.mxu0
    %7547 = vmatpush.bf16.msra.mxu0 %v7409
    %7548 = vmatpush.bf16.msra.mxu0 %v7406
    %7549 = vmatpush.bf16.msra.mxu0 %v7403
    %7550 = vmatpush.bf16.msra.mxu0 %v7400
    %7551 = vmatpush.bf16.msra.mxu0 %v7397
    %7552 = vmatpush.bf16.msra.mxu0 %v7394
    %7553 = vmatpush.bf16.msra.mxu0 %v7391
    %7554 = vmatpush.bf16.msra.mxu0 %v7388
    %7555 = vmatmul.bf16.gmra.mxu0 %v6859
    %v7556 = vpop.f32.mrf.mxu0
    %v7557 = vadd.f32 %v7544, %v7556
    %v7558 = vpop.f32.mrf.mxu0
    %7559 = vdwg.mxu0
    %7560 = vmatpush.bf16.msra.mxu0 %v7338
    %7561 = vmatpush.bf16.msra.mxu0 %v7335
    %7562 = vmatpush.bf16.msra.mxu0 %v7332
    %7563 = vmatpush.bf16.msra.mxu0 %v7329
    %7564 = vmatpush.bf16.msra.mxu0 %v7326
    %7565 = vmatpush.bf16.msra.mxu0 %v7323
    %7566 = vmatpush.bf16.msra.mxu0 %v7320
    %7567 = vmatpush.bf16.msra.mxu0 %v7317
    %7568 = vmatmul.bf16.gmra.mxu0 %v6856
    %v7569 = vpop.f32.mrf.mxu0
    %v7570 = vadd.f32 %v6991, %v7569
    %v7571 = vpop.f32.mrf.mxu0
    %7572 = vdwg.mxu0
    %7573 = vmatpush.bf16.msra.mxu0 %v7362
    %7574 = vmatpush.bf16.msra.mxu0 %v7359
    %7575 = vmatpush.bf16.msra.mxu0 %v7356
    %7576 = vmatpush.bf16.msra.mxu0 %v7353
    %7577 = vmatpush.bf16.msra.mxu0 %v7350
    %7578 = vmatpush.bf16.msra.mxu0 %v7347
    %7579 = vmatpush.bf16.msra.mxu0 %v7344
    %7580 = vmatpush.bf16.msra.mxu0 %v7341
    %7581 = vmatmul.bf16.gmra.mxu0 %v6857
    %v7582 = vpop.f32.mrf.mxu0
    %v7583 = vadd.f32 %v7570, %v7582
    %v7584 = vpop.f32.mrf.mxu0
    %7585 = vdwg.mxu0
    %7586 = vmatpush.bf16.msra.mxu0 %v7386
    %7587 = vmatpush.bf16.msra.mxu0 %v7383
    %7588 = vmatpush.bf16.msra.mxu0 %v7380
    %7589 = vmatpush.bf16.msra.mxu0 %v7377
    %7590 = vmatpush.bf16.msra.mxu0 %v7374
    %7591 = vmatpush.bf16.msra.mxu0 %v7371
    %7592 = vmatpush.bf16.msra.mxu0 %v7368
    %7593 = vmatpush.bf16.msra.mxu0 %v7365
    %7594 = vmatmul.bf16.gmra.mxu0 %v6858
    %v7595 = vpop.f32.mrf.mxu0
    %v7596 = vadd.f32 %v7583, %v7595
    %v7597 = vpop.f32.mrf.mxu0
    %7598 = vdwg.mxu0
    %7599 = vmatpush.bf16.msra.mxu0 %v7410
    %7600 = vmatpush.bf16.msra.mxu0 %v7407
    %7601 = vmatpush.bf16.msra.mxu0 %v7404
    %7602 = vmatpush.bf16.msra.mxu0 %v7401
    %7603 = vmatpush.bf16.msra.mxu0 %v7398
    %7604 = vmatpush.bf16.msra.mxu0 %v7395
    %7605 = vmatpush.bf16.msra.mxu0 %v7392
    %7606 = vmatpush.bf16.msra.mxu0 %v7389
    %7607 = vmatmul.bf16.gmra.mxu0 %v6859
    %v7608 = vpop.f32.mrf.mxu0
    %v7609 = vadd.f32 %v7596, %v7608
    %v7610 = vpop.f32.mrf.mxu0
    %7611 = vdwg.mxu0
    %7612 = vmatpush.bf16.msra.mxu0 %v7339
    %7613 = vmatpush.bf16.msra.mxu0 %v7336
    %7614 = vmatpush.bf16.msra.mxu0 %v7333
    %7615 = vmatpush.bf16.msra.mxu0 %v7330
    %7616 = vmatpush.bf16.msra.mxu0 %v7327
    %7617 = vmatpush.bf16.msra.mxu0 %v7324
    %7618 = vmatpush.bf16.msra.mxu0 %v7321
    %7619 = vmatpush.bf16.msra.mxu0 %v7318
    %7620 = vmatmul.bf16.gmra.mxu0 %v6856
    %v7621 = vpop.f32.mrf.mxu0
    %v7622 = vadd.f32 %v6992, %v7621
    %v7623 = vpop.f32.mrf.mxu0
    %7624 = vdwg.mxu0
    %7625 = vmatpush.bf16.msra.mxu0 %v7363
    %7626 = vmatpush.bf16.msra.mxu0 %v7360
    %7627 = vmatpush.bf16.msra.mxu0 %v7357
    %7628 = vmatpush.bf16.msra.mxu0 %v7354
    %7629 = vmatpush.bf16.msra.mxu0 %v7351
    %7630 = vmatpush.bf16.msra.mxu0 %v7348
    %7631 = vmatpush.bf16.msra.mxu0 %v7345
    %7632 = vmatpush.bf16.msra.mxu0 %v7342
    %7633 = vmatmul.bf16.gmra.mxu0 %v6857
    %v7634 = vpop.f32.mrf.mxu0
    %v7635 = vadd.f32 %v7622, %v7634
    %v7636 = vpop.f32.mrf.mxu0
    %7637 = vdwg.mxu0
    %7638 = vmatpush.bf16.msra.mxu0 %v7387
    %7639 = vmatpush.bf16.msra.mxu0 %v7384
    %7640 = vmatpush.bf16.msra.mxu0 %v7381
    %7641 = vmatpush.bf16.msra.mxu0 %v7378
    %7642 = vmatpush.bf16.msra.mxu0 %v7375
    %7643 = vmatpush.bf16.msra.mxu0 %v7372
    %7644 = vmatpush.bf16.msra.mxu0 %v7369
    %7645 = vmatpush.bf16.msra.mxu0 %v7366
    %7646 = vmatmul.bf16.gmra.mxu0 %v6858
    %v7647 = vpop.f32.mrf.mxu0
    %v7648 = vadd.f32 %v7635, %v7647
    %v7649 = vpop.f32.mrf.mxu0
    %7650 = vdwg.mxu0
    %7651 = vmatpush.bf16.msra.mxu0 %v7411
    %7652 = vmatpush.bf16.msra.mxu0 %v7408
    %7653 = vmatpush.bf16.msra.mxu0 %v7405
    %7654 = vmatpush.bf16.msra.mxu0 %v7402
    %7655 = vmatpush.bf16.msra.mxu0 %v7399
    %7656 = vmatpush.bf16.msra.mxu0 %v7396
    %7657 = vmatpush.bf16.msra.mxu0 %v7393
    %7658 = vmatpush.bf16.msra.mxu0 %v7390
    %7659 = vmatmul.bf16.gmra.mxu0 %v6859
    %v7660 = vpop.f32.mrf.mxu0
    %v7661 = vadd.f32 %v7648, %v7660
    %v7662 = vpop.f32.mrf.mxu0
    %7663 = vdwg.mxu0
    %v7664 = vadd.f32 %v7557, %v4696
    %v7665 = vadd.f32 %v7609, %v4800
    %v7666 = vadd.f32 %v7661, %v4904
    %v7667 = vpack.c.bf16 %v7664, %v7664
    %v7668 = vpack.c.bf16 %v7665, %v7665
    %v7669 = vpack.c.bf16 %v7666, %v7666
    %v7670 = vld [vmem:[#allocation22] sm:$0xff]
    %v7671 = vld [vmem:[#allocation22 + $0x8] sm:$0xff]
    %v7672 = vld [vmem:[#allocation22 + $0x10] sm:$0xff]
    %v7673 = vld [vmem:[#allocation22 + $0x18] sm:$0xff]
    %v7674 = vld [vmem:[#allocation22 + $0x20] sm:$0xff]
    %v7675 = vld [vmem:[#allocation22 + $0x28] sm:$0xff]
    %v7676 = vld [vmem:[#allocation22 + $0x30] sm:$0xff]
    %v7677 = vld [vmem:[#allocation22 + $0x38] sm:$0xff]
    %v7678 = vld [vmem:[#allocation22 + $0x40] sm:$0xff]
    %v7679 = vld [vmem:[#allocation22 + $0x48] sm:$0xff]
    %v7680 = vld [vmem:[#allocation22 + $0x50] sm:$0xff]
    %v7681 = vld [vmem:[#allocation22 + $0x58] sm:$0xff]
    %v7682 = vld [vmem:[#allocation22 + $0x60] sm:$0xff]
    %v7683 = vld [vmem:[#allocation22 + $0x68] sm:$0xff]
    %v7684 = vld [vmem:[#allocation22 + $0x70] sm:$0xff]
    %v7685 = vld [vmem:[#allocation22 + $0x78] sm:$0xff]
    %v7686 = vld [vmem:[#allocation22 + $0x80] sm:$0xff]
    %v7687 = vld [vmem:[#allocation22 + $0x88] sm:$0xff]
    %v7688 = vld [vmem:[#allocation22 + $0x90] sm:$0xff]
    %v7689 = vld [vmem:[#allocation22 + $0x98] sm:$0xff]
    %v7690 = vld [vmem:[#allocation22 + $0xa0] sm:$0xff]
    %v7691 = vld [vmem:[#allocation22 + $0xa8] sm:$0xff]
    %v7692 = vld [vmem:[#allocation22 + $0xb0] sm:$0xff]
    %v7693 = vld [vmem:[#allocation22 + $0xb8] sm:$0xff]
    %v7694 = vld [vmem:[#allocation22 + $0xc0] sm:$0xff]
    %v7695 = vld [vmem:[#allocation22 + $0xc8] sm:$0xff]
    %v7696 = vld [vmem:[#allocation22 + $0xd0] sm:$0xff]
    %v7697 = vld [vmem:[#allocation22 + $0xd8] sm:$0xff]
    %v7698 = vld [vmem:[#allocation22 + $0xe0] sm:$0xff]
    %v7699 = vld [vmem:[#allocation22 + $0xe8] sm:$0xff]
    %v7700 = vld [vmem:[#allocation22 + $0xf0] sm:$0xff]
    %v7701 = vld [vmem:[#allocation22 + $0xf8] sm:$0xff]
    %v7702 = vld [vmem:[#allocation22 + $0x100] sm:$0xff]
    %v7703 = vld [vmem:[#allocation22 + $0x108] sm:$0xff]
    %v7704 = vld [vmem:[#allocation22 + $0x110] sm:$0xff]
    %v7705 = vld [vmem:[#allocation22 + $0x118] sm:$0xff]
    %v7706 = vld [vmem:[#allocation22 + $0x120] sm:$0xff]
    %v7707 = vld [vmem:[#allocation22 + $0x128] sm:$0xff]
    %v7708 = vld [vmem:[#allocation22 + $0x130] sm:$0xff]
    %v7709 = vld [vmem:[#allocation22 + $0x138] sm:$0xff]
    %v7710 = vld [vmem:[#allocation22 + $0x140] sm:$0xff]
    %v7711 = vld [vmem:[#allocation22 + $0x148] sm:$0xff]
    %v7712 = vld [vmem:[#allocation22 + $0x150] sm:$0xff]
    %v7713 = vld [vmem:[#allocation22 + $0x158] sm:$0xff]
    %v7714 = vld [vmem:[#allocation22 + $0x160] sm:$0xff]
    %v7715 = vld [vmem:[#allocation22 + $0x168] sm:$0xff]
    %v7716 = vld [vmem:[#allocation22 + $0x170] sm:$0xff]
    %v7717 = vld [vmem:[#allocation22 + $0x178] sm:$0xff]
    %v7718 = vld [vmem:[#allocation22 + $0x180] sm:$0xff]
    %v7719 = vld [vmem:[#allocation22 + $0x188] sm:$0xff]
    %v7720 = vld [vmem:[#allocation22 + $0x190] sm:$0xff]
    %v7721 = vld [vmem:[#allocation22 + $0x198] sm:$0xff]
    %v7722 = vld [vmem:[#allocation22 + $0x1a0] sm:$0xff]
    %v7723 = vld [vmem:[#allocation22 + $0x1a8] sm:$0xff]
    %v7724 = vld [vmem:[#allocation22 + $0x1b0] sm:$0xff]
    %v7725 = vld [vmem:[#allocation22 + $0x1b8] sm:$0xff]
    %v7726 = vld [vmem:[#allocation22 + $0x1c0] sm:$0xff]
    %v7727 = vld [vmem:[#allocation22 + $0x1c8] sm:$0xff]
    %v7728 = vld [vmem:[#allocation22 + $0x1d0] sm:$0xff]
    %v7729 = vld [vmem:[#allocation22 + $0x1d8] sm:$0xff]
    %v7730 = vld [vmem:[#allocation22 + $0x1e0] sm:$0xff]
    %v7731 = vld [vmem:[#allocation22 + $0x1e8] sm:$0xff]
    %v7732 = vld [vmem:[#allocation22 + $0x1f0] sm:$0xff]
    %v7733 = vld [vmem:[#allocation22 + $0x1f8] sm:$0xff]
    %v7734 = vld [vmem:[#allocation22 + $0x200] sm:$0xff]
    %v7735 = vld [vmem:[#allocation22 + $0x208] sm:$0xff]
    %v7736 = vld [vmem:[#allocation22 + $0x210] sm:$0xff]
    %v7737 = vld [vmem:[#allocation22 + $0x218] sm:$0xff]
    %v7738 = vld [vmem:[#allocation22 + $0x220] sm:$0xff]
    %v7739 = vld [vmem:[#allocation22 + $0x228] sm:$0xff]
    %v7740 = vld [vmem:[#allocation22 + $0x230] sm:$0xff]
    %v7741 = vld [vmem:[#allocation22 + $0x238] sm:$0xff]
    %v7742 = vld [vmem:[#allocation22 + $0x240] sm:$0xff]
    %v7743 = vld [vmem:[#allocation22 + $0x248] sm:$0xff]
    %v7744 = vld [vmem:[#allocation22 + $0x250] sm:$0xff]
    %v7745 = vld [vmem:[#allocation22 + $0x258] sm:$0xff]
    %v7746 = vld [vmem:[#allocation22 + $0x260] sm:$0xff]
    %v7747 = vld [vmem:[#allocation22 + $0x268] sm:$0xff]
    %v7748 = vld [vmem:[#allocation22 + $0x270] sm:$0xff]
    %v7749 = vld [vmem:[#allocation22 + $0x278] sm:$0xff]
    %v7750 = vld [vmem:[#allocation22 + $0x280] sm:$0xff]
    %v7751 = vld [vmem:[#allocation22 + $0x288] sm:$0xff]
    %v7752 = vld [vmem:[#allocation22 + $0x290] sm:$0xff]
    %v7753 = vld [vmem:[#allocation22 + $0x298] sm:$0xff]
    %v7754 = vld [vmem:[#allocation22 + $0x2a0] sm:$0xff]
    %v7755 = vld [vmem:[#allocation22 + $0x2a8] sm:$0xff]
    %v7756 = vld [vmem:[#allocation22 + $0x2b0] sm:$0xff]
    %v7757 = vld [vmem:[#allocation22 + $0x2b8] sm:$0xff]
    %v7758 = vld [vmem:[#allocation22 + $0x2c0] sm:$0xff]
    %v7759 = vld [vmem:[#allocation22 + $0x2c8] sm:$0xff]
    %v7760 = vld [vmem:[#allocation22 + $0x2d0] sm:$0xff]
    %v7761 = vld [vmem:[#allocation22 + $0x2d8] sm:$0xff]
    %v7762 = vld [vmem:[#allocation22 + $0x2e0] sm:$0xff]
    %v7763 = vld [vmem:[#allocation22 + $0x2e8] sm:$0xff]
    %v7764 = vld [vmem:[#allocation22 + $0x2f0] sm:$0xff]
    %v7765 = vld [vmem:[#allocation22 + $0x2f8] sm:$0xff]
    %v7766 = vld [vmem:[#allocation22 + $0x300] sm:$0xff]
    %v7767 = vld [vmem:[#allocation22 + $0x308] sm:$0xff]
    %v7768 = vld [vmem:[#allocation22 + $0x310] sm:$0xff]
    %v7769 = vld [vmem:[#allocation22 + $0x318] sm:$0xff]
    %v7770 = vld [vmem:[#allocation22 + $0x320] sm:$0xff]
    %v7771 = vld [vmem:[#allocation22 + $0x328] sm:$0xff]
    %v7772 = vld [vmem:[#allocation22 + $0x330] sm:$0xff]
    %v7773 = vld [vmem:[#allocation22 + $0x338] sm:$0xff]
    %v7774 = vld [vmem:[#allocation22 + $0x340] sm:$0xff]
    %v7775 = vld [vmem:[#allocation22 + $0x348] sm:$0xff]
    %v7776 = vld [vmem:[#allocation22 + $0x350] sm:$0xff]
    %v7777 = vld [vmem:[#allocation22 + $0x358] sm:$0xff]
    %v7778 = vld [vmem:[#allocation22 + $0x360] sm:$0xff]
    %v7779 = vld [vmem:[#allocation22 + $0x368] sm:$0xff]
    %v7780 = vld [vmem:[#allocation22 + $0x370] sm:$0xff]
    %v7781 = vld [vmem:[#allocation22 + $0x378] sm:$0xff]
    %v7782 = vld [vmem:[#allocation22 + $0x380] sm:$0xff]
    %v7783 = vld [vmem:[#allocation22 + $0x388] sm:$0xff]
    %v7784 = vld [vmem:[#allocation22 + $0x390] sm:$0xff]
    %v7785 = vld [vmem:[#allocation22 + $0x398] sm:$0xff]
    %v7786 = vld [vmem:[#allocation22 + $0x3a0] sm:$0xff]
    %v7787 = vld [vmem:[#allocation22 + $0x3a8] sm:$0xff]
    %v7788 = vld [vmem:[#allocation22 + $0x3b0] sm:$0xff]
    %v7789 = vld [vmem:[#allocation22 + $0x3b8] sm:$0xff]
    %v7790 = vld [vmem:[#allocation22 + $0x3c0] sm:$0xff]
    %v7791 = vld [vmem:[#allocation22 + $0x3c8] sm:$0xff]
    %v7792 = vld [vmem:[#allocation22 + $0x3d0] sm:$0xff]
    %v7793 = vld [vmem:[#allocation22 + $0x3d8] sm:$0xff]
    %v7794 = vld [vmem:[#allocation22 + $0x3e0] sm:$0xff]
    %v7795 = vld [vmem:[#allocation22 + $0x3e8] sm:$0xff]
    %v7796 = vld [vmem:[#allocation22 + $0x3f0] sm:$0xff]
    %v7797 = vld [vmem:[#allocation22 + $0x3f8] sm:$0xff]
    %v7798 = vld [vmem:[#allocation22 + $0x400] sm:$0xff]
    %v7799 = vld [vmem:[#allocation22 + $0x408] sm:$0xff]
    %v7800 = vld [vmem:[#allocation22 + $0x410] sm:$0xff]
    %v7801 = vld [vmem:[#allocation22 + $0x418] sm:$0xff]
    %v7802 = vld [vmem:[#allocation22 + $0x420] sm:$0xff]
    %v7803 = vld [vmem:[#allocation22 + $0x428] sm:$0xff]
    %v7804 = vld [vmem:[#allocation22 + $0x430] sm:$0xff]
    %v7805 = vld [vmem:[#allocation22 + $0x438] sm:$0xff]
    %v7806 = vld [vmem:[#allocation22 + $0x440] sm:$0xff]
    %v7807 = vld [vmem:[#allocation22 + $0x448] sm:$0xff]
    %v7808 = vld [vmem:[#allocation22 + $0x450] sm:$0xff]
    %v7809 = vld [vmem:[#allocation22 + $0x458] sm:$0xff]
    %v7810 = vld [vmem:[#allocation22 + $0x460] sm:$0xff]
    %v7811 = vld [vmem:[#allocation22 + $0x468] sm:$0xff]
    %v7812 = vld [vmem:[#allocation22 + $0x470] sm:$0xff]
    %v7813 = vld [vmem:[#allocation22 + $0x478] sm:$0xff]
    %v7814 = vld [vmem:[#allocation22 + $0x480] sm:$0xff]
    %v7815 = vld [vmem:[#allocation22 + $0x488] sm:$0xff]
    %v7816 = vld [vmem:[#allocation22 + $0x490] sm:$0xff]
    %v7817 = vld [vmem:[#allocation22 + $0x498] sm:$0xff]
    %v7818 = vld [vmem:[#allocation22 + $0x4a0] sm:$0xff]
    %v7819 = vld [vmem:[#allocation22 + $0x4a8] sm:$0xff]
    %v7820 = vld [vmem:[#allocation22 + $0x4b0] sm:$0xff]
    %v7821 = vld [vmem:[#allocation22 + $0x4b8] sm:$0xff]
    %v7822 = vld [vmem:[#allocation22 + $0x4c0] sm:$0xff]
    %v7823 = vld [vmem:[#allocation22 + $0x4c8] sm:$0xff]
    %v7824 = vld [vmem:[#allocation22 + $0x4d0] sm:$0xff]
    %v7825 = vld [vmem:[#allocation22 + $0x4d8] sm:$0xff]
    %v7826 = vld [vmem:[#allocation22 + $0x4e0] sm:$0xff]
    %v7827 = vld [vmem:[#allocation22 + $0x4e8] sm:$0xff]
    %v7828 = vld [vmem:[#allocation22 + $0x4f0] sm:$0xff]
    %v7829 = vld [vmem:[#allocation22 + $0x4f8] sm:$0xff]
    %v7830 = vld [vmem:[#allocation22 + $0x500] sm:$0xff]
    %v7831 = vld [vmem:[#allocation22 + $0x508] sm:$0xff]
    %v7832 = vld [vmem:[#allocation22 + $0x510] sm:$0xff]
    %v7833 = vld [vmem:[#allocation22 + $0x518] sm:$0xff]
    %v7834 = vld [vmem:[#allocation22 + $0x520] sm:$0xff]
    %v7835 = vld [vmem:[#allocation22 + $0x528] sm:$0xff]
    %v7836 = vld [vmem:[#allocation22 + $0x530] sm:$0xff]
    %v7837 = vld [vmem:[#allocation22 + $0x538] sm:$0xff]
    %v7838 = vld [vmem:[#allocation22 + $0x540] sm:$0xff]
    %v7839 = vld [vmem:[#allocation22 + $0x548] sm:$0xff]
    %v7840 = vld [vmem:[#allocation22 + $0x550] sm:$0xff]
    %v7841 = vld [vmem:[#allocation22 + $0x558] sm:$0xff]
    %v7842 = vld [vmem:[#allocation22 + $0x560] sm:$0xff]
    %v7843 = vld [vmem:[#allocation22 + $0x568] sm:$0xff]
    %v7844 = vld [vmem:[#allocation22 + $0x570] sm:$0xff]
    %v7845 = vld [vmem:[#allocation22 + $0x578] sm:$0xff]
    %v7846 = vld [vmem:[#allocation22 + $0x580] sm:$0xff]
    %v7847 = vld [vmem:[#allocation22 + $0x588] sm:$0xff]
    %v7848 = vld [vmem:[#allocation22 + $0x590] sm:$0xff]
    %v7849 = vld [vmem:[#allocation22 + $0x598] sm:$0xff]
    %v7850 = vld [vmem:[#allocation22 + $0x5a0] sm:$0xff]
    %v7851 = vld [vmem:[#allocation22 + $0x5a8] sm:$0xff]
    %v7852 = vld [vmem:[#allocation22 + $0x5b0] sm:$0xff]
    %v7853 = vld [vmem:[#allocation22 + $0x5b8] sm:$0xff]
    %v7854 = vld [vmem:[#allocation22 + $0x5c0] sm:$0xff]
    %v7855 = vld [vmem:[#allocation22 + $0x5c8] sm:$0xff]
    %v7856 = vld [vmem:[#allocation22 + $0x5d0] sm:$0xff]
    %v7857 = vld [vmem:[#allocation22 + $0x5d8] sm:$0xff]
    %v7858 = vld [vmem:[#allocation22 + $0x5e0] sm:$0xff]
    %v7859 = vld [vmem:[#allocation22 + $0x5e8] sm:$0xff]
    %v7860 = vld [vmem:[#allocation22 + $0x5f0] sm:$0xff]
    %v7861 = vld [vmem:[#allocation22 + $0x5f8] sm:$0xff]
    %v7862 = vld [vmem:[#allocation23] sm:$0xff]
    %v7864 = vperm.slane %v7862, 0
    %v7865 = vperm.slane %v7862, 1
    %v7866 = vperm.slane %v7862, 2
    %v7867 = vperm.slane %v7862, 3
    %v7868 = vperm.slane %v7862, 4
    %v7869 = vperm.slane %v7862, 5
    %v7870 = vperm.slane %v7862, 6
    %v7871 = vperm.slane %v7862, 7
    %v8072 = vunpack.c.l.b16 %v7670
    %v8073 = vunpack.c.h.b16 %v7670
    %v8074 = vunpack.c.l.b16 %v7671
    %v8075 = vunpack.c.h.b16 %v7671
    %v8076 = vunpack.c.l.b16 %v7672
    %v8077 = vunpack.c.h.b16 %v7672
    %v8078 = vunpack.c.l.b16 %v7673
    %v8079 = vunpack.c.h.b16 %v7673
    %v8080 = vunpack.c.l.b16 %v7674
    %v8081 = vunpack.c.h.b16 %v7674
    %v8082 = vunpack.c.l.b16 %v7675
    %v8083 = vunpack.c.h.b16 %v7675
    %v8084 = vunpack.c.l.b16 %v7676
    %v8085 = vunpack.c.h.b16 %v7676
    %v8086 = vunpack.c.l.b16 %v7677
    %v8087 = vunpack.c.h.b16 %v7677
    %v8088 = vunpack.c.l.b16 %v7678
    %v8089 = vunpack.c.h.b16 %v7678
    %v8090 = vunpack.c.l.b16 %v7679
    %v8091 = vunpack.c.h.b16 %v7679
    %v8092 = vunpack.c.l.b16 %v7680
    %v8093 = vunpack.c.h.b16 %v7680
    %v8094 = vunpack.c.l.b16 %v7681
    %v8095 = vunpack.c.h.b16 %v7681
    %v8096 = vunpack.c.l.b16 %v7682
    %v8097 = vunpack.c.h.b16 %v7682
    %v8098 = vunpack.c.l.b16 %v7683
    %v8099 = vunpack.c.h.b16 %v7683
    %v8100 = vunpack.c.l.b16 %v7684
    %v8101 = vunpack.c.h.b16 %v7684
    %v8102 = vunpack.c.l.b16 %v7685
    %v8103 = vunpack.c.h.b16 %v7685
    %v8104 = vunpack.c.l.b16 %v7686
    %v8105 = vunpack.c.h.b16 %v7686
    %v8106 = vunpack.c.l.b16 %v7687
    %v8107 = vunpack.c.h.b16 %v7687
    %v8108 = vunpack.c.l.b16 %v7688
    %v8109 = vunpack.c.h.b16 %v7688
    %v8110 = vunpack.c.l.b16 %v7689
    %v8111 = vunpack.c.h.b16 %v7689
    %v8112 = vunpack.c.l.b16 %v7690
    %v8113 = vunpack.c.h.b16 %v7690
    %v8114 = vunpack.c.l.b16 %v7691
    %v8115 = vunpack.c.h.b16 %v7691
    %v8116 = vunpack.c.l.b16 %v7692
    %v8117 = vunpack.c.h.b16 %v7692
    %v8118 = vunpack.c.l.b16 %v7693
    %v8119 = vunpack.c.h.b16 %v7693
    %v8120 = vunpack.c.l.b16 %v7694
    %v8121 = vunpack.c.h.b16 %v7694
    %v8122 = vunpack.c.l.b16 %v7695
    %v8123 = vunpack.c.h.b16 %v7695
    %v8124 = vunpack.c.l.b16 %v7696
    %v8125 = vunpack.c.h.b16 %v7696
    %v8126 = vunpack.c.l.b16 %v7697
    %v8127 = vunpack.c.h.b16 %v7697
    %v8128 = vunpack.c.l.b16 %v7698
    %v8129 = vunpack.c.h.b16 %v7698
    %v8130 = vunpack.c.l.b16 %v7699
    %v8131 = vunpack.c.h.b16 %v7699
    %v8132 = vunpack.c.l.b16 %v7700
    %v8133 = vunpack.c.h.b16 %v7700
    %v8134 = vunpack.c.l.b16 %v7701
    %v8135 = vunpack.c.h.b16 %v7701
    %v8136 = vunpack.c.l.b16 %v7702
    %v8137 = vunpack.c.h.b16 %v7702
    %v8138 = vunpack.c.l.b16 %v7703
    %v8139 = vunpack.c.h.b16 %v7703
    %v8140 = vunpack.c.l.b16 %v7704
    %v8141 = vunpack.c.h.b16 %v7704
    %v8142 = vunpack.c.l.b16 %v7705
    %v8143 = vunpack.c.h.b16 %v7705
    %v8144 = vunpack.c.l.b16 %v7706
    %v8145 = vunpack.c.h.b16 %v7706
    %v8146 = vunpack.c.l.b16 %v7707
    %v8147 = vunpack.c.h.b16 %v7707
    %v8148 = vunpack.c.l.b16 %v7708
    %v8149 = vunpack.c.h.b16 %v7708
    %v8150 = vunpack.c.l.b16 %v7709
    %v8151 = vunpack.c.h.b16 %v7709
    %v8152 = vunpack.c.l.b16 %v7710
    %v8153 = vunpack.c.h.b16 %v7710
    %v8154 = vunpack.c.l.b16 %v7711
    %v8155 = vunpack.c.h.b16 %v7711
    %v8156 = vunpack.c.l.b16 %v7712
    %v8157 = vunpack.c.h.b16 %v7712
    %v8158 = vunpack.c.l.b16 %v7713
    %v8159 = vunpack.c.h.b16 %v7713
    %v8160 = vunpack.c.l.b16 %v7714
    %v8161 = vunpack.c.h.b16 %v7714
    %v8162 = vunpack.c.l.b16 %v7715
    %v8163 = vunpack.c.h.b16 %v7715
    %v8164 = vunpack.c.l.b16 %v7716
    %v8165 = vunpack.c.h.b16 %v7716
    %v8166 = vunpack.c.l.b16 %v7717
    %v8167 = vunpack.c.h.b16 %v7717
    %v8168 = vunpack.c.l.b16 %v7718
    %v8169 = vunpack.c.h.b16 %v7718
    %v8170 = vunpack.c.l.b16 %v7719
    %v8171 = vunpack.c.h.b16 %v7719
    %v8172 = vunpack.c.l.b16 %v7720
    %v8173 = vunpack.c.h.b16 %v7720
    %v8174 = vunpack.c.l.b16 %v7721
    %v8175 = vunpack.c.h.b16 %v7721
    %v8176 = vunpack.c.l.b16 %v7722
    %v8177 = vunpack.c.h.b16 %v7722
    %v8178 = vunpack.c.l.b16 %v7723
    %v8179 = vunpack.c.h.b16 %v7723
    %v8180 = vunpack.c.l.b16 %v7724
    %v8181 = vunpack.c.h.b16 %v7724
    %v8182 = vunpack.c.l.b16 %v7725
    %v8183 = vunpack.c.h.b16 %v7725
    %v8184 = vunpack.c.l.b16 %v7726
    %v8185 = vunpack.c.h.b16 %v7726
    %v8186 = vunpack.c.l.b16 %v7727
    %v8187 = vunpack.c.h.b16 %v7727
    %v8188 = vunpack.c.l.b16 %v7728
    %v8189 = vunpack.c.h.b16 %v7728
    %v8190 = vunpack.c.l.b16 %v7729
    %v8191 = vunpack.c.h.b16 %v7729
    %v8192 = vunpack.c.l.b16 %v7730
    %v8193 = vunpack.c.h.b16 %v7730
    %v8194 = vunpack.c.l.b16 %v7731
    %v8195 = vunpack.c.h.b16 %v7731
    %v8196 = vunpack.c.l.b16 %v7732
    %v8197 = vunpack.c.h.b16 %v7732
    %v8198 = vunpack.c.l.b16 %v7733
    %v8199 = vunpack.c.h.b16 %v7733
    %v8200 = vunpack.c.l.b16 %v7734
    %v8201 = vunpack.c.h.b16 %v7734
    %v8202 = vunpack.c.l.b16 %v7735
    %v8203 = vunpack.c.h.b16 %v7735
    %v8204 = vunpack.c.l.b16 %v7736
    %v8205 = vunpack.c.h.b16 %v7736
    %v8206 = vunpack.c.l.b16 %v7737
    %v8207 = vunpack.c.h.b16 %v7737
    %v8208 = vunpack.c.l.b16 %v7738
    %v8209 = vunpack.c.h.b16 %v7738
    %v8210 = vunpack.c.l.b16 %v7739
    %v8211 = vunpack.c.h.b16 %v7739
    %v8212 = vunpack.c.l.b16 %v7740
    %v8213 = vunpack.c.h.b16 %v7740
    %v8214 = vunpack.c.l.b16 %v7741
    %v8215 = vunpack.c.h.b16 %v7741
    %v8216 = vunpack.c.l.b16 %v7742
    %v8217 = vunpack.c.h.b16 %v7742
    %v8218 = vunpack.c.l.b16 %v7743
    %v8219 = vunpack.c.h.b16 %v7743
    %v8220 = vunpack.c.l.b16 %v7744
    %v8221 = vunpack.c.h.b16 %v7744
    %v8222 = vunpack.c.l.b16 %v7745
    %v8223 = vunpack.c.h.b16 %v7745
    %v8224 = vunpack.c.l.b16 %v7746
    %v8225 = vunpack.c.h.b16 %v7746
    %v8226 = vunpack.c.l.b16 %v7747
    %v8227 = vunpack.c.h.b16 %v7747
    %v8228 = vunpack.c.l.b16 %v7748
    %v8229 = vunpack.c.h.b16 %v7748
    %v8230 = vunpack.c.l.b16 %v7749
    %v8231 = vunpack.c.h.b16 %v7749
    %v8232 = vunpack.c.l.b16 %v7750
    %v8233 = vunpack.c.h.b16 %v7750
    %v8234 = vunpack.c.l.b16 %v7751
    %v8235 = vunpack.c.h.b16 %v7751
    %v8236 = vunpack.c.l.b16 %v7752
    %v8237 = vunpack.c.h.b16 %v7752
    %v8238 = vunpack.c.l.b16 %v7753
    %v8239 = vunpack.c.h.b16 %v7753
    %v8240 = vunpack.c.l.b16 %v7754
    %v8241 = vunpack.c.h.b16 %v7754
    %v8242 = vunpack.c.l.b16 %v7755
    %v8243 = vunpack.c.h.b16 %v7755
    %v8244 = vunpack.c.l.b16 %v7756
    %v8245 = vunpack.c.h.b16 %v7756
    %v8246 = vunpack.c.l.b16 %v7757
    %v8247 = vunpack.c.h.b16 %v7757
    %v8248 = vunpack.c.l.b16 %v7758
    %v8249 = vunpack.c.h.b16 %v7758
    %v8250 = vunpack.c.l.b16 %v7759
    %v8251 = vunpack.c.h.b16 %v7759
    %v8252 = vunpack.c.l.b16 %v7760
    %v8253 = vunpack.c.h.b16 %v7760
    %v8254 = vunpack.c.l.b16 %v7761
    %v8255 = vunpack.c.h.b16 %v7761
    %v8256 = vunpack.c.l.b16 %v7762
    %v8257 = vunpack.c.h.b16 %v7762
    %v8258 = vunpack.c.l.b16 %v7763
    %v8259 = vunpack.c.h.b16 %v7763
    %v8260 = vunpack.c.l.b16 %v7764
    %v8261 = vunpack.c.h.b16 %v7764
    %v8262 = vunpack.c.l.b16 %v7765
    %v8263 = vunpack.c.h.b16 %v7765
    %v8264 = vunpack.c.l.b16 %v7766
    %v8265 = vunpack.c.h.b16 %v7766
    %v8266 = vunpack.c.l.b16 %v7767
    %v8267 = vunpack.c.h.b16 %v7767
    %v8268 = vunpack.c.l.b16 %v7768
    %v8269 = vunpack.c.h.b16 %v7768
    %v8270 = vunpack.c.l.b16 %v7769
    %v8271 = vunpack.c.h.b16 %v7769
    %v8272 = vunpack.c.l.b16 %v7770
    %v8273 = vunpack.c.h.b16 %v7770
    %v8274 = vunpack.c.l.b16 %v7771
    %v8275 = vunpack.c.h.b16 %v7771
    %v8276 = vunpack.c.l.b16 %v7772
    %v8277 = vunpack.c.h.b16 %v7772
    %v8278 = vunpack.c.l.b16 %v7773
    %v8279 = vunpack.c.h.b16 %v7773
    %v8280 = vunpack.c.l.b16 %v7774
    %v8281 = vunpack.c.h.b16 %v7774
    %v8282 = vunpack.c.l.b16 %v7775
    %v8283 = vunpack.c.h.b16 %v7775
    %v8284 = vunpack.c.l.b16 %v7776
    %v8285 = vunpack.c.h.b16 %v7776
    %v8286 = vunpack.c.l.b16 %v7777
    %v8287 = vunpack.c.h.b16 %v7777
    %v8288 = vunpack.c.l.b16 %v7778
    %v8289 = vunpack.c.h.b16 %v7778
    %v8290 = vunpack.c.l.b16 %v7779
    %v8291 = vunpack.c.h.b16 %v7779
    %v8292 = vunpack.c.l.b16 %v7780
    %v8293 = vunpack.c.h.b16 %v7780
    %v8294 = vunpack.c.l.b16 %v7781
    %v8295 = vunpack.c.h.b16 %v7781
    %v8296 = vunpack.c.l.b16 %v7782
    %v8297 = vunpack.c.h.b16 %v7782
    %v8298 = vunpack.c.l.b16 %v7783
    %v8299 = vunpack.c.h.b16 %v7783
    %v8300 = vunpack.c.l.b16 %v7784
    %v8301 = vunpack.c.h.b16 %v7784
    %v8302 = vunpack.c.l.b16 %v7785
    %v8303 = vunpack.c.h.b16 %v7785
    %v8304 = vunpack.c.l.b16 %v7786
    %v8305 = vunpack.c.h.b16 %v7786
    %v8306 = vunpack.c.l.b16 %v7787
    %v8307 = vunpack.c.h.b16 %v7787
    %v8308 = vunpack.c.l.b16 %v7788
    %v8309 = vunpack.c.h.b16 %v7788
    %v8310 = vunpack.c.l.b16 %v7789
    %v8311 = vunpack.c.h.b16 %v7789
    %v8312 = vunpack.c.l.b16 %v7790
    %v8313 = vunpack.c.h.b16 %v7790
    %v8314 = vunpack.c.l.b16 %v7791
    %v8315 = vunpack.c.h.b16 %v7791
    %v8316 = vunpack.c.l.b16 %v7792
    %v8317 = vunpack.c.h.b16 %v7792
    %v8318 = vunpack.c.l.b16 %v7793
    %v8319 = vunpack.c.h.b16 %v7793
    %v8320 = vunpack.c.l.b16 %v7794
    %v8321 = vunpack.c.h.b16 %v7794
    %v8322 = vunpack.c.l.b16 %v7795
    %v8323 = vunpack.c.h.b16 %v7795
    %v8324 = vunpack.c.l.b16 %v7796
    %v8325 = vunpack.c.h.b16 %v7796
    %v8326 = vunpack.c.l.b16 %v7797
    %v8327 = vunpack.c.h.b16 %v7797
    %v8328 = vunpack.c.l.b16 %v7798
    %v8329 = vunpack.c.h.b16 %v7798
    %v8330 = vunpack.c.l.b16 %v7799
    %v8331 = vunpack.c.h.b16 %v7799
    %v8332 = vunpack.c.l.b16 %v7800
    %v8333 = vunpack.c.h.b16 %v7800
    %v8334 = vunpack.c.l.b16 %v7801
    %v8335 = vunpack.c.h.b16 %v7801
    %v8336 = vunpack.c.l.b16 %v7802
    %v8337 = vunpack.c.h.b16 %v7802
    %v8338 = vunpack.c.l.b16 %v7803
    %v8339 = vunpack.c.h.b16 %v7803
    %v8340 = vunpack.c.l.b16 %v7804
    %v8341 = vunpack.c.h.b16 %v7804
    %v8342 = vunpack.c.l.b16 %v7805
    %v8343 = vunpack.c.h.b16 %v7805
    %v8344 = vunpack.c.l.b16 %v7806
    %v8345 = vunpack.c.h.b16 %v7806
    %v8346 = vunpack.c.l.b16 %v7807
    %v8347 = vunpack.c.h.b16 %v7807
    %v8348 = vunpack.c.l.b16 %v7808
    %v8349 = vunpack.c.h.b16 %v7808
    %v8350 = vunpack.c.l.b16 %v7809
    %v8351 = vunpack.c.h.b16 %v7809
    %v8352 = vunpack.c.l.b16 %v7810
    %v8353 = vunpack.c.h.b16 %v7810
    %v8354 = vunpack.c.l.b16 %v7811
    %v8355 = vunpack.c.h.b16 %v7811
    %v8356 = vunpack.c.l.b16 %v7812
    %v8357 = vunpack.c.h.b16 %v7812
    %v8358 = vunpack.c.l.b16 %v7813
    %v8359 = vunpack.c.h.b16 %v7813
    %v8360 = vunpack.c.l.b16 %v7814
    %v8361 = vunpack.c.h.b16 %v7814
    %v8362 = vunpack.c.l.b16 %v7815
    %v8363 = vunpack.c.h.b16 %v7815
    %v8364 = vunpack.c.l.b16 %v7816
    %v8365 = vunpack.c.h.b16 %v7816
    %v8366 = vunpack.c.l.b16 %v7817
    %v8367 = vunpack.c.h.b16 %v7817
    %v8368 = vunpack.c.l.b16 %v7818
    %v8369 = vunpack.c.h.b16 %v7818
    %v8370 = vunpack.c.l.b16 %v7819
    %v8371 = vunpack.c.h.b16 %v7819
    %v8372 = vunpack.c.l.b16 %v7820
    %v8373 = vunpack.c.h.b16 %v7820
    %v8374 = vunpack.c.l.b16 %v7821
    %v8375 = vunpack.c.h.b16 %v7821
    %v8376 = vunpack.c.l.b16 %v7822
    %v8377 = vunpack.c.h.b16 %v7822
    %v8378 = vunpack.c.l.b16 %v7823
    %v8379 = vunpack.c.h.b16 %v7823
    %v8380 = vunpack.c.l.b16 %v7824
    %v8381 = vunpack.c.h.b16 %v7824
    %v8382 = vunpack.c.l.b16 %v7825
    %v8383 = vunpack.c.h.b16 %v7825
    %v8384 = vunpack.c.l.b16 %v7826
    %v8385 = vunpack.c.h.b16 %v7826
    %v8386 = vunpack.c.l.b16 %v7827
    %v8387 = vunpack.c.h.b16 %v7827
    %v8388 = vunpack.c.l.b16 %v7828
    %v8389 = vunpack.c.h.b16 %v7828
    %v8390 = vunpack.c.l.b16 %v7829
    %v8391 = vunpack.c.h.b16 %v7829
    %v8392 = vunpack.c.l.b16 %v7830
    %v8393 = vunpack.c.h.b16 %v7830
    %v8394 = vunpack.c.l.b16 %v7831
    %v8395 = vunpack.c.h.b16 %v7831
    %v8396 = vunpack.c.l.b16 %v7832
    %v8397 = vunpack.c.h.b16 %v7832
    %v8398 = vunpack.c.l.b16 %v7833
    %v8399 = vunpack.c.h.b16 %v7833
    %v8400 = vunpack.c.l.b16 %v7834
    %v8401 = vunpack.c.h.b16 %v7834
    %v8402 = vunpack.c.l.b16 %v7835
    %v8403 = vunpack.c.h.b16 %v7835
    %v8404 = vunpack.c.l.b16 %v7836
    %v8405 = vunpack.c.h.b16 %v7836
    %v8406 = vunpack.c.l.b16 %v7837
    %v8407 = vunpack.c.h.b16 %v7837
    %v8408 = vunpack.c.l.b16 %v7838
    %v8409 = vunpack.c.h.b16 %v7838
    %v8410 = vunpack.c.l.b16 %v7839
    %v8411 = vunpack.c.h.b16 %v7839
    %v8412 = vunpack.c.l.b16 %v7840
    %v8413 = vunpack.c.h.b16 %v7840
    %v8414 = vunpack.c.l.b16 %v7841
    %v8415 = vunpack.c.h.b16 %v7841
    %v8416 = vunpack.c.l.b16 %v7842
    %v8417 = vunpack.c.h.b16 %v7842
    %v8418 = vunpack.c.l.b16 %v7843
    %v8419 = vunpack.c.h.b16 %v7843
    %v8420 = vunpack.c.l.b16 %v7844
    %v8421 = vunpack.c.h.b16 %v7844
    %v8422 = vunpack.c.l.b16 %v7845
    %v8423 = vunpack.c.h.b16 %v7845
    %v8424 = vunpack.c.l.b16 %v7846
    %v8425 = vunpack.c.h.b16 %v7846
    %v8426 = vunpack.c.l.b16 %v7847
    %v8427 = vunpack.c.h.b16 %v7847
    %v8428 = vunpack.c.l.b16 %v7848
    %v8429 = vunpack.c.h.b16 %v7848
    %v8430 = vunpack.c.l.b16 %v7849
    %v8431 = vunpack.c.h.b16 %v7849
    %v8432 = vunpack.c.l.b16 %v7850
    %v8433 = vunpack.c.h.b16 %v7850
    %v8434 = vunpack.c.l.b16 %v7851
    %v8435 = vunpack.c.h.b16 %v7851
    %v8436 = vunpack.c.l.b16 %v7852
    %v8437 = vunpack.c.h.b16 %v7852
    %v8438 = vunpack.c.l.b16 %v7853
    %v8439 = vunpack.c.h.b16 %v7853
    %v8440 = vunpack.c.l.b16 %v7854
    %v8441 = vunpack.c.h.b16 %v7854
    %v8442 = vunpack.c.l.b16 %v7855
    %v8443 = vunpack.c.h.b16 %v7855
    %v8444 = vunpack.c.l.b16 %v7856
    %v8445 = vunpack.c.h.b16 %v7856
    %v8446 = vunpack.c.l.b16 %v7857
    %v8447 = vunpack.c.h.b16 %v7857
    %v8448 = vunpack.c.l.b16 %v7858
    %v8449 = vunpack.c.h.b16 %v7858
    %v8450 = vunpack.c.l.b16 %v7859
    %v8451 = vunpack.c.h.b16 %v7859
    %v8452 = vunpack.c.l.b16 %v7860
    %v8453 = vunpack.c.h.b16 %v7860
    %v8454 = vunpack.c.l.b16 %v7861
    %v8455 = vunpack.c.h.b16 %v7861
    %v8456 = vpack.c.b16 %v8080, %v8072
    %v8457 = vpack.c.b16 %v8081, %v8073
    %v8458 = vpack.c.b16 %v8082, %v8074
    %v8459 = vpack.c.b16 %v8083, %v8075
    %v8460 = vpack.c.b16 %v8084, %v8076
    %v8461 = vpack.c.b16 %v8085, %v8077
    %v8462 = vpack.c.b16 %v8086, %v8078
    %v8463 = vpack.c.b16 %v8087, %v8079
    %v8464 = vpack.c.b16 %v8096, %v8088
    %v8465 = vpack.c.b16 %v8097, %v8089
    %v8466 = vpack.c.b16 %v8098, %v8090
    %v8467 = vpack.c.b16 %v8099, %v8091
    %v8468 = vpack.c.b16 %v8100, %v8092
    %v8469 = vpack.c.b16 %v8101, %v8093
    %v8470 = vpack.c.b16 %v8102, %v8094
    %v8471 = vpack.c.b16 %v8103, %v8095
    %v8472 = vpack.c.b16 %v8112, %v8104
    %v8473 = vpack.c.b16 %v8113, %v8105
    %v8474 = vpack.c.b16 %v8114, %v8106
    %v8475 = vpack.c.b16 %v8115, %v8107
    %v8476 = vpack.c.b16 %v8116, %v8108
    %v8477 = vpack.c.b16 %v8117, %v8109
    %v8478 = vpack.c.b16 %v8118, %v8110
    %v8479 = vpack.c.b16 %v8119, %v8111
    %v8480 = vpack.c.b16 %v8128, %v8120
    %v8481 = vpack.c.b16 %v8129, %v8121
    %v8482 = vpack.c.b16 %v8130, %v8122
    %v8483 = vpack.c.b16 %v8131, %v8123
    %v8484 = vpack.c.b16 %v8132, %v8124
    %v8485 = vpack.c.b16 %v8133, %v8125
    %v8486 = vpack.c.b16 %v8134, %v8126
    %v8487 = vpack.c.b16 %v8135, %v8127
    %v8488 = vpack.c.b16 %v8144, %v8136
    %v8489 = vpack.c.b16 %v8145, %v8137
    %v8490 = vpack.c.b16 %v8146, %v8138
    %v8491 = vpack.c.b16 %v8147, %v8139
    %v8492 = vpack.c.b16 %v8148, %v8140
    %v8493 = vpack.c.b16 %v8149, %v8141
    %v8494 = vpack.c.b16 %v8150, %v8142
    %v8495 = vpack.c.b16 %v8151, %v8143
    %v8496 = vpack.c.b16 %v8160, %v8152
    %v8497 = vpack.c.b16 %v8161, %v8153
    %v8498 = vpack.c.b16 %v8162, %v8154
    %v8499 = vpack.c.b16 %v8163, %v8155
    %v8500 = vpack.c.b16 %v8164, %v8156
    %v8501 = vpack.c.b16 %v8165, %v8157
    %v8502 = vpack.c.b16 %v8166, %v8158
    %v8503 = vpack.c.b16 %v8167, %v8159
    %v8504 = vpack.c.b16 %v8176, %v8168
    %v8505 = vpack.c.b16 %v8177, %v8169
    %v8506 = vpack.c.b16 %v8178, %v8170
    %v8507 = vpack.c.b16 %v8179, %v8171
    %v8508 = vpack.c.b16 %v8180, %v8172
    %v8509 = vpack.c.b16 %v8181, %v8173
    %v8510 = vpack.c.b16 %v8182, %v8174
    %v8511 = vpack.c.b16 %v8183, %v8175
    %v8512 = vpack.c.b16 %v8192, %v8184
    %v8513 = vpack.c.b16 %v8193, %v8185
    %v8514 = vpack.c.b16 %v8194, %v8186
    %v8515 = vpack.c.b16 %v8195, %v8187
    %v8516 = vpack.c.b16 %v8196, %v8188
    %v8517 = vpack.c.b16 %v8197, %v8189
    %v8518 = vpack.c.b16 %v8198, %v8190
    %v8519 = vpack.c.b16 %v8199, %v8191
    %v8520 = vpack.c.b16 %v8208, %v8200
    %v8521 = vpack.c.b16 %v8209, %v8201
    %v8522 = vpack.c.b16 %v8210, %v8202
    %v8523 = vpack.c.b16 %v8211, %v8203
    %v8524 = vpack.c.b16 %v8212, %v8204
    %v8525 = vpack.c.b16 %v8213, %v8205
    %v8526 = vpack.c.b16 %v8214, %v8206
    %v8527 = vpack.c.b16 %v8215, %v8207
    %v8528 = vpack.c.b16 %v8224, %v8216
    %v8529 = vpack.c.b16 %v8225, %v8217
    %v8530 = vpack.c.b16 %v8226, %v8218
    %v8531 = vpack.c.b16 %v8227, %v8219
    %v8532 = vpack.c.b16 %v8228, %v8220
    %v8533 = vpack.c.b16 %v8229, %v8221
    %v8534 = vpack.c.b16 %v8230, %v8222
    %v8535 = vpack.c.b16 %v8231, %v8223
    %v8536 = vpack.c.b16 %v8240, %v8232
    %v8537 = vpack.c.b16 %v8241, %v8233
    %v8538 = vpack.c.b16 %v8242, %v8234
    %v8539 = vpack.c.b16 %v8243, %v8235
    %v8540 = vpack.c.b16 %v8244, %v8236
    %v8541 = vpack.c.b16 %v8245, %v8237
    %v8542 = vpack.c.b16 %v8246, %v8238
    %v8543 = vpack.c.b16 %v8247, %v8239
    %v8544 = vpack.c.b16 %v8256, %v8248
    %v8545 = vpack.c.b16 %v8257, %v8249
    %v8546 = vpack.c.b16 %v8258, %v8250
    %v8547 = vpack.c.b16 %v8259, %v8251
    %v8548 = vpack.c.b16 %v8260, %v8252
    %v8549 = vpack.c.b16 %v8261, %v8253
    %v8550 = vpack.c.b16 %v8262, %v8254
    %v8551 = vpack.c.b16 %v8263, %v8255
    %v8552 = vpack.c.b16 %v8272, %v8264
    %v8553 = vpack.c.b16 %v8273, %v8265
    %v8554 = vpack.c.b16 %v8274, %v8266
    %v8555 = vpack.c.b16 %v8275, %v8267
    %v8556 = vpack.c.b16 %v8276, %v8268
    %v8557 = vpack.c.b16 %v8277, %v8269
    %v8558 = vpack.c.b16 %v8278, %v8270
    %v8559 = vpack.c.b16 %v8279, %v8271
    %v8560 = vpack.c.b16 %v8288, %v8280
    %v8561 = vpack.c.b16 %v8289, %v8281
    %v8562 = vpack.c.b16 %v8290, %v8282
    %v8563 = vpack.c.b16 %v8291, %v8283
    %v8564 = vpack.c.b16 %v8292, %v8284
    %v8565 = vpack.c.b16 %v8293, %v8285
    %v8566 = vpack.c.b16 %v8294, %v8286
    %v8567 = vpack.c.b16 %v8295, %v8287
    %v8568 = vpack.c.b16 %v8304, %v8296
    %v8569 = vpack.c.b16 %v8305, %v8297
    %v8570 = vpack.c.b16 %v8306, %v8298
    %v8571 = vpack.c.b16 %v8307, %v8299
    %v8572 = vpack.c.b16 %v8308, %v8300
    %v8573 = vpack.c.b16 %v8309, %v8301
    %v8574 = vpack.c.b16 %v8310, %v8302
    %v8575 = vpack.c.b16 %v8311, %v8303
    %v8576 = vpack.c.b16 %v8320, %v8312
    %v8577 = vpack.c.b16 %v8321, %v8313
    %v8578 = vpack.c.b16 %v8322, %v8314
    %v8579 = vpack.c.b16 %v8323, %v8315
    %v8580 = vpack.c.b16 %v8324, %v8316
    %v8581 = vpack.c.b16 %v8325, %v8317
    %v8582 = vpack.c.b16 %v8326, %v8318
    %v8583 = vpack.c.b16 %v8327, %v8319
    %v8584 = vpack.c.b16 %v8336, %v8328
    %v8585 = vpack.c.b16 %v8337, %v8329
    %v8586 = vpack.c.b16 %v8338, %v8330
    %v8587 = vpack.c.b16 %v8339, %v8331
    %v8588 = vpack.c.b16 %v8340, %v8332
    %v8589 = vpack.c.b16 %v8341, %v8333
    %v8590 = vpack.c.b16 %v8342, %v8334
    %v8591 = vpack.c.b16 %v8343, %v8335
    %v8592 = vpack.c.b16 %v8352, %v8344
    %v8593 = vpack.c.b16 %v8353, %v8345
    %v8594 = vpack.c.b16 %v8354, %v8346
    %v8595 = vpack.c.b16 %v8355, %v8347
    %v8596 = vpack.c.b16 %v8356, %v8348
    %v8597 = vpack.c.b16 %v8357, %v8349
    %v8598 = vpack.c.b16 %v8358, %v8350
    %v8599 = vpack.c.b16 %v8359, %v8351
    %v8600 = vpack.c.b16 %v8368, %v8360
    %v8601 = vpack.c.b16 %v8369, %v8361
    %v8602 = vpack.c.b16 %v8370, %v8362
    %v8603 = vpack.c.b16 %v8371, %v8363
    %v8604 = vpack.c.b16 %v8372, %v8364
    %v8605 = vpack.c.b16 %v8373, %v8365
    %v8606 = vpack.c.b16 %v8374, %v8366
    %v8607 = vpack.c.b16 %v8375, %v8367
    %v8608 = vpack.c.b16 %v8384, %v8376
    %v8609 = vpack.c.b16 %v8385, %v8377
    %v8610 = vpack.c.b16 %v8386, %v8378
    %v8611 = vpack.c.b16 %v8387, %v8379
    %v8612 = vpack.c.b16 %v8388, %v8380
    %v8613 = vpack.c.b16 %v8389, %v8381
    %v8614 = vpack.c.b16 %v8390, %v8382
    %v8615 = vpack.c.b16 %v8391, %v8383
    %v8616 = vpack.c.b16 %v8400, %v8392
    %v8617 = vpack.c.b16 %v8401, %v8393
    %v8618 = vpack.c.b16 %v8402, %v8394
    %v8619 = vpack.c.b16 %v8403, %v8395
    %v8620 = vpack.c.b16 %v8404, %v8396
    %v8621 = vpack.c.b16 %v8405, %v8397
    %v8622 = vpack.c.b16 %v8406, %v8398
    %v8623 = vpack.c.b16 %v8407, %v8399
    %v8624 = vpack.c.b16 %v8416, %v8408
    %v8625 = vpack.c.b16 %v8417, %v8409
    %v8626 = vpack.c.b16 %v8418, %v8410
    %v8627 = vpack.c.b16 %v8419, %v8411
    %v8628 = vpack.c.b16 %v8420, %v8412
    %v8629 = vpack.c.b16 %v8421, %v8413
    %v8630 = vpack.c.b16 %v8422, %v8414
    %v8631 = vpack.c.b16 %v8423, %v8415
    %v8632 = vpack.c.b16 %v8432, %v8424
    %v8633 = vpack.c.b16 %v8433, %v8425
    %v8634 = vpack.c.b16 %v8434, %v8426
    %v8635 = vpack.c.b16 %v8435, %v8427
    %v8636 = vpack.c.b16 %v8436, %v8428
    %v8637 = vpack.c.b16 %v8437, %v8429
    %v8638 = vpack.c.b16 %v8438, %v8430
    %v8639 = vpack.c.b16 %v8439, %v8431
    %v8640 = vpack.c.b16 %v8448, %v8440
    %v8641 = vpack.c.b16 %v8449, %v8441
    %v8642 = vpack.c.b16 %v8450, %v8442
    %v8643 = vpack.c.b16 %v8451, %v8443
    %v8644 = vpack.c.b16 %v8452, %v8444
    %v8645 = vpack.c.b16 %v8453, %v8445
    %v8646 = vpack.c.b16 %v8454, %v8446
    %v8647 = vpack.c.b16 %v8455, %v8447
    %8840 = vmatpush.bf16.msra.mxu0 %v8512
    %8841 = vmatpush.bf16.msra.mxu0 %v8504
    %8842 = vmatpush.bf16.msra.mxu0 %v8496
    %8843 = vmatpush.bf16.msra.mxu0 %v8488
    %8844 = vmatpush.bf16.msra.mxu0 %v8480
    %8845 = vmatpush.bf16.msra.mxu0 %v8472
    %8846 = vmatpush.bf16.msra.mxu0 %v8464
    %8847 = vmatpush.bf16.msra.mxu0 %v8456
    %8848 = vmatmul.bf16.gmra.mxu0 %v7667
    %v8849 = vpop.f32.mrf.mxu0
    %v8850 = vadd.f32 %v7864, %v8849
    %v8851 = vpop.f32.mrf.mxu0
    %8852 = vdwg.mxu0
    %8853 = vmatpush.bf16.msra.mxu0 %v8576
    %8854 = vmatpush.bf16.msra.mxu0 %v8568
    %8855 = vmatpush.bf16.msra.mxu0 %v8560
    %8856 = vmatpush.bf16.msra.mxu0 %v8552
    %8857 = vmatpush.bf16.msra.mxu0 %v8544
    %8858 = vmatpush.bf16.msra.mxu0 %v8536
    %8859 = vmatpush.bf16.msra.mxu0 %v8528
    %8860 = vmatpush.bf16.msra.mxu0 %v8520
    %8861 = vmatmul.bf16.gmra.mxu0 %v7668
    %v8862 = vpop.f32.mrf.mxu0
    %v8863 = vadd.f32 %v8850, %v8862
    %v8864 = vpop.f32.mrf.mxu0
    %8865 = vdwg.mxu0
    %8866 = vmatpush.bf16.msra.mxu0 %v8640
    %8867 = vmatpush.bf16.msra.mxu0 %v8632
    %8868 = vmatpush.bf16.msra.mxu0 %v8624
    %8869 = vmatpush.bf16.msra.mxu0 %v8616
    %8870 = vmatpush.bf16.msra.mxu0 %v8608
    %8871 = vmatpush.bf16.msra.mxu0 %v8600
    %8872 = vmatpush.bf16.msra.mxu0 %v8592
    %8873 = vmatpush.bf16.msra.mxu0 %v8584
    %8874 = vmatmul.bf16.gmra.mxu0 %v7669
    %v8875 = vpop.f32.mrf.mxu0
    %v8876 = vadd.f32 %v8863, %v8875
    %v8877 = vpop.f32.mrf.mxu0
    %8878 = vdwg.mxu0
    %8879 = vmatpush.bf16.msra.mxu0 %v8513
    %8880 = vmatpush.bf16.msra.mxu0 %v8505
    %8881 = vmatpush.bf16.msra.mxu0 %v8497
    %8882 = vmatpush.bf16.msra.mxu0 %v8489
    %8883 = vmatpush.bf16.msra.mxu0 %v8481
    %8884 = vmatpush.bf16.msra.mxu0 %v8473
    %8885 = vmatpush.bf16.msra.mxu0 %v8465
    %8886 = vmatpush.bf16.msra.mxu0 %v8457
    %8887 = vmatmul.bf16.gmra.mxu0 %v7667
    %v8888 = vpop.f32.mrf.mxu0
    %v8889 = vadd.f32 %v7865, %v8888
    %v8890 = vpop.f32.mrf.mxu0
    %8891 = vdwg.mxu0
    %8892 = vmatpush.bf16.msra.mxu0 %v8577
    %8893 = vmatpush.bf16.msra.mxu0 %v8569
    %8894 = vmatpush.bf16.msra.mxu0 %v8561
    %8895 = vmatpush.bf16.msra.mxu0 %v8553
    %8896 = vmatpush.bf16.msra.mxu0 %v8545
    %8897 = vmatpush.bf16.msra.mxu0 %v8537
    %8898 = vmatpush.bf16.msra.mxu0 %v8529
    %8899 = vmatpush.bf16.msra.mxu0 %v8521
    %8900 = vmatmul.bf16.gmra.mxu0 %v7668
    %v8901 = vpop.f32.mrf.mxu0
    %v8902 = vadd.f32 %v8889, %v8901
    %v8903 = vpop.f32.mrf.mxu0
    %8904 = vdwg.mxu0
    %8905 = vmatpush.bf16.msra.mxu0 %v8641
    %8906 = vmatpush.bf16.msra.mxu0 %v8633
    %8907 = vmatpush.bf16.msra.mxu0 %v8625
    %8908 = vmatpush.bf16.msra.mxu0 %v8617
    %8909 = vmatpush.bf16.msra.mxu0 %v8609
    %8910 = vmatpush.bf16.msra.mxu0 %v8601
    %8911 = vmatpush.bf16.msra.mxu0 %v8593
    %8912 = vmatpush.bf16.msra.mxu0 %v8585
    %8913 = vmatmul.bf16.gmra.mxu0 %v7669
    %v8914 = vpop.f32.mrf.mxu0
    %v8915 = vadd.f32 %v8902, %v8914
    %v8916 = vpop.f32.mrf.mxu0
    %8917 = vdwg.mxu0
    %8918 = vmatpush.bf16.msra.mxu0 %v8514
    %8919 = vmatpush.bf16.msra.mxu0 %v8506
    %8920 = vmatpush.bf16.msra.mxu0 %v8498
    %8921 = vmatpush.bf16.msra.mxu0 %v8490
    %8922 = vmatpush.bf16.msra.mxu0 %v8482
    %8923 = vmatpush.bf16.msra.mxu0 %v8474
    %8924 = vmatpush.bf16.msra.mxu0 %v8466
    %8925 = vmatpush.bf16.msra.mxu0 %v8458
    %8926 = vmatmul.bf16.gmra.mxu0 %v7667
    %v8927 = vpop.f32.mrf.mxu0
    %v8928 = vadd.f32 %v7866, %v8927
    %v8929 = vpop.f32.mrf.mxu0
    %8930 = vdwg.mxu0
    %8931 = vmatpush.bf16.msra.mxu0 %v8578
    %8932 = vmatpush.bf16.msra.mxu0 %v8570
    %8933 = vmatpush.bf16.msra.mxu0 %v8562
    %8934 = vmatpush.bf16.msra.mxu0 %v8554
    %8935 = vmatpush.bf16.msra.mxu0 %v8546
    %8936 = vmatpush.bf16.msra.mxu0 %v8538
    %8937 = vmatpush.bf16.msra.mxu0 %v8530
    %8938 = vmatpush.bf16.msra.mxu0 %v8522
    %8939 = vmatmul.bf16.gmra.mxu0 %v7668
    %v8940 = vpop.f32.mrf.mxu0
    %v8941 = vadd.f32 %v8928, %v8940
    %v8942 = vpop.f32.mrf.mxu0
    %8943 = vdwg.mxu0
    %8944 = vmatpush.bf16.msra.mxu0 %v8642
    %8945 = vmatpush.bf16.msra.mxu0 %v8634
    %8946 = vmatpush.bf16.msra.mxu0 %v8626
    %8947 = vmatpush.bf16.msra.mxu0 %v8618
    %8948 = vmatpush.bf16.msra.mxu0 %v8610
    %8949 = vmatpush.bf16.msra.mxu0 %v8602
    %8950 = vmatpush.bf16.msra.mxu0 %v8594
    %8951 = vmatpush.bf16.msra.mxu0 %v8586
    %8952 = vmatmul.bf16.gmra.mxu0 %v7669
    %v8953 = vpop.f32.mrf.mxu0
    %v8954 = vadd.f32 %v8941, %v8953
    %v8955 = vpop.f32.mrf.mxu0
    %8956 = vdwg.mxu0
    %8957 = vmatpush.bf16.msra.mxu0 %v8515
    %8958 = vmatpush.bf16.msra.mxu0 %v8507
    %8959 = vmatpush.bf16.msra.mxu0 %v8499
    %8960 = vmatpush.bf16.msra.mxu0 %v8491
    %8961 = vmatpush.bf16.msra.mxu0 %v8483
    %8962 = vmatpush.bf16.msra.mxu0 %v8475
    %8963 = vmatpush.bf16.msra.mxu0 %v8467
    %8964 = vmatpush.bf16.msra.mxu0 %v8459
    %8965 = vmatmul.bf16.gmra.mxu0 %v7667
    %v8966 = vpop.f32.mrf.mxu0
    %v8967 = vadd.f32 %v7867, %v8966
    %v8968 = vpop.f32.mrf.mxu0
    %8969 = vdwg.mxu0
    %8970 = vmatpush.bf16.msra.mxu0 %v8579
    %8971 = vmatpush.bf16.msra.mxu0 %v8571
    %8972 = vmatpush.bf16.msra.mxu0 %v8563
    %8973 = vmatpush.bf16.msra.mxu0 %v8555
    %8974 = vmatpush.bf16.msra.mxu0 %v8547
    %8975 = vmatpush.bf16.msra.mxu0 %v8539
    %8976 = vmatpush.bf16.msra.mxu0 %v8531
    %8977 = vmatpush.bf16.msra.mxu0 %v8523
    %8978 = vmatmul.bf16.gmra.mxu0 %v7668
    %v8979 = vpop.f32.mrf.mxu0
    %v8980 = vadd.f32 %v8967, %v8979
    %v8981 = vpop.f32.mrf.mxu0
    %8982 = vdwg.mxu0
    %8983 = vmatpush.bf16.msra.mxu0 %v8643
    %8984 = vmatpush.bf16.msra.mxu0 %v8635
    %8985 = vmatpush.bf16.msra.mxu0 %v8627
    %8986 = vmatpush.bf16.msra.mxu0 %v8619
    %8987 = vmatpush.bf16.msra.mxu0 %v8611
    %8988 = vmatpush.bf16.msra.mxu0 %v8603
    %8989 = vmatpush.bf16.msra.mxu0 %v8595
    %8990 = vmatpush.bf16.msra.mxu0 %v8587
    %8991 = vmatmul.bf16.gmra.mxu0 %v7669
    %v8992 = vpop.f32.mrf.mxu0
    %v8993 = vadd.f32 %v8980, %v8992
    %v8994 = vpop.f32.mrf.mxu0
    %8995 = vdwg.mxu0
    %8996 = vmatpush.bf16.msra.mxu0 %v8516
    %8997 = vmatpush.bf16.msra.mxu0 %v8508
    %8998 = vmatpush.bf16.msra.mxu0 %v8500
    %8999 = vmatpush.bf16.msra.mxu0 %v8492
    %9000 = vmatpush.bf16.msra.mxu0 %v8484
    %9001 = vmatpush.bf16.msra.mxu0 %v8476
    %9002 = vmatpush.bf16.msra.mxu0 %v8468
    %9003 = vmatpush.bf16.msra.mxu0 %v8460
    %9004 = vmatmul.bf16.gmra.mxu0 %v7667
    %v9005 = vpop.f32.mrf.mxu0
    %v9006 = vadd.f32 %v7868, %v9005
    %v9007 = vpop.f32.mrf.mxu0
    %9008 = vdwg.mxu0
    %9009 = vmatpush.bf16.msra.mxu0 %v8580
    %9010 = vmatpush.bf16.msra.mxu0 %v8572
    %9011 = vmatpush.bf16.msra.mxu0 %v8564
    %9012 = vmatpush.bf16.msra.mxu0 %v8556
    %9013 = vmatpush.bf16.msra.mxu0 %v8548
    %9014 = vmatpush.bf16.msra.mxu0 %v8540
    %9015 = vmatpush.bf16.msra.mxu0 %v8532
    %9016 = vmatpush.bf16.msra.mxu0 %v8524
    %9017 = vmatmul.bf16.gmra.mxu0 %v7668
    %v9018 = vpop.f32.mrf.mxu0
    %v9019 = vadd.f32 %v9006, %v9018
    %v9020 = vpop.f32.mrf.mxu0
    %9021 = vdwg.mxu0
    %9022 = vmatpush.bf16.msra.mxu0 %v8644
    %9023 = vmatpush.bf16.msra.mxu0 %v8636
    %9024 = vmatpush.bf16.msra.mxu0 %v8628
    %9025 = vmatpush.bf16.msra.mxu0 %v8620
    %9026 = vmatpush.bf16.msra.mxu0 %v8612
    %9027 = vmatpush.bf16.msra.mxu0 %v8604
    %9028 = vmatpush.bf16.msra.mxu0 %v8596
    %9029 = vmatpush.bf16.msra.mxu0 %v8588
    %9030 = vmatmul.bf16.gmra.mxu0 %v7669
    %v9031 = vpop.f32.mrf.mxu0
    %v9032 = vadd.f32 %v9019, %v9031
    %v9033 = vpop.f32.mrf.mxu0
    %9034 = vdwg.mxu0
    %9035 = vmatpush.bf16.msra.mxu0 %v8517
    %9036 = vmatpush.bf16.msra.mxu0 %v8509
    %9037 = vmatpush.bf16.msra.mxu0 %v8501
    %9038 = vmatpush.bf16.msra.mxu0 %v8493
    %9039 = vmatpush.bf16.msra.mxu0 %v8485
    %9040 = vmatpush.bf16.msra.mxu0 %v8477
    %9041 = vmatpush.bf16.msra.mxu0 %v8469
    %9042 = vmatpush.bf16.msra.mxu0 %v8461
    %9043 = vmatmul.bf16.gmra.mxu0 %v7667
    %v9044 = vpop.f32.mrf.mxu0
    %v9045 = vadd.f32 %v7869, %v9044
    %v9046 = vpop.f32.mrf.mxu0
    %9047 = vdwg.mxu0
    %9048 = vmatpush.bf16.msra.mxu0 %v8581
    %9049 = vmatpush.bf16.msra.mxu0 %v8573
    %9050 = vmatpush.bf16.msra.mxu0 %v8565
    %9051 = vmatpush.bf16.msra.mxu0 %v8557
    %9052 = vmatpush.bf16.msra.mxu0 %v8549
    %9053 = vmatpush.bf16.msra.mxu0 %v8541
    %9054 = vmatpush.bf16.msra.mxu0 %v8533
    %9055 = vmatpush.bf16.msra.mxu0 %v8525
    %9056 = vmatmul.bf16.gmra.mxu0 %v7668
    %v9057 = vpop.f32.mrf.mxu0
    %v9058 = vadd.f32 %v9045, %v9057
    %v9059 = vpop.f32.mrf.mxu0
    %9060 = vdwg.mxu0
    %9061 = vmatpush.bf16.msra.mxu0 %v8645
    %9062 = vmatpush.bf16.msra.mxu0 %v8637
    %9063 = vmatpush.bf16.msra.mxu0 %v8629
    %9064 = vmatpush.bf16.msra.mxu0 %v8621
    %9065 = vmatpush.bf16.msra.mxu0 %v8613
    %9066 = vmatpush.bf16.msra.mxu0 %v8605
    %9067 = vmatpush.bf16.msra.mxu0 %v8597
    %9068 = vmatpush.bf16.msra.mxu0 %v8589
    %9069 = vmatmul.bf16.gmra.mxu0 %v7669
    %v9070 = vpop.f32.mrf.mxu0
    %v9071 = vadd.f32 %v9058, %v9070
    %v9072 = vpop.f32.mrf.mxu0
    %9073 = vdwg.mxu0
    %9074 = vmatpush.bf16.msra.mxu0 %v8518
    %9075 = vmatpush.bf16.msra.mxu0 %v8510
    %9076 = vmatpush.bf16.msra.mxu0 %v8502
    %9077 = vmatpush.bf16.msra.mxu0 %v8494
    %9078 = vmatpush.bf16.msra.mxu0 %v8486
    %9079 = vmatpush.bf16.msra.mxu0 %v8478
    %9080 = vmatpush.bf16.msra.mxu0 %v8470
    %9081 = vmatpush.bf16.msra.mxu0 %v8462
    %9082 = vmatmul.bf16.gmra.mxu0 %v7667
    %v9083 = vpop.f32.mrf.mxu0
    %v9084 = vadd.f32 %v7870, %v9083
    %v9085 = vpop.f32.mrf.mxu0
    %9086 = vdwg.mxu0
    %9087 = vmatpush.bf16.msra.mxu0 %v8582
    %9088 = vmatpush.bf16.msra.mxu0 %v8574
    %9089 = vmatpush.bf16.msra.mxu0 %v8566
    %9090 = vmatpush.bf16.msra.mxu0 %v8558
    %9091 = vmatpush.bf16.msra.mxu0 %v8550
    %9092 = vmatpush.bf16.msra.mxu0 %v8542
    %9093 = vmatpush.bf16.msra.mxu0 %v8534
    %9094 = vmatpush.bf16.msra.mxu0 %v8526
    %9095 = vmatmul.bf16.gmra.mxu0 %v7668
    %v9096 = vpop.f32.mrf.mxu0
    %v9097 = vadd.f32 %v9084, %v9096
    %v9098 = vpop.f32.mrf.mxu0
    %9099 = vdwg.mxu0
    %9100 = vmatpush.bf16.msra.mxu0 %v8646
    %9101 = vmatpush.bf16.msra.mxu0 %v8638
    %9102 = vmatpush.bf16.msra.mxu0 %v8630
    %9103 = vmatpush.bf16.msra.mxu0 %v8622
    %9104 = vmatpush.bf16.msra.mxu0 %v8614
    %9105 = vmatpush.bf16.msra.mxu0 %v8606
    %9106 = vmatpush.bf16.msra.mxu0 %v8598
    %9107 = vmatpush.bf16.msra.mxu0 %v8590
    %9108 = vmatmul.bf16.gmra.mxu0 %v7669
    %v9109 = vpop.f32.mrf.mxu0
    %v9110 = vadd.f32 %v9097, %v9109
    %v9111 = vpop.f32.mrf.mxu0
    %9112 = vdwg.mxu0
    %9113 = vmatpush.bf16.msra.mxu0 %v8519
    %9114 = vmatpush.bf16.msra.mxu0 %v8511
    %9115 = vmatpush.bf16.msra.mxu0 %v8503
    %9116 = vmatpush.bf16.msra.mxu0 %v8495
    %9117 = vmatpush.bf16.msra.mxu0 %v8487
    %9118 = vmatpush.bf16.msra.mxu0 %v8479
    %9119 = vmatpush.bf16.msra.mxu0 %v8471
    %9120 = vmatpush.bf16.msra.mxu0 %v8463
    %9121 = vmatmul.bf16.gmra.mxu0 %v7667
    %v9122 = vpop.f32.mrf.mxu0
    %v9123 = vadd.f32 %v7871, %v9122
    %v9124 = vpop.f32.mrf.mxu0
    %9125 = vdwg.mxu0
    %9126 = vmatpush.bf16.msra.mxu0 %v8583
    %9127 = vmatpush.bf16.msra.mxu0 %v8575
    %9128 = vmatpush.bf16.msra.mxu0 %v8567
    %9129 = vmatpush.bf16.msra.mxu0 %v8559
    %9130 = vmatpush.bf16.msra.mxu0 %v8551
    %9131 = vmatpush.bf16.msra.mxu0 %v8543
    %9132 = vmatpush.bf16.msra.mxu0 %v8535
    %9133 = vmatpush.bf16.msra.mxu0 %v8527
    %9134 = vmatmul.bf16.gmra.mxu0 %v7668
    %v9135 = vpop.f32.mrf.mxu0
    %v9136 = vadd.f32 %v9123, %v9135
    %v9137 = vpop.f32.mrf.mxu0
    %9138 = vdwg.mxu0
    %9139 = vmatpush.bf16.msra.mxu0 %v8647
    %9140 = vmatpush.bf16.msra.mxu0 %v8639
    %9141 = vmatpush.bf16.msra.mxu0 %v8631
    %9142 = vmatpush.bf16.msra.mxu0 %v8623
    %9143 = vmatpush.bf16.msra.mxu0 %v8615
    %9144 = vmatpush.bf16.msra.mxu0 %v8607
    %9145 = vmatpush.bf16.msra.mxu0 %v8599
    %9146 = vmatpush.bf16.msra.mxu0 %v8591
    %9147 = vmatmul.bf16.gmra.mxu0 %v7669
    %v9148 = vpop.f32.mrf.mxu0
    %v9149 = vadd.f32 %v9136, %v9148
    %v9150 = vpop.f32.mrf.mxu0
    %9151 = vdwg.mxu0
    %v9152 = vmax.f32 %v8876, 0.0
    %v9153 = vmax.f32 %v8915, 0.0
    %v9154 = vmax.f32 %v8954, 0.0
    %v9155 = vmax.f32 %v8993, 0.0
    %v9156 = vmax.f32 %v9032, 0.0
    %v9157 = vmax.f32 %v9071, 0.0
    %v9158 = vmax.f32 %v9110, 0.0
    %v9159 = vmax.f32 %v9149, 0.0
    %v9160 = vpack.c.bf16 %v9152, %v9152
    %v9161 = vpack.c.bf16 %v9153, %v9153
    %v9162 = vpack.c.bf16 %v9154, %v9154
    %v9163 = vpack.c.bf16 %v9155, %v9155
    %v9164 = vpack.c.bf16 %v9156, %v9156
    %v9165 = vpack.c.bf16 %v9157, %v9157
    %v9166 = vpack.c.bf16 %v9158, %v9158
    %v9167 = vpack.c.bf16 %v9159, %v9159
    %v9168 = vld [vmem:[#allocation25] sm:$0xff]
    %v9169 = vld [vmem:[#allocation25 + $0x8] sm:$0xf]
    %v9170 = vld [vmem:[#allocation25 + $0xc] sm:$0xff]
    %v9171 = vld [vmem:[#allocation25 + $0x14] sm:$0xf]
    %v9172 = vld [vmem:[#allocation25 + $0x18] sm:$0xff]
    %v9173 = vld [vmem:[#allocation25 + $0x20] sm:$0xf]
    %v9174 = vld [vmem:[#allocation25 + $0x24] sm:$0xff]
    %v9175 = vld [vmem:[#allocation25 + $0x2c] sm:$0xf]
    %v9176 = vld [vmem:[#allocation25 + $0x30] sm:$0xff]
    %v9177 = vld [vmem:[#allocation25 + $0x38] sm:$0xf]
    %v9178 = vld [vmem:[#allocation25 + $0x3c] sm:$0xff]
    %v9179 = vld [vmem:[#allocation25 + $0x44] sm:$0xf]
    %v9180 = vld [vmem:[#allocation25 + $0x48] sm:$0xff]
    %v9181 = vld [vmem:[#allocation25 + $0x50] sm:$0xf]
    %v9182 = vld [vmem:[#allocation25 + $0x54] sm:$0xff]
    %v9183 = vld [vmem:[#allocation25 + $0x5c] sm:$0xf]
    %v9184 = vld [vmem:[#allocation25 + $0x60] sm:$0xff]
    %v9185 = vld [vmem:[#allocation25 + $0x68] sm:$0xf]
    %v9186 = vld [vmem:[#allocation25 + $0x6c] sm:$0xff]
    %v9187 = vld [vmem:[#allocation25 + $0x74] sm:$0xf]
    %v9188 = vld [vmem:[#allocation25 + $0x78] sm:$0xff]
    %v9189 = vld [vmem:[#allocation25 + $0x80] sm:$0xf]
    %v9190 = vld [vmem:[#allocation25 + $0x84] sm:$0xff]
    %v9191 = vld [vmem:[#allocation25 + $0x8c] sm:$0xf]
    %v9192 = vld [vmem:[#allocation25 + $0x90] sm:$0xff]
    %v9193 = vld [vmem:[#allocation25 + $0x98] sm:$0xf]
    %v9194 = vld [vmem:[#allocation25 + $0x9c] sm:$0xff]
    %v9195 = vld [vmem:[#allocation25 + $0xa4] sm:$0xf]
    %v9196 = vld [vmem:[#allocation25 + $0xa8] sm:$0xff]
    %v9197 = vld [vmem:[#allocation25 + $0xb0] sm:$0xf]
    %v9198 = vld [vmem:[#allocation25 + $0xb4] sm:$0xff]
    %v9199 = vld [vmem:[#allocation25 + $0xbc] sm:$0xf]
    %v9200 = vld [vmem:[#allocation25 + $0xc0] sm:$0xff]
    %v9201 = vld [vmem:[#allocation25 + $0xc8] sm:$0xf]
    %v9202 = vld [vmem:[#allocation25 + $0xcc] sm:$0xff]
    %v9203 = vld [vmem:[#allocation25 + $0xd4] sm:$0xf]
    %v9204 = vld [vmem:[#allocation25 + $0xd8] sm:$0xff]
    %v9205 = vld [vmem:[#allocation25 + $0xe0] sm:$0xf]
    %v9206 = vld [vmem:[#allocation25 + $0xe4] sm:$0xff]
    %v9207 = vld [vmem:[#allocation25 + $0xec] sm:$0xf]
    %v9208 = vld [vmem:[#allocation25 + $0xf0] sm:$0xff]
    %v9209 = vld [vmem:[#allocation25 + $0xf8] sm:$0xf]
    %v9210 = vld [vmem:[#allocation25 + $0xfc] sm:$0xff]
    %v9211 = vld [vmem:[#allocation25 + $0x104] sm:$0xf]
    %v9212 = vld [vmem:[#allocation25 + $0x108] sm:$0xff]
    %v9213 = vld [vmem:[#allocation25 + $0x110] sm:$0xf]
    %v9214 = vld [vmem:[#allocation25 + $0x114] sm:$0xff]
    %v9215 = vld [vmem:[#allocation25 + $0x11c] sm:$0xf]
    %v9216 = vld [vmem:[#allocation25 + $0x120] sm:$0xff]
    %v9217 = vld [vmem:[#allocation25 + $0x128] sm:$0xf]
    %v9218 = vld [vmem:[#allocation25 + $0x12c] sm:$0xff]
    %v9219 = vld [vmem:[#allocation25 + $0x134] sm:$0xf]
    %v9220 = vld [vmem:[#allocation25 + $0x138] sm:$0xff]
    %v9221 = vld [vmem:[#allocation25 + $0x140] sm:$0xf]
    %v9222 = vld [vmem:[#allocation25 + $0x144] sm:$0xff]
    %v9223 = vld [vmem:[#allocation25 + $0x14c] sm:$0xf]
    %v9224 = vld [vmem:[#allocation25 + $0x150] sm:$0xff]
    %v9225 = vld [vmem:[#allocation25 + $0x158] sm:$0xf]
    %v9226 = vld [vmem:[#allocation25 + $0x15c] sm:$0xff]
    %v9227 = vld [vmem:[#allocation25 + $0x164] sm:$0xf]
    %v9228 = vld [vmem:[#allocation25 + $0x168] sm:$0xff]
    %v9229 = vld [vmem:[#allocation25 + $0x170] sm:$0xf]
    %v9230 = vld [vmem:[#allocation25 + $0x174] sm:$0xff]
    %v9231 = vld [vmem:[#allocation25 + $0x17c] sm:$0xf]
    %v9232 = vld [vmem:[#allocation25 + $0x180] sm:$0xff]
    %v9233 = vld [vmem:[#allocation25 + $0x188] sm:$0xf]
    %v9234 = vld [vmem:[#allocation25 + $0x18c] sm:$0xff]
    %v9235 = vld [vmem:[#allocation25 + $0x194] sm:$0xf]
    %v9236 = vld [vmem:[#allocation25 + $0x198] sm:$0xff]
    %v9237 = vld [vmem:[#allocation25 + $0x1a0] sm:$0xf]
    %v9238 = vld [vmem:[#allocation25 + $0x1a4] sm:$0xff]
    %v9239 = vld [vmem:[#allocation25 + $0x1ac] sm:$0xf]
    %v9240 = vld [vmem:[#allocation25 + $0x1b0] sm:$0xff]
    %v9241 = vld [vmem:[#allocation25 + $0x1b8] sm:$0xf]
    %v9242 = vld [vmem:[#allocation25 + $0x1bc] sm:$0xff]
    %v9243 = vld [vmem:[#allocation25 + $0x1c4] sm:$0xf]
    %v9244 = vld [vmem:[#allocation25 + $0x1c8] sm:$0xff]
    %v9245 = vld [vmem:[#allocation25 + $0x1d0] sm:$0xf]
    %v9246 = vld [vmem:[#allocation25 + $0x1d4] sm:$0xff]
    %v9247 = vld [vmem:[#allocation25 + $0x1dc] sm:$0xf]
    %v9248 = vld [vmem:[#allocation25 + $0x1e0] sm:$0xff]
    %v9249 = vld [vmem:[#allocation25 + $0x1e8] sm:$0xf]
    %v9250 = vld [vmem:[#allocation25 + $0x1ec] sm:$0xff]
    %v9251 = vld [vmem:[#allocation25 + $0x1f4] sm:$0xf]
    %v9252 = vld [vmem:[#allocation25 + $0x1f8] sm:$0xff]
    %v9253 = vld [vmem:[#allocation25 + $0x200] sm:$0xf]
    %v9254 = vld [vmem:[#allocation25 + $0x204] sm:$0xff]
    %v9255 = vld [vmem:[#allocation25 + $0x20c] sm:$0xf]
    %v9256 = vld [vmem:[#allocation25 + $0x210] sm:$0xff]
    %v9257 = vld [vmem:[#allocation25 + $0x218] sm:$0xf]
    %v9258 = vld [vmem:[#allocation25 + $0x21c] sm:$0xff]
    %v9259 = vld [vmem:[#allocation25 + $0x224] sm:$0xf]
    %v9260 = vld [vmem:[#allocation25 + $0x228] sm:$0xff]
    %v9261 = vld [vmem:[#allocation25 + $0x230] sm:$0xf]
    %v9262 = vld [vmem:[#allocation25 + $0x234] sm:$0xff]
    %v9263 = vld [vmem:[#allocation25 + $0x23c] sm:$0xf]
    %v9264 = vld [vmem:[#allocation25 + $0x240] sm:$0xff]
    %v9265 = vld [vmem:[#allocation25 + $0x248] sm:$0xf]
    %v9266 = vld [vmem:[#allocation25 + $0x24c] sm:$0xff]
    %v9267 = vld [vmem:[#allocation25 + $0x254] sm:$0xf]
    %v9268 = vld [vmem:[#allocation25 + $0x258] sm:$0xff]
    %v9269 = vld [vmem:[#allocation25 + $0x260] sm:$0xf]
    %v9270 = vld [vmem:[#allocation25 + $0x264] sm:$0xff]
    %v9271 = vld [vmem:[#allocation25 + $0x26c] sm:$0xf]
    %v9272 = vld [vmem:[#allocation25 + $0x270] sm:$0xff]
    %v9273 = vld [vmem:[#allocation25 + $0x278] sm:$0xf]
    %v9274 = vld [vmem:[#allocation25 + $0x27c] sm:$0xff]
    %v9275 = vld [vmem:[#allocation25 + $0x284] sm:$0xf]
    %v9276 = vld [vmem:[#allocation25 + $0x288] sm:$0xff]
    %v9277 = vld [vmem:[#allocation25 + $0x290] sm:$0xf]
    %v9278 = vld [vmem:[#allocation25 + $0x294] sm:$0xff]
    %v9279 = vld [vmem:[#allocation25 + $0x29c] sm:$0xf]
    %v9280 = vld [vmem:[#allocation25 + $0x2a0] sm:$0xff]
    %v9281 = vld [vmem:[#allocation25 + $0x2a8] sm:$0xf]
    %v9282 = vld [vmem:[#allocation25 + $0x2ac] sm:$0xff]
    %v9283 = vld [vmem:[#allocation25 + $0x2b4] sm:$0xf]
    %v9284 = vld [vmem:[#allocation25 + $0x2b8] sm:$0xff]
    %v9285 = vld [vmem:[#allocation25 + $0x2c0] sm:$0xf]
    %v9286 = vld [vmem:[#allocation25 + $0x2c4] sm:$0xff]
    %v9287 = vld [vmem:[#allocation25 + $0x2cc] sm:$0xf]
    %v9288 = vld [vmem:[#allocation25 + $0x2d0] sm:$0xff]
    %v9289 = vld [vmem:[#allocation25 + $0x2d8] sm:$0xf]
    %v9290 = vld [vmem:[#allocation25 + $0x2dc] sm:$0xff]
    %v9291 = vld [vmem:[#allocation25 + $0x2e4] sm:$0xf]
    %v9292 = vld [vmem:[#allocation25 + $0x2e8] sm:$0xff]
    %v9293 = vld [vmem:[#allocation25 + $0x2f0] sm:$0xf]
    %v9294 = vld [vmem:[#allocation25 + $0x2f4] sm:$0xff]
    %v9295 = vld [vmem:[#allocation25 + $0x2fc] sm:$0xf]
    %v9296 = vld [vmem:[#allocation25 + $0x300] sm:$0xff]
    %v9297 = vld [vmem:[#allocation25 + $0x308] sm:$0xf]
    %v9298 = vld [vmem:[#allocation25 + $0x30c] sm:$0xff]
    %v9299 = vld [vmem:[#allocation25 + $0x314] sm:$0xf]
    %v9300 = vld [vmem:[#allocation25 + $0x318] sm:$0xff]
    %v9301 = vld [vmem:[#allocation25 + $0x320] sm:$0xf]
    %v9302 = vld [vmem:[#allocation25 + $0x324] sm:$0xff]
    %v9303 = vld [vmem:[#allocation25 + $0x32c] sm:$0xf]
    %v9304 = vld [vmem:[#allocation25 + $0x330] sm:$0xff]
    %v9305 = vld [vmem:[#allocation25 + $0x338] sm:$0xf]
    %v9306 = vld [vmem:[#allocation25 + $0x33c] sm:$0xff]
    %v9307 = vld [vmem:[#allocation25 + $0x344] sm:$0xf]
    %v9308 = vld [vmem:[#allocation25 + $0x348] sm:$0xff]
    %v9309 = vld [vmem:[#allocation25 + $0x350] sm:$0xf]
    %v9310 = vld [vmem:[#allocation25 + $0x354] sm:$0xff]
    %v9311 = vld [vmem:[#allocation25 + $0x35c] sm:$0xf]
    %v9312 = vld [vmem:[#allocation25 + $0x360] sm:$0xff]
    %v9313 = vld [vmem:[#allocation25 + $0x368] sm:$0xf]
    %v9314 = vld [vmem:[#allocation25 + $0x36c] sm:$0xff]
    %v9315 = vld [vmem:[#allocation25 + $0x374] sm:$0xf]
    %v9316 = vld [vmem:[#allocation25 + $0x378] sm:$0xff]
    %v9317 = vld [vmem:[#allocation25 + $0x380] sm:$0xf]
    %v9318 = vld [vmem:[#allocation25 + $0x384] sm:$0xff]
    %v9319 = vld [vmem:[#allocation25 + $0x38c] sm:$0xf]
    %v9320 = vld [vmem:[#allocation25 + $0x390] sm:$0xff]
    %v9321 = vld [vmem:[#allocation25 + $0x398] sm:$0xf]
    %v9322 = vld [vmem:[#allocation25 + $0x39c] sm:$0xff]
    %v9323 = vld [vmem:[#allocation25 + $0x3a4] sm:$0xf]
    %v9324 = vld [vmem:[#allocation25 + $0x3a8] sm:$0xff]
    %v9325 = vld [vmem:[#allocation25 + $0x3b0] sm:$0xf]
    %v9326 = vld [vmem:[#allocation25 + $0x3b4] sm:$0xff]
    %v9327 = vld [vmem:[#allocation25 + $0x3bc] sm:$0xf]
    %v9328 = vld [vmem:[#allocation25 + $0x3c0] sm:$0xff]
    %v9329 = vld [vmem:[#allocation25 + $0x3c8] sm:$0xf]
    %v9330 = vld [vmem:[#allocation25 + $0x3cc] sm:$0xff]
    %v9331 = vld [vmem:[#allocation25 + $0x3d4] sm:$0xf]
    %v9332 = vld [vmem:[#allocation25 + $0x3d8] sm:$0xff]
    %v9333 = vld [vmem:[#allocation25 + $0x3e0] sm:$0xf]
    %v9334 = vld [vmem:[#allocation25 + $0x3e4] sm:$0xff]
    %v9335 = vld [vmem:[#allocation25 + $0x3ec] sm:$0xf]
    %v9336 = vld [vmem:[#allocation25 + $0x3f0] sm:$0xff]
    %v9337 = vld [vmem:[#allocation25 + $0x3f8] sm:$0xf]
    %v9338 = vld [vmem:[#allocation25 + $0x3fc] sm:$0xff]
    %v9339 = vld [vmem:[#allocation25 + $0x404] sm:$0xf]
    %v9340 = vld [vmem:[#allocation25 + $0x408] sm:$0xff]
    %v9341 = vld [vmem:[#allocation25 + $0x410] sm:$0xf]
    %v9342 = vld [vmem:[#allocation25 + $0x414] sm:$0xff]
    %v9343 = vld [vmem:[#allocation25 + $0x41c] sm:$0xf]
    %v9344 = vld [vmem:[#allocation25 + $0x420] sm:$0xff]
    %v9345 = vld [vmem:[#allocation25 + $0x428] sm:$0xf]
    %v9346 = vld [vmem:[#allocation25 + $0x42c] sm:$0xff]
    %v9347 = vld [vmem:[#allocation25 + $0x434] sm:$0xf]
    %v9348 = vld [vmem:[#allocation25 + $0x438] sm:$0xff]
    %v9349 = vld [vmem:[#allocation25 + $0x440] sm:$0xf]
    %v9350 = vld [vmem:[#allocation25 + $0x444] sm:$0xff]
    %v9351 = vld [vmem:[#allocation25 + $0x44c] sm:$0xf]
    %v9352 = vld [vmem:[#allocation25 + $0x450] sm:$0xff]
    %v9353 = vld [vmem:[#allocation25 + $0x458] sm:$0xf]
    %v9354 = vld [vmem:[#allocation25 + $0x45c] sm:$0xff]
    %v9355 = vld [vmem:[#allocation25 + $0x464] sm:$0xf]
    %v9356 = vld [vmem:[#allocation25 + $0x468] sm:$0xff]
    %v9357 = vld [vmem:[#allocation25 + $0x470] sm:$0xf]
    %v9358 = vld [vmem:[#allocation25 + $0x474] sm:$0xff]
    %v9359 = vld [vmem:[#allocation25 + $0x47c] sm:$0xf]
    %v9360 = vld [vmem:[#allocation25 + $0x480] sm:$0xff]
    %v9361 = vld [vmem:[#allocation25 + $0x488] sm:$0xf]
    %v9362 = vld [vmem:[#allocation25 + $0x48c] sm:$0xff]
    %v9363 = vld [vmem:[#allocation25 + $0x494] sm:$0xf]
    %v9364 = vld [vmem:[#allocation25 + $0x498] sm:$0xff]
    %v9365 = vld [vmem:[#allocation25 + $0x4a0] sm:$0xf]
    %v9366 = vld [vmem:[#allocation25 + $0x4a4] sm:$0xff]
    %v9367 = vld [vmem:[#allocation25 + $0x4ac] sm:$0xf]
    %v9368 = vld [vmem:[#allocation25 + $0x4b0] sm:$0xff]
    %v9369 = vld [vmem:[#allocation25 + $0x4b8] sm:$0xf]
    %v9370 = vld [vmem:[#allocation25 + $0x4bc] sm:$0xff]
    %v9371 = vld [vmem:[#allocation25 + $0x4c4] sm:$0xf]
    %v9372 = vld [vmem:[#allocation25 + $0x4c8] sm:$0xff]
    %v9373 = vld [vmem:[#allocation25 + $0x4d0] sm:$0xf]
    %v9374 = vld [vmem:[#allocation25 + $0x4d4] sm:$0xff]
    %v9375 = vld [vmem:[#allocation25 + $0x4dc] sm:$0xf]
    %v9376 = vld [vmem:[#allocation25 + $0x4e0] sm:$0xff]
    %v9377 = vld [vmem:[#allocation25 + $0x4e8] sm:$0xf]
    %v9378 = vld [vmem:[#allocation25 + $0x4ec] sm:$0xff]
    %v9379 = vld [vmem:[#allocation25 + $0x4f4] sm:$0xf]
    %v9380 = vld [vmem:[#allocation25 + $0x4f8] sm:$0xff]
    %v9381 = vld [vmem:[#allocation25 + $0x500] sm:$0xf]
    %v9382 = vld [vmem:[#allocation25 + $0x504] sm:$0xff]
    %v9383 = vld [vmem:[#allocation25 + $0x50c] sm:$0xf]
    %v9384 = vld [vmem:[#allocation25 + $0x510] sm:$0xff]
    %v9385 = vld [vmem:[#allocation25 + $0x518] sm:$0xf]
    %v9386 = vld [vmem:[#allocation25 + $0x51c] sm:$0xff]
    %v9387 = vld [vmem:[#allocation25 + $0x524] sm:$0xf]
    %v9388 = vld [vmem:[#allocation25 + $0x528] sm:$0xff]
    %v9389 = vld [vmem:[#allocation25 + $0x530] sm:$0xf]
    %v9390 = vld [vmem:[#allocation25 + $0x534] sm:$0xff]
    %v9391 = vld [vmem:[#allocation25 + $0x53c] sm:$0xf]
    %v9392 = vld [vmem:[#allocation25 + $0x540] sm:$0xff]
    %v9393 = vld [vmem:[#allocation25 + $0x548] sm:$0xf]
    %v9394 = vld [vmem:[#allocation25 + $0x54c] sm:$0xff]
    %v9395 = vld [vmem:[#allocation25 + $0x554] sm:$0xf]
    %v9396 = vld [vmem:[#allocation25 + $0x558] sm:$0xff]
    %v9397 = vld [vmem:[#allocation25 + $0x560] sm:$0xf]
    %v9398 = vld [vmem:[#allocation25 + $0x564] sm:$0xff]
    %v9399 = vld [vmem:[#allocation25 + $0x56c] sm:$0xf]
    %v9400 = vld [vmem:[#allocation25 + $0x570] sm:$0xff]
    %v9401 = vld [vmem:[#allocation25 + $0x578] sm:$0xf]
    %v9402 = vld [vmem:[#allocation25 + $0x57c] sm:$0xff]
    %v9403 = vld [vmem:[#allocation25 + $0x584] sm:$0xf]
    %v9404 = vld [vmem:[#allocation25 + $0x588] sm:$0xff]
    %v9405 = vld [vmem:[#allocation25 + $0x590] sm:$0xf]
    %v9406 = vld [vmem:[#allocation25 + $0x594] sm:$0xff]
    %v9407 = vld [vmem:[#allocation25 + $0x59c] sm:$0xf]
    %v9408 = vld [vmem:[#allocation25 + $0x5a0] sm:$0xff]
    %v9409 = vld [vmem:[#allocation25 + $0x5a8] sm:$0xf]
    %v9410 = vld [vmem:[#allocation25 + $0x5ac] sm:$0xff]
    %v9411 = vld [vmem:[#allocation25 + $0x5b4] sm:$0xf]
    %v9412 = vld [vmem:[#allocation25 + $0x5b8] sm:$0xff]
    %v9413 = vld [vmem:[#allocation25 + $0x5c0] sm:$0xf]
    %v9414 = vld [vmem:[#allocation25 + $0x5c4] sm:$0xff]
    %v9415 = vld [vmem:[#allocation25 + $0x5cc] sm:$0xf]
    %v9416 = vld [vmem:[#allocation25 + $0x5d0] sm:$0xff]
    %v9417 = vld [vmem:[#allocation25 + $0x5d8] sm:$0xf]
    %v9418 = vld [vmem:[#allocation25 + $0x5dc] sm:$0xff]
    %v9419 = vld [vmem:[#allocation25 + $0x5e4] sm:$0xf]
    %v9420 = vld [vmem:[#allocation25 + $0x5e8] sm:$0xff]
    %v9421 = vld [vmem:[#allocation25 + $0x5f0] sm:$0xf]
    %v9422 = vld [vmem:[#allocation25 + $0x5f4] sm:$0xff]
    %v9423 = vld [vmem:[#allocation25 + $0x5fc] sm:$0xf]
    %v9424 = vld [vmem:[#allocation26] sm:$0x7]
    %v9426 = vperm.slane %v9424, 0
    %v9427 = vperm.slane %v9424, 1
    %v9428 = vperm.slane %v9424, 2
    %v9688 = vunpack.c.l.b16 %v9168
    %v9689 = vunpack.c.h.b16 %v9168
    %v9690 = vunpack.c.l.b16 %v9169
    %v9691 = vunpack.c.l.b16 %v9170
    %v9692 = vunpack.c.h.b16 %v9170
    %v9693 = vunpack.c.l.b16 %v9171
    %v9694 = vunpack.c.l.b16 %v9172
    %v9695 = vunpack.c.h.b16 %v9172
    %v9696 = vunpack.c.l.b16 %v9173
    %v9697 = vunpack.c.l.b16 %v9174
    %v9698 = vunpack.c.h.b16 %v9174
    %v9699 = vunpack.c.l.b16 %v9175
    %v9700 = vunpack.c.l.b16 %v9176
    %v9701 = vunpack.c.h.b16 %v9176
    %v9702 = vunpack.c.l.b16 %v9177
    %v9703 = vunpack.c.l.b16 %v9178
    %v9704 = vunpack.c.h.b16 %v9178
    %v9705 = vunpack.c.l.b16 %v9179
    %v9706 = vunpack.c.l.b16 %v9180
    %v9707 = vunpack.c.h.b16 %v9180
    %v9708 = vunpack.c.l.b16 %v9181
    %v9709 = vunpack.c.l.b16 %v9182
    %v9710 = vunpack.c.h.b16 %v9182
    %v9711 = vunpack.c.l.b16 %v9183
    %v9712 = vunpack.c.l.b16 %v9184
    %v9713 = vunpack.c.h.b16 %v9184
    %v9714 = vunpack.c.l.b16 %v9185
    %v9715 = vunpack.c.l.b16 %v9186
    %v9716 = vunpack.c.h.b16 %v9186
    %v9717 = vunpack.c.l.b16 %v9187
    %v9718 = vunpack.c.l.b16 %v9188
    %v9719 = vunpack.c.h.b16 %v9188
    %v9720 = vunpack.c.l.b16 %v9189
    %v9721 = vunpack.c.l.b16 %v9190
    %v9722 = vunpack.c.h.b16 %v9190
    %v9723 = vunpack.c.l.b16 %v9191
    %v9724 = vunpack.c.l.b16 %v9192
    %v9725 = vunpack.c.h.b16 %v9192
    %v9726 = vunpack.c.l.b16 %v9193
    %v9727 = vunpack.c.l.b16 %v9194
    %v9728 = vunpack.c.h.b16 %v9194
    %v9729 = vunpack.c.l.b16 %v9195
    %v9730 = vunpack.c.l.b16 %v9196
    %v9731 = vunpack.c.h.b16 %v9196
    %v9732 = vunpack.c.l.b16 %v9197
    %v9733 = vunpack.c.l.b16 %v9198
    %v9734 = vunpack.c.h.b16 %v9198
    %v9735 = vunpack.c.l.b16 %v9199
    %v9736 = vunpack.c.l.b16 %v9200
    %v9737 = vunpack.c.h.b16 %v9200
    %v9738 = vunpack.c.l.b16 %v9201
    %v9739 = vunpack.c.l.b16 %v9202
    %v9740 = vunpack.c.h.b16 %v9202
    %v9741 = vunpack.c.l.b16 %v9203
    %v9742 = vunpack.c.l.b16 %v9204
    %v9743 = vunpack.c.h.b16 %v9204
    %v9744 = vunpack.c.l.b16 %v9205
    %v9745 = vunpack.c.l.b16 %v9206
    %v9746 = vunpack.c.h.b16 %v9206
    %v9747 = vunpack.c.l.b16 %v9207
    %v9748 = vunpack.c.l.b16 %v9208
    %v9749 = vunpack.c.h.b16 %v9208
    %v9750 = vunpack.c.l.b16 %v9209
    %v9751 = vunpack.c.l.b16 %v9210
    %v9752 = vunpack.c.h.b16 %v9210
    %v9753 = vunpack.c.l.b16 %v9211
    %v9754 = vunpack.c.l.b16 %v9212
    %v9755 = vunpack.c.h.b16 %v9212
    %v9756 = vunpack.c.l.b16 %v9213
    %v9757 = vunpack.c.l.b16 %v9214
    %v9758 = vunpack.c.h.b16 %v9214
    %v9759 = vunpack.c.l.b16 %v9215
    %v9760 = vunpack.c.l.b16 %v9216
    %v9761 = vunpack.c.h.b16 %v9216
    %v9762 = vunpack.c.l.b16 %v9217
    %v9763 = vunpack.c.l.b16 %v9218
    %v9764 = vunpack.c.h.b16 %v9218
    %v9765 = vunpack.c.l.b16 %v9219
    %v9766 = vunpack.c.l.b16 %v9220
    %v9767 = vunpack.c.h.b16 %v9220
    %v9768 = vunpack.c.l.b16 %v9221
    %v9769 = vunpack.c.l.b16 %v9222
    %v9770 = vunpack.c.h.b16 %v9222
    %v9771 = vunpack.c.l.b16 %v9223
    %v9772 = vunpack.c.l.b16 %v9224
    %v9773 = vunpack.c.h.b16 %v9224
    %v9774 = vunpack.c.l.b16 %v9225
    %v9775 = vunpack.c.l.b16 %v9226
    %v9776 = vunpack.c.h.b16 %v9226
    %v9777 = vunpack.c.l.b16 %v9227
    %v9778 = vunpack.c.l.b16 %v9228
    %v9779 = vunpack.c.h.b16 %v9228
    %v9780 = vunpack.c.l.b16 %v9229
    %v9781 = vunpack.c.l.b16 %v9230
    %v9782 = vunpack.c.h.b16 %v9230
    %v9783 = vunpack.c.l.b16 %v9231
    %v9784 = vunpack.c.l.b16 %v9232
    %v9785 = vunpack.c.h.b16 %v9232
    %v9786 = vunpack.c.l.b16 %v9233
    %v9787 = vunpack.c.l.b16 %v9234
    %v9788 = vunpack.c.h.b16 %v9234
    %v9789 = vunpack.c.l.b16 %v9235
    %v9790 = vunpack.c.l.b16 %v9236
    %v9791 = vunpack.c.h.b16 %v9236
    %v9792 = vunpack.c.l.b16 %v9237
    %v9793 = vunpack.c.l.b16 %v9238
    %v9794 = vunpack.c.h.b16 %v9238
    %v9795 = vunpack.c.l.b16 %v9239
    %v9796 = vunpack.c.l.b16 %v9240
    %v9797 = vunpack.c.h.b16 %v9240
    %v9798 = vunpack.c.l.b16 %v9241
    %v9799 = vunpack.c.l.b16 %v9242
    %v9800 = vunpack.c.h.b16 %v9242
    %v9801 = vunpack.c.l.b16 %v9243
    %v9802 = vunpack.c.l.b16 %v9244
    %v9803 = vunpack.c.h.b16 %v9244
    %v9804 = vunpack.c.l.b16 %v9245
    %v9805 = vunpack.c.l.b16 %v9246
    %v9806 = vunpack.c.h.b16 %v9246
    %v9807 = vunpack.c.l.b16 %v9247
    %v9808 = vunpack.c.l.b16 %v9248
    %v9809 = vunpack.c.h.b16 %v9248
    %v9810 = vunpack.c.l.b16 %v9249
    %v9811 = vunpack.c.l.b16 %v9250
    %v9812 = vunpack.c.h.b16 %v9250
    %v9813 = vunpack.c.l.b16 %v9251
    %v9814 = vunpack.c.l.b16 %v9252
    %v9815 = vunpack.c.h.b16 %v9252
    %v9816 = vunpack.c.l.b16 %v9253
    %v9817 = vunpack.c.l.b16 %v9254
    %v9818 = vunpack.c.h.b16 %v9254
    %v9819 = vunpack.c.l.b16 %v9255
    %v9820 = vunpack.c.l.b16 %v9256
    %v9821 = vunpack.c.h.b16 %v9256
    %v9822 = vunpack.c.l.b16 %v9257
    %v9823 = vunpack.c.l.b16 %v9258
    %v9824 = vunpack.c.h.b16 %v9258
    %v9825 = vunpack.c.l.b16 %v9259
    %v9826 = vunpack.c.l.b16 %v9260
    %v9827 = vunpack.c.h.b16 %v9260
    %v9828 = vunpack.c.l.b16 %v9261
    %v9829 = vunpack.c.l.b16 %v9262
    %v9830 = vunpack.c.h.b16 %v9262
    %v9831 = vunpack.c.l.b16 %v9263
    %v9832 = vunpack.c.l.b16 %v9264
    %v9833 = vunpack.c.h.b16 %v9264
    %v9834 = vunpack.c.l.b16 %v9265
    %v9835 = vunpack.c.l.b16 %v9266
    %v9836 = vunpack.c.h.b16 %v9266
    %v9837 = vunpack.c.l.b16 %v9267
    %v9838 = vunpack.c.l.b16 %v9268
    %v9839 = vunpack.c.h.b16 %v9268
    %v9840 = vunpack.c.l.b16 %v9269
    %v9841 = vunpack.c.l.b16 %v9270
    %v9842 = vunpack.c.h.b16 %v9270
    %v9843 = vunpack.c.l.b16 %v9271
    %v9844 = vunpack.c.l.b16 %v9272
    %v9845 = vunpack.c.h.b16 %v9272
    %v9846 = vunpack.c.l.b16 %v9273
    %v9847 = vunpack.c.l.b16 %v9274
    %v9848 = vunpack.c.h.b16 %v9274
    %v9849 = vunpack.c.l.b16 %v9275
    %v9850 = vunpack.c.l.b16 %v9276
    %v9851 = vunpack.c.h.b16 %v9276
    %v9852 = vunpack.c.l.b16 %v9277
    %v9853 = vunpack.c.l.b16 %v9278
    %v9854 = vunpack.c.h.b16 %v9278
    %v9855 = vunpack.c.l.b16 %v9279
    %v9856 = vunpack.c.l.b16 %v9280
    %v9857 = vunpack.c.h.b16 %v9280
    %v9858 = vunpack.c.l.b16 %v9281
    %v9859 = vunpack.c.l.b16 %v9282
    %v9860 = vunpack.c.h.b16 %v9282
    %v9861 = vunpack.c.l.b16 %v9283
    %v9862 = vunpack.c.l.b16 %v9284
    %v9863 = vunpack.c.h.b16 %v9284
    %v9864 = vunpack.c.l.b16 %v9285
    %v9865 = vunpack.c.l.b16 %v9286
    %v9866 = vunpack.c.h.b16 %v9286
    %v9867 = vunpack.c.l.b16 %v9287
    %v9868 = vunpack.c.l.b16 %v9288
    %v9869 = vunpack.c.h.b16 %v9288
    %v9870 = vunpack.c.l.b16 %v9289
    %v9871 = vunpack.c.l.b16 %v9290
    %v9872 = vunpack.c.h.b16 %v9290
    %v9873 = vunpack.c.l.b16 %v9291
    %v9874 = vunpack.c.l.b16 %v9292
    %v9875 = vunpack.c.h.b16 %v9292
    %v9876 = vunpack.c.l.b16 %v9293
    %v9877 = vunpack.c.l.b16 %v9294
    %v9878 = vunpack.c.h.b16 %v9294
    %v9879 = vunpack.c.l.b16 %v9295
    %v9880 = vunpack.c.l.b16 %v9296
    %v9881 = vunpack.c.h.b16 %v9296
    %v9882 = vunpack.c.l.b16 %v9297
    %v9883 = vunpack.c.l.b16 %v9298
    %v9884 = vunpack.c.h.b16 %v9298
    %v9885 = vunpack.c.l.b16 %v9299
    %v9886 = vunpack.c.l.b16 %v9300
    %v9887 = vunpack.c.h.b16 %v9300
    %v9888 = vunpack.c.l.b16 %v9301
    %v9889 = vunpack.c.l.b16 %v9302
    %v9890 = vunpack.c.h.b16 %v9302
    %v9891 = vunpack.c.l.b16 %v9303
    %v9892 = vunpack.c.l.b16 %v9304
    %v9893 = vunpack.c.h.b16 %v9304
    %v9894 = vunpack.c.l.b16 %v9305
    %v9895 = vunpack.c.l.b16 %v9306
    %v9896 = vunpack.c.h.b16 %v9306
    %v9897 = vunpack.c.l.b16 %v9307
    %v9898 = vunpack.c.l.b16 %v9308
    %v9899 = vunpack.c.h.b16 %v9308
    %v9900 = vunpack.c.l.b16 %v9309
    %v9901 = vunpack.c.l.b16 %v9310
    %v9902 = vunpack.c.h.b16 %v9310
    %v9903 = vunpack.c.l.b16 %v9311
    %v9904 = vunpack.c.l.b16 %v9312
    %v9905 = vunpack.c.h.b16 %v9312
    %v9906 = vunpack.c.l.b16 %v9313
    %v9907 = vunpack.c.l.b16 %v9314
    %v9908 = vunpack.c.h.b16 %v9314
    %v9909 = vunpack.c.l.b16 %v9315
    %v9910 = vunpack.c.l.b16 %v9316
    %v9911 = vunpack.c.h.b16 %v9316
    %v9912 = vunpack.c.l.b16 %v9317
    %v9913 = vunpack.c.l.b16 %v9318
    %v9914 = vunpack.c.h.b16 %v9318
    %v9915 = vunpack.c.l.b16 %v9319
    %v9916 = vunpack.c.l.b16 %v9320
    %v9917 = vunpack.c.h.b16 %v9320
    %v9918 = vunpack.c.l.b16 %v9321
    %v9919 = vunpack.c.l.b16 %v9322
    %v9920 = vunpack.c.h.b16 %v9322
    %v9921 = vunpack.c.l.b16 %v9323
    %v9922 = vunpack.c.l.b16 %v9324
    %v9923 = vunpack.c.h.b16 %v9324
    %v9924 = vunpack.c.l.b16 %v9325
    %v9925 = vunpack.c.l.b16 %v9326
    %v9926 = vunpack.c.h.b16 %v9326
    %v9927 = vunpack.c.l.b16 %v9327
    %v9928 = vunpack.c.l.b16 %v9328
    %v9929 = vunpack.c.h.b16 %v9328
    %v9930 = vunpack.c.l.b16 %v9329
    %v9931 = vunpack.c.l.b16 %v9330
    %v9932 = vunpack.c.h.b16 %v9330
    %v9933 = vunpack.c.l.b16 %v9331
    %v9934 = vunpack.c.l.b16 %v9332
    %v9935 = vunpack.c.h.b16 %v9332
    %v9936 = vunpack.c.l.b16 %v9333
    %v9937 = vunpack.c.l.b16 %v9334
    %v9938 = vunpack.c.h.b16 %v9334
    %v9939 = vunpack.c.l.b16 %v9335
    %v9940 = vunpack.c.l.b16 %v9336
    %v9941 = vunpack.c.h.b16 %v9336
    %v9942 = vunpack.c.l.b16 %v9337
    %v9943 = vunpack.c.l.b16 %v9338
    %v9944 = vunpack.c.h.b16 %v9338
    %v9945 = vunpack.c.l.b16 %v9339
    %v9946 = vunpack.c.l.b16 %v9340
    %v9947 = vunpack.c.h.b16 %v9340
    %v9948 = vunpack.c.l.b16 %v9341
    %v9949 = vunpack.c.l.b16 %v9342
    %v9950 = vunpack.c.h.b16 %v9342
    %v9951 = vunpack.c.l.b16 %v9343
    %v9952 = vunpack.c.l.b16 %v9344
    %v9953 = vunpack.c.h.b16 %v9344
    %v9954 = vunpack.c.l.b16 %v9345
    %v9955 = vunpack.c.l.b16 %v9346
    %v9956 = vunpack.c.h.b16 %v9346
    %v9957 = vunpack.c.l.b16 %v9347
    %v9958 = vunpack.c.l.b16 %v9348
    %v9959 = vunpack.c.h.b16 %v9348
    %v9960 = vunpack.c.l.b16 %v9349
    %v9961 = vunpack.c.l.b16 %v9350
    %v9962 = vunpack.c.h.b16 %v9350
    %v9963 = vunpack.c.l.b16 %v9351
    %v9964 = vunpack.c.l.b16 %v9352
    %v9965 = vunpack.c.h.b16 %v9352
    %v9966 = vunpack.c.l.b16 %v9353
    %v9967 = vunpack.c.l.b16 %v9354
    %v9968 = vunpack.c.h.b16 %v9354
    %v9969 = vunpack.c.l.b16 %v9355
    %v9970 = vunpack.c.l.b16 %v9356
    %v9971 = vunpack.c.h.b16 %v9356
    %v9972 = vunpack.c.l.b16 %v9357
    %v9973 = vunpack.c.l.b16 %v9358
    %v9974 = vunpack.c.h.b16 %v9358
    %v9975 = vunpack.c.l.b16 %v9359
    %v9976 = vunpack.c.l.b16 %v9360
    %v9977 = vunpack.c.h.b16 %v9360
    %v9978 = vunpack.c.l.b16 %v9361
    %v9979 = vunpack.c.l.b16 %v9362
    %v9980 = vunpack.c.h.b16 %v9362
    %v9981 = vunpack.c.l.b16 %v9363
    %v9982 = vunpack.c.l.b16 %v9364
    %v9983 = vunpack.c.h.b16 %v9364
    %v9984 = vunpack.c.l.b16 %v9365
    %v9985 = vunpack.c.l.b16 %v9366
    %v9986 = vunpack.c.h.b16 %v9366
    %v9987 = vunpack.c.l.b16 %v9367
    %v9988 = vunpack.c.l.b16 %v9368
    %v9989 = vunpack.c.h.b16 %v9368
    %v9990 = vunpack.c.l.b16 %v9369
    %v9991 = vunpack.c.l.b16 %v9370
    %v9992 = vunpack.c.h.b16 %v9370
    %v9993 = vunpack.c.l.b16 %v9371
    %v9994 = vunpack.c.l.b16 %v9372
    %v9995 = vunpack.c.h.b16 %v9372
    %v9996 = vunpack.c.l.b16 %v9373
    %v9997 = vunpack.c.l.b16 %v9374
    %v9998 = vunpack.c.h.b16 %v9374
    %v9999 = vunpack.c.l.b16 %v9375
    %v10000 = vunpack.c.l.b16 %v9376
    %v10001 = vunpack.c.h.b16 %v9376
    %v10002 = vunpack.c.l.b16 %v9377
    %v10003 = vunpack.c.l.b16 %v9378
    %v10004 = vunpack.c.h.b16 %v9378
    %v10005 = vunpack.c.l.b16 %v9379
    %v10006 = vunpack.c.l.b16 %v9380
    %v10007 = vunpack.c.h.b16 %v9380
    %v10008 = vunpack.c.l.b16 %v9381
    %v10009 = vunpack.c.l.b16 %v9382
    %v10010 = vunpack.c.h.b16 %v9382
    %v10011 = vunpack.c.l.b16 %v9383
    %v10012 = vunpack.c.l.b16 %v9384
    %v10013 = vunpack.c.h.b16 %v9384
    %v10014 = vunpack.c.l.b16 %v9385
    %v10015 = vunpack.c.l.b16 %v9386
    %v10016 = vunpack.c.h.b16 %v9386
    %v10017 = vunpack.c.l.b16 %v9387
    %v10018 = vunpack.c.l.b16 %v9388
    %v10019 = vunpack.c.h.b16 %v9388
    %v10020 = vunpack.c.l.b16 %v9389
    %v10021 = vunpack.c.l.b16 %v9390
    %v10022 = vunpack.c.h.b16 %v9390
    %v10023 = vunpack.c.l.b16 %v9391
    %v10024 = vunpack.c.l.b16 %v9392
    %v10025 = vunpack.c.h.b16 %v9392
    %v10026 = vunpack.c.l.b16 %v9393
    %v10027 = vunpack.c.l.b16 %v9394
    %v10028 = vunpack.c.h.b16 %v9394
    %v10029 = vunpack.c.l.b16 %v9395
    %v10030 = vunpack.c.l.b16 %v9396
    %v10031 = vunpack.c.h.b16 %v9396
    %v10032 = vunpack.c.l.b16 %v9397
    %v10033 = vunpack.c.l.b16 %v9398
    %v10034 = vunpack.c.h.b16 %v9398
    %v10035 = vunpack.c.l.b16 %v9399
    %v10036 = vunpack.c.l.b16 %v9400
    %v10037 = vunpack.c.h.b16 %v9400
    %v10038 = vunpack.c.l.b16 %v9401
    %v10039 = vunpack.c.l.b16 %v9402
    %v10040 = vunpack.c.h.b16 %v9402
    %v10041 = vunpack.c.l.b16 %v9403
    %v10042 = vunpack.c.l.b16 %v9404
    %v10043 = vunpack.c.h.b16 %v9404
    %v10044 = vunpack.c.l.b16 %v9405
    %v10045 = vunpack.c.l.b16 %v9406
    %v10046 = vunpack.c.h.b16 %v9406
    %v10047 = vunpack.c.l.b16 %v9407
    %v10048 = vunpack.c.l.b16 %v9408
    %v10049 = vunpack.c.h.b16 %v9408
    %v10050 = vunpack.c.l.b16 %v9409
    %v10051 = vunpack.c.l.b16 %v9410
    %v10052 = vunpack.c.h.b16 %v9410
    %v10053 = vunpack.c.l.b16 %v9411
    %v10054 = vunpack.c.l.b16 %v9412
    %v10055 = vunpack.c.h.b16 %v9412
    %v10056 = vunpack.c.l.b16 %v9413
    %v10057 = vunpack.c.l.b16 %v9414
    %v10058 = vunpack.c.h.b16 %v9414
    %v10059 = vunpack.c.l.b16 %v9415
    %v10060 = vunpack.c.l.b16 %v9416
    %v10061 = vunpack.c.h.b16 %v9416
    %v10062 = vunpack.c.l.b16 %v9417
    %v10063 = vunpack.c.l.b16 %v9418
    %v10064 = vunpack.c.h.b16 %v9418
    %v10065 = vunpack.c.l.b16 %v9419
    %v10066 = vunpack.c.l.b16 %v9420
    %v10067 = vunpack.c.h.b16 %v9420
    %v10068 = vunpack.c.l.b16 %v9421
    %v10069 = vunpack.c.l.b16 %v9422
    %v10070 = vunpack.c.h.b16 %v9422
    %v10071 = vunpack.c.l.b16 %v9423
    %v10072 = vpack.c.b16 %v9691, %v9688
    %v10073 = vpack.c.b16 %v9692, %v9689
    %v10074 = vpack.c.b16 %v9693, %v9690
    %v10075 = vpack.c.b16 %v9697, %v9694
    %v10076 = vpack.c.b16 %v9698, %v9695
    %v10077 = vpack.c.b16 %v9699, %v9696
    %v10078 = vpack.c.b16 %v9703, %v9700
    %v10079 = vpack.c.b16 %v9704, %v9701
    %v10080 = vpack.c.b16 %v9705, %v9702
    %v10081 = vpack.c.b16 %v9709, %v9706
    %v10082 = vpack.c.b16 %v9710, %v9707
    %v10083 = vpack.c.b16 %v9711, %v9708
    %v10084 = vpack.c.b16 %v9715, %v9712
    %v10085 = vpack.c.b16 %v9716, %v9713
    %v10086 = vpack.c.b16 %v9717, %v9714
    %v10087 = vpack.c.b16 %v9721, %v9718
    %v10088 = vpack.c.b16 %v9722, %v9719
    %v10089 = vpack.c.b16 %v9723, %v9720
    %v10090 = vpack.c.b16 %v9727, %v9724
    %v10091 = vpack.c.b16 %v9728, %v9725
    %v10092 = vpack.c.b16 %v9729, %v9726
    %v10093 = vpack.c.b16 %v9733, %v9730
    %v10094 = vpack.c.b16 %v9734, %v9731
    %v10095 = vpack.c.b16 %v9735, %v9732
    %v10096 = vpack.c.b16 %v9739, %v9736
    %v10097 = vpack.c.b16 %v9740, %v9737
    %v10098 = vpack.c.b16 %v9741, %v9738
    %v10099 = vpack.c.b16 %v9745, %v9742
    %v10100 = vpack.c.b16 %v9746, %v9743
    %v10101 = vpack.c.b16 %v9747, %v9744
    %v10102 = vpack.c.b16 %v9751, %v9748
    %v10103 = vpack.c.b16 %v9752, %v9749
    %v10104 = vpack.c.b16 %v9753, %v9750
    %v10105 = vpack.c.b16 %v9757, %v9754
    %v10106 = vpack.c.b16 %v9758, %v9755
    %v10107 = vpack.c.b16 %v9759, %v9756
    %v10108 = vpack.c.b16 %v9763, %v9760
    %v10109 = vpack.c.b16 %v9764, %v9761
    %v10110 = vpack.c.b16 %v9765, %v9762
    %v10111 = vpack.c.b16 %v9769, %v9766
    %v10112 = vpack.c.b16 %v9770, %v9767
    %v10113 = vpack.c.b16 %v9771, %v9768
    %v10114 = vpack.c.b16 %v9775, %v9772
    %v10115 = vpack.c.b16 %v9776, %v9773
    %v10116 = vpack.c.b16 %v9777, %v9774
    %v10117 = vpack.c.b16 %v9781, %v9778
    %v10118 = vpack.c.b16 %v9782, %v9779
    %v10119 = vpack.c.b16 %v9783, %v9780
    %v10120 = vpack.c.b16 %v9787, %v9784
    %v10121 = vpack.c.b16 %v9788, %v9785
    %v10122 = vpack.c.b16 %v9789, %v9786
    %v10123 = vpack.c.b16 %v9793, %v9790
    %v10124 = vpack.c.b16 %v9794, %v9791
    %v10125 = vpack.c.b16 %v9795, %v9792
    %v10126 = vpack.c.b16 %v9799, %v9796
    %v10127 = vpack.c.b16 %v9800, %v9797
    %v10128 = vpack.c.b16 %v9801, %v9798
    %v10129 = vpack.c.b16 %v9805, %v9802
    %v10130 = vpack.c.b16 %v9806, %v9803
    %v10131 = vpack.c.b16 %v9807, %v9804
    %v10132 = vpack.c.b16 %v9811, %v9808
    %v10133 = vpack.c.b16 %v9812, %v9809
    %v10134 = vpack.c.b16 %v9813, %v9810
    %v10135 = vpack.c.b16 %v9817, %v9814
    %v10136 = vpack.c.b16 %v9818, %v9815
    %v10137 = vpack.c.b16 %v9819, %v9816
    %v10138 = vpack.c.b16 %v9823, %v9820
    %v10139 = vpack.c.b16 %v9824, %v9821
    %v10140 = vpack.c.b16 %v9825, %v9822
    %v10141 = vpack.c.b16 %v9829, %v9826
    %v10142 = vpack.c.b16 %v9830, %v9827
    %v10143 = vpack.c.b16 %v9831, %v9828
    %v10144 = vpack.c.b16 %v9835, %v9832
    %v10145 = vpack.c.b16 %v9836, %v9833
    %v10146 = vpack.c.b16 %v9837, %v9834
    %v10147 = vpack.c.b16 %v9841, %v9838
    %v10148 = vpack.c.b16 %v9842, %v9839
    %v10149 = vpack.c.b16 %v9843, %v9840
    %v10150 = vpack.c.b16 %v9847, %v9844
    %v10151 = vpack.c.b16 %v9848, %v9845
    %v10152 = vpack.c.b16 %v9849, %v9846
    %v10153 = vpack.c.b16 %v9853, %v9850
    %v10154 = vpack.c.b16 %v9854, %v9851
    %v10155 = vpack.c.b16 %v9855, %v9852
    %v10156 = vpack.c.b16 %v9859, %v9856
    %v10157 = vpack.c.b16 %v9860, %v9857
    %v10158 = vpack.c.b16 %v9861, %v9858
    %v10159 = vpack.c.b16 %v9865, %v9862
    %v10160 = vpack.c.b16 %v9866, %v9863
    %v10161 = vpack.c.b16 %v9867, %v9864
    %v10162 = vpack.c.b16 %v9871, %v9868
    %v10163 = vpack.c.b16 %v9872, %v9869
    %v10164 = vpack.c.b16 %v9873, %v9870
    %v10165 = vpack.c.b16 %v9877, %v9874
    %v10166 = vpack.c.b16 %v9878, %v9875
    %v10167 = vpack.c.b16 %v9879, %v9876
    %v10168 = vpack.c.b16 %v9883, %v9880
    %v10169 = vpack.c.b16 %v9884, %v9881
    %v10170 = vpack.c.b16 %v9885, %v9882
    %v10171 = vpack.c.b16 %v9889, %v9886
    %v10172 = vpack.c.b16 %v9890, %v9887
    %v10173 = vpack.c.b16 %v9891, %v9888
    %v10174 = vpack.c.b16 %v9895, %v9892
    %v10175 = vpack.c.b16 %v9896, %v9893
    %v10176 = vpack.c.b16 %v9897, %v9894
    %v10177 = vpack.c.b16 %v9901, %v9898
    %v10178 = vpack.c.b16 %v9902, %v9899
    %v10179 = vpack.c.b16 %v9903, %v9900
    %v10180 = vpack.c.b16 %v9907, %v9904
    %v10181 = vpack.c.b16 %v9908, %v9905
    %v10182 = vpack.c.b16 %v9909, %v9906
    %v10183 = vpack.c.b16 %v9913, %v9910
    %v10184 = vpack.c.b16 %v9914, %v9911
    %v10185 = vpack.c.b16 %v9915, %v9912
    %v10186 = vpack.c.b16 %v9919, %v9916
    %v10187 = vpack.c.b16 %v9920, %v9917
    %v10188 = vpack.c.b16 %v9921, %v9918
    %v10189 = vpack.c.b16 %v9925, %v9922
    %v10190 = vpack.c.b16 %v9926, %v9923
    %v10191 = vpack.c.b16 %v9927, %v9924
    %v10192 = vpack.c.b16 %v9931, %v9928
    %v10193 = vpack.c.b16 %v9932, %v9929
    %v10194 = vpack.c.b16 %v9933, %v9930
    %v10195 = vpack.c.b16 %v9937, %v9934
    %v10196 = vpack.c.b16 %v9938, %v9935
    %v10197 = vpack.c.b16 %v9939, %v9936
    %v10198 = vpack.c.b16 %v9943, %v9940
    %v10199 = vpack.c.b16 %v9944, %v9941
    %v10200 = vpack.c.b16 %v9945, %v9942
    %v10201 = vpack.c.b16 %v9949, %v9946
    %v10202 = vpack.c.b16 %v9950, %v9947
    %v10203 = vpack.c.b16 %v9951, %v9948
    %v10204 = vpack.c.b16 %v9955, %v9952
    %v10205 = vpack.c.b16 %v9956, %v9953
    %v10206 = vpack.c.b16 %v9957, %v9954
    %v10207 = vpack.c.b16 %v9961, %v9958
    %v10208 = vpack.c.b16 %v9962, %v9959
    %v10209 = vpack.c.b16 %v9963, %v9960
    %v10210 = vpack.c.b16 %v9967, %v9964
    %v10211 = vpack.c.b16 %v9968, %v9965
    %v10212 = vpack.c.b16 %v9969, %v9966
    %v10213 = vpack.c.b16 %v9973, %v9970
    %v10214 = vpack.c.b16 %v9974, %v9971
    %v10215 = vpack.c.b16 %v9975, %v9972
    %v10216 = vpack.c.b16 %v9979, %v9976
    %v10217 = vpack.c.b16 %v9980, %v9977
    %v10218 = vpack.c.b16 %v9981, %v9978
    %v10219 = vpack.c.b16 %v9985, %v9982
    %v10220 = vpack.c.b16 %v9986, %v9983
    %v10221 = vpack.c.b16 %v9987, %v9984
    %v10222 = vpack.c.b16 %v9991, %v9988
    %v10223 = vpack.c.b16 %v9992, %v9989
    %v10224 = vpack.c.b16 %v9993, %v9990
    %v10225 = vpack.c.b16 %v9997, %v9994
    %v10226 = vpack.c.b16 %v9998, %v9995
    %v10227 = vpack.c.b16 %v9999, %v9996
    %v10228 = vpack.c.b16 %v10003, %v10000
    %v10229 = vpack.c.b16 %v10004, %v10001
    %v10230 = vpack.c.b16 %v10005, %v10002
    %v10231 = vpack.c.b16 %v10009, %v10006
    %v10232 = vpack.c.b16 %v10010, %v10007
    %v10233 = vpack.c.b16 %v10011, %v10008
    %v10234 = vpack.c.b16 %v10015, %v10012
    %v10235 = vpack.c.b16 %v10016, %v10013
    %v10236 = vpack.c.b16 %v10017, %v10014
    %v10237 = vpack.c.b16 %v10021, %v10018
    %v10238 = vpack.c.b16 %v10022, %v10019
    %v10239 = vpack.c.b16 %v10023, %v10020
    %v10240 = vpack.c.b16 %v10027, %v10024
    %v10241 = vpack.c.b16 %v10028, %v10025
    %v10242 = vpack.c.b16 %v10029, %v10026
    %v10243 = vpack.c.b16 %v10033, %v10030
    %v10244 = vpack.c.b16 %v10034, %v10031
    %v10245 = vpack.c.b16 %v10035, %v10032
    %v10246 = vpack.c.b16 %v10039, %v10036
    %v10247 = vpack.c.b16 %v10040, %v10037
    %v10248 = vpack.c.b16 %v10041, %v10038
    %v10249 = vpack.c.b16 %v10045, %v10042
    %v10250 = vpack.c.b16 %v10046, %v10043
    %v10251 = vpack.c.b16 %v10047, %v10044
    %v10252 = vpack.c.b16 %v10051, %v10048
    %v10253 = vpack.c.b16 %v10052, %v10049
    %v10254 = vpack.c.b16 %v10053, %v10050
    %v10255 = vpack.c.b16 %v10057, %v10054
    %v10256 = vpack.c.b16 %v10058, %v10055
    %v10257 = vpack.c.b16 %v10059, %v10056
    %v10258 = vpack.c.b16 %v10063, %v10060
    %v10259 = vpack.c.b16 %v10064, %v10061
    %v10260 = vpack.c.b16 %v10065, %v10062
    %v10261 = vpack.c.b16 %v10069, %v10066
    %v10262 = vpack.c.b16 %v10070, %v10067
    %v10263 = vpack.c.b16 %v10071, %v10068
    %10456 = vmatpush.bf16.msra.mxu0 %v10093
    %10457 = vmatpush.bf16.msra.mxu0 %v10090
    %10458 = vmatpush.bf16.msra.mxu0 %v10087
    %10459 = vmatpush.bf16.msra.mxu0 %v10084
    %10460 = vmatpush.bf16.msra.mxu0 %v10081
    %10461 = vmatpush.bf16.msra.mxu0 %v10078
    %10462 = vmatpush.bf16.msra.mxu0 %v10075
    %10463 = vmatpush.bf16.msra.mxu0 %v10072
    %10464 = vmatmul.bf16.gmra.mxu0 %v9160
    %v10465 = vpop.f32.mrf.mxu0
    %v10466 = vadd.f32 %v9426, %v10465
    %v10467 = vpop.f32.mrf.mxu0
    %10468 = vdwg.mxu0
    %10469 = vmatpush.bf16.msra.mxu0 %v10117
    %10470 = vmatpush.bf16.msra.mxu0 %v10114
    %10471 = vmatpush.bf16.msra.mxu0 %v10111
    %10472 = vmatpush.bf16.msra.mxu0 %v10108
    %10473 = vmatpush.bf16.msra.mxu0 %v10105
    %10474 = vmatpush.bf16.msra.mxu0 %v10102
    %10475 = vmatpush.bf16.msra.mxu0 %v10099
    %10476 = vmatpush.bf16.msra.mxu0 %v10096
    %10477 = vmatmul.bf16.gmra.mxu0 %v9161
    %v10478 = vpop.f32.mrf.mxu0
    %v10479 = vadd.f32 %v10466, %v10478
    %v10480 = vpop.f32.mrf.mxu0
    %10481 = vdwg.mxu0
    %10482 = vmatpush.bf16.msra.mxu0 %v10141
    %10483 = vmatpush.bf16.msra.mxu0 %v10138
    %10484 = vmatpush.bf16.msra.mxu0 %v10135
    %10485 = vmatpush.bf16.msra.mxu0 %v10132
    %10486 = vmatpush.bf16.msra.mxu0 %v10129
    %10487 = vmatpush.bf16.msra.mxu0 %v10126
    %10488 = vmatpush.bf16.msra.mxu0 %v10123
    %10489 = vmatpush.bf16.msra.mxu0 %v10120
    %10490 = vmatmul.bf16.gmra.mxu0 %v9162
    %v10491 = vpop.f32.mrf.mxu0
    %v10492 = vadd.f32 %v10479, %v10491
    %v10493 = vpop.f32.mrf.mxu0
    %10494 = vdwg.mxu0
    %10495 = vmatpush.bf16.msra.mxu0 %v10165
    %10496 = vmatpush.bf16.msra.mxu0 %v10162
    %10497 = vmatpush.bf16.msra.mxu0 %v10159
    %10498 = vmatpush.bf16.msra.mxu0 %v10156
    %10499 = vmatpush.bf16.msra.mxu0 %v10153
    %10500 = vmatpush.bf16.msra.mxu0 %v10150
    %10501 = vmatpush.bf16.msra.mxu0 %v10147
    %10502 = vmatpush.bf16.msra.mxu0 %v10144
    %10503 = vmatmul.bf16.gmra.mxu0 %v9163
    %v10504 = vpop.f32.mrf.mxu0
    %v10505 = vadd.f32 %v10492, %v10504
    %v10506 = vpop.f32.mrf.mxu0
    %10507 = vdwg.mxu0
    %10508 = vmatpush.bf16.msra.mxu0 %v10189
    %10509 = vmatpush.bf16.msra.mxu0 %v10186
    %10510 = vmatpush.bf16.msra.mxu0 %v10183
    %10511 = vmatpush.bf16.msra.mxu0 %v10180
    %10512 = vmatpush.bf16.msra.mxu0 %v10177
    %10513 = vmatpush.bf16.msra.mxu0 %v10174
    %10514 = vmatpush.bf16.msra.mxu0 %v10171
    %10515 = vmatpush.bf16.msra.mxu0 %v10168
    %10516 = vmatmul.bf16.gmra.mxu0 %v9164
    %v10517 = vpop.f32.mrf.mxu0
    %v10518 = vadd.f32 %v10505, %v10517
    %v10519 = vpop.f32.mrf.mxu0
    %10520 = vdwg.mxu0
    %10521 = vmatpush.bf16.msra.mxu0 %v10213
    %10522 = vmatpush.bf16.msra.mxu0 %v10210
    %10523 = vmatpush.bf16.msra.mxu0 %v10207
    %10524 = vmatpush.bf16.msra.mxu0 %v10204
    %10525 = vmatpush.bf16.msra.mxu0 %v10201
    %10526 = vmatpush.bf16.msra.mxu0 %v10198
    %10527 = vmatpush.bf16.msra.mxu0 %v10195
    %10528 = vmatpush.bf16.msra.mxu0 %v10192
    %10529 = vmatmul.bf16.gmra.mxu0 %v9165
    %v10530 = vpop.f32.mrf.mxu0
    %v10531 = vadd.f32 %v10518, %v10530
    %v10532 = vpop.f32.mrf.mxu0
    %10533 = vdwg.mxu0
    %10534 = vmatpush.bf16.msra.mxu0 %v10237
    %10535 = vmatpush.bf16.msra.mxu0 %v10234
    %10536 = vmatpush.bf16.msra.mxu0 %v10231
    %10537 = vmatpush.bf16.msra.mxu0 %v10228
    %10538 = vmatpush.bf16.msra.mxu0 %v10225
    %10539 = vmatpush.bf16.msra.mxu0 %v10222
    %10540 = vmatpush.bf16.msra.mxu0 %v10219
    %10541 = vmatpush.bf16.msra.mxu0 %v10216
    %10542 = vmatmul.bf16.gmra.mxu0 %v9166
    %v10543 = vpop.f32.mrf.mxu0
    %v10544 = vadd.f32 %v10531, %v10543
    %v10545 = vpop.f32.mrf.mxu0
    %10546 = vdwg.mxu0
    %10547 = vmatpush.bf16.msra.mxu0 %v10261
    %10548 = vmatpush.bf16.msra.mxu0 %v10258
    %10549 = vmatpush.bf16.msra.mxu0 %v10255
    %10550 = vmatpush.bf16.msra.mxu0 %v10252
    %10551 = vmatpush.bf16.msra.mxu0 %v10249
    %10552 = vmatpush.bf16.msra.mxu0 %v10246
    %10553 = vmatpush.bf16.msra.mxu0 %v10243
    %10554 = vmatpush.bf16.msra.mxu0 %v10240
    %10555 = vmatmul.bf16.gmra.mxu0 %v9167
    %v10556 = vpop.f32.mrf.mxu0
    %v10557 = vadd.f32 %v10544, %v10556
    %v10558 = vpop.f32.mrf.mxu0
    %10559 = vdwg.mxu0
    %10560 = vmatpush.bf16.msra.mxu0 %v10094
    %10561 = vmatpush.bf16.msra.mxu0 %v10091
    %10562 = vmatpush.bf16.msra.mxu0 %v10088
    %10563 = vmatpush.bf16.msra.mxu0 %v10085
    %10564 = vmatpush.bf16.msra.mxu0 %v10082
    %10565 = vmatpush.bf16.msra.mxu0 %v10079
    %10566 = vmatpush.bf16.msra.mxu0 %v10076
    %10567 = vmatpush.bf16.msra.mxu0 %v10073
    %10568 = vmatmul.bf16.gmra.mxu0 %v9160
    %v10569 = vpop.f32.mrf.mxu0
    %v10570 = vadd.f32 %v9427, %v10569
    %v10571 = vpop.f32.mrf.mxu0
    %10572 = vdwg.mxu0
    %10573 = vmatpush.bf16.msra.mxu0 %v10118
    %10574 = vmatpush.bf16.msra.mxu0 %v10115
    %10575 = vmatpush.bf16.msra.mxu0 %v10112
    %10576 = vmatpush.bf16.msra.mxu0 %v10109
    %10577 = vmatpush.bf16.msra.mxu0 %v10106
    %10578 = vmatpush.bf16.msra.mxu0 %v10103
    %10579 = vmatpush.bf16.msra.mxu0 %v10100
    %10580 = vmatpush.bf16.msra.mxu0 %v10097
    %10581 = vmatmul.bf16.gmra.mxu0 %v9161
    %v10582 = vpop.f32.mrf.mxu0
    %v10583 = vadd.f32 %v10570, %v10582
    %v10584 = vpop.f32.mrf.mxu0
    %10585 = vdwg.mxu0
    %10586 = vmatpush.bf16.msra.mxu0 %v10142
    %10587 = vmatpush.bf16.msra.mxu0 %v10139
    %10588 = vmatpush.bf16.msra.mxu0 %v10136
    %10589 = vmatpush.bf16.msra.mxu0 %v10133
    %10590 = vmatpush.bf16.msra.mxu0 %v10130
    %10591 = vmatpush.bf16.msra.mxu0 %v10127
    %10592 = vmatpush.bf16.msra.mxu0 %v10124
    %10593 = vmatpush.bf16.msra.mxu0 %v10121
    %10594 = vmatmul.bf16.gmra.mxu0 %v9162
    %v10595 = vpop.f32.mrf.mxu0
    %v10596 = vadd.f32 %v10583, %v10595
    %v10597 = vpop.f32.mrf.mxu0
    %10598 = vdwg.mxu0
    %10599 = vmatpush.bf16.msra.mxu0 %v10166
    %10600 = vmatpush.bf16.msra.mxu0 %v10163
    %10601 = vmatpush.bf16.msra.mxu0 %v10160
    %10602 = vmatpush.bf16.msra.mxu0 %v10157
    %10603 = vmatpush.bf16.msra.mxu0 %v10154
    %10604 = vmatpush.bf16.msra.mxu0 %v10151
    %10605 = vmatpush.bf16.msra.mxu0 %v10148
    %10606 = vmatpush.bf16.msra.mxu0 %v10145
    %10607 = vmatmul.bf16.gmra.mxu0 %v9163
    %v10608 = vpop.f32.mrf.mxu0
    %v10609 = vadd.f32 %v10596, %v10608
    %v10610 = vpop.f32.mrf.mxu0
    %10611 = vdwg.mxu0
    %10612 = vmatpush.bf16.msra.mxu0 %v10190
    %10613 = vmatpush.bf16.msra.mxu0 %v10187
    %10614 = vmatpush.bf16.msra.mxu0 %v10184
    %10615 = vmatpush.bf16.msra.mxu0 %v10181
    %10616 = vmatpush.bf16.msra.mxu0 %v10178
    %10617 = vmatpush.bf16.msra.mxu0 %v10175
    %10618 = vmatpush.bf16.msra.mxu0 %v10172
    %10619 = vmatpush.bf16.msra.mxu0 %v10169
    %10620 = vmatmul.bf16.gmra.mxu0 %v9164
    %v10621 = vpop.f32.mrf.mxu0
    %v10622 = vadd.f32 %v10609, %v10621
    %v10623 = vpop.f32.mrf.mxu0
    %10624 = vdwg.mxu0
    %10625 = vmatpush.bf16.msra.mxu0 %v10214
    %10626 = vmatpush.bf16.msra.mxu0 %v10211
    %10627 = vmatpush.bf16.msra.mxu0 %v10208
    %10628 = vmatpush.bf16.msra.mxu0 %v10205
    %10629 = vmatpush.bf16.msra.mxu0 %v10202
    %10630 = vmatpush.bf16.msra.mxu0 %v10199
    %10631 = vmatpush.bf16.msra.mxu0 %v10196
    %10632 = vmatpush.bf16.msra.mxu0 %v10193
    %10633 = vmatmul.bf16.gmra.mxu0 %v9165
    %v10634 = vpop.f32.mrf.mxu0
    %v10635 = vadd.f32 %v10622, %v10634
    %v10636 = vpop.f32.mrf.mxu0
    %10637 = vdwg.mxu0
    %10638 = vmatpush.bf16.msra.mxu0 %v10238
    %10639 = vmatpush.bf16.msra.mxu0 %v10235
    %10640 = vmatpush.bf16.msra.mxu0 %v10232
    %10641 = vmatpush.bf16.msra.mxu0 %v10229
    %10642 = vmatpush.bf16.msra.mxu0 %v10226
    %10643 = vmatpush.bf16.msra.mxu0 %v10223
    %10644 = vmatpush.bf16.msra.mxu0 %v10220
    %10645 = vmatpush.bf16.msra.mxu0 %v10217
    %10646 = vmatmul.bf16.gmra.mxu0 %v9166
    %v10647 = vpop.f32.mrf.mxu0
    %v10648 = vadd.f32 %v10635, %v10647
    %v10649 = vpop.f32.mrf.mxu0
    %10650 = vdwg.mxu0
    %10651 = vmatpush.bf16.msra.mxu0 %v10262
    %10652 = vmatpush.bf16.msra.mxu0 %v10259
    %10653 = vmatpush.bf16.msra.mxu0 %v10256
    %10654 = vmatpush.bf16.msra.mxu0 %v10253
    %10655 = vmatpush.bf16.msra.mxu0 %v10250
    %10656 = vmatpush.bf16.msra.mxu0 %v10247
    %10657 = vmatpush.bf16.msra.mxu0 %v10244
    %10658 = vmatpush.bf16.msra.mxu0 %v10241
    %10659 = vmatmul.bf16.gmra.mxu0 %v9167
    %v10660 = vpop.f32.mrf.mxu0
    %v10661 = vadd.f32 %v10648, %v10660
    %v10662 = vpop.f32.mrf.mxu0
    %10663 = vdwg.mxu0
    %10664 = vmatpush.bf16.msra.mxu0 %v10095
    %10665 = vmatpush.bf16.msra.mxu0 %v10092
    %10666 = vmatpush.bf16.msra.mxu0 %v10089
    %10667 = vmatpush.bf16.msra.mxu0 %v10086
    %10668 = vmatpush.bf16.msra.mxu0 %v10083
    %10669 = vmatpush.bf16.msra.mxu0 %v10080
    %10670 = vmatpush.bf16.msra.mxu0 %v10077
    %10671 = vmatpush.bf16.msra.mxu0 %v10074
    %10672 = vmatmul.bf16.gmra.mxu0 %v9160
    %v10673 = vpop.f32.mrf.mxu0
    %v10674 = vadd.f32 %v9428, %v10673
    %v10675 = vpop.f32.mrf.mxu0
    %10676 = vdwg.mxu0
    %10677 = vmatpush.bf16.msra.mxu0 %v10119
    %10678 = vmatpush.bf16.msra.mxu0 %v10116
    %10679 = vmatpush.bf16.msra.mxu0 %v10113
    %10680 = vmatpush.bf16.msra.mxu0 %v10110
    %10681 = vmatpush.bf16.msra.mxu0 %v10107
    %10682 = vmatpush.bf16.msra.mxu0 %v10104
    %10683 = vmatpush.bf16.msra.mxu0 %v10101
    %10684 = vmatpush.bf16.msra.mxu0 %v10098
    %10685 = vmatmul.bf16.gmra.mxu0 %v9161
    %v10686 = vpop.f32.mrf.mxu0
    %v10687 = vadd.f32 %v10674, %v10686
    %v10688 = vpop.f32.mrf.mxu0
    %10689 = vdwg.mxu0
    %10690 = vmatpush.bf16.msra.mxu0 %v10143
    %10691 = vmatpush.bf16.msra.mxu0 %v10140
    %10692 = vmatpush.bf16.msra.mxu0 %v10137
    %10693 = vmatpush.bf16.msra.mxu0 %v10134
    %10694 = vmatpush.bf16.msra.mxu0 %v10131
    %10695 = vmatpush.bf16.msra.mxu0 %v10128
    %10696 = vmatpush.bf16.msra.mxu0 %v10125
    %10697 = vmatpush.bf16.msra.mxu0 %v10122
    %10698 = vmatmul.bf16.gmra.mxu0 %v9162
    %v10699 = vpop.f32.mrf.mxu0
    %v10700 = vadd.f32 %v10687, %v10699
    %v10701 = vpop.f32.mrf.mxu0
    %10702 = vdwg.mxu0
    %10703 = vmatpush.bf16.msra.mxu0 %v10167
    %10704 = vmatpush.bf16.msra.mxu0 %v10164
    %10705 = vmatpush.bf16.msra.mxu0 %v10161
    %10706 = vmatpush.bf16.msra.mxu0 %v10158
    %10707 = vmatpush.bf16.msra.mxu0 %v10155
    %10708 = vmatpush.bf16.msra.mxu0 %v10152
    %10709 = vmatpush.bf16.msra.mxu0 %v10149
    %10710 = vmatpush.bf16.msra.mxu0 %v10146
    %10711 = vmatmul.bf16.gmra.mxu0 %v9163
    %v10712 = vpop.f32.mrf.mxu0
    %v10713 = vadd.f32 %v10700, %v10712
    %v10714 = vpop.f32.mrf.mxu0
    %10715 = vdwg.mxu0
    %10716 = vmatpush.bf16.msra.mxu0 %v10191
    %10717 = vmatpush.bf16.msra.mxu0 %v10188
    %10718 = vmatpush.bf16.msra.mxu0 %v10185
    %10719 = vmatpush.bf16.msra.mxu0 %v10182
    %10720 = vmatpush.bf16.msra.mxu0 %v10179
    %10721 = vmatpush.bf16.msra.mxu0 %v10176
    %10722 = vmatpush.bf16.msra.mxu0 %v10173
    %10723 = vmatpush.bf16.msra.mxu0 %v10170
    %10724 = vmatmul.bf16.gmra.mxu0 %v9164
    %v10725 = vpop.f32.mrf.mxu0
    %v10726 = vadd.f32 %v10713, %v10725
    %v10727 = vpop.f32.mrf.mxu0
    %10728 = vdwg.mxu0
    %10729 = vmatpush.bf16.msra.mxu0 %v10215
    %10730 = vmatpush.bf16.msra.mxu0 %v10212
    %10731 = vmatpush.bf16.msra.mxu0 %v10209
    %10732 = vmatpush.bf16.msra.mxu0 %v10206
    %10733 = vmatpush.bf16.msra.mxu0 %v10203
    %10734 = vmatpush.bf16.msra.mxu0 %v10200
    %10735 = vmatpush.bf16.msra.mxu0 %v10197
    %10736 = vmatpush.bf16.msra.mxu0 %v10194
    %10737 = vmatmul.bf16.gmra.mxu0 %v9165
    %v10738 = vpop.f32.mrf.mxu0
    %v10739 = vadd.f32 %v10726, %v10738
    %v10740 = vpop.f32.mrf.mxu0
    %10741 = vdwg.mxu0
    %10742 = vmatpush.bf16.msra.mxu0 %v10239
    %10743 = vmatpush.bf16.msra.mxu0 %v10236
    %10744 = vmatpush.bf16.msra.mxu0 %v10233
    %10745 = vmatpush.bf16.msra.mxu0 %v10230
    %10746 = vmatpush.bf16.msra.mxu0 %v10227
    %10747 = vmatpush.bf16.msra.mxu0 %v10224
    %10748 = vmatpush.bf16.msra.mxu0 %v10221
    %10749 = vmatpush.bf16.msra.mxu0 %v10218
    %10750 = vmatmul.bf16.gmra.mxu0 %v9166
    %v10751 = vpop.f32.mrf.mxu0
    %v10752 = vadd.f32 %v10739, %v10751
    %v10753 = vpop.f32.mrf.mxu0
    %10754 = vdwg.mxu0
    %10755 = vmatpush.bf16.msra.mxu0 %v10263
    %10756 = vmatpush.bf16.msra.mxu0 %v10260
    %10757 = vmatpush.bf16.msra.mxu0 %v10257
    %10758 = vmatpush.bf16.msra.mxu0 %v10254
    %10759 = vmatpush.bf16.msra.mxu0 %v10251
    %10760 = vmatpush.bf16.msra.mxu0 %v10248
    %10761 = vmatpush.bf16.msra.mxu0 %v10245
    %10762 = vmatpush.bf16.msra.mxu0 %v10242
    %10763 = vmatmul.bf16.gmra.mxu0 %v9167
    %v10764 = vpop.f32.mrf.mxu0
    %v10765 = vadd.f32 %v10752, %v10764
    %v10766 = vpop.f32.mrf.mxu0
    %10767 = vdwg.mxu0
    %v10768 = vsel %vm6744, %v10557, 0.0
    %v10769 = vsel %vm6744, %v10661, 0.0
    %v10770 = vadd.f32 %v10768, %v10769
    %v10771 = vsel %vm6744, %v10765, 0.0
    %v10772 = vadd.f32 %v10770, %v10771
    %10773 = vadd.xlane.f32.xlu0 %v10772
    %v10774 = vpop.xlane.xlu0 %10773
    %v10775 = vmul.f32 %v10774, 0.0033333334
    %v10776 = vlaneseq
    %v10777 = vand.u32 %v10776, 127
    %v10778 = vadd.s32 %v10777, 128
    %v10779 = vadd.s32 %v10777, 256
    %vm10780 = vcmp.lt.s32.totalorder %v10777, 300
    %vm10781 = vcmp.lt.s32.totalorder %v10778, 300
    %vm10782 = vcmp.lt.s32.totalorder %v10779, 300
    %v10783 = vsub.f32 %v10557, %v10775
    %v10784 = vsub.f32 %v10661, %v10775
    %v10785 = vsub.f32 %v10765, %v10775
    %v10786 = vsel %vm10780, %v10783, 0.0
    %v10787 = vsel %vm10781, %v10784, 0.0
    %v10788 = vsel %vm10782, %v10785, 0.0
    %v10789 = vmul.f32 %v10786, %v10786
    %v10790 = vmul.f32 %v10787, %v10787
    %v10791 = vmul.f32 %v10788, %v10788
    %v10792 = vsel %vm6744, %v10789, 0.0
    %v10793 = vsel %vm6744, %v10790, 0.0
    %v10794 = vadd.f32 %v10792, %v10793
    %v10795 = vsel %vm6744, %v10791, 0.0
    %v10796 = vadd.f32 %v10794, %v10795
    %10797 = vadd.xlane.f32.xlu0 %v10796
    %v10798 = vpop.xlane.xlu0 %10797
    %v10799 = vmul.f32 %v10798, 0.0033333334
    %v10800 = vadd.f32 %v10799, 1e-05
    %v10801 = vrsqrt.pop %v10800
    %v10802 = vmul.f32 %v10801, %v10800
    %v10803 = vmul.f32 %v10802, %v10801
    %v10804 = vmul.f32 0.5, %v10803
    %v10805 = vsub.f32 1.5, %v10804
    %v10806 = vmul.f32 %v10801, %v10805
    %vm10807 = vweird.f32 %v10800
    %vm10808 = vweird.f32 %v10801
    %vm10809 = vmor %vm10807, %vm10808
    %v10810 = vsel %vm10809, %v10801, %v10806
    %v10811 = vmul.f32 %v10786, %v10810
    %v10812 = vmul.f32 %v10787, %v10810
    %v10813 = vmul.f32 %v10788, %v10810
    %v10814 = vld [vmem:[#allocation28] sm:$0x7]
    %v10816 = vperm.slane %v10814, 0
    %v10817 = vperm.slane %v10814, 1
    %v10818 = vperm.slane %v10814, 2
    %v10822 = vmul.f32 %v10811, %v10816
    %v10823 = vmul.f32 %v10812, %v10817
    %v10824 = vmul.f32 %v10813, %v10818
    %v10825 = vld [vmem:[#allocation29] sm:$0x7]
    %v10827 = vperm.slane %v10825, 0
    %v10828 = vperm.slane %v10825, 1
    %v10829 = vperm.slane %v10825, 2
    %v10833 = vadd.f32 %v10822, %v10827
    %v10834 = vadd.f32 %v10823, %v10828
    %v10835 = vadd.f32 %v10824, %v10829
    %v10839 = vrot.slane %v10834, 6
    %v10840 = vrot.slane %v10835, 4
    %v10841 = vsel %vm6744, %v10833, %v10839
    %v10842 = vsel %vm6668, %v10841, %v10840
    %10844 = vst [vmem:[%s19] sm:$0x3f] %v10842
    // Predicated region
    $region150: #{my_model_forward.2} parent=1 // pred_check
      _
    $region151: #{my_model_forward.2} parent=1 // pred_check_branch
      %10846 = sbr.rel (0) target = $region153
    $region152: #{my_model_forward.2} parent=1 // pred_region
      _
    $region153: #{my_model_forward.2} parent=1 // pred_fallthru
      _
    // Predicated region
    $region154: #{my_model_forward.2} parent=1 // pred_check
      _
    $region155: #{my_model_forward.2} parent=1 // pred_check_branch
      %10848 = sbr.rel (0) target = $region157
    $region156: #{my_model_forward.2} parent=1 // pred_region
      _
    $region157: #{my_model_forward.2} parent=1 // pred_fallthru
      _
    %10849 = vsyncpa [#allocation4], 1
    %10850 = vsyncpa [#allocation6], 1
    %10851 = vsyncpa [#allocation9], 1
    %10852 = vsyncpa [#allocation12], 1
    %10853 = vsyncpa [#allocation15], 1
    %10854 = vsyncpa [#allocation18], 1
    %10855 = vsyncpa [#allocation21], 1
    %10856 = vsyncpa [#allocation24], 1
    %10857 = vsyncpa [#allocation27], 1
    %10858 = vsyncpa [#allocation30], 1

</llo_original>
